<compile_context>
chip_gen: v5e
topology: v5e:2x2
jax: 0.10.0
libtpu: 0.0.40
codegen_flags: <defaults>
</compile_context>

<pallas_src>
import jax
import jax.numpy as jnp
from jax.experimental import pallas as pl
from jax.experimental.pallas import tpu as pltpu

BN_EPS = 1e-5
LANE = 128


def _round_up(x, m):
    return (x + m - 1) // m * m


def _conv3x3_acc(pad_ref, w_ref, acc_ref, n, h, w, cp):
    """3x3 conv, stride 1, over a zero-padded (n, h+2, w+2, cp) f32 VMEM ref.

    w_ref: (9, cp, cp) bf16, tap k = kh*3 + kw.
    Accumulates into acc_ref, an (n*h*w, cp) f32 VMEM scratch, so the MXU
    accumulates in place instead of spilling a huge live vreg value.
    """
    m = n * h * w
    for k in range(9):
        kh, kw = divmod(k, 3)
        patch = pad_ref[:, kh:kh + h, kw:kw + w, :]
        patch = patch.reshape(m, cp).astype(jnp.bfloat16)
        tap = jnp.dot(patch, w_ref[k], preferred_element_type=jnp.float32)
        if k == 0:
            acc_ref[...] = tap          # first tap overwrites: no zero-fill pass
        else:
            acc_ref[...] += tap


def _bn_affine(acc_ref, g_ref, b_ref):
    """Training-mode BatchNorm folded to per-channel (scale, shift).

    Stats are over rows (= N*H*W) of the f32 accumulator.  Each acc_ref[...]
    is a separate VMEM read so no full-size centered/squared temporaries have
    to stay live across the reductions.
    """
    mean = jnp.mean(acc_ref[...], axis=0, keepdims=True)
    var = jnp.mean((acc_ref[...] - mean) ** 2, axis=0, keepdims=True)
    scale = g_ref[...] * jax.lax.rsqrt(var + BN_EPS)
    shift = b_ref[...] - mean * scale
    return scale, shift


def basic_block_kernel(x_ref, w1_ref, g1_ref, b1_ref, w2_ref, g2_ref, b2_ref,
                       o_ref, xpad_ref, ypad_ref, acc_ref):
    """Fused: relu(bn2(conv2(relu(bn1(conv1(x))))) + x), all in VMEM."""
    n, h, w, cp = x_ref.shape
    m = n * h * w

    # In-kernel zero padding: only the 1-pixel halo border is zero-filled
    # (the interiors are fully overwritten below).
    zrow = jnp.zeros((n, 1, w + 2, cp), jnp.float32)
    zcol = jnp.zeros((n, h + 2, 1, cp), jnp.float32)
    for ref in (xpad_ref, ypad_ref):
        ref[:, 0:1, :, :] = zrow
        ref[:, h + 1:h + 2, :, :] = zrow
        ref[:, :, 0:1, :] = zcol
        ref[:, :, w + 1:w + 2, :] = zcol

    xpad_ref[:, 1:h + 1, 1:w + 1, :] = x_ref[...]

    # conv1 -> bn1 -> relu   (intermediate stays in VMEM, never touches HBM);
    # normalization + ReLU fused into the scratch store.
    _conv3x3_acc(xpad_ref, w1_ref, acc_ref, n, h, w, cp)
    scale1, shift1 = _bn_affine(acc_ref, g1_ref, b1_ref)
    ypad_ref[:, 1:h + 1, 1:w + 1, :] = jnp.maximum(
        acc_ref[...] * scale1 + shift1, 0.0).reshape(n, h, w, cp)

    # conv2 -> bn2 -> + identity -> relu, fused into the output store.
    _conv3x3_acc(ypad_ref, w2_ref, acc_ref, n, h, w, cp)
    scale2, shift2 = _bn_affine(acc_ref, g2_ref, b2_ref)
    out = acc_ref[...] * scale2 + shift2 + x_ref[...].reshape(m, cp)
    o_ref[...] = jnp.maximum(out, 0.0).reshape(n, h, w, cp)

    # TODO(synk): SE attention, DropPath (stochastic_depth > 0), ShakeDrop and
    # the downsample / stride>1 paths are disabled by the module's default
    # constructor args and are not implemented here.


def _vmem_spec():
    return pl.BlockSpec(memory_space=pltpu.MemorySpace.VMEM)


def _pack_conv_weight(w_oihw, cp):
    """(Cout, Cin, 3, 3) PyTorch layout -> (9, cp, cp) bf16, tap k = kh*3+kw."""
    cout, cin, kh, kw = w_oihw.shape
    wk = jnp.transpose(w_oihw, (2, 3, 1, 0)).reshape(kh * kw, cin, cout)
    wk = jnp.pad(wk, ((0, 0), (0, cp - cin), (0, cp - cout)))
    return wk.astype(jnp.bfloat16)


def _pack_bn_param(p, cp):
    return jnp.pad(p, (0, cp - p.shape[0])).reshape(1, cp).astype(jnp.float32)


def _vmem_limit_bytes(n, h, w, cp):
    """Scoped-VMEM request sized to the real operand + scratch footprint."""
    f32, bf16 = 4, 2
    act = n * h * w * cp
    halo = n * (h + 2) * (w + 2) * cp
    total = (2 * act * f32              # x input + output
             + 2 * halo * f32           # two halo scratches
             + act * f32                # conv accumulator scratch
             + 2 * 9 * cp * cp * bf16   # packed conv weights
             + 4 * cp * f32)            # bn params
    # 25% + 2 MiB headroom for compiler temporaries; capped at v7x physical.
    return int(min(total * 1.25 + (2 << 20), 64 << 20))


@jax.jit
def basic_block_forward(x_nchw, params):
    """x_nchw: (N, C, H, W) float32; stride=1, no downsample (inplanes == planes)."""
    x = jnp.transpose(x_nchw, (0, 2, 3, 1))                   # NCHW -> NHWC
    n, h, w, c = x.shape
    cout = params["w1"].shape[0]
    cp = _round_up(max(c, cout), LANE)                        # lane-dense channels

    xp = jnp.pad(x, ((0, 0), (0, 0), (0, 0), (0, cp - c)))
    w1 = _pack_conv_weight(params["w1"], cp)
    w2 = _pack_conv_weight(params["w2"], cp)
    g1 = _pack_bn_param(params["gamma1"], cp)
    b1 = _pack_bn_param(params["beta1"], cp)
    g2 = _pack_bn_param(params["gamma2"], cp)
    b2 = _pack_bn_param(params["beta2"], cp)

    out = pl.pallas_call(
        basic_block_kernel,
        out_shape=jax.ShapeDtypeStruct((n, h, w, cp), jnp.float32),
        in_specs=[_vmem_spec()] * 7,
        out_specs=_vmem_spec(),
        scratch_shapes=[
            pltpu.VMEM((n, h + 2, w + 2, cp), jnp.float32),   # halo-padded x
            pltpu.VMEM((n, h + 2, w + 2, cp), jnp.float32),   # halo-padded relu(bn1)
            pltpu.VMEM((n * h * w, cp), jnp.float32),         # conv MXU accumulator
        ],
        compiler_params=pltpu.CompilerParams(
            vmem_limit_bytes=_vmem_limit_bytes(n, h, w, cp)),
    )(xp, w1, g1, b1, w2, g2, b2)

    out = out[..., :cout]
    # TODO(synk): if the surrounding model can stay NHWC, drop this transpose
    # (and the one above) to remove two extra HBM passes.
    return jnp.transpose(out, (0, 3, 1, 2))                   # NHWC -> NCHW


def init_basic_block_params(key, inplanes, planes):
    k1, k2, k3, k4 = jax.random.split(key, 4)
    fan1 = inplanes * 9
    fan2 = planes * 9
    return {
        "w1": jax.random.normal(k1, (planes, inplanes, 3, 3), jnp.float32) / jnp.sqrt(fan1),
        "w2": jax.random.normal(k2, (planes, planes, 3, 3), jnp.float32) / jnp.sqrt(fan2),
        "gamma1": 1.0 + 0.1 * jax.random.normal(k3, (planes,), jnp.float32),
        "beta1": 0.05 * jnp.arange(planes, dtype=jnp.float32),
        "gamma2": 1.0 + 0.1 * jax.random.normal(k4, (planes,), jnp.float32),
        "beta2": -0.05 * jnp.arange(planes, dtype=jnp.float32),
    }


# ------------------------- pure-JAX f32 reference (sanity) -------------------------
def _ref_conv_bn(x_nhwc, w_oihw, gamma, beta):
    w = jnp.transpose(w_oihw, (2, 3, 1, 0))  # HWIO
    y = jax.lax.conv_general_dilated(
        x_nhwc, w, window_strides=(1, 1), padding=((1, 1), (1, 1)),
        dimension_numbers=("NHWC", "HWIO", "NHWC"))
    mean = jnp.mean(y, axis=(0, 1, 2), keepdims=True)
    var = jnp.mean((y - mean) ** 2, axis=(0, 1, 2), keepdims=True)
    return (y - mean) * (gamma * jax.lax.rsqrt(var + BN_EPS)) + beta


def basic_block_reference(x_nchw, params):
    x = jnp.transpose(x_nchw, (0, 2, 3, 1))
    y = jnp.maximum(_ref_conv_bn(x, params["w1"], params["gamma1"], params["beta1"]), 0.0)
    y = _ref_conv_bn(y, params["w2"], params["gamma2"], params["beta2"]) + x
    y = jnp.maximum(y, 0.0)
    return jnp.transpose(y, (0, 3, 1, 2))


if __name__ == "__main__":
    key = jax.random.PRNGKey(0)
    kx, kp = jax.random.split(key)

    N, C, H, W = 2, 4, 16, 16           # inplanes = planes = 4, stride = 1
    x = jax.random.normal(kx, (N, C, H, W), jnp.float32)
    params = init_basic_block_params(kp, inplanes=C, planes=C)

    out = jax.block_until_ready(basic_block_forward(x, params))
    ref = jax.block_until_ready(basic_block_reference(x, params))

    assert out.shape == (N, C, H, W)
    # bf16 matmul operands (f32 accumulation) => looser tolerance than pure f32.
    max_err = float(jnp.max(jnp.abs(out - ref)))
    assert jnp.allclose(out, ref, atol=1e-1, rtol=5e-2), max_err

    print("KERNEL_OK")
</pallas_src>

<mosaic_0001>
module attributes {stable_mosaic.version = 11 : i64} {
  func.func @basic_block_kernel(%arg0: memref<2x16x16x128xf32, #tpu.memory_space<vmem>>, %arg1: memref<9x128x128xbf16, #tpu.memory_space<vmem>>, %arg2: memref<1x128xf32, #tpu.memory_space<vmem>>, %arg3: memref<1x128xf32, #tpu.memory_space<vmem>>, %arg4: memref<9x128x128xbf16, #tpu.memory_space<vmem>>, %arg5: memref<1x128xf32, #tpu.memory_space<vmem>>, %arg6: memref<1x128xf32, #tpu.memory_space<vmem>>, %arg7: memref<2x16x16x128xf32, #tpu.memory_space<vmem>>, %arg8: memref<2x18x18x128xf32, #tpu.memory_space<vmem>>, %arg9: memref<2x18x18x128xf32, #tpu.memory_space<vmem>>, %arg10: memref<512x128xf32, #tpu.memory_space<vmem>>) attributes {dimension_semantics = [], scalar_prefetch = 0 : i64, scratch_operands = 3 : i64, tpu.core_type = #tpu.core_type<tc>} {
    %cst = arith.constant 0.000000e+00 : f32
    %0 = vector.broadcast %cst : f32 to vector<2x1x18x128xf32>
    %cst_0 = arith.constant 0.000000e+00 : f32
    %1 = vector.broadcast %cst_0 : f32 to vector<2x18x1x128xf32>
    %c0 = arith.constant 0 : index
    %c0_1 = arith.constant 0 : index
    %c0_2 = arith.constant 0 : index
    %c0_3 = arith.constant 0 : index
    %2 = vector.load %arg8[%c0, %c0_1, %c0_2, %c0_3] : memref<2x18x18x128xf32, #tpu.memory_space<vmem>>, vector<2x1x18x128xf32>
    tpu.vector_store %arg8[%c0, %c0_1, %c0_2, %c0_3], %0 {strides = array<i32>} : memref<2x18x18x128xf32, #tpu.memory_space<vmem>>, vector<2x1x18x128xf32>,
    %c0_4 = arith.constant 0 : index
    %c17 = arith.constant 17 : index
    %c0_5 = arith.constant 0 : index
    %c0_6 = arith.constant 0 : index
    %3 = vector.load %arg8[%c0_4, %c17, %c0_5, %c0_6] : memref<2x18x18x128xf32, #tpu.memory_space<vmem>>, vector<2x1x18x128xf32>
    tpu.vector_store %arg8[%c0_4, %c17, %c0_5, %c0_6], %0 {strides = array<i32>} : memref<2x18x18x128xf32, #tpu.memory_space<vmem>>, vector<2x1x18x128xf32>,
    %c0_7 = arith.constant 0 : index
    %c0_8 = arith.constant 0 : index
    %c0_9 = arith.constant 0 : index
    %c0_10 = arith.constant 0 : index
    %4 = vector.load %arg8[%c0_7, %c0_8, %c0_9, %c0_10] : memref<2x18x18x128xf32, #tpu.memory_space<vmem>>, vector<2x18x1x128xf32>
    tpu.vector_store %arg8[%c0_7, %c0_8, %c0_9, %c0_10], %1 {strides = array<i32>} : memref<2x18x18x128xf32, #tpu.memory_space<vmem>>, vector<2x18x1x128xf32>,
    %c0_11 = arith.constant 0 : index
    %c0_12 = arith.constant 0 : index
    %c17_13 = arith.constant 17 : index
    %c0_14 = arith.constant 0 : index
    %5 = vector.load %arg8[%c0_11, %c0_12, %c17_13, %c0_14] : memref<2x18x18x128xf32, #tpu.memory_space<vmem>>, vector<2x18x1x128xf32>
    tpu.vector_store %arg8[%c0_11, %c0_12, %c17_13, %c0_14], %1 {strides = array<i32>} : memref<2x18x18x128xf32, #tpu.memory_space<vmem>>, vector<2x18x1x128xf32>,
    %c0_15 = arith.constant 0 : index
    %c0_16 = arith.constant 0 : index
    %c0_17 = arith.constant 0 : index
    %c0_18 = arith.constant 0 : index
    %6 = vector.load %arg9[%c0_15, %c0_16, %c0_17, %c0_18] : memref<2x18x18x128xf32, #tpu.memory_space<vmem>>, vector<2x1x18x128xf32>
    tpu.vector_store %arg9[%c0_15, %c0_16, %c0_17, %c0_18], %0 {strides = array<i32>} : memref<2x18x18x128xf32, #tpu.memory_space<vmem>>, vector<2x1x18x128xf32>,
    %c0_19 = arith.constant 0 : index
    %c17_20 = arith.constant 17 : index
    %c0_21 = arith.constant 0 : index
    %c0_22 = arith.constant 0 : index
    %7 = vector.load %arg9[%c0_19, %c17_20, %c0_21, %c0_22] : memref<2x18x18x128xf32, #tpu.memory_space<vmem>>, vector<2x1x18x128xf32>
    tpu.vector_store %arg9[%c0_19, %c17_20, %c0_21, %c0_22], %0 {strides = array<i32>} : memref<2x18x18x128xf32, #tpu.memory_space<vmem>>, vector<2x1x18x128xf32>,
    %c0_23 = arith.constant 0 : index
    %c0_24 = arith.constant 0 : index
    %c0_25 = arith.constant 0 : index
    %c0_26 = arith.constant 0 : index
    %8 = vector.load %arg9[%c0_23, %c0_24, %c0_25, %c0_26] : memref<2x18x18x128xf32, #tpu.memory_space<vmem>>, vector<2x18x1x128xf32>
    tpu.vector_store %arg9[%c0_23, %c0_24, %c0_25, %c0_26], %1 {strides = array<i32>} : memref<2x18x18x128xf32, #tpu.memory_space<vmem>>, vector<2x18x1x128xf32>,
    %c0_27 = arith.constant 0 : index
    %c0_28 = arith.constant 0 : index
    %c17_29 = arith.constant 17 : index
    %c0_30 = arith.constant 0 : index
    %9 = vector.load %arg9[%c0_27, %c0_28, %c17_29, %c0_30] : memref<2x18x18x128xf32, #tpu.memory_space<vmem>>, vector<2x18x1x128xf32>
    tpu.vector_store %arg9[%c0_27, %c0_28, %c17_29, %c0_30], %1 {strides = array<i32>} : memref<2x18x18x128xf32, #tpu.memory_space<vmem>>, vector<2x18x1x128xf32>,
    %c0_31 = arith.constant 0 : index
    %c0_32 = arith.constant 0 : index
    %c0_33 = arith.constant 0 : index
    %c0_34 = arith.constant 0 : index
    %10 = vector.load %arg0[%c0_31, %c0_32, %c0_33, %c0_34] : memref<2x16x16x128xf32, #tpu.memory_space<vmem>>, vector<2x16x16x128xf32>
    %c0_35 = arith.constant 0 : index
    %c1 = arith.constant 1 : index
    %c1_36 = arith.constant 1 : index
    %c0_37 = arith.constant 0 : index
    %11 = vector.load %arg8[%c0_35, %c1, %c1_36, %c0_37] : memref<2x18x18x128xf32, #tpu.memory_space<vmem>>, vector<2x16x16x128xf32>
    tpu.vector_store %arg8[%c0_35, %c1, %c1_36, %c0_37], %10 {strides = array<i32>} : memref<2x18x18x128xf32, #tpu.memory_space<vmem>>, vector<2x16x16x128xf32>,
    %c0_38 = arith.constant 0 : index
    %c0_39 = arith.constant 0 : index
    %c0_40 = arith.constant 0 : index
    %c0_41 = arith.constant 0 : index
    %12 = vector.load %arg8[%c0_38, %c0_39, %c0_40, %c0_41] : memref<2x18x18x128xf32, #tpu.memory_space<vmem>>, vector<2x16x16x128xf32>
    %13 = vector.shape_cast %12 : vector<2x16x16x128xf32> to vector<512x128xf32>
    %14 = arith.truncf %13 : vector<512x128xf32> to vector<512x128xbf16>
    %c0_42 = arith.constant 0 : index
    %c0_43 = arith.constant 0 : index
    %c0_44 = arith.constant 0 : index
    %15 = vector.load %arg1[%c0_42, %c0_43, %c0_44] : memref<9x128x128xbf16, #tpu.memory_space<vmem>>, vector<1x128x128xbf16>
    %16 = vector.shape_cast %15 : vector<1x128x128xbf16> to vector<128x128xbf16>
    %cst_45 = arith.constant dense<0.000000e+00> : vector<512x128xf32>
    %17 = tpu.matmul %14, %16, %cst_45 {dimension_numbers = #tpu.dot_dimension_numbers<[1], [0], [0], [1], [0, 0, 1, 1], [], []>} : vector<512x128xbf16>, vector<128x128xbf16>, vector<512x128xf32> -> vector<512x128xf32>
    %c0_46 = arith.constant 0 : index
    %c0_47 = arith.constant 0 : index
    %18 = vector.load %arg10[%c0_46, %c0_47] : memref<512x128xf32, #tpu.memory_space<vmem>>, vector<512x128xf32>
    tpu.vector_store %arg10[%c0_46, %c0_47], %17 {strides = array<i32>} : memref<512x128xf32, #tpu.memory_space<vmem>>, vector<512x128xf32>,
    %c0_48 = arith.constant 0 : index
    %c0_49 = arith.constant 0 : index
    %c1_50 = arith.constant 1 : index
    %c0_51 = arith.constant 0 : index
    %19 = vector.load %arg8[%c0_48, %c0_49, %c1_50, %c0_51] : memref<2x18x18x128xf32, #tpu.memory_space<vmem>>, vector<2x16x16x128xf32>
    %20 = vector.shape_cast %19 : vector<2x16x16x128xf32> to vector<512x128xf32>
    %21 = arith.truncf %20 : vector<512x128xf32> to vector<512x128xbf16>
    %c1_52 = arith.constant 1 : index
    %c0_53 = arith.constant 0 : index
    %c0_54 = arith.constant 0 : index
    %22 = vector.load %arg1[%c1_52, %c0_53, %c0_54] : memref<9x128x128xbf16, #tpu.memory_space<vmem>>, vector<1x128x128xbf16>
    %23 = vector.shape_cast %22 : vector<1x128x128xbf16> to vector<128x128xbf16>
    %cst_55 = arith.constant dense<0.000000e+00> : vector<512x128xf32>
    %24 = tpu.matmul %21, %23, %cst_55 {dimension_numbers = #tpu.dot_dimension_numbers<[1], [0], [0], [1], [0, 0, 1, 1], [], []>} : vector<512x128xbf16>, vector<128x128xbf16>, vector<512x128xf32> -> vector<512x128xf32>
    %c0_56 = arith.constant 0 : index
    %c0_57 = arith.constant 0 : index
    %25 = vector.load %arg10[%c0_56, %c0_57] : memref<512x128xf32, #tpu.memory_space<vmem>>, vector<512x128xf32>
    %26 = arith.addf %25, %24 : vector<512x128xf32>
    %c0_58 = arith.constant 0 : index
    %c0_59 = arith.constant 0 : index
    %27 = vector.load %arg10[%c0_58, %c0_59] : memref<512x128xf32, #tpu.memory_space<vmem>>, vector<512x128xf32>
    tpu.vector_store %arg10[%c0_58, %c0_59], %26 {strides = array<i32>} : memref<512x128xf32, #tpu.memory_space<vmem>>, vector<512x128xf32>,
    %c0_60 = arith.constant 0 : index
    %c0_61 = arith.constant 0 : index
    %c2 = arith.constant 2 : index
    %c0_62 = arith.constant 0 : index
    %28 = vector.load %arg8[%c0_60, %c0_61, %c2, %c0_62] : memref<2x18x18x128xf32, #tpu.memory_space<vmem>>, vector<2x16x16x128xf32>
    %29 = vector.shape_cast %28 : vector<2x16x16x128xf32> to vector<512x128xf32>
    %30 = arith.truncf %29 : vector<512x128xf32> to vector<512x128xbf16>
    %c2_63 = arith.constant 2 : index
    %c0_64 = arith.constant 0 : index
    %c0_65 = arith.constant 0 : index
    %31 = vector.load %arg1[%c2_63, %c0_64, %c0_65] : memref<9x128x128xbf16, #tpu.memory_space<vmem>>, vector<1x128x128xbf16>
    %32 = vector.shape_cast %31 : vector<1x128x128xbf16> to vector<128x128xbf16>
    %cst_66 = arith.constant dense<0.000000e+00> : vector<512x128xf32>
    %33 = tpu.matmul %30, %32, %cst_66 {dimension_numbers = #tpu.dot_dimension_numbers<[1], [0], [0], [1], [0, 0, 1, 1], [], []>} : vector<512x128xbf16>, vector<128x128xbf16>, vector<512x128xf32> -> vector<512x128xf32>
    %c0_67 = arith.constant 0 : index
    %c0_68 = arith.constant 0 : index
    %34 = vector.load %arg10[%c0_67, %c0_68] : memref<512x128xf32, #tpu.memory_space<vmem>>, vector<512x128xf32>
    %35 = arith.addf %34, %33 : vector<512x128xf32>
    %c0_69 = arith.constant 0 : index
    %c0_70 = arith.constant 0 : index
    %36 = vector.load %arg10[%c0_69, %c0_70] : memref<512x128xf32, #tpu.memory_space<vmem>>, vector<512x128xf32>
    tpu.vector_store %arg10[%c0_69, %c0_70], %35 {strides = array<i32>} : memref<512x128xf32, #tpu.memory_space<vmem>>, vector<512x128xf32>,
    %c0_71 = arith.constant 0 : index
    %c1_72 = arith.constant 1 : index
    %c0_73 = arith.constant 0 : index
    %c0_74 = arith.constant 0 : index
    %37 = vector.load %arg8[%c0_71, %c1_72, %c0_73, %c0_74] : memref<2x18x18x128xf32, #tpu.memory_space<vmem>>, vector<2x16x16x128xf32>
    %38 = vector.shape_cast %37 : vector<2x16x16x128xf32> to vector<512x128xf32>
    %39 = arith.truncf %38 : vector<512x128xf32> to vector<512x128xbf16>
    %c3 = arith.constant 3 : index
    %c0_75 = arith.constant 0 : index
    %c0_76 = arith.constant 0 : index
    %40 = vector.load %arg1[%c3, %c0_75, %c0_76] : memref<9x128x128xbf16, #tpu.memory_space<vmem>>, vector<1x128x128xbf16>
    %41 = vector.shape_cast %40 : vector<1x128x128xbf16> to vector<128x128xbf16>
    %cst_77 = arith.constant dense<0.000000e+00> : vector<512x128xf32>
    %42 = tpu.matmul %39, %41, %cst_77 {dimension_numbers = #tpu.dot_dimension_numbers<[1], [0], [0], [1], [0, 0, 1, 1], [], []>} : vector<512x128xbf16>, vector<128x128xbf16>, vector<512x128xf32> -> vector<512x128xf32>
    %c0_78 = arith.constant 0 : index
    %c0_79 = arith.constant 0 : index
    %43 = vector.load %arg10[%c0_78, %c0_79] : memref<512x128xf32, #tpu.memory_space<vmem>>, vector<512x128xf32>
    %44 = arith.addf %43, %42 : vector<512x128xf32>
    %c0_80 = arith.constant 0 : index
    %c0_81 = arith.constant 0 : index
    %45 = vector.load %arg10[%c0_80, %c0_81] : memref<512x128xf32, #tpu.memory_space<vmem>>, vector<512x128xf32>
    tpu.vector_store %arg10[%c0_80, %c0_81], %44 {strides = array<i32>} : memref<512x128xf32, #tpu.memory_space<vmem>>, vector<512x128xf32>,
    %c0_82 = arith.constant 0 : index
    %c1_83 = arith.constant 1 : index
    %c1_84 = arith.constant 1 : index
    %c0_85 = arith.constant 0 : index
    %46 = vector.load %arg8[%c0_82, %c1_83, %c1_84, %c0_85] : memref<2x18x18x128xf32, #tpu.memory_space<vmem>>, vector<2x16x16x128xf32>
    %47 = vector.shape_cast %46 : vector<2x16x16x128xf32> to vector<512x128xf32>
    %48 = arith.truncf %47 : vector<512x128xf32> to vector<512x128xbf16>
    %c4 = arith.constant 4 : index
    %c0_86 = arith.constant 0 : index
    %c0_87 = arith.constant 0 : index
    %49 = vector.load %arg1[%c4, %c0_86, %c0_87] : memref<9x128x128xbf16, #tpu.memory_space<vmem>>, vector<1x128x128xbf16>
    %50 = vector.shape_cast %49 : vector<1x128x128xbf16> to vector<128x128xbf16>
    %cst_88 = arith.constant dense<0.000000e+00> : vector<512x128xf32>
    %51 = tpu.matmul %48, %50, %cst_88 {dimension_numbers = #tpu.dot_dimension_numbers<[1], [0], [0], [1], [0, 0, 1, 1], [], []>} : vector<512x128xbf16>, vector<128x128xbf16>, vector<512x128xf32> -> vector<512x128xf32>
    %c0_89 = arith.constant 0 : index
    %c0_90 = arith.constant 0 : index
    %52 = vector.load %arg10[%c0_89, %c0_90] : memref<512x128xf32, #tpu.memory_space<vmem>>, vector<512x128xf32>
    %53 = arith.addf %52, %51 : vector<512x128xf32>
    %c0_91 = arith.constant 0 : index
    %c0_92 = arith.constant 0 : index
    %54 = vector.load %arg10[%c0_91, %c0_92] : memref<512x128xf32, #tpu.memory_space<vmem>>, vector<512x128xf32>
    tpu.vector_store %arg10[%c0_91, %c0_92], %53 {strides = array<i32>} : memref<512x128xf32, #tpu.memory_space<vmem>>, vector<512x128xf32>,
    %c0_93 = arith.constant 0 : index
    %c1_94 = arith.constant 1 : index
    %c2_95 = arith.constant 2 : index
    %c0_96 = arith.constant 0 : index
    %55 = vector.load %arg8[%c0_93, %c1_94, %c2_95, %c0_96] : memref<2x18x18x128xf32, #tpu.memory_space<vmem>>, vector<2x16x16x128xf32>
    %56 = vector.shape_cast %55 : vector<2x16x16x128xf32> to vector<512x128xf32>
    %57 = arith.truncf %56 : vector<512x128xf32> to vector<512x128xbf16>
    %c5 = arith.constant 5 : index
    %c0_97 = arith.constant 0 : index
    %c0_98 = arith.constant 0 : index
    %58 = vector.load %arg1[%c5, %c0_97, %c0_98] : memref<9x128x128xbf16, #tpu.memory_space<vmem>>, vector<1x128x128xbf16>
    %59 = vector.shape_cast %58 : vector<1x128x128xbf16> to vector<128x128xbf16>
    %cst_99 = arith.constant dense<0.000000e+00> : vector<512x128xf32>
    %60 = tpu.matmul %57, %59, %cst_99 {dimension_numbers = #tpu.dot_dimension_numbers<[1], [0], [0], [1], [0, 0, 1, 1], [], []>} : vector<512x128xbf16>, vector<128x128xbf16>, vector<512x128xf32> -> vector<512x128xf32>
    %c0_100 = arith.constant 0 : index
    %c0_101 = arith.constant 0 : index
    %61 = vector.load %arg10[%c0_100, %c0_101] : memref<512x128xf32, #tpu.memory_space<vmem>>, vector<512x128xf32>
    %62 = arith.addf %61, %60 : vector<512x128xf32>
    %c0_102 = arith.constant 0 : index
    %c0_103 = arith.constant 0 : index
    %63 = vector.load %arg10[%c0_102, %c0_103] : memref<512x128xf32, #tpu.memory_space<vmem>>, vector<512x128xf32>
    tpu.vector_store %arg10[%c0_102, %c0_103], %62 {strides = array<i32>} : memref<512x128xf32, #tpu.memory_space<vmem>>, vector<512x128xf32>,
    %c0_104 = arith.constant 0 : index
    %c2_105 = arith.constant 2 : index
    %c0_106 = arith.constant 0 : index
    %c0_107 = arith.constant 0 : index
    %64 = vector.load %arg8[%c0_104, %c2_105, %c0_106, %c0_107] : memref<2x18x18x128xf32, #tpu.memory_space<vmem>>, vector<2x16x16x128xf32>
    %65 = vector.shape_cast %64 : vector<2x16x16x128xf32> to vector<512x128xf32>
    %66 = arith.truncf %65 : vector<512x128xf32> to vector<512x128xbf16>
    %c6 = arith.constant 6 : index
    %c0_108 = arith.constant 0 : index
    %c0_109 = arith.constant 0 : index
    %67 = vector.load %arg1[%c6, %c0_108, %c0_109] : memref<9x128x128xbf16, #tpu.memory_space<vmem>>, vector<1x128x128xbf16>
    %68 = vector.shape_cast %67 : vector<1x128x128xbf16> to vector<128x128xbf16>
    %cst_110 = arith.constant dense<0.000000e+00> : vector<512x128xf32>
    %69 = tpu.matmul %66, %68, %cst_110 {dimension_numbers = #tpu.dot_dimension_numbers<[1], [0], [0], [1], [0, 0, 1, 1], [], []>} : vector<512x128xbf16>, vector<128x128xbf16>, vector<512x128xf32> -> vector<512x128xf32>
    %c0_111 = arith.constant 0 : index
    %c0_112 = arith.constant 0 : index
    %70 = vector.load %arg10[%c0_111, %c0_112] : memref<512x128xf32, #tpu.memory_space<vmem>>, vector<512x128xf32>
    %71 = arith.addf %70, %69 : vector<512x128xf32>
    %c0_113 = arith.constant 0 : index
    %c0_114 = arith.constant 0 : index
    %72 = vector.load %arg10[%c0_113, %c0_114] : memref<512x128xf32, #tpu.memory_space<vmem>>, vector<512x128xf32>
    tpu.vector_store %arg10[%c0_113, %c0_114], %71 {strides = array<i32>} : memref<512x128xf32, #tpu.memory_space<vmem>>, vector<512x128xf32>,
    %c0_115 = arith.constant 0 : index
    %c2_116 = arith.constant 2 : index
    %c1_117 = arith.constant 1 : index
    %c0_118 = arith.constant 0 : index
    %73 = vector.load %arg8[%c0_115, %c2_116, %c1_117, %c0_118] : memref<2x18x18x128xf32, #tpu.memory_space<vmem>>, vector<2x16x16x128xf32>
    %74 = vector.shape_cast %73 : vector<2x16x16x128xf32> to vector<512x128xf32>
    %75 = arith.truncf %74 : vector<512x128xf32> to vector<512x128xbf16>
    %c7 = arith.constant 7 : index
    %c0_119 = arith.constant 0 : index
    %c0_120 = arith.constant 0 : index
    %76 = vector.load %arg1[%c7, %c0_119, %c0_120] : memref<9x128x128xbf16, #tpu.memory_space<vmem>>, vector<1x128x128xbf16>
    %77 = vector.shape_cast %76 : vector<1x128x128xbf16> to vector<128x128xbf16>
    %cst_121 = arith.constant dense<0.000000e+00> : vector<512x128xf32>
    %78 = tpu.matmul %75, %77, %cst_121 {dimension_numbers = #tpu.dot_dimension_numbers<[1], [0], [0], [1], [0, 0, 1, 1], [], []>} : vector<512x128xbf16>, vector<128x128xbf16>, vector<512x128xf32> -> vector<512x128xf32>
    %c0_122 = arith.constant 0 : index
    %c0_123 = arith.constant 0 : index
    %79 = vector.load %arg10[%c0_122, %c0_123] : memref<512x128xf32, #tpu.memory_space<vmem>>, vector<512x128xf32>
    %80 = arith.addf %79, %78 : vector<512x128xf32>
    %c0_124 = arith.constant 0 : index
    %c0_125 = arith.constant 0 : index
    %81 = vector.load %arg10[%c0_124, %c0_125] : memref<512x128xf32, #tpu.memory_space<vmem>>, vector<512x128xf32>
    tpu.vector_store %arg10[%c0_124, %c0_125], %80 {strides = array<i32>} : memref<512x128xf32, #tpu.memory_space<vmem>>, vector<512x128xf32>,
    %c0_126 = arith.constant 0 : index
    %c2_127 = arith.constant 2 : index
    %c2_128 = arith.constant 2 : index
    %c0_129 = arith.constant 0 : index
    %82 = vector.load %arg8[%c0_126, %c2_127, %c2_128, %c0_129] : memref<2x18x18x128xf32, #tpu.memory_space<vmem>>, vector<2x16x16x128xf32>
    %83 = vector.shape_cast %82 : vector<2x16x16x128xf32> to vector<512x128xf32>
    %84 = arith.truncf %83 : vector<512x128xf32> to vector<512x128xbf16>
    %c8 = arith.constant 8 : index
    %c0_130 = arith.constant 0 : index
    %c0_131 = arith.constant 0 : index
    %85 = vector.load %arg1[%c8, %c0_130, %c0_131] : memref<9x128x128xbf16, #tpu.memory_space<vmem>>, vector<1x128x128xbf16>
    %86 = vector.shape_cast %85 : vector<1x128x128xbf16> to vector<128x128xbf16>
    %cst_132 = arith.constant dense<0.000000e+00> : vector<512x128xf32>
    %87 = tpu.matmul %84, %86, %cst_132 {dimension_numbers = #tpu.dot_dimension_numbers<[1], [0], [0], [1], [0, 0, 1, 1], [], []>} : vector<512x128xbf16>, vector<128x128xbf16>, vector<512x128xf32> -> vector<512x128xf32>
    %c0_133 = arith.constant 0 : index
    %c0_134 = arith.constant 0 : index
    %88 = vector.load %arg10[%c0_133, %c0_134] : memref<512x128xf32, #tpu.memory_space<vmem>>, vector<512x128xf32>
    %89 = arith.addf %88, %87 : vector<512x128xf32>
    %c0_135 = arith.constant 0 : index
    %c0_136 = arith.constant 0 : index
    %90 = vector.load %arg10[%c0_135, %c0_136] : memref<512x128xf32, #tpu.memory_space<vmem>>, vector<512x128xf32>
    tpu.vector_store %arg10[%c0_135, %c0_136], %89 {strides = array<i32>} : memref<512x128xf32, #tpu.memory_space<vmem>>, vector<512x128xf32>,
    %c0_137 = arith.constant 0 : index
    %c0_138 = arith.constant 0 : index
    %91 = vector.load %arg10[%c0_137, %c0_138] : memref<512x128xf32, #tpu.memory_space<vmem>>, vector<512x128xf32>
    %cst_139 = arith.constant dense<0.000000e+00> : vector<128xf32>
    %92 = vector.multi_reduction <add>, %91, %cst_139 [0] : vector<512x128xf32> to vector<128xf32>
    %93 = vector.shape_cast %92 : vector<128xf32> to vector<1x128xf32>
    %cst_140 = arith.constant 5.120000e+02 : f32
    %94 = vector.broadcast %cst_140 : f32 to vector<1x128xf32>
    %95 = arith.divf %93, %94 : vector<1x128xf32>
    %c0_141 = arith.constant 0 : index
    %c0_142 = arith.constant 0 : index
    %96 = vector.load %arg10[%c0_141, %c0_142] : memref<512x128xf32, #tpu.memory_space<vmem>>, vector<512x128xf32>
    %97 = vector.broadcast %95 : vector<1x128xf32> to vector<512x128xf32>
    %98 = arith.subf %96, %97 : vector<512x128xf32>
    %99 = arith.mulf %98, %98 : vector<512x128xf32>
    %cst_143 = arith.constant dense<0.000000e+00> : vector<128xf32>
    %100 = vector.multi_reduction <add>, %99, %cst_143 [0] : vector<512x128xf32> to vector<128xf32>
    %101 = vector.shape_cast %100 : vector<128xf32> to vector<1x128xf32>
    %cst_144 = arith.constant 5.120000e+02 : f32
    %102 = vector.broadcast %cst_144 : f32 to vector<1x128xf32>
    %103 = arith.divf %101, %102 : vector<1x128xf32>
    %c0_145 = arith.constant 0 : index
    %c0_146 = arith.constant 0 : index
    %104 = vector.load %arg2[%c0_145, %c0_146] : memref<1x128xf32, #tpu.memory_space<vmem>>, vector<1x128xf32>
    %cst_147 = arith.constant 9.99999974E-6 : f32
    %105 = vector.broadcast %cst_147 : f32 to vector<1x128xf32>
    %106 = arith.addf %103, %105 : vector<1x128xf32>
    %107 = math.rsqrt %106 : vector<1x128xf32>
    %108 = arith.mulf %104, %107 : vector<1x128xf32>
    %c0_148 = arith.constant 0 : index
    %c0_149 = arith.constant 0 : index
    %109 = vector.load %arg3[%c0_148, %c0_149] : memref<1x128xf32, #tpu.memory_space<vmem>>, vector<1x128xf32>
    %110 = arith.mulf %95, %108 : vector<1x128xf32>
    %111 = arith.subf %109, %110 : vector<1x128xf32>
    %c0_150 = arith.constant 0 : index
    %c0_151 = arith.constant 0 : index
    %112 = vector.load %arg10[%c0_150, %c0_151] : memref<512x128xf32, #tpu.memory_space<vmem>>, vector<512x128xf32>
    %113 = vector.broadcast %108 : vector<1x128xf32> to vector<512x128xf32>
    %114 = arith.mulf %112, %113 : vector<512x128xf32>
    %115 = vector.broadcast %111 : vector<1x128xf32> to vector<512x128xf32>
    %116 = arith.addf %114, %115 : vector<512x128xf32>
    %cst_152 = arith.constant 0.000000e+00 : f32
    %117 = vector.broadcast %cst_152 : f32 to vector<512x128xf32>
    %118 = arith.maximumf %116, %117 : vector<512x128xf32>
    %119 = vector.shape_cast %118 : vector<512x128xf32> to vector<2x16x16x128xf32>
    %c0_153 = arith.constant 0 : index
    %c1_154 = arith.constant 1 : index
    %c1_155 = arith.constant 1 : index
    %c0_156 = arith.constant 0 : index
    %120 = vector.load %arg9[%c0_153, %c1_154, %c1_155, %c0_156] : memref<2x18x18x128xf32, #tpu.memory_space<vmem>>, vector<2x16x16x128xf32>
    tpu.vector_store %arg9[%c0_153, %c1_154, %c1_155, %c0_156], %119 {strides = array<i32>} : memref<2x18x18x128xf32, #tpu.memory_space<vmem>>, vector<2x16x16x128xf32>,
    %c0_157 = arith.constant 0 : index
    %c0_158 = arith.constant 0 : index
    %c0_159 = arith.constant 0 : index
    %c0_160 = arith.constant 0 : index
    %121 = vector.load %arg9[%c0_157, %c0_158, %c0_159, %c0_160] : memref<2x18x18x128xf32, #tpu.memory_space<vmem>>, vector<2x16x16x128xf32>
    %122 = vector.shape_cast %121 : vector<2x16x16x128xf32> to vector<512x128xf32>
    %123 = arith.truncf %122 : vector<512x128xf32> to vector<512x128xbf16>
    %c0_161 = arith.constant 0 : index
    %c0_162 = arith.constant 0 : index
    %c0_163 = arith.constant 0 : index
    %124 = vector.load %arg4[%c0_161, %c0_162, %c0_163] : memref<9x128x128xbf16, #tpu.memory_space<vmem>>, vector<1x128x128xbf16>
    %125 = vector.shape_cast %124 : vector<1x128x128xbf16> to vector<128x128xbf16>
    %cst_164 = arith.constant dense<0.000000e+00> : vector<512x128xf32>
    %126 = tpu.matmul %123, %125, %cst_164 {dimension_numbers = #tpu.dot_dimension_numbers<[1], [0], [0], [1], [0, 0, 1, 1], [], []>} : vector<512x128xbf16>, vector<128x128xbf16>, vector<512x128xf32> -> vector<512x128xf32>
    %c0_165 = arith.constant 0 : index
    %c0_166 = arith.constant 0 : index
    %127 = vector.load %arg10[%c0_165, %c0_166] : memref<512x128xf32, #tpu.memory_space<vmem>>, vector<512x128xf32>
    tpu.vector_store %arg10[%c0_165, %c0_166], %126 {strides = array<i32>} : memref<512x128xf32, #tpu.memory_space<vmem>>, vector<512x128xf32>,
    %c0_167 = arith.constant 0 : index
    %c0_168 = arith.constant 0 : index
    %c1_169 = arith.constant 1 : index
    %c0_170 = arith.constant 0 : index
    %128 = vector.load %arg9[%c0_167, %c0_168, %c1_169, %c0_170] : memref<2x18x18x128xf32, #tpu.memory_space<vmem>>, vector<2x16x16x128xf32>
    %129 = vector.shape_cast %128 : vector<2x16x16x128xf32> to vector<512x128xf32>
    %130 = arith.truncf %129 : vector<512x128xf32> to vector<512x128xbf16>
    %c1_171 = arith.constant 1 : index
    %c0_172 = arith.constant 0 : index
    %c0_173 = arith.constant 0 : index
    %131 = vector.load %arg4[%c1_171, %c0_172, %c0_173] : memref<9x128x128xbf16, #tpu.memory_space<vmem>>, vector<1x128x128xbf16>
    %132 = vector.shape_cast %131 : vector<1x128x128xbf16> to vector<128x128xbf16>
    %cst_174 = arith.constant dense<0.000000e+00> : vector<512x128xf32>
    %133 = tpu.matmul %130, %132, %cst_174 {dimension_numbers = #tpu.dot_dimension_numbers<[1], [0], [0], [1], [0, 0, 1, 1], [], []>} : vector<512x128xbf16>, vector<128x128xbf16>, vector<512x128xf32> -> vector<512x128xf32>
    %c0_175 = arith.constant 0 : index
    %c0_176 = arith.constant 0 : index
    %134 = vector.load %arg10[%c0_175, %c0_176] : memref<512x128xf32, #tpu.memory_space<vmem>>, vector<512x128xf32>
    %135 = arith.addf %134, %133 : vector<512x128xf32>
    %c0_177 = arith.constant 0 : index
    %c0_178 = arith.constant 0 : index
    %136 = vector.load %arg10[%c0_177, %c0_178] : memref<512x128xf32, #tpu.memory_space<vmem>>, vector<512x128xf32>
    tpu.vector_store %arg10[%c0_177, %c0_178], %135 {strides = array<i32>} : memref<512x128xf32, #tpu.memory_space<vmem>>, vector<512x128xf32>,
    %c0_179 = arith.constant 0 : index
    %c0_180 = arith.constant 0 : index
    %c2_181 = arith.constant 2 : index
    %c0_182 = arith.constant 0 : index
    %137 = vector.load %arg9[%c0_179, %c0_180, %c2_181, %c0_182] : memref<2x18x18x128xf32, #tpu.memory_space<vmem>>, vector<2x16x16x128xf32>
    %138 = vector.shape_cast %137 : vector<2x16x16x128xf32> to vector<512x128xf32>
    %139 = arith.truncf %138 : vector<512x128xf32> to vector<512x128xbf16>
    %c2_183 = arith.constant 2 : index
    %c0_184 = arith.constant 0 : index
    %c0_185 = arith.constant 0 : index
    %140 = vector.load %arg4[%c2_183, %c0_184, %c0_185] : memref<9x128x128xbf16, #tpu.memory_space<vmem>>, vector<1x128x128xbf16>
    %141 = vector.shape_cast %140 : vector<1x128x128xbf16> to vector<128x128xbf16>
    %cst_186 = arith.constant dense<0.000000e+00> : vector<512x128xf32>
    %142 = tpu.matmul %139, %141, %cst_186 {dimension_numbers = #tpu.dot_dimension_numbers<[1], [0], [0], [1], [0, 0, 1, 1], [], []>} : vector<512x128xbf16>, vector<128x128xbf16>, vector<512x128xf32> -> vector<512x128xf32>
    %c0_187 = arith.constant 0 : index
    %c0_188 = arith.constant 0 : index
    %143 = vector.load %arg10[%c0_187, %c0_188] : memref<512x128xf32, #tpu.memory_space<vmem>>, vector<512x128xf32>
    %144 = arith.addf %143, %142 : vector<512x128xf32>
    %c0_189 = arith.constant 0 : index
    %c0_190 = arith.constant 0 : index
    %145 = vector.load %arg10[%c0_189, %c0_190] : memref<512x128xf32, #tpu.memory_space<vmem>>, vector<512x128xf32>
    tpu.vector_store %arg10[%c0_189, %c0_190], %144 {strides = array<i32>} : memref<512x128xf32, #tpu.memory_space<vmem>>, vector<512x128xf32>,
    %c0_191 = arith.constant 0 : index
    %c1_192 = arith.constant 1 : index
    %c0_193 = arith.constant 0 : index
    %c0_194 = arith.constant 0 : index
    %146 = vector.load %arg9[%c0_191, %c1_192, %c0_193, %c0_194] : memref<2x18x18x128xf32, #tpu.memory_space<vmem>>, vector<2x16x16x128xf32>
    %147 = vector.shape_cast %146 : vector<2x16x16x128xf32> to vector<512x128xf32>
    %148 = arith.truncf %147 : vector<512x128xf32> to vector<512x128xbf16>
    %c3_195 = arith.constant 3 : index
    %c0_196 = arith.constant 0 : index
    %c0_197 = arith.constant 0 : index
    %149 = vector.load %arg4[%c3_195, %c0_196, %c0_197] : memref<9x128x128xbf16, #tpu.memory_space<vmem>>, vector<1x128x128xbf16>
    %150 = vector.shape_cast %149 : vector<1x128x128xbf16> to vector<128x128xbf16>
    %cst_198 = arith.constant dense<0.000000e+00> : vector<512x128xf32>
    %151 = tpu.matmul %148, %150, %cst_198 {dimension_numbers = #tpu.dot_dimension_numbers<[1], [0], [0], [1], [0, 0, 1, 1], [], []>} : vector<512x128xbf16>, vector<128x128xbf16>, vector<512x128xf32> -> vector<512x128xf32>
    %c0_199 = arith.constant 0 : index
    %c0_200 = arith.constant 0 : index
    %152 = vector.load %arg10[%c0_199, %c0_200] : memref<512x128xf32, #tpu.memory_space<vmem>>, vector<512x128xf32>
    %153 = arith.addf %152, %151 : vector<512x128xf32>
    %c0_201 = arith.constant 0 : index
    %c0_202 = arith.constant 0 : index
    %154 = vector.load %arg10[%c0_201, %c0_202] : memref<512x128xf32, #tpu.memory_space<vmem>>, vector<512x128xf32>
    tpu.vector_store %arg10[%c0_201, %c0_202], %153 {strides = array<i32>} : memref<512x128xf32, #tpu.memory_space<vmem>>, vector<512x128xf32>,
    %c0_203 = arith.constant 0 : index
    %c1_204 = arith.constant 1 : index
    %c1_205 = arith.constant 1 : index
    %c0_206 = arith.constant 0 : index
    %155 = vector.load %arg9[%c0_203, %c1_204, %c1_205, %c0_206] : memref<2x18x18x128xf32, #tpu.memory_space<vmem>>, vector<2x16x16x128xf32>
    %156 = vector.shape_cast %155 : vector<2x16x16x128xf32> to vector<512x128xf32>
    %157 = arith.truncf %156 : vector<512x128xf32> to vector<512x128xbf16>
    %c4_207 = arith.constant 4 : index
    %c0_208 = arith.constant 0 : index
    %c0_209 = arith.constant 0 : index
    %158 = vector.load %arg4[%c4_207, %c0_208, %c0_209] : memref<9x128x128xbf16, #tpu.memory_space<vmem>>, vector<1x128x128xbf16>
    %159 = vector.shape_cast %158 : vector<1x128x128xbf16> to vector<128x128xbf16>
    %cst_210 = arith.constant dense<0.000000e+00> : vector<512x128xf32>
    %160 = tpu.matmul %157, %159, %cst_210 {dimension_numbers = #tpu.dot_dimension_numbers<[1], [0], [0], [1], [0, 0, 1, 1], [], []>} : vector<512x128xbf16>, vector<128x128xbf16>, vector<512x128xf32> -> vector<512x128xf32>
    %c0_211 = arith.constant 0 : index
    %c0_212 = arith.constant 0 : index
    %161 = vector.load %arg10[%c0_211, %c0_212] : memref<512x128xf32, #tpu.memory_space<vmem>>, vector<512x128xf32>
    %162 = arith.addf %161, %160 : vector<512x128xf32>
    %c0_213 = arith.constant 0 : index
    %c0_214 = arith.constant 0 : index
    %163 = vector.load %arg10[%c0_213, %c0_214] : memref<512x128xf32, #tpu.memory_space<vmem>>, vector<512x128xf32>
    tpu.vector_store %arg10[%c0_213, %c0_214], %162 {strides = array<i32>} : memref<512x128xf32, #tpu.memory_space<vmem>>, vector<512x128xf32>,
    %c0_215 = arith.constant 0 : index
    %c1_216 = arith.constant 1 : index
    %c2_217 = arith.constant 2 : index
    %c0_218 = arith.constant 0 : index
    %164 = vector.load %arg9[%c0_215, %c1_216, %c2_217, %c0_218] : memref<2x18x18x128xf32, #tpu.memory_space<vmem>>, vector<2x16x16x128xf32>
    %165 = vector.shape_cast %164 : vector<2x16x16x128xf32> to vector<512x128xf32>
    %166 = arith.truncf %165 : vector<512x128xf32> to vector<512x128xbf16>
    %c5_219 = arith.constant 5 : index
    %c0_220 = arith.constant 0 : index
    %c0_221 = arith.constant 0 : index
    %167 = vector.load %arg4[%c5_219, %c0_220, %c0_221] : memref<9x128x128xbf16, #tpu.memory_space<vmem>>, vector<1x128x128xbf16>
    %168 = vector.shape_cast %167 : vector<1x128x128xbf16> to vector<128x128xbf16>
    %cst_222 = arith.constant dense<0.000000e+00> : vector<512x128xf32>
    %169 = tpu.matmul %166, %168, %cst_222 {dimension_numbers = #tpu.dot_dimension_numbers<[1], [0], [0], [1], [0, 0, 1, 1], [], []>} : vector<512x128xbf16>, vector<128x128xbf16>, vector<512x128xf32> -> vector<512x128xf32>
    %c0_223 = arith.constant 0 : index
    %c0_224 = arith.constant 0 : index
    %170 = vector.load %arg10[%c0_223, %c0_224] : memref<512x128xf32, #tpu.memory_space<vmem>>, vector<512x128xf32>
    %171 = arith.addf %170, %169 : vector<512x128xf32>
    %c0_225 = arith.constant 0 : index
    %c0_226 = arith.constant 0 : index
    %172 = vector.load %arg10[%c0_225, %c0_226] : memref<512x128xf32, #tpu.memory_space<vmem>>, vector<512x128xf32>
    tpu.vector_store %arg10[%c0_225, %c0_226], %171 {strides = array<i32>} : memref<512x128xf32, #tpu.memory_space<vmem>>, vector<512x128xf32>,
    %c0_227 = arith.constant 0 : index
    %c2_228 = arith.constant 2 : index
    %c0_229 = arith.constant 0 : index
    %c0_230 = arith.constant 0 : index
    %173 = vector.load %arg9[%c0_227, %c2_228, %c0_229, %c0_230] : memref<2x18x18x128xf32, #tpu.memory_space<vmem>>, vector<2x16x16x128xf32>
    %174 = vector.shape_cast %173 : vector<2x16x16x128xf32> to vector<512x128xf32>
    %175 = arith.truncf %174 : vector<512x128xf32> to vector<512x128xbf16>
    %c6_231 = arith.constant 6 : index
    %c0_232 = arith.constant 0 : index
    %c0_233 = arith.constant 0 : index
    %176 = vector.load %arg4[%c6_231, %c0_232, %c0_233] : memref<9x128x128xbf16, #tpu.memory_space<vmem>>, vector<1x128x128xbf16>
    %177 = vector.shape_cast %176 : vector<1x128x128xbf16> to vector<128x128xbf16>
    %cst_234 = arith.constant dense<0.000000e+00> : vector<512x128xf32>
    %178 = tpu.matmul %175, %177, %cst_234 {dimension_numbers = #tpu.dot_dimension_numbers<[1], [0], [0], [1], [0, 0, 1, 1], [], []>} : vector<512x128xbf16>, vector<128x128xbf16>, vector<512x128xf32> -> vector<512x128xf32>
    %c0_235 = arith.constant 0 : index
    %c0_236 = arith.constant 0 : index
    %179 = vector.load %arg10[%c0_235, %c0_236] : memref<512x128xf32, #tpu.memory_space<vmem>>, vector<512x128xf32>
    %180 = arith.addf %179, %178 : vector<512x128xf32>
    %c0_237 = arith.constant 0 : index
    %c0_238 = arith.constant 0 : index
    %181 = vector.load %arg10[%c0_237, %c0_238] : memref<512x128xf32, #tpu.memory_space<vmem>>, vector<512x128xf32>
    tpu.vector_store %arg10[%c0_237, %c0_238], %180 {strides = array<i32>} : memref<512x128xf32, #tpu.memory_space<vmem>>, vector<512x128xf32>,
    %c0_239 = arith.constant 0 : index
    %c2_240 = arith.constant 2 : index
    %c1_241 = arith.constant 1 : index
    %c0_242 = arith.constant 0 : index
    %182 = vector.load %arg9[%c0_239, %c2_240, %c1_241, %c0_242] : memref<2x18x18x128xf32, #tpu.memory_space<vmem>>, vector<2x16x16x128xf32>
    %183 = vector.shape_cast %182 : vector<2x16x16x128xf32> to vector<512x128xf32>
    %184 = arith.truncf %183 : vector<512x128xf32> to vector<512x128xbf16>
    %c7_243 = arith.constant 7 : index
    %c0_244 = arith.constant 0 : index
    %c0_245 = arith.constant 0 : index
    %185 = vector.load %arg4[%c7_243, %c0_244, %c0_245] : memref<9x128x128xbf16, #tpu.memory_space<vmem>>, vector<1x128x128xbf16>
    %186 = vector.shape_cast %185 : vector<1x128x128xbf16> to vector<128x128xbf16>
    %cst_246 = arith.constant dense<0.000000e+00> : vector<512x128xf32>
    %187 = tpu.matmul %184, %186, %cst_246 {dimension_numbers = #tpu.dot_dimension_numbers<[1], [0], [0], [1], [0, 0, 1, 1], [], []>} : vector<512x128xbf16>, vector<128x128xbf16>, vector<512x128xf32> -> vector<512x128xf32>
    %c0_247 = arith.constant 0 : index
    %c0_248 = arith.constant 0 : index
    %188 = vector.load %arg10[%c0_247, %c0_248] : memref<512x128xf32, #tpu.memory_space<vmem>>, vector<512x128xf32>
    %189 = arith.addf %188, %187 : vector<512x128xf32>
    %c0_249 = arith.constant 0 : index
    %c0_250 = arith.constant 0 : index
    %190 = vector.load %arg10[%c0_249, %c0_250] : memref<512x128xf32, #tpu.memory_space<vmem>>, vector<512x128xf32>
    tpu.vector_store %arg10[%c0_249, %c0_250], %189 {strides = array<i32>} : memref<512x128xf32, #tpu.memory_space<vmem>>, vector<512x128xf32>,
    %c0_251 = arith.constant 0 : index
    %c2_252 = arith.constant 2 : index
    %c2_253 = arith.constant 2 : index
    %c0_254 = arith.constant 0 : index
    %191 = vector.load %arg9[%c0_251, %c2_252, %c2_253, %c0_254] : memref<2x18x18x128xf32, #tpu.memory_space<vmem>>, vector<2x16x16x128xf32>
    %192 = vector.shape_cast %191 : vector<2x16x16x128xf32> to vector<512x128xf32>
    %193 = arith.truncf %192 : vector<512x128xf32> to vector<512x128xbf16>
    %c8_255 = arith.constant 8 : index
    %c0_256 = arith.constant 0 : index
    %c0_257 = arith.constant 0 : index
    %194 = vector.load %arg4[%c8_255, %c0_256, %c0_257] : memref<9x128x128xbf16, #tpu.memory_space<vmem>>, vector<1x128x128xbf16>
    %195 = vector.shape_cast %194 : vector<1x128x128xbf16> to vector<128x128xbf16>
    %cst_258 = arith.constant dense<0.000000e+00> : vector<512x128xf32>
    %196 = tpu.matmul %193, %195, %cst_258 {dimension_numbers = #tpu.dot_dimension_numbers<[1], [0], [0], [1], [0, 0, 1, 1], [], []>} : vector<512x128xbf16>, vector<128x128xbf16>, vector<512x128xf32> -> vector<512x128xf32>
    %c0_259 = arith.constant 0 : index
    %c0_260 = arith.constant 0 : index
    %197 = vector.load %arg10[%c0_259, %c0_260] : memref<512x128xf32, #tpu.memory_space<vmem>>, vector<512x128xf32>
    %198 = arith.addf %197, %196 : vector<512x128xf32>
    %c0_261 = arith.constant 0 : index
    %c0_262 = arith.constant 0 : index
    %199 = vector.load %arg10[%c0_261, %c0_262] : memref<512x128xf32, #tpu.memory_space<vmem>>, vector<512x128xf32>
    tpu.vector_store %arg10[%c0_261, %c0_262], %198 {strides = array<i32>} : memref<512x128xf32, #tpu.memory_space<vmem>>, vector<512x128xf32>,
    %c0_263 = arith.constant 0 : index
    %c0_264 = arith.constant 0 : index
    %200 = vector.load %arg10[%c0_263, %c0_264] : memref<512x128xf32, #tpu.memory_space<vmem>>, vector<512x128xf32>
    %cst_265 = arith.constant dense<0.000000e+00> : vector<128xf32>
    %201 = vector.multi_reduction <add>, %200, %cst_265 [0] : vector<512x128xf32> to vector<128xf32>
    %202 = vector.shape_cast %201 : vector<128xf32> to vector<1x128xf32>
    %cst_266 = arith.constant 5.120000e+02 : f32
    %203 = vector.broadcast %cst_266 : f32 to vector<1x128xf32>
    %204 = arith.divf %202, %203 : vector<1x128xf32>
    %c0_267 = arith.constant 0 : index
    %c0_268 = arith.constant 0 : index
    %205 = vector.load %arg10[%c0_267, %c0_268] : memref<512x128xf32, #tpu.memory_space<vmem>>, vector<512x128xf32>
    %206 = vector.broadcast %204 : vector<1x128xf32> to vector<512x128xf32>
    %207 = arith.subf %205, %206 : vector<512x128xf32>
    %208 = arith.mulf %207, %207 : vector<512x128xf32>
    %cst_269 = arith.constant dense<0.000000e+00> : vector<128xf32>
    %209 = vector.multi_reduction <add>, %208, %cst_269 [0] : vector<512x128xf32> to vector<128xf32>
    %210 = vector.shape_cast %209 : vector<128xf32> to vector<1x128xf32>
    %cst_270 = arith.constant 5.120000e+02 : f32
    %211 = vector.broadcast %cst_270 : f32 to vector<1x128xf32>
    %212 = arith.divf %210, %211 : vector<1x128xf32>
    %c0_271 = arith.constant 0 : index
    %c0_272 = arith.constant 0 : index
    %213 = vector.load %arg5[%c0_271, %c0_272] : memref<1x128xf32, #tpu.memory_space<vmem>>, vector<1x128xf32>
    %cst_273 = arith.constant 9.99999974E-6 : f32
    %214 = vector.broadcast %cst_273 : f32 to vector<1x128xf32>
    %215 = arith.addf %212, %214 : vector<1x128xf32>
    %216 = math.rsqrt %215 : vector<1x128xf32>
    %217 = arith.mulf %213, %216 : vector<1x128xf32>
    %c0_274 = arith.constant 0 : index
    %c0_275 = arith.constant 0 : index
    %218 = vector.load %arg6[%c0_274, %c0_275] : memref<1x128xf32, #tpu.memory_space<vmem>>, vector<1x128xf32>
    %219 = arith.mulf %204, %217 : vector<1x128xf32>
    %220 = arith.subf %218, %219 : vector<1x128xf32>
    %c0_276 = arith.constant 0 : index
    %c0_277 = arith.constant 0 : index
    %221 = vector.load %arg10[%c0_276, %c0_277] : memref<512x128xf32, #tpu.memory_space<vmem>>, vector<512x128xf32>
    %222 = vector.broadcast %217 : vector<1x128xf32> to vector<512x128xf32>
    %223 = arith.mulf %221, %222 : vector<512x128xf32>
    %224 = vector.broadcast %220 : vector<1x128xf32> to vector<512x128xf32>
    %225 = arith.addf %223, %224 : vector<512x128xf32>
    %c0_278 = arith.constant 0 : index
    %c0_279 = arith.constant 0 : index
    %c0_280 = arith.constant 0 : index
    %c0_281 = arith.constant 0 : index
    %226 = vector.load %arg0[%c0_278, %c0_279, %c0_280, %c0_281] : memref<2x16x16x128xf32, #tpu.memory_space<vmem>>, vector<2x16x16x128xf32>
    %227 = vector.shape_cast %226 : vector<2x16x16x128xf32> to vector<512x128xf32>
    %228 = arith.addf %225, %227 : vector<512x128xf32>
    %cst_282 = arith.constant 0.000000e+00 : f32
    %229 = vector.broadcast %cst_282 : f32 to vector<512x128xf32>
    %230 = arith.maximumf %228, %229 : vector<512x128xf32>
    %231 = vector.shape_cast %230 : vector<512x128xf32> to vector<2x16x16x128xf32>
    %c0_283 = arith.constant 0 : index
    %c0_284 = arith.constant 0 : index
    %c0_285 = arith.constant 0 : index
    %c0_286 = arith.constant 0 : index
    %232 = vector.load %arg7[%c0_283, %c0_284, %c0_285, %c0_286] : memref<2x16x16x128xf32, #tpu.memory_space<vmem>>, vector<2x16x16x128xf32>
    tpu.vector_store %arg7[%c0_283, %c0_284, %c0_285, %c0_286], %231 {strides = array<i32>} : memref<2x16x16x128xf32, #tpu.memory_space<vmem>>, vector<2x16x16x128xf32>,
    return
  }
}

</mosaic_0001>

<llo_original>
// kernel: basic_block_forward.1
$region0: #{basic_block_forward.1}
  #allocation0 [shape = 'u32[]', space=smem, size = 0x4, offset = 0x4, fixed_abs, tag = 'smem constant byte address 0x4 - core index']
  #allocation1 [shape = 'u32[72,128]{1,0:T(1,128)}', space=vmem, size = 0x9000, scoped, tag = 'internal scratch']
  #allocation2 [shape = 'f32[2,18,18,128]{3,2,1,0:T(8,128)}', space=vmem, size = 0x6c000, scoped, tag = 'scratch operand']
  #allocation3 [shape = 'f32[2,18,18,128]{3,2,1,0:T(8,128)}', space=vmem, size = 0x6c000, scoped, tag = 'scratch operand']
  #allocation4 [shape = 'f32[512,128]{1,0:T(8,128)}', space=vmem, size = 0x40000, scoped, tag = 'scratch operand']
  %s0 = inlined_call_operand.vmem [shape: f32[2,16,16,128], index: 0, kind: input, shape index: {}]
  %s1 = inlined_call_operand.vmem [shape: bf16[9,128,128], index: 1, kind: input, shape index: {}]
  %s2 = inlined_call_operand.vmem [shape: f32[1,128], index: 2, kind: input, shape index: {}]
  %s3 = inlined_call_operand.vmem [shape: f32[1,128], index: 3, kind: input, shape index: {}]
  %s4 = inlined_call_operand.vmem [shape: bf16[9,128,128], index: 4, kind: input, shape index: {}]
  %s5 = inlined_call_operand.vmem [shape: f32[1,128], index: 5, kind: input, shape index: {}]
  %s6 = inlined_call_operand.vmem [shape: f32[1,128], index: 6, kind: input, shape index: {}]
  %s7 = inlined_call_operand.vmem [shape: f32[2,16,16,128], index: 7, kind: output, shape index: {}]
  %s8 = sld [smem:[#allocation0]]
  $region38: #{basic_block_forward.1} parent=0
    _
  %s10 = ssub.s32 1, %s8
  %s11 = scalar_select 0, %s10, %s8
  // Predicated region
  $region2: #{basic_block_forward.1} parent=0 // pred_check
    _
  $region3: #{basic_block_forward.1} parent=0 // pred_check_branch
    %13 = sbr.rel (0) target = $region5
  $region4: #{basic_block_forward.1} parent=0 // pred_region
    _
  $region5: #{basic_block_forward.1} parent=0 // pred_fallthru
    _
  // Predicated region
  $region6: #{basic_block_forward.1} parent=0 // pred_check
    _
  $region7: #{basic_block_forward.1} parent=0 // pred_check_branch
    %15 = sbr.rel (0) target = $region9
  $region8: #{basic_block_forward.1} parent=0 // pred_region
    _
  $region9: #{basic_block_forward.1} parent=0 // pred_fallthru
    _
  // Predicated region
  $region10: #{basic_block_forward.1} parent=0 // pred_check
    _
  $region11: #{basic_block_forward.1} parent=0 // pred_check_branch
    %17 = sbr.rel (0) target = $region13
  $region12: #{basic_block_forward.1} parent=0 // pred_region
    _
  $region13: #{basic_block_forward.1} parent=0 // pred_fallthru
    _
  // Predicated region
  $region14: #{basic_block_forward.1} parent=0 // pred_check
    _
  $region15: #{basic_block_forward.1} parent=0 // pred_check_branch
    %19 = sbr.rel (0) target = $region17
  $region16: #{basic_block_forward.1} parent=0 // pred_region
    _
  $region17: #{basic_block_forward.1} parent=0 // pred_fallthru
    _
  // Predicated region
  $region18: #{basic_block_forward.1} parent=0 // pred_check
    _
  $region19: #{basic_block_forward.1} parent=0 // pred_check_branch
    %21 = sbr.rel (0) target = $region21
  $region20: #{basic_block_forward.1} parent=0 // pred_region
    _
  $region21: #{basic_block_forward.1} parent=0 // pred_fallthru
    _
  // Predicated region
  $region22: #{basic_block_forward.1} parent=0 // pred_check
    _
  $region23: #{basic_block_forward.1} parent=0 // pred_check_branch
    %23 = sbr.rel (0) target = $region25
  $region24: #{basic_block_forward.1} parent=0 // pred_region
    _
  $region25: #{basic_block_forward.1} parent=0 // pred_fallthru
    _
  // Predicated region
  $region26: #{basic_block_forward.1} parent=0 // pred_check
    _
  $region27: #{basic_block_forward.1} parent=0 // pred_check_branch
    %25 = sbr.rel (0) target = $region29
  $region28: #{basic_block_forward.1} parent=0 // pred_region
    _
  $region29: #{basic_block_forward.1} parent=0 // pred_fallthru
    _
  %26 = vst [vmem:[#allocation2] sm:$0xff] 0.0
  %27 = vst [vmem:[#allocation2 + $0x8] sm:$0xff] 0.0
  %28 = vst [vmem:[#allocation2 + $0x10] sm:$0x3] 0.0
  %29 = vst [vmem:[#allocation2 + $0x1b0] sm:$0xff] 0.0
  %30 = vst [vmem:[#allocation2 + $0x1b8] sm:$0xff] 0.0
  %31 = vst [vmem:[#allocation2 + $0x1c0] sm:$0x3] 0.0
  %s32 = scalar_lea.vmem [#allocation2], 408
  %33 = vst [vmem:[%s32] sm:$0xff] 0.0
  %34 = vst [vmem:[%s32 + $0x8] sm:$0xff] 0.0
  %35 = vst [vmem:[%s32 + $0x10] sm:$0x3] 0.0
  %36 = vst [vmem:[%s32 + $0x1b0] sm:$0xff] 0.0
  %37 = vst [vmem:[%s32 + $0x1b8] sm:$0xff] 0.0
  %38 = vst [vmem:[%s32 + $0x1c0] sm:$0x3] 0.0
  %39 = vst [vmem:[#allocation2] sm:$0x1] 0.0
  %40 = vst [vmem:[#allocation2 + $0x18] sm:$0x1] 0.0
  %41 = vst [vmem:[#allocation2 + $0x30] sm:$0x1] 0.0
  %42 = vst [vmem:[#allocation2 + $0x48] sm:$0x1] 0.0
  %43 = vst [vmem:[#allocation2 + $0x60] sm:$0x1] 0.0
  %44 = vst [vmem:[#allocation2 + $0x78] sm:$0x1] 0.0
  %45 = vst [vmem:[#allocation2 + $0x90] sm:$0x1] 0.0
  %46 = vst [vmem:[#allocation2 + $0xa8] sm:$0x1] 0.0
  %47 = vst [vmem:[#allocation2 + $0xc0] sm:$0x1] 0.0
  %48 = vst [vmem:[#allocation2 + $0xd8] sm:$0x1] 0.0
  %49 = vst [vmem:[#allocation2 + $0xf0] sm:$0x1] 0.0
  %50 = vst [vmem:[#allocation2 + $0x108] sm:$0x1] 0.0
  %51 = vst [vmem:[#allocation2 + $0x120] sm:$0x1] 0.0
  %52 = vst [vmem:[#allocation2 + $0x138] sm:$0x1] 0.0
  %53 = vst [vmem:[#allocation2 + $0x150] sm:$0x1] 0.0
  %54 = vst [vmem:[#allocation2 + $0x168] sm:$0x1] 0.0
  %55 = vst [vmem:[#allocation2 + $0x180] sm:$0x1] 0.0
  %56 = vst [vmem:[#allocation2 + $0x198] sm:$0x1] 0.0
  %57 = vst [vmem:[#allocation2 + $0x1b0] sm:$0x1] 0.0
  %58 = vst [vmem:[#allocation2 + $0x1c8] sm:$0x1] 0.0
  %59 = vst [vmem:[#allocation2 + $0x1e0] sm:$0x1] 0.0
  %60 = vst [vmem:[#allocation2 + $0x1f8] sm:$0x1] 0.0
  %61 = vst [vmem:[#allocation2 + $0x210] sm:$0x1] 0.0
  %62 = vst [vmem:[#allocation2 + $0x228] sm:$0x1] 0.0
  %63 = vst [vmem:[#allocation2 + $0x240] sm:$0x1] 0.0
  %64 = vst [vmem:[#allocation2 + $0x258] sm:$0x1] 0.0
  %65 = vst [vmem:[#allocation2 + $0x270] sm:$0x1] 0.0
  %66 = vst [vmem:[#allocation2 + $0x288] sm:$0x1] 0.0
  %67 = vst [vmem:[#allocation2 + $0x2a0] sm:$0x1] 0.0
  %68 = vst [vmem:[#allocation2 + $0x2b8] sm:$0x1] 0.0
  %69 = vst [vmem:[#allocation2 + $0x2d0] sm:$0x1] 0.0
  %70 = vst [vmem:[#allocation2 + $0x2e8] sm:$0x1] 0.0
  %71 = vst [vmem:[#allocation2 + $0x300] sm:$0x1] 0.0
  %72 = vst [vmem:[#allocation2 + $0x318] sm:$0x1] 0.0
  %73 = vst [vmem:[#allocation2 + $0x330] sm:$0x1] 0.0
  %74 = vst [vmem:[#allocation2 + $0x348] sm:$0x1] 0.0
  %75 = vst [vmem:[#allocation2 + $0x11] sm:$0x1] 0.0
  %76 = vst [vmem:[#allocation2 + $0x29] sm:$0x1] 0.0
  %77 = vst [vmem:[#allocation2 + $0x41] sm:$0x1] 0.0
  %78 = vst [vmem:[#allocation2 + $0x59] sm:$0x1] 0.0
  %79 = vst [vmem:[#allocation2 + $0x71] sm:$0x1] 0.0
  %80 = vst [vmem:[#allocation2 + $0x89] sm:$0x1] 0.0
  %81 = vst [vmem:[#allocation2 + $0xa1] sm:$0x1] 0.0
  %82 = vst [vmem:[#allocation2 + $0xb9] sm:$0x1] 0.0
  %83 = vst [vmem:[#allocation2 + $0xd1] sm:$0x1] 0.0
  %84 = vst [vmem:[#allocation2 + $0xe9] sm:$0x1] 0.0
  %85 = vst [vmem:[#allocation2 + $0x101] sm:$0x1] 0.0
  %86 = vst [vmem:[#allocation2 + $0x119] sm:$0x1] 0.0
  %87 = vst [vmem:[#allocation2 + $0x131] sm:$0x1] 0.0
  %88 = vst [vmem:[#allocation2 + $0x149] sm:$0x1] 0.0
  %89 = vst [vmem:[#allocation2 + $0x161] sm:$0x1] 0.0
  %90 = vst [vmem:[#allocation2 + $0x179] sm:$0x1] 0.0
  %91 = vst [vmem:[#allocation2 + $0x191] sm:$0x1] 0.0
  %92 = vst [vmem:[#allocation2 + $0x1a9] sm:$0x1] 0.0
  %93 = vst [vmem:[#allocation2 + $0x1c1] sm:$0x1] 0.0
  %94 = vst [vmem:[#allocation2 + $0x1d9] sm:$0x1] 0.0
  %95 = vst [vmem:[#allocation2 + $0x1f1] sm:$0x1] 0.0
  %96 = vst [vmem:[#allocation2 + $0x209] sm:$0x1] 0.0
  %97 = vst [vmem:[#allocation2 + $0x221] sm:$0x1] 0.0
  %98 = vst [vmem:[#allocation2 + $0x239] sm:$0x1] 0.0
  %99 = vst [vmem:[#allocation2 + $0x251] sm:$0x1] 0.0
  %100 = vst [vmem:[#allocation2 + $0x269] sm:$0x1] 0.0
  %101 = vst [vmem:[#allocation2 + $0x281] sm:$0x1] 0.0
  %102 = vst [vmem:[#allocation2 + $0x299] sm:$0x1] 0.0
  %103 = vst [vmem:[#allocation2 + $0x2b1] sm:$0x1] 0.0
  %104 = vst [vmem:[#allocation2 + $0x2c9] sm:$0x1] 0.0
  %105 = vst [vmem:[#allocation2 + $0x2e1] sm:$0x1] 0.0
  %106 = vst [vmem:[#allocation2 + $0x2f9] sm:$0x1] 0.0
  %107 = vst [vmem:[#allocation2 + $0x311] sm:$0x1] 0.0
  %108 = vst [vmem:[#allocation2 + $0x329] sm:$0x1] 0.0
  %109 = vst [vmem:[#allocation2 + $0x341] sm:$0x1] 0.0
  %110 = vst [vmem:[#allocation2 + $0x359] sm:$0x1] 0.0
  %111 = vst [vmem:[#allocation3] sm:$0xff] 0.0
  %112 = vst [vmem:[#allocation3 + $0x8] sm:$0xff] 0.0
  %113 = vst [vmem:[#allocation3 + $0x10] sm:$0x3] 0.0
  %114 = vst [vmem:[#allocation3 + $0x1b0] sm:$0xff] 0.0
  %115 = vst [vmem:[#allocation3 + $0x1b8] sm:$0xff] 0.0
  %116 = vst [vmem:[#allocation3 + $0x1c0] sm:$0x3] 0.0
  %s117 = scalar_lea.vmem [#allocation3], 408
  %118 = vst [vmem:[%s117] sm:$0xff] 0.0
  %119 = vst [vmem:[%s117 + $0x8] sm:$0xff] 0.0
  %120 = vst [vmem:[%s117 + $0x10] sm:$0x3] 0.0
  %121 = vst [vmem:[%s117 + $0x1b0] sm:$0xff] 0.0
  %122 = vst [vmem:[%s117 + $0x1b8] sm:$0xff] 0.0
  %123 = vst [vmem:[%s117 + $0x1c0] sm:$0x3] 0.0
  %124 = vst [vmem:[#allocation3] sm:$0x1] 0.0
  %125 = vst [vmem:[#allocation3 + $0x18] sm:$0x1] 0.0
  %126 = vst [vmem:[#allocation3 + $0x30] sm:$0x1] 0.0
  %127 = vst [vmem:[#allocation3 + $0x48] sm:$0x1] 0.0
  %128 = vst [vmem:[#allocation3 + $0x60] sm:$0x1] 0.0
  %129 = vst [vmem:[#allocation3 + $0x78] sm:$0x1] 0.0
  %130 = vst [vmem:[#allocation3 + $0x90] sm:$0x1] 0.0
  %131 = vst [vmem:[#allocation3 + $0xa8] sm:$0x1] 0.0
  %132 = vst [vmem:[#allocation3 + $0xc0] sm:$0x1] 0.0
  %133 = vst [vmem:[#allocation3 + $0xd8] sm:$0x1] 0.0
  %134 = vst [vmem:[#allocation3 + $0xf0] sm:$0x1] 0.0
  %135 = vst [vmem:[#allocation3 + $0x108] sm:$0x1] 0.0
  %136 = vst [vmem:[#allocation3 + $0x120] sm:$0x1] 0.0
  %137 = vst [vmem:[#allocation3 + $0x138] sm:$0x1] 0.0
  %138 = vst [vmem:[#allocation3 + $0x150] sm:$0x1] 0.0
  %139 = vst [vmem:[#allocation3 + $0x168] sm:$0x1] 0.0
  %140 = vst [vmem:[#allocation3 + $0x180] sm:$0x1] 0.0
  %141 = vst [vmem:[#allocation3 + $0x198] sm:$0x1] 0.0
  %142 = vst [vmem:[#allocation3 + $0x1b0] sm:$0x1] 0.0
  %143 = vst [vmem:[#allocation3 + $0x1c8] sm:$0x1] 0.0
  %144 = vst [vmem:[#allocation3 + $0x1e0] sm:$0x1] 0.0
  %145 = vst [vmem:[#allocation3 + $0x1f8] sm:$0x1] 0.0
  %146 = vst [vmem:[#allocation3 + $0x210] sm:$0x1] 0.0
  %147 = vst [vmem:[#allocation3 + $0x228] sm:$0x1] 0.0
  %148 = vst [vmem:[#allocation3 + $0x240] sm:$0x1] 0.0
  %149 = vst [vmem:[#allocation3 + $0x258] sm:$0x1] 0.0
  %150 = vst [vmem:[#allocation3 + $0x270] sm:$0x1] 0.0
  %151 = vst [vmem:[#allocation3 + $0x288] sm:$0x1] 0.0
  %152 = vst [vmem:[#allocation3 + $0x2a0] sm:$0x1] 0.0
  %153 = vst [vmem:[#allocation3 + $0x2b8] sm:$0x1] 0.0
  %154 = vst [vmem:[#allocation3 + $0x2d0] sm:$0x1] 0.0
  %155 = vst [vmem:[#allocation3 + $0x2e8] sm:$0x1] 0.0
  %156 = vst [vmem:[#allocation3 + $0x300] sm:$0x1] 0.0
  %157 = vst [vmem:[#allocation3 + $0x318] sm:$0x1] 0.0
  %158 = vst [vmem:[#allocation3 + $0x330] sm:$0x1] 0.0
  %159 = vst [vmem:[#allocation3 + $0x348] sm:$0x1] 0.0
  %160 = vst [vmem:[#allocation3 + $0x11] sm:$0x1] 0.0
  %161 = vst [vmem:[#allocation3 + $0x29] sm:$0x1] 0.0
  %162 = vst [vmem:[#allocation3 + $0x41] sm:$0x1] 0.0
  %163 = vst [vmem:[#allocation3 + $0x59] sm:$0x1] 0.0
  %164 = vst [vmem:[#allocation3 + $0x71] sm:$0x1] 0.0
  %165 = vst [vmem:[#allocation3 + $0x89] sm:$0x1] 0.0
  %166 = vst [vmem:[#allocation3 + $0xa1] sm:$0x1] 0.0
  %167 = vst [vmem:[#allocation3 + $0xb9] sm:$0x1] 0.0
  %168 = vst [vmem:[#allocation3 + $0xd1] sm:$0x1] 0.0
  %169 = vst [vmem:[#allocation3 + $0xe9] sm:$0x1] 0.0
  %170 = vst [vmem:[#allocation3 + $0x101] sm:$0x1] 0.0
  %171 = vst [vmem:[#allocation3 + $0x119] sm:$0x1] 0.0
  %172 = vst [vmem:[#allocation3 + $0x131] sm:$0x1] 0.0
  %173 = vst [vmem:[#allocation3 + $0x149] sm:$0x1] 0.0
  %174 = vst [vmem:[#allocation3 + $0x161] sm:$0x1] 0.0
  %175 = vst [vmem:[#allocation3 + $0x179] sm:$0x1] 0.0
  %176 = vst [vmem:[#allocation3 + $0x191] sm:$0x1] 0.0
  %177 = vst [vmem:[#allocation3 + $0x1a9] sm:$0x1] 0.0
  %178 = vst [vmem:[#allocation3 + $0x1c1] sm:$0x1] 0.0
  %179 = vst [vmem:[#allocation3 + $0x1d9] sm:$0x1] 0.0
  %180 = vst [vmem:[#allocation3 + $0x1f1] sm:$0x1] 0.0
  %181 = vst [vmem:[#allocation3 + $0x209] sm:$0x1] 0.0
  %182 = vst [vmem:[#allocation3 + $0x221] sm:$0x1] 0.0
  %183 = vst [vmem:[#allocation3 + $0x239] sm:$0x1] 0.0
  %184 = vst [vmem:[#allocation3 + $0x251] sm:$0x1] 0.0
  %185 = vst [vmem:[#allocation3 + $0x269] sm:$0x1] 0.0
  %186 = vst [vmem:[#allocation3 + $0x281] sm:$0x1] 0.0
  %187 = vst [vmem:[#allocation3 + $0x299] sm:$0x1] 0.0
  %188 = vst [vmem:[#allocation3 + $0x2b1] sm:$0x1] 0.0
  %189 = vst [vmem:[#allocation3 + $0x2c9] sm:$0x1] 0.0
  %190 = vst [vmem:[#allocation3 + $0x2e1] sm:$0x1] 0.0
  %191 = vst [vmem:[#allocation3 + $0x2f9] sm:$0x1] 0.0
  %192 = vst [vmem:[#allocation3 + $0x311] sm:$0x1] 0.0
  %193 = vst [vmem:[#allocation3 + $0x329] sm:$0x1] 0.0
  %194 = vst [vmem:[#allocation3 + $0x341] sm:$0x1] 0.0
  %195 = vst [vmem:[#allocation3 + $0x359] sm:$0x1] 0.0
  %v196 = vld [vmem:[%s0] sm:$0xff]
  %v197 = vld [vmem:[%s0 + $0x8] sm:$0xff]
  %v198 = vld [vmem:[%s0 + $0x10] sm:$0xff]
  %v199 = vld [vmem:[%s0 + $0x18] sm:$0xff]
  %v200 = vld [vmem:[%s0 + $0x20] sm:$0xff]
  %v201 = vld [vmem:[%s0 + $0x28] sm:$0xff]
  %v202 = vld [vmem:[%s0 + $0x30] sm:$0xff]
  %v203 = vld [vmem:[%s0 + $0x38] sm:$0xff]
  %v204 = vld [vmem:[%s0 + $0x40] sm:$0xff]
  %v205 = vld [vmem:[%s0 + $0x48] sm:$0xff]
  %v206 = vld [vmem:[%s0 + $0x50] sm:$0xff]
  %v207 = vld [vmem:[%s0 + $0x58] sm:$0xff]
  %v208 = vld [vmem:[%s0 + $0x60] sm:$0xff]
  %v209 = vld [vmem:[%s0 + $0x68] sm:$0xff]
  %v210 = vld [vmem:[%s0 + $0x70] sm:$0xff]
  %v211 = vld [vmem:[%s0 + $0x78] sm:$0xff]
  %v212 = vld [vmem:[%s0 + $0x80] sm:$0xff]
  %v213 = vld [vmem:[%s0 + $0x88] sm:$0xff]
  %v214 = vld [vmem:[%s0 + $0x90] sm:$0xff]
  %v215 = vld [vmem:[%s0 + $0x98] sm:$0xff]
  %v216 = vld [vmem:[%s0 + $0xa0] sm:$0xff]
  %v217 = vld [vmem:[%s0 + $0xa8] sm:$0xff]
  %v218 = vld [vmem:[%s0 + $0xb0] sm:$0xff]
  %v219 = vld [vmem:[%s0 + $0xb8] sm:$0xff]
  %v220 = vld [vmem:[%s0 + $0xc0] sm:$0xff]
  %v221 = vld [vmem:[%s0 + $0xc8] sm:$0xff]
  %v222 = vld [vmem:[%s0 + $0xd0] sm:$0xff]
  %v223 = vld [vmem:[%s0 + $0xd8] sm:$0xff]
  %v224 = vld [vmem:[%s0 + $0xe0] sm:$0xff]
  %v225 = vld [vmem:[%s0 + $0xe8] sm:$0xff]
  %v226 = vld [vmem:[%s0 + $0xf0] sm:$0xff]
  %v227 = vld [vmem:[%s0 + $0xf8] sm:$0xff]
  %v228 = vld [vmem:[%s0 + $0x100] sm:$0xff]
  %v229 = vld [vmem:[%s0 + $0x108] sm:$0xff]
  %v230 = vld [vmem:[%s0 + $0x110] sm:$0xff]
  %v231 = vld [vmem:[%s0 + $0x118] sm:$0xff]
  %v232 = vld [vmem:[%s0 + $0x120] sm:$0xff]
  %v233 = vld [vmem:[%s0 + $0x128] sm:$0xff]
  %v234 = vld [vmem:[%s0 + $0x130] sm:$0xff]
  %v235 = vld [vmem:[%s0 + $0x138] sm:$0xff]
  %v236 = vld [vmem:[%s0 + $0x140] sm:$0xff]
  %v237 = vld [vmem:[%s0 + $0x148] sm:$0xff]
  %v238 = vld [vmem:[%s0 + $0x150] sm:$0xff]
  %v239 = vld [vmem:[%s0 + $0x158] sm:$0xff]
  %v240 = vld [vmem:[%s0 + $0x160] sm:$0xff]
  %v241 = vld [vmem:[%s0 + $0x168] sm:$0xff]
  %v242 = vld [vmem:[%s0 + $0x170] sm:$0xff]
  %v243 = vld [vmem:[%s0 + $0x178] sm:$0xff]
  %v244 = vld [vmem:[%s0 + $0x180] sm:$0xff]
  %v245 = vld [vmem:[%s0 + $0x188] sm:$0xff]
  %v246 = vld [vmem:[%s0 + $0x190] sm:$0xff]
  %v247 = vld [vmem:[%s0 + $0x198] sm:$0xff]
  %v248 = vld [vmem:[%s0 + $0x1a0] sm:$0xff]
  %v249 = vld [vmem:[%s0 + $0x1a8] sm:$0xff]
  %v250 = vld [vmem:[%s0 + $0x1b0] sm:$0xff]
  %v251 = vld [vmem:[%s0 + $0x1b8] sm:$0xff]
  %v252 = vld [vmem:[%s0 + $0x1c0] sm:$0xff]
  %v253 = vld [vmem:[%s0 + $0x1c8] sm:$0xff]
  %v254 = vld [vmem:[%s0 + $0x1d0] sm:$0xff]
  %v255 = vld [vmem:[%s0 + $0x1d8] sm:$0xff]
  %v256 = vld [vmem:[%s0 + $0x1e0] sm:$0xff]
  %v257 = vld [vmem:[%s0 + $0x1e8] sm:$0xff]
  %v258 = vld [vmem:[%s0 + $0x1f0] sm:$0xff]
  %v259 = vld [vmem:[%s0 + $0x1f8] sm:$0xff]
  %s260 = scalar_lea.vmem [#allocation2], 24
  %261 = vst [vmem:[%s260 + $0x1] sm:$0xff] %v196
  %262 = vst [vmem:[%s260 + $0x9] sm:$0xff] %v197
  %263 = vst [vmem:[%s260 + $0x19] sm:$0xff] %v198
  %264 = vst [vmem:[%s260 + $0x21] sm:$0xff] %v199
  %265 = vst [vmem:[%s260 + $0x31] sm:$0xff] %v200
  %266 = vst [vmem:[%s260 + $0x39] sm:$0xff] %v201
  %267 = vst [vmem:[%s260 + $0x49] sm:$0xff] %v202
  %268 = vst [vmem:[%s260 + $0x51] sm:$0xff] %v203
  %269 = vst [vmem:[%s260 + $0x61] sm:$0xff] %v204
  %270 = vst [vmem:[%s260 + $0x69] sm:$0xff] %v205
  %271 = vst [vmem:[%s260 + $0x79] sm:$0xff] %v206
  %272 = vst [vmem:[%s260 + $0x81] sm:$0xff] %v207
  %273 = vst [vmem:[%s260 + $0x91] sm:$0xff] %v208
  %274 = vst [vmem:[%s260 + $0x99] sm:$0xff] %v209
  %275 = vst [vmem:[%s260 + $0xa9] sm:$0xff] %v210
  %276 = vst [vmem:[%s260 + $0xb1] sm:$0xff] %v211
  %277 = vst [vmem:[%s260 + $0xc1] sm:$0xff] %v212
  %278 = vst [vmem:[%s260 + $0xc9] sm:$0xff] %v213
  %279 = vst [vmem:[%s260 + $0xd9] sm:$0xff] %v214
  %280 = vst [vmem:[%s260 + $0xe1] sm:$0xff] %v215
  %281 = vst [vmem:[%s260 + $0xf1] sm:$0xff] %v216
  %282 = vst [vmem:[%s260 + $0xf9] sm:$0xff] %v217
  %283 = vst [vmem:[%s260 + $0x109] sm:$0xff] %v218
  %284 = vst [vmem:[%s260 + $0x111] sm:$0xff] %v219
  %285 = vst [vmem:[%s260 + $0x121] sm:$0xff] %v220
  %286 = vst [vmem:[%s260 + $0x129] sm:$0xff] %v221
  %287 = vst [vmem:[%s260 + $0x139] sm:$0xff] %v222
  %288 = vst [vmem:[%s260 + $0x141] sm:$0xff] %v223
  %289 = vst [vmem:[%s260 + $0x151] sm:$0xff] %v224
  %290 = vst [vmem:[%s260 + $0x159] sm:$0xff] %v225
  %291 = vst [vmem:[%s260 + $0x169] sm:$0xff] %v226
  %292 = vst [vmem:[%s260 + $0x171] sm:$0xff] %v227
  %293 = vst [vmem:[%s260 + $0x1b1] sm:$0xff] %v228
  %294 = vst [vmem:[%s260 + $0x1b9] sm:$0xff] %v229
  %295 = vst [vmem:[%s260 + $0x1c9] sm:$0xff] %v230
  %296 = vst [vmem:[%s260 + $0x1d1] sm:$0xff] %v231
  %297 = vst [vmem:[%s260 + $0x1e1] sm:$0xff] %v232
  %298 = vst [vmem:[%s260 + $0x1e9] sm:$0xff] %v233
  %299 = vst [vmem:[%s260 + $0x1f9] sm:$0xff] %v234
  %300 = vst [vmem:[%s260 + $0x201] sm:$0xff] %v235
  %301 = vst [vmem:[%s260 + $0x211] sm:$0xff] %v236
  %302 = vst [vmem:[%s260 + $0x219] sm:$0xff] %v237
  %303 = vst [vmem:[%s260 + $0x229] sm:$0xff] %v238
  %304 = vst [vmem:[%s260 + $0x231] sm:$0xff] %v239
  %305 = vst [vmem:[%s260 + $0x241] sm:$0xff] %v240
  %306 = vst [vmem:[%s260 + $0x249] sm:$0xff] %v241
  %307 = vst [vmem:[%s260 + $0x259] sm:$0xff] %v242
  %308 = vst [vmem:[%s260 + $0x261] sm:$0xff] %v243
  %309 = vst [vmem:[%s260 + $0x271] sm:$0xff] %v244
  %310 = vst [vmem:[%s260 + $0x279] sm:$0xff] %v245
  %311 = vst [vmem:[%s260 + $0x289] sm:$0xff] %v246
  %312 = vst [vmem:[%s260 + $0x291] sm:$0xff] %v247
  %313 = vst [vmem:[%s260 + $0x2a1] sm:$0xff] %v248
  %314 = vst [vmem:[%s260 + $0x2a9] sm:$0xff] %v249
  %315 = vst [vmem:[%s260 + $0x2b9] sm:$0xff] %v250
  %316 = vst [vmem:[%s260 + $0x2c1] sm:$0xff] %v251
  %317 = vst [vmem:[%s260 + $0x2d1] sm:$0xff] %v252
  %318 = vst [vmem:[%s260 + $0x2d9] sm:$0xff] %v253
  %319 = vst [vmem:[%s260 + $0x2e9] sm:$0xff] %v254
  %320 = vst [vmem:[%s260 + $0x2f1] sm:$0xff] %v255
  %321 = vst [vmem:[%s260 + $0x301] sm:$0xff] %v256
  %322 = vst [vmem:[%s260 + $0x309] sm:$0xff] %v257
  %323 = vst [vmem:[%s260 + $0x319] sm:$0xff] %v258
  %324 = vst [vmem:[%s260 + $0x321] sm:$0xff] %v259
  %v325 = vld [vmem:[#allocation2] sm:$0xff]
  %v326 = vld [vmem:[#allocation2 + $0x8] sm:$0xff]
  %v327 = vld [vmem:[#allocation2 + $0x18] sm:$0xff]
  %v328 = vld [vmem:[#allocation2 + $0x20] sm:$0xff]
  %v329 = vld [vmem:[#allocation2 + $0x30] sm:$0xff]
  %v330 = vld [vmem:[#allocation2 + $0x38] sm:$0xff]
  %v331 = vld [vmem:[#allocation2 + $0x48] sm:$0xff]
  %v332 = vld [vmem:[#allocation2 + $0x50] sm:$0xff]
  %v333 = vld [vmem:[#allocation2 + $0x60] sm:$0xff]
  %v334 = vld [vmem:[#allocation2 + $0x68] sm:$0xff]
  %v335 = vld [vmem:[#allocation2 + $0x78] sm:$0xff]
  %v336 = vld [vmem:[#allocation2 + $0x80] sm:$0xff]
  %v337 = vld [vmem:[#allocation2 + $0x90] sm:$0xff]
  %v338 = vld [vmem:[#allocation2 + $0x98] sm:$0xff]
  %v339 = vld [vmem:[#allocation2 + $0xa8] sm:$0xff]
  %v340 = vld [vmem:[#allocation2 + $0xb0] sm:$0xff]
  %v341 = vld [vmem:[#allocation2 + $0xc0] sm:$0xff]
  %v342 = vld [vmem:[#allocation2 + $0xc8] sm:$0xff]
  %v343 = vld [vmem:[#allocation2 + $0xd8] sm:$0xff]
  %v344 = vld [vmem:[#allocation2 + $0xe0] sm:$0xff]
  %v345 = vld [vmem:[#allocation2 + $0xf0] sm:$0xff]
  %v346 = vld [vmem:[#allocation2 + $0xf8] sm:$0xff]
  %v347 = vld [vmem:[#allocation2 + $0x108] sm:$0xff]
  %v348 = vld [vmem:[#allocation2 + $0x110] sm:$0xff]
  %v349 = vld [vmem:[#allocation2 + $0x120] sm:$0xff]
  %v350 = vld [vmem:[#allocation2 + $0x128] sm:$0xff]
  %v351 = vld [vmem:[#allocation2 + $0x138] sm:$0xff]
  %v352 = vld [vmem:[#allocation2 + $0x140] sm:$0xff]
  %v353 = vld [vmem:[#allocation2 + $0x150] sm:$0xff]
  %v354 = vld [vmem:[#allocation2 + $0x158] sm:$0xff]
  %v355 = vld [vmem:[#allocation2 + $0x168] sm:$0xff]
  %v356 = vld [vmem:[#allocation2 + $0x170] sm:$0xff]
  %v357 = vld [vmem:[#allocation2 + $0x1b0] sm:$0xff]
  %v358 = vld [vmem:[#allocation2 + $0x1b8] sm:$0xff]
  %v359 = vld [vmem:[#allocation2 + $0x1c8] sm:$0xff]
  %v360 = vld [vmem:[#allocation2 + $0x1d0] sm:$0xff]
  %v361 = vld [vmem:[#allocation2 + $0x1e0] sm:$0xff]
  %v362 = vld [vmem:[#allocation2 + $0x1e8] sm:$0xff]
  %v363 = vld [vmem:[#allocation2 + $0x1f8] sm:$0xff]
  %v364 = vld [vmem:[#allocation2 + $0x200] sm:$0xff]
  %v365 = vld [vmem:[#allocation2 + $0x210] sm:$0xff]
  %v366 = vld [vmem:[#allocation2 + $0x218] sm:$0xff]
  %v367 = vld [vmem:[#allocation2 + $0x228] sm:$0xff]
  %v368 = vld [vmem:[#allocation2 + $0x230] sm:$0xff]
  %v369 = vld [vmem:[#allocation2 + $0x240] sm:$0xff]
  %v370 = vld [vmem:[#allocation2 + $0x248] sm:$0xff]
  %v371 = vld [vmem:[#allocation2 + $0x258] sm:$0xff]
  %v372 = vld [vmem:[#allocation2 + $0x260] sm:$0xff]
  %v373 = vld [vmem:[#allocation2 + $0x270] sm:$0xff]
  %v374 = vld [vmem:[#allocation2 + $0x278] sm:$0xff]
  %v375 = vld [vmem:[#allocation2 + $0x288] sm:$0xff]
  %v376 = vld [vmem:[#allocation2 + $0x290] sm:$0xff]
  %v377 = vld [vmem:[#allocation2 + $0x2a0] sm:$0xff]
  %v378 = vld [vmem:[#allocation2 + $0x2a8] sm:$0xff]
  %v379 = vld [vmem:[#allocation2 + $0x2b8] sm:$0xff]
  %v380 = vld [vmem:[#allocation2 + $0x2c0] sm:$0xff]
  %v381 = vld [vmem:[#allocation2 + $0x2d0] sm:$0xff]
  %v382 = vld [vmem:[#allocation2 + $0x2d8] sm:$0xff]
  %v383 = vld [vmem:[#allocation2 + $0x2e8] sm:$0xff]
  %v384 = vld [vmem:[#allocation2 + $0x2f0] sm:$0xff]
  %v385 = vld [vmem:[#allocation2 + $0x300] sm:$0xff]
  %v386 = vld [vmem:[#allocation2 + $0x308] sm:$0xff]
  %v387 = vld [vmem:[#allocation2 + $0x318] sm:$0xff]
  %v388 = vld [vmem:[#allocation2 + $0x320] sm:$0xff]
  %v389 = vpack.c.bf16 %v326, %v325
  %v390 = vpack.c.bf16 %v328, %v327
  %v391 = vpack.c.bf16 %v330, %v329
  %v392 = vpack.c.bf16 %v332, %v331
  %v393 = vpack.c.bf16 %v334, %v333
  %v394 = vpack.c.bf16 %v336, %v335
  %v395 = vpack.c.bf16 %v338, %v337
  %v396 = vpack.c.bf16 %v340, %v339
  %v397 = vpack.c.bf16 %v342, %v341
  %v398 = vpack.c.bf16 %v344, %v343
  %v399 = vpack.c.bf16 %v346, %v345
  %v400 = vpack.c.bf16 %v348, %v347
  %v401 = vpack.c.bf16 %v350, %v349
  %v402 = vpack.c.bf16 %v352, %v351
  %v403 = vpack.c.bf16 %v354, %v353
  %v404 = vpack.c.bf16 %v356, %v355
  %v405 = vpack.c.bf16 %v358, %v357
  %v406 = vpack.c.bf16 %v360, %v359
  %v407 = vpack.c.bf16 %v362, %v361
  %v408 = vpack.c.bf16 %v364, %v363
  %v409 = vpack.c.bf16 %v366, %v365
  %v410 = vpack.c.bf16 %v368, %v367
  %v411 = vpack.c.bf16 %v370, %v369
  %v412 = vpack.c.bf16 %v372, %v371
  %v413 = vpack.c.bf16 %v374, %v373
  %v414 = vpack.c.bf16 %v376, %v375
  %v415 = vpack.c.bf16 %v378, %v377
  %v416 = vpack.c.bf16 %v380, %v379
  %v417 = vpack.c.bf16 %v382, %v381
  %v418 = vpack.c.bf16 %v384, %v383
  %v419 = vpack.c.bf16 %v386, %v385
  %v420 = vpack.c.bf16 %v388, %v387
  %v421 = vld [vmem:[%s1] sm:$0xf]
  %v422 = vld [vmem:[%s1 + $0x4] sm:$0xf]
  %v423 = vld [vmem:[%s1 + $0x8] sm:$0xf]
  %v424 = vld [vmem:[%s1 + $0xc] sm:$0xf]
  %v425 = vld [vmem:[%s1 + $0x10] sm:$0xf]
  %v426 = vld [vmem:[%s1 + $0x14] sm:$0xf]
  %v427 = vld [vmem:[%s1 + $0x18] sm:$0xf]
  %v428 = vld [vmem:[%s1 + $0x1c] sm:$0xf]
  %v429 = vld [vmem:[%s1 + $0x20] sm:$0xf]
  %v430 = vld [vmem:[%s1 + $0x24] sm:$0xf]
  %v431 = vld [vmem:[%s1 + $0x28] sm:$0xf]
  %v432 = vld [vmem:[%s1 + $0x2c] sm:$0xf]
  %v433 = vld [vmem:[%s1 + $0x30] sm:$0xf]
  %v434 = vld [vmem:[%s1 + $0x34] sm:$0xf]
  %v435 = vld [vmem:[%s1 + $0x38] sm:$0xf]
  %v436 = vld [vmem:[%s1 + $0x3c] sm:$0xf]
  %v453 = vunpack.c.l.b16 %v421
  %v454 = vunpack.c.l.b16 %v422
  %v455 = vunpack.c.l.b16 %v423
  %v456 = vunpack.c.l.b16 %v424
  %v457 = vunpack.c.l.b16 %v425
  %v458 = vunpack.c.l.b16 %v426
  %v459 = vunpack.c.l.b16 %v427
  %v460 = vunpack.c.l.b16 %v428
  %v461 = vunpack.c.l.b16 %v429
  %v462 = vunpack.c.l.b16 %v430
  %v463 = vunpack.c.l.b16 %v431
  %v464 = vunpack.c.l.b16 %v432
  %v465 = vunpack.c.l.b16 %v433
  %v466 = vunpack.c.l.b16 %v434
  %v467 = vunpack.c.l.b16 %v435
  %v468 = vunpack.c.l.b16 %v436
  %v469 = vpack.c.b16 %v454, %v453
  %v470 = vpack.c.b16 %v456, %v455
  %v471 = vpack.c.b16 %v458, %v457
  %v472 = vpack.c.b16 %v460, %v459
  %v473 = vpack.c.b16 %v462, %v461
  %v474 = vpack.c.b16 %v464, %v463
  %v475 = vpack.c.b16 %v466, %v465
  %v476 = vpack.c.b16 %v468, %v467
  %485 = vmatpush.bf16.msra.mxu0 %v476
  %486 = vmatpush.bf16.msra.mxu0 %v475
  %487 = vmatpush.bf16.msra.mxu0 %v474
  %488 = vmatpush.bf16.msra.mxu0 %v473
  %489 = vmatpush.bf16.msra.mxu0 %v472
  %490 = vmatpush.bf16.msra.mxu0 %v471
  %491 = vmatpush.bf16.msra.mxu0 %v470
  %492 = vmatpush.bf16.msra.mxu0 %v469
  %493 = vmatmul.bf16.gmra.mxu0 %v389
  %v494 = vpop.f32.mrf.mxu0
  %v495 = vadd.f32 0.0, %v494
  %v496 = vpop.f32.mrf.mxu0
  %v497 = vadd.f32 0.0, %v496
  %498 = vmatmul.bf16.gmra.mxu0 %v390
  %v499 = vpop.f32.mrf.mxu0
  %v500 = vadd.f32 0.0, %v499
  %v501 = vpop.f32.mrf.mxu0
  %v502 = vadd.f32 0.0, %v501
  %503 = vmatmul.bf16.gmra.mxu0 %v391
  %v504 = vpop.f32.mrf.mxu0
  %v505 = vadd.f32 0.0, %v504
  %v506 = vpop.f32.mrf.mxu0
  %v507 = vadd.f32 0.0, %v506
  %508 = vmatmul.bf16.gmra.mxu0 %v392
  %v509 = vpop.f32.mrf.mxu0
  %v510 = vadd.f32 0.0, %v509
  %v511 = vpop.f32.mrf.mxu0
  %v512 = vadd.f32 0.0, %v511
  %513 = vmatmul.bf16.gmra.mxu0 %v393
  %v514 = vpop.f32.mrf.mxu0
  %v515 = vadd.f32 0.0, %v514
  %v516 = vpop.f32.mrf.mxu0
  %v517 = vadd.f32 0.0, %v516
  %518 = vmatmul.bf16.gmra.mxu0 %v394
  %v519 = vpop.f32.mrf.mxu0
  %v520 = vadd.f32 0.0, %v519
  %v521 = vpop.f32.mrf.mxu0
  %v522 = vadd.f32 0.0, %v521
  %523 = vmatmul.bf16.gmra.mxu0 %v395
  %v524 = vpop.f32.mrf.mxu0
  %v525 = vadd.f32 0.0, %v524
  %v526 = vpop.f32.mrf.mxu0
  %v527 = vadd.f32 0.0, %v526
  %528 = vmatmul.bf16.gmra.mxu0 %v396
  %v529 = vpop.f32.mrf.mxu0
  %v530 = vadd.f32 0.0, %v529
  %v531 = vpop.f32.mrf.mxu0
  %v532 = vadd.f32 0.0, %v531
  %533 = vmatmul.bf16.gmra.mxu0 %v397
  %v534 = vpop.f32.mrf.mxu0
  %v535 = vadd.f32 0.0, %v534
  %v536 = vpop.f32.mrf.mxu0
  %v537 = vadd.f32 0.0, %v536
  %538 = vmatmul.bf16.gmra.mxu0 %v398
  %v539 = vpop.f32.mrf.mxu0
  %v540 = vadd.f32 0.0, %v539
  %v541 = vpop.f32.mrf.mxu0
  %v542 = vadd.f32 0.0, %v541
  %543 = vmatmul.bf16.gmra.mxu0 %v399
  %v544 = vpop.f32.mrf.mxu0
  %v545 = vadd.f32 0.0, %v544
  %v546 = vpop.f32.mrf.mxu0
  %v547 = vadd.f32 0.0, %v546
  %548 = vmatmul.bf16.gmra.mxu0 %v400
  %v549 = vpop.f32.mrf.mxu0
  %v550 = vadd.f32 0.0, %v549
  %v551 = vpop.f32.mrf.mxu0
  %v552 = vadd.f32 0.0, %v551
  %553 = vmatmul.bf16.gmra.mxu0 %v401
  %v554 = vpop.f32.mrf.mxu0
  %v555 = vadd.f32 0.0, %v554
  %v556 = vpop.f32.mrf.mxu0
  %v557 = vadd.f32 0.0, %v556
  %558 = vmatmul.bf16.gmra.mxu0 %v402
  %v559 = vpop.f32.mrf.mxu0
  %v560 = vadd.f32 0.0, %v559
  %v561 = vpop.f32.mrf.mxu0
  %v562 = vadd.f32 0.0, %v561
  %563 = vmatmul.bf16.gmra.mxu0 %v403
  %v564 = vpop.f32.mrf.mxu0
  %v565 = vadd.f32 0.0, %v564
  %v566 = vpop.f32.mrf.mxu0
  %v567 = vadd.f32 0.0, %v566
  %568 = vmatmul.bf16.gmra.mxu0 %v404
  %v569 = vpop.f32.mrf.mxu0
  %v570 = vadd.f32 0.0, %v569
  %v571 = vpop.f32.mrf.mxu0
  %v572 = vadd.f32 0.0, %v571
  %573 = vmatmul.bf16.gmra.mxu0 %v405
  %v574 = vpop.f32.mrf.mxu0
  %v575 = vadd.f32 0.0, %v574
  %v576 = vpop.f32.mrf.mxu0
  %v577 = vadd.f32 0.0, %v576
  %578 = vmatmul.bf16.gmra.mxu0 %v406
  %v579 = vpop.f32.mrf.mxu0
  %v580 = vadd.f32 0.0, %v579
  %v581 = vpop.f32.mrf.mxu0
  %v582 = vadd.f32 0.0, %v581
  %583 = vmatmul.bf16.gmra.mxu0 %v407
  %v584 = vpop.f32.mrf.mxu0
  %v585 = vadd.f32 0.0, %v584
  %v586 = vpop.f32.mrf.mxu0
  %v587 = vadd.f32 0.0, %v586
  %588 = vmatmul.bf16.gmra.mxu0 %v408
  %v589 = vpop.f32.mrf.mxu0
  %v590 = vadd.f32 0.0, %v589
  %v591 = vpop.f32.mrf.mxu0
  %v592 = vadd.f32 0.0, %v591
  %593 = vmatmul.bf16.gmra.mxu0 %v409
  %v594 = vpop.f32.mrf.mxu0
  %v595 = vadd.f32 0.0, %v594
  %v596 = vpop.f32.mrf.mxu0
  %v597 = vadd.f32 0.0, %v596
  %598 = vmatmul.bf16.gmra.mxu0 %v410
  %v599 = vpop.f32.mrf.mxu0
  %v600 = vadd.f32 0.0, %v599
  %v601 = vpop.f32.mrf.mxu0
  %v602 = vadd.f32 0.0, %v601
  %603 = vmatmul.bf16.gmra.mxu0 %v411
  %v604 = vpop.f32.mrf.mxu0
  %v605 = vadd.f32 0.0, %v604
  %v606 = vpop.f32.mrf.mxu0
  %v607 = vadd.f32 0.0, %v606
  %608 = vmatmul.bf16.gmra.mxu0 %v412
  %v609 = vpop.f32.mrf.mxu0
  %v610 = vadd.f32 0.0, %v609
  %v611 = vpop.f32.mrf.mxu0
  %v612 = vadd.f32 0.0, %v611
  %613 = vmatmul.bf16.gmra.mxu0 %v413
  %v614 = vpop.f32.mrf.mxu0
  %v615 = vadd.f32 0.0, %v614
  %v616 = vpop.f32.mrf.mxu0
  %v617 = vadd.f32 0.0, %v616
  %618 = vmatmul.bf16.gmra.mxu0 %v414
  %v619 = vpop.f32.mrf.mxu0
  %v620 = vadd.f32 0.0, %v619
  %v621 = vpop.f32.mrf.mxu0
  %v622 = vadd.f32 0.0, %v621
  %623 = vmatmul.bf16.gmra.mxu0 %v415
  %v624 = vpop.f32.mrf.mxu0
  %v625 = vadd.f32 0.0, %v624
  %v626 = vpop.f32.mrf.mxu0
  %v627 = vadd.f32 0.0, %v626
  %628 = vmatmul.bf16.gmra.mxu0 %v416
  %v629 = vpop.f32.mrf.mxu0
  %v630 = vadd.f32 0.0, %v629
  %v631 = vpop.f32.mrf.mxu0
  %v632 = vadd.f32 0.0, %v631
  %633 = vmatmul.bf16.gmra.mxu0 %v417
  %v634 = vpop.f32.mrf.mxu0
  %v635 = vadd.f32 0.0, %v634
  %v636 = vpop.f32.mrf.mxu0
  %v637 = vadd.f32 0.0, %v636
  %638 = vmatmul.bf16.gmra.mxu0 %v418
  %v639 = vpop.f32.mrf.mxu0
  %v640 = vadd.f32 0.0, %v639
  %v641 = vpop.f32.mrf.mxu0
  %v642 = vadd.f32 0.0, %v641
  %643 = vmatmul.bf16.gmra.mxu0 %v419
  %v644 = vpop.f32.mrf.mxu0
  %v645 = vadd.f32 0.0, %v644
  %v646 = vpop.f32.mrf.mxu0
  %v647 = vadd.f32 0.0, %v646
  %648 = vmatmul.bf16.gmra.mxu0 %v420
  %v649 = vpop.f32.mrf.mxu0
  %v650 = vadd.f32 0.0, %v649
  %v651 = vpop.f32.mrf.mxu0
  %v652 = vadd.f32 0.0, %v651
  %653 = vdwg.mxu0
  %654 = vst [vmem:[#allocation4] sm:$0xff] %v495
  %655 = vst [vmem:[#allocation4 + $0x8] sm:$0xff] %v497
  %656 = vst [vmem:[#allocation4 + $0x10] sm:$0xff] %v500
  %657 = vst [vmem:[#allocation4 + $0x18] sm:$0xff] %v502
  %658 = vst [vmem:[#allocation4 + $0x20] sm:$0xff] %v505
  %659 = vst [vmem:[#allocation4 + $0x28] sm:$0xff] %v507
  %660 = vst [vmem:[#allocation4 + $0x30] sm:$0xff] %v510
  %661 = vst [vmem:[#allocation4 + $0x38] sm:$0xff] %v512
  %662 = vst [vmem:[#allocation4 + $0x40] sm:$0xff] %v515
  %663 = vst [vmem:[#allocation4 + $0x48] sm:$0xff] %v517
  %664 = vst [vmem:[#allocation4 + $0x50] sm:$0xff] %v520
  %665 = vst [vmem:[#allocation4 + $0x58] sm:$0xff] %v522
  %666 = vst [vmem:[#allocation4 + $0x60] sm:$0xff] %v525
  %667 = vst [vmem:[#allocation4 + $0x68] sm:$0xff] %v527
  %668 = vst [vmem:[#allocation4 + $0x70] sm:$0xff] %v530
  %669 = vst [vmem:[#allocation4 + $0x78] sm:$0xff] %v532
  %670 = vst [vmem:[#allocation4 + $0x80] sm:$0xff] %v535
  %671 = vst [vmem:[#allocation4 + $0x88] sm:$0xff] %v537
  %672 = vst [vmem:[#allocation4 + $0x90] sm:$0xff] %v540
  %673 = vst [vmem:[#allocation4 + $0x98] sm:$0xff] %v542
  %674 = vst [vmem:[#allocation4 + $0xa0] sm:$0xff] %v545
  %675 = vst [vmem:[#allocation4 + $0xa8] sm:$0xff] %v547
  %676 = vst [vmem:[#allocation4 + $0xb0] sm:$0xff] %v550
  %677 = vst [vmem:[#allocation4 + $0xb8] sm:$0xff] %v552
  %678 = vst [vmem:[#allocation4 + $0xc0] sm:$0xff] %v555
  %679 = vst [vmem:[#allocation4 + $0xc8] sm:$0xff] %v557
  %680 = vst [vmem:[#allocation4 + $0xd0] sm:$0xff] %v560
  %681 = vst [vmem:[#allocation4 + $0xd8] sm:$0xff] %v562
  %682 = vst [vmem:[#allocation4 + $0xe0] sm:$0xff] %v565
  %683 = vst [vmem:[#allocation4 + $0xe8] sm:$0xff] %v567
  %684 = vst [vmem:[#allocation4 + $0xf0] sm:$0xff] %v570
  %685 = vst [vmem:[#allocation4 + $0xf8] sm:$0xff] %v572
  %686 = vst [vmem:[#allocation4 + $0x100] sm:$0xff] %v575
  %687 = vst [vmem:[#allocation4 + $0x108] sm:$0xff] %v577
  %688 = vst [vmem:[#allocation4 + $0x110] sm:$0xff] %v580
  %689 = vst [vmem:[#allocation4 + $0x118] sm:$0xff] %v582
  %690 = vst [vmem:[#allocation4 + $0x120] sm:$0xff] %v585
  %691 = vst [vmem:[#allocation4 + $0x128] sm:$0xff] %v587
  %692 = vst [vmem:[#allocation4 + $0x130] sm:$0xff] %v590
  %693 = vst [vmem:[#allocation4 + $0x138] sm:$0xff] %v592
  %694 = vst [vmem:[#allocation4 + $0x140] sm:$0xff] %v595
  %695 = vst [vmem:[#allocation4 + $0x148] sm:$0xff] %v597
  %696 = vst [vmem:[#allocation4 + $0x150] sm:$0xff] %v600
  %697 = vst [vmem:[#allocation4 + $0x158] sm:$0xff] %v602
  %698 = vst [vmem:[#allocation4 + $0x160] sm:$0xff] %v605
  %699 = vst [vmem:[#allocation4 + $0x168] sm:$0xff] %v607
  %700 = vst [vmem:[#allocation4 + $0x170] sm:$0xff] %v610
  %701 = vst [vmem:[#allocation4 + $0x178] sm:$0xff] %v612
  %702 = vst [vmem:[#allocation4 + $0x180] sm:$0xff] %v615
  %703 = vst [vmem:[#allocation4 + $0x188] sm:$0xff] %v617
  %704 = vst [vmem:[#allocation4 + $0x190] sm:$0xff] %v620
  %705 = vst [vmem:[#allocation4 + $0x198] sm:$0xff] %v622
  %706 = vst [vmem:[#allocation4 + $0x1a0] sm:$0xff] %v625
  %707 = vst [vmem:[#allocation4 + $0x1a8] sm:$0xff] %v627
  %708 = vst [vmem:[#allocation4 + $0x1b0] sm:$0xff] %v630
  %709 = vst [vmem:[#allocation4 + $0x1b8] sm:$0xff] %v632
  %710 = vst [vmem:[#allocation4 + $0x1c0] sm:$0xff] %v635
  %711 = vst [vmem:[#allocation4 + $0x1c8] sm:$0xff] %v637
  %712 = vst [vmem:[#allocation4 + $0x1d0] sm:$0xff] %v640
  %713 = vst [vmem:[#allocation4 + $0x1d8] sm:$0xff] %v642
  %714 = vst [vmem:[#allocation4 + $0x1e0] sm:$0xff] %v645
  %715 = vst [vmem:[#allocation4 + $0x1e8] sm:$0xff] %v647
  %716 = vst [vmem:[#allocation4 + $0x1f0] sm:$0xff] %v650
  %717 = vst [vmem:[#allocation4 + $0x1f8] sm:$0xff] %v652
  %v718 = vld [vmem:[#allocation2 + $0x1] sm:$0xff]
  %v719 = vld [vmem:[#allocation2 + $0x9] sm:$0xff]
  %v720 = vld [vmem:[#allocation2 + $0x19] sm:$0xff]
  %v721 = vld [vmem:[#allocation2 + $0x21] sm:$0xff]
  %v722 = vld [vmem:[#allocation2 + $0x31] sm:$0xff]
  %v723 = vld [vmem:[#allocation2 + $0x39] sm:$0xff]
  %v724 = vld [vmem:[#allocation2 + $0x49] sm:$0xff]
  %v725 = vld [vmem:[#allocation2 + $0x51] sm:$0xff]
  %v726 = vld [vmem:[#allocation2 + $0x61] sm:$0xff]
  %v727 = vld [vmem:[#allocation2 + $0x69] sm:$0xff]
  %v728 = vld [vmem:[#allocation2 + $0x79] sm:$0xff]
  %v729 = vld [vmem:[#allocation2 + $0x81] sm:$0xff]
  %v730 = vld [vmem:[#allocation2 + $0x91] sm:$0xff]
  %v731 = vld [vmem:[#allocation2 + $0x99] sm:$0xff]
  %v732 = vld [vmem:[#allocation2 + $0xa9] sm:$0xff]
  %v733 = vld [vmem:[#allocation2 + $0xb1] sm:$0xff]
  %v734 = vld [vmem:[#allocation2 + $0xc1] sm:$0xff]
  %v735 = vld [vmem:[#allocation2 + $0xc9] sm:$0xff]
  %v736 = vld [vmem:[#allocation2 + $0xd9] sm:$0xff]
  %v737 = vld [vmem:[#allocation2 + $0xe1] sm:$0xff]
  %v738 = vld [vmem:[#allocation2 + $0xf1] sm:$0xff]
  %v739 = vld [vmem:[#allocation2 + $0xf9] sm:$0xff]
  %v740 = vld [vmem:[#allocation2 + $0x109] sm:$0xff]
  %v741 = vld [vmem:[#allocation2 + $0x111] sm:$0xff]
  %v742 = vld [vmem:[#allocation2 + $0x121] sm:$0xff]
  %v743 = vld [vmem:[#allocation2 + $0x129] sm:$0xff]
  %v744 = vld [vmem:[#allocation2 + $0x139] sm:$0xff]
  %v745 = vld [vmem:[#allocation2 + $0x141] sm:$0xff]
  %v746 = vld [vmem:[#allocation2 + $0x151] sm:$0xff]
  %v747 = vld [vmem:[#allocation2 + $0x159] sm:$0xff]
  %v748 = vld [vmem:[#allocation2 + $0x169] sm:$0xff]
  %v749 = vld [vmem:[#allocation2 + $0x171] sm:$0xff]
  %v750 = vld [vmem:[#allocation2 + $0x1b1] sm:$0xff]
  %v751 = vld [vmem:[#allocation2 + $0x1b9] sm:$0xff]
  %v752 = vld [vmem:[#allocation2 + $0x1c9] sm:$0xff]
  %v753 = vld [vmem:[#allocation2 + $0x1d1] sm:$0xff]
  %v754 = vld [vmem:[#allocation2 + $0x1e1] sm:$0xff]
  %v755 = vld [vmem:[#allocation2 + $0x1e9] sm:$0xff]
  %v756 = vld [vmem:[#allocation2 + $0x1f9] sm:$0xff]
  %v757 = vld [vmem:[#allocation2 + $0x201] sm:$0xff]
  %v758 = vld [vmem:[#allocation2 + $0x211] sm:$0xff]
  %v759 = vld [vmem:[#allocation2 + $0x219] sm:$0xff]
  %v760 = vld [vmem:[#allocation2 + $0x229] sm:$0xff]
  %v761 = vld [vmem:[#allocation2 + $0x231] sm:$0xff]
  %v762 = vld [vmem:[#allocation2 + $0x241] sm:$0xff]
  %v763 = vld [vmem:[#allocation2 + $0x249] sm:$0xff]
  %v764 = vld [vmem:[#allocation2 + $0x259] sm:$0xff]
  %v765 = vld [vmem:[#allocation2 + $0x261] sm:$0xff]
  %v766 = vld [vmem:[#allocation2 + $0x271] sm:$0xff]
  %v767 = vld [vmem:[#allocation2 + $0x279] sm:$0xff]
  %v768 = vld [vmem:[#allocation2 + $0x289] sm:$0xff]
  %v769 = vld [vmem:[#allocation2 + $0x291] sm:$0xff]
  %v770 = vld [vmem:[#allocation2 + $0x2a1] sm:$0xff]
  %v771 = vld [vmem:[#allocation2 + $0x2a9] sm:$0xff]
  %v772 = vld [vmem:[#allocation2 + $0x2b9] sm:$0xff]
  %v773 = vld [vmem:[#allocation2 + $0x2c1] sm:$0xff]
  %v774 = vld [vmem:[#allocation2 + $0x2d1] sm:$0xff]
  %v775 = vld [vmem:[#allocation2 + $0x2d9] sm:$0xff]
  %v776 = vld [vmem:[#allocation2 + $0x2e9] sm:$0xff]
  %v777 = vld [vmem:[#allocation2 + $0x2f1] sm:$0xff]
  %v778 = vld [vmem:[#allocation2 + $0x301] sm:$0xff]
  %v779 = vld [vmem:[#allocation2 + $0x309] sm:$0xff]
  %v780 = vld [vmem:[#allocation2 + $0x319] sm:$0xff]
  %v781 = vld [vmem:[#allocation2 + $0x321] sm:$0xff]
  %v782 = vpack.c.bf16 %v719, %v718
  %v783 = vpack.c.bf16 %v721, %v720
  %v784 = vpack.c.bf16 %v723, %v722
  %v785 = vpack.c.bf16 %v725, %v724
  %v786 = vpack.c.bf16 %v727, %v726
  %v787 = vpack.c.bf16 %v729, %v728
  %v788 = vpack.c.bf16 %v731, %v730
  %v789 = vpack.c.bf16 %v733, %v732
  %v790 = vpack.c.bf16 %v735, %v734
  %v791 = vpack.c.bf16 %v737, %v736
  %v792 = vpack.c.bf16 %v739, %v738
  %v793 = vpack.c.bf16 %v741, %v740
  %v794 = vpack.c.bf16 %v743, %v742
  %v795 = vpack.c.bf16 %v745, %v744
  %v796 = vpack.c.bf16 %v747, %v746
  %v797 = vpack.c.bf16 %v749, %v748
  %v798 = vpack.c.bf16 %v751, %v750
  %v799 = vpack.c.bf16 %v753, %v752
  %v800 = vpack.c.bf16 %v755, %v754
  %v801 = vpack.c.bf16 %v757, %v756
  %v802 = vpack.c.bf16 %v759, %v758
  %v803 = vpack.c.bf16 %v761, %v760
  %v804 = vpack.c.bf16 %v763, %v762
  %v805 = vpack.c.bf16 %v765, %v764
  %v806 = vpack.c.bf16 %v767, %v766
  %v807 = vpack.c.bf16 %v769, %v768
  %v808 = vpack.c.bf16 %v771, %v770
  %v809 = vpack.c.bf16 %v773, %v772
  %v810 = vpack.c.bf16 %v775, %v774
  %v811 = vpack.c.bf16 %v777, %v776
  %v812 = vpack.c.bf16 %v779, %v778
  %v813 = vpack.c.bf16 %v781, %v780
  %s814 = scalar_lea.vmem %s1, 64
  %v815 = vld [vmem:[%s814] sm:$0xf]
  %v816 = vld [vmem:[%s814 + $0x4] sm:$0xf]
  %v817 = vld [vmem:[%s814 + $0x8] sm:$0xf]
  %v818 = vld [vmem:[%s814 + $0xc] sm:$0xf]
  %v819 = vld [vmem:[%s814 + $0x10] sm:$0xf]
  %v820 = vld [vmem:[%s814 + $0x14] sm:$0xf]
  %v821 = vld [vmem:[%s814 + $0x18] sm:$0xf]
  %v822 = vld [vmem:[%s814 + $0x1c] sm:$0xf]
  %v823 = vld [vmem:[%s814 + $0x20] sm:$0xf]
  %v824 = vld [vmem:[%s814 + $0x24] sm:$0xf]
  %v825 = vld [vmem:[%s814 + $0x28] sm:$0xf]
  %v826 = vld [vmem:[%s814 + $0x2c] sm:$0xf]
  %v827 = vld [vmem:[%s814 + $0x30] sm:$0xf]
  %v828 = vld [vmem:[%s814 + $0x34] sm:$0xf]
  %v829 = vld [vmem:[%s814 + $0x38] sm:$0xf]
  %v830 = vld [vmem:[%s814 + $0x3c] sm:$0xf]
  %v847 = vunpack.c.l.b16 %v815
  %v848 = vunpack.c.l.b16 %v816
  %v849 = vunpack.c.l.b16 %v817
  %v850 = vunpack.c.l.b16 %v818
  %v851 = vunpack.c.l.b16 %v819
  %v852 = vunpack.c.l.b16 %v820
  %v853 = vunpack.c.l.b16 %v821
  %v854 = vunpack.c.l.b16 %v822
  %v855 = vunpack.c.l.b16 %v823
  %v856 = vunpack.c.l.b16 %v824
  %v857 = vunpack.c.l.b16 %v825
  %v858 = vunpack.c.l.b16 %v826
  %v859 = vunpack.c.l.b16 %v827
  %v860 = vunpack.c.l.b16 %v828
  %v861 = vunpack.c.l.b16 %v829
  %v862 = vunpack.c.l.b16 %v830
  %v863 = vpack.c.b16 %v848, %v847
  %v864 = vpack.c.b16 %v850, %v849
  %v865 = vpack.c.b16 %v852, %v851
  %v866 = vpack.c.b16 %v854, %v853
  %v867 = vpack.c.b16 %v856, %v855
  %v868 = vpack.c.b16 %v858, %v857
  %v869 = vpack.c.b16 %v860, %v859
  %v870 = vpack.c.b16 %v862, %v861
  %879 = vmatpush.bf16.msra.mxu0 %v870
  %880 = vmatpush.bf16.msra.mxu0 %v869
  %881 = vmatpush.bf16.msra.mxu0 %v868
  %882 = vmatpush.bf16.msra.mxu0 %v867
  %883 = vmatpush.bf16.msra.mxu0 %v866
  %884 = vmatpush.bf16.msra.mxu0 %v865
  %885 = vmatpush.bf16.msra.mxu0 %v864
  %886 = vmatpush.bf16.msra.mxu0 %v863
  %887 = vmatmul.bf16.gmra.mxu0 %v782
  %v888 = vpop.f32.mrf.mxu0
  %v889 = vadd.f32 0.0, %v888
  %v890 = vpop.f32.mrf.mxu0
  %v891 = vadd.f32 0.0, %v890
  %892 = vmatmul.bf16.gmra.mxu0 %v783
  %v893 = vpop.f32.mrf.mxu0
  %v894 = vadd.f32 0.0, %v893
  %v895 = vpop.f32.mrf.mxu0
  %v896 = vadd.f32 0.0, %v895
  %897 = vmatmul.bf16.gmra.mxu0 %v784
  %v898 = vpop.f32.mrf.mxu0
  %v899 = vadd.f32 0.0, %v898
  %v900 = vpop.f32.mrf.mxu0
  %v901 = vadd.f32 0.0, %v900
  %902 = vmatmul.bf16.gmra.mxu0 %v785
  %v903 = vpop.f32.mrf.mxu0
  %v904 = vadd.f32 0.0, %v903
  %v905 = vpop.f32.mrf.mxu0
  %v906 = vadd.f32 0.0, %v905
  %907 = vmatmul.bf16.gmra.mxu0 %v786
  %v908 = vpop.f32.mrf.mxu0
  %v909 = vadd.f32 0.0, %v908
  %v910 = vpop.f32.mrf.mxu0
  %v911 = vadd.f32 0.0, %v910
  %912 = vmatmul.bf16.gmra.mxu0 %v787
  %v913 = vpop.f32.mrf.mxu0
  %v914 = vadd.f32 0.0, %v913
  %v915 = vpop.f32.mrf.mxu0
  %v916 = vadd.f32 0.0, %v915
  %917 = vmatmul.bf16.gmra.mxu0 %v788
  %v918 = vpop.f32.mrf.mxu0
  %v919 = vadd.f32 0.0, %v918
  %v920 = vpop.f32.mrf.mxu0
  %v921 = vadd.f32 0.0, %v920
  %922 = vmatmul.bf16.gmra.mxu0 %v789
  %v923 = vpop.f32.mrf.mxu0
  %v924 = vadd.f32 0.0, %v923
  %v925 = vpop.f32.mrf.mxu0
  %v926 = vadd.f32 0.0, %v925
  %927 = vmatmul.bf16.gmra.mxu0 %v790
  %v928 = vpop.f32.mrf.mxu0
  %v929 = vadd.f32 0.0, %v928
  %v930 = vpop.f32.mrf.mxu0
  %v931 = vadd.f32 0.0, %v930
  %932 = vmatmul.bf16.gmra.mxu0 %v791
  %v933 = vpop.f32.mrf.mxu0
  %v934 = vadd.f32 0.0, %v933
  %v935 = vpop.f32.mrf.mxu0
  %v936 = vadd.f32 0.0, %v935
  %937 = vmatmul.bf16.gmra.mxu0 %v792
  %v938 = vpop.f32.mrf.mxu0
  %v939 = vadd.f32 0.0, %v938
  %v940 = vpop.f32.mrf.mxu0
  %v941 = vadd.f32 0.0, %v940
  %942 = vmatmul.bf16.gmra.mxu0 %v793
  %v943 = vpop.f32.mrf.mxu0
  %v944 = vadd.f32 0.0, %v943
  %v945 = vpop.f32.mrf.mxu0
  %v946 = vadd.f32 0.0, %v945
  %947 = vmatmul.bf16.gmra.mxu0 %v794
  %v948 = vpop.f32.mrf.mxu0
  %v949 = vadd.f32 0.0, %v948
  %v950 = vpop.f32.mrf.mxu0
  %v951 = vadd.f32 0.0, %v950
  %952 = vmatmul.bf16.gmra.mxu0 %v795
  %v953 = vpop.f32.mrf.mxu0
  %v954 = vadd.f32 0.0, %v953
  %v955 = vpop.f32.mrf.mxu0
  %v956 = vadd.f32 0.0, %v955
  %957 = vmatmul.bf16.gmra.mxu0 %v796
  %v958 = vpop.f32.mrf.mxu0
  %v959 = vadd.f32 0.0, %v958
  %v960 = vpop.f32.mrf.mxu0
  %v961 = vadd.f32 0.0, %v960
  %962 = vmatmul.bf16.gmra.mxu0 %v797
  %v963 = vpop.f32.mrf.mxu0
  %v964 = vadd.f32 0.0, %v963
  %v965 = vpop.f32.mrf.mxu0
  %v966 = vadd.f32 0.0, %v965
  %967 = vmatmul.bf16.gmra.mxu0 %v798
  %v968 = vpop.f32.mrf.mxu0
  %v969 = vadd.f32 0.0, %v968
  %v970 = vpop.f32.mrf.mxu0
  %v971 = vadd.f32 0.0, %v970
  %972 = vmatmul.bf16.gmra.mxu0 %v799
  %v973 = vpop.f32.mrf.mxu0
  %v974 = vadd.f32 0.0, %v973
  %v975 = vpop.f32.mrf.mxu0
  %v976 = vadd.f32 0.0, %v975
  %977 = vmatmul.bf16.gmra.mxu0 %v800
  %v978 = vpop.f32.mrf.mxu0
  %v979 = vadd.f32 0.0, %v978
  %v980 = vpop.f32.mrf.mxu0
  %v981 = vadd.f32 0.0, %v980
  %982 = vmatmul.bf16.gmra.mxu0 %v801
  %v983 = vpop.f32.mrf.mxu0
  %v984 = vadd.f32 0.0, %v983
  %v985 = vpop.f32.mrf.mxu0
  %v986 = vadd.f32 0.0, %v985
  %987 = vmatmul.bf16.gmra.mxu0 %v802
  %v988 = vpop.f32.mrf.mxu0
  %v989 = vadd.f32 0.0, %v988
  %v990 = vpop.f32.mrf.mxu0
  %v991 = vadd.f32 0.0, %v990
  %992 = vmatmul.bf16.gmra.mxu0 %v803
  %v993 = vpop.f32.mrf.mxu0
  %v994 = vadd.f32 0.0, %v993
  %v995 = vpop.f32.mrf.mxu0
  %v996 = vadd.f32 0.0, %v995
  %997 = vmatmul.bf16.gmra.mxu0 %v804
  %v998 = vpop.f32.mrf.mxu0
  %v999 = vadd.f32 0.0, %v998
  %v1000 = vpop.f32.mrf.mxu0
  %v1001 = vadd.f32 0.0, %v1000
  %1002 = vmatmul.bf16.gmra.mxu0 %v805
  %v1003 = vpop.f32.mrf.mxu0
  %v1004 = vadd.f32 0.0, %v1003
  %v1005 = vpop.f32.mrf.mxu0
  %v1006 = vadd.f32 0.0, %v1005
  %1007 = vmatmul.bf16.gmra.mxu0 %v806
  %v1008 = vpop.f32.mrf.mxu0
  %v1009 = vadd.f32 0.0, %v1008
  %v1010 = vpop.f32.mrf.mxu0
  %v1011 = vadd.f32 0.0, %v1010
  %1012 = vmatmul.bf16.gmra.mxu0 %v807
  %v1013 = vpop.f32.mrf.mxu0
  %v1014 = vadd.f32 0.0, %v1013
  %v1015 = vpop.f32.mrf.mxu0
  %v1016 = vadd.f32 0.0, %v1015
  %1017 = vmatmul.bf16.gmra.mxu0 %v808
  %v1018 = vpop.f32.mrf.mxu0
  %v1019 = vadd.f32 0.0, %v1018
  %v1020 = vpop.f32.mrf.mxu0
  %v1021 = vadd.f32 0.0, %v1020
  %1022 = vmatmul.bf16.gmra.mxu0 %v809
  %v1023 = vpop.f32.mrf.mxu0
  %v1024 = vadd.f32 0.0, %v1023
  %v1025 = vpop.f32.mrf.mxu0
  %v1026 = vadd.f32 0.0, %v1025
  %1027 = vmatmul.bf16.gmra.mxu0 %v810
  %v1028 = vpop.f32.mrf.mxu0
  %v1029 = vadd.f32 0.0, %v1028
  %v1030 = vpop.f32.mrf.mxu0
  %v1031 = vadd.f32 0.0, %v1030
  %1032 = vmatmul.bf16.gmra.mxu0 %v811
  %v1033 = vpop.f32.mrf.mxu0
  %v1034 = vadd.f32 0.0, %v1033
  %v1035 = vpop.f32.mrf.mxu0
  %v1036 = vadd.f32 0.0, %v1035
  %1037 = vmatmul.bf16.gmra.mxu0 %v812
  %v1038 = vpop.f32.mrf.mxu0
  %v1039 = vadd.f32 0.0, %v1038
  %v1040 = vpop.f32.mrf.mxu0
  %v1041 = vadd.f32 0.0, %v1040
  %1042 = vmatmul.bf16.gmra.mxu0 %v813
  %v1043 = vpop.f32.mrf.mxu0
  %v1044 = vadd.f32 0.0, %v1043
  %v1045 = vpop.f32.mrf.mxu0
  %v1046 = vadd.f32 0.0, %v1045
  %1047 = vdwg.mxu0
  %v1048 = vld [vmem:[#allocation4] sm:$0xff]
  %v1049 = vld [vmem:[#allocation4 + $0x8] sm:$0xff]
  %v1050 = vld [vmem:[#allocation4 + $0x10] sm:$0xff]
  %v1051 = vld [vmem:[#allocation4 + $0x18] sm:$0xff]
  %v1052 = vld [vmem:[#allocation4 + $0x20] sm:$0xff]
  %v1053 = vld [vmem:[#allocation4 + $0x28] sm:$0xff]
  %v1054 = vld [vmem:[#allocation4 + $0x30] sm:$0xff]
  %v1055 = vld [vmem:[#allocation4 + $0x38] sm:$0xff]
  %v1056 = vld [vmem:[#allocation4 + $0x40] sm:$0xff]
  %v1057 = vld [vmem:[#allocation4 + $0x48] sm:$0xff]
  %v1058 = vld [vmem:[#allocation4 + $0x50] sm:$0xff]
  %v1059 = vld [vmem:[#allocation4 + $0x58] sm:$0xff]
  %v1060 = vld [vmem:[#allocation4 + $0x60] sm:$0xff]
  %v1061 = vld [vmem:[#allocation4 + $0x68] sm:$0xff]
  %v1062 = vld [vmem:[#allocation4 + $0x70] sm:$0xff]
  %v1063 = vld [vmem:[#allocation4 + $0x78] sm:$0xff]
  %v1064 = vld [vmem:[#allocation4 + $0x80] sm:$0xff]
  %v1065 = vld [vmem:[#allocation4 + $0x88] sm:$0xff]
  %v1066 = vld [vmem:[#allocation4 + $0x90] sm:$0xff]
  %v1067 = vld [vmem:[#allocation4 + $0x98] sm:$0xff]
  %v1068 = vld [vmem:[#allocation4 + $0xa0] sm:$0xff]
  %v1069 = vld [vmem:[#allocation4 + $0xa8] sm:$0xff]
  %v1070 = vld [vmem:[#allocation4 + $0xb0] sm:$0xff]
  %v1071 = vld [vmem:[#allocation4 + $0xb8] sm:$0xff]
  %v1072 = vld [vmem:[#allocation4 + $0xc0] sm:$0xff]
  %v1073 = vld [vmem:[#allocation4 + $0xc8] sm:$0xff]
  %v1074 = vld [vmem:[#allocation4 + $0xd0] sm:$0xff]
  %v1075 = vld [vmem:[#allocation4 + $0xd8] sm:$0xff]
  %v1076 = vld [vmem:[#allocation4 + $0xe0] sm:$0xff]
  %v1077 = vld [vmem:[#allocation4 + $0xe8] sm:$0xff]
  %v1078 = vld [vmem:[#allocation4 + $0xf0] sm:$0xff]
  %v1079 = vld [vmem:[#allocation4 + $0xf8] sm:$0xff]
  %v1080 = vld [vmem:[#allocation4 + $0x100] sm:$0xff]
  %v1081 = vld [vmem:[#allocation4 + $0x108] sm:$0xff]
  %v1082 = vld [vmem:[#allocation4 + $0x110] sm:$0xff]
  %v1083 = vld [vmem:[#allocation4 + $0x118] sm:$0xff]
  %v1084 = vld [vmem:[#allocation4 + $0x120] sm:$0xff]
  %v1085 = vld [vmem:[#allocation4 + $0x128] sm:$0xff]
  %v1086 = vld [vmem:[#allocation4 + $0x130] sm:$0xff]
  %v1087 = vld [vmem:[#allocation4 + $0x138] sm:$0xff]
  %v1088 = vld [vmem:[#allocation4 + $0x140] sm:$0xff]
  %v1089 = vld [vmem:[#allocation4 + $0x148] sm:$0xff]
  %v1090 = vld [vmem:[#allocation4 + $0x150] sm:$0xff]
  %v1091 = vld [vmem:[#allocation4 + $0x158] sm:$0xff]
  %v1092 = vld [vmem:[#allocation4 + $0x160] sm:$0xff]
  %v1093 = vld [vmem:[#allocation4 + $0x168] sm:$0xff]
  %v1094 = vld [vmem:[#allocation4 + $0x170] sm:$0xff]
  %v1095 = vld [vmem:[#allocation4 + $0x178] sm:$0xff]
  %v1096 = vld [vmem:[#allocation4 + $0x180] sm:$0xff]
  %v1097 = vld [vmem:[#allocation4 + $0x188] sm:$0xff]
  %v1098 = vld [vmem:[#allocation4 + $0x190] sm:$0xff]
  %v1099 = vld [vmem:[#allocation4 + $0x198] sm:$0xff]
  %v1100 = vld [vmem:[#allocation4 + $0x1a0] sm:$0xff]
  %v1101 = vld [vmem:[#allocation4 + $0x1a8] sm:$0xff]
  %v1102 = vld [vmem:[#allocation4 + $0x1b0] sm:$0xff]
  %v1103 = vld [vmem:[#allocation4 + $0x1b8] sm:$0xff]
  %v1104 = vld [vmem:[#allocation4 + $0x1c0] sm:$0xff]
  %v1105 = vld [vmem:[#allocation4 + $0x1c8] sm:$0xff]
  %v1106 = vld [vmem:[#allocation4 + $0x1d0] sm:$0xff]
  %v1107 = vld [vmem:[#allocation4 + $0x1d8] sm:$0xff]
  %v1108 = vld [vmem:[#allocation4 + $0x1e0] sm:$0xff]
  %v1109 = vld [vmem:[#allocation4 + $0x1e8] sm:$0xff]
  %v1110 = vld [vmem:[#allocation4 + $0x1f0] sm:$0xff]
  %v1111 = vld [vmem:[#allocation4 + $0x1f8] sm:$0xff]
  %v1112 = vadd.f32 %v1048, %v889
  %v1113 = vadd.f32 %v1049, %v891
  %v1114 = vadd.f32 %v1050, %v894
  %v1115 = vadd.f32 %v1051, %v896
  %v1116 = vadd.f32 %v1052, %v899
  %v1117 = vadd.f32 %v1053, %v901
  %v1118 = vadd.f32 %v1054, %v904
  %v1119 = vadd.f32 %v1055, %v906
  %v1120 = vadd.f32 %v1056, %v909
  %v1121 = vadd.f32 %v1057, %v911
  %v1122 = vadd.f32 %v1058, %v914
  %v1123 = vadd.f32 %v1059, %v916
  %v1124 = vadd.f32 %v1060, %v919
  %v1125 = vadd.f32 %v1061, %v921
  %v1126 = vadd.f32 %v1062, %v924
  %v1127 = vadd.f32 %v1063, %v926
  %v1128 = vadd.f32 %v1064, %v929
  %v1129 = vadd.f32 %v1065, %v931
  %v1130 = vadd.f32 %v1066, %v934
  %v1131 = vadd.f32 %v1067, %v936
  %v1132 = vadd.f32 %v1068, %v939
  %v1133 = vadd.f32 %v1069, %v941
  %v1134 = vadd.f32 %v1070, %v944
  %v1135 = vadd.f32 %v1071, %v946
  %v1136 = vadd.f32 %v1072, %v949
  %v1137 = vadd.f32 %v1073, %v951
  %v1138 = vadd.f32 %v1074, %v954
  %v1139 = vadd.f32 %v1075, %v956
  %v1140 = vadd.f32 %v1076, %v959
  %v1141 = vadd.f32 %v1077, %v961
  %v1142 = vadd.f32 %v1078, %v964
  %v1143 = vadd.f32 %v1079, %v966
  %v1144 = vadd.f32 %v1080, %v969
  %v1145 = vadd.f32 %v1081, %v971
  %v1146 = vadd.f32 %v1082, %v974
  %v1147 = vadd.f32 %v1083, %v976
  %v1148 = vadd.f32 %v1084, %v979
  %v1149 = vadd.f32 %v1085, %v981
  %v1150 = vadd.f32 %v1086, %v984
  %v1151 = vadd.f32 %v1087, %v986
  %v1152 = vadd.f32 %v1088, %v989
  %v1153 = vadd.f32 %v1089, %v991
  %v1154 = vadd.f32 %v1090, %v994
  %v1155 = vadd.f32 %v1091, %v996
  %v1156 = vadd.f32 %v1092, %v999
  %v1157 = vadd.f32 %v1093, %v1001
  %v1158 = vadd.f32 %v1094, %v1004
  %v1159 = vadd.f32 %v1095, %v1006
  %v1160 = vadd.f32 %v1096, %v1009
  %v1161 = vadd.f32 %v1097, %v1011
  %v1162 = vadd.f32 %v1098, %v1014
  %v1163 = vadd.f32 %v1099, %v1016
  %v1164 = vadd.f32 %v1100, %v1019
  %v1165 = vadd.f32 %v1101, %v1021
  %v1166 = vadd.f32 %v1102, %v1024
  %v1167 = vadd.f32 %v1103, %v1026
  %v1168 = vadd.f32 %v1104, %v1029
  %v1169 = vadd.f32 %v1105, %v1031
  %v1170 = vadd.f32 %v1106, %v1034
  %v1171 = vadd.f32 %v1107, %v1036
  %v1172 = vadd.f32 %v1108, %v1039
  %v1173 = vadd.f32 %v1109, %v1041
  %v1174 = vadd.f32 %v1110, %v1044
  %v1175 = vadd.f32 %v1111, %v1046
  %1176 = vst [vmem:[#allocation4] sm:$0xff] %v1112
  %1177 = vst [vmem:[#allocation4 + $0x8] sm:$0xff] %v1113
  %1178 = vst [vmem:[#allocation4 + $0x10] sm:$0xff] %v1114
  %1179 = vst [vmem:[#allocation4 + $0x18] sm:$0xff] %v1115
  %1180 = vst [vmem:[#allocation4 + $0x20] sm:$0xff] %v1116
  %1181 = vst [vmem:[#allocation4 + $0x28] sm:$0xff] %v1117
  %1182 = vst [vmem:[#allocation4 + $0x30] sm:$0xff] %v1118
  %1183 = vst [vmem:[#allocation4 + $0x38] sm:$0xff] %v1119
  %1184 = vst [vmem:[#allocation4 + $0x40] sm:$0xff] %v1120
  %1185 = vst [vmem:[#allocation4 + $0x48] sm:$0xff] %v1121
  %1186 = vst [vmem:[#allocation4 + $0x50] sm:$0xff] %v1122
  %1187 = vst [vmem:[#allocation4 + $0x58] sm:$0xff] %v1123
  %1188 = vst [vmem:[#allocation4 + $0x60] sm:$0xff] %v1124
  %1189 = vst [vmem:[#allocation4 + $0x68] sm:$0xff] %v1125
  %1190 = vst [vmem:[#allocation4 + $0x70] sm:$0xff] %v1126
  %1191 = vst [vmem:[#allocation4 + $0x78] sm:$0xff] %v1127
  %1192 = vst [vmem:[#allocation4 + $0x80] sm:$0xff] %v1128
  %1193 = vst [vmem:[#allocation4 + $0x88] sm:$0xff] %v1129
  %1194 = vst [vmem:[#allocation4 + $0x90] sm:$0xff] %v1130
  %1195 = vst [vmem:[#allocation4 + $0x98] sm:$0xff] %v1131
  %1196 = vst [vmem:[#allocation4 + $0xa0] sm:$0xff] %v1132
  %1197 = vst [vmem:[#allocation4 + $0xa8] sm:$0xff] %v1133
  %1198 = vst [vmem:[#allocation4 + $0xb0] sm:$0xff] %v1134
  %1199 = vst [vmem:[#allocation4 + $0xb8] sm:$0xff] %v1135
  %1200 = vst [vmem:[#allocation4 + $0xc0] sm:$0xff] %v1136
  %1201 = vst [vmem:[#allocation4 + $0xc8] sm:$0xff] %v1137
  %1202 = vst [vmem:[#allocation4 + $0xd0] sm:$0xff] %v1138
  %1203 = vst [vmem:[#allocation4 + $0xd8] sm:$0xff] %v1139
  %1204 = vst [vmem:[#allocation4 + $0xe0] sm:$0xff] %v1140
  %1205 = vst [vmem:[#allocation4 + $0xe8] sm:$0xff] %v1141
  %1206 = vst [vmem:[#allocation4 + $0xf0] sm:$0xff] %v1142
  %1207 = vst [vmem:[#allocation4 + $0xf8] sm:$0xff] %v1143
  %1208 = vst [vmem:[#allocation4 + $0x100] sm:$0xff] %v1144
  %1209 = vst [vmem:[#allocation4 + $0x108] sm:$0xff] %v1145
  %1210 = vst [vmem:[#allocation4 + $0x110] sm:$0xff] %v1146
  %1211 = vst [vmem:[#allocation4 + $0x118] sm:$0xff] %v1147
  %1212 = vst [vmem:[#allocation4 + $0x120] sm:$0xff] %v1148
  %1213 = vst [vmem:[#allocation4 + $0x128] sm:$0xff] %v1149
  %1214 = vst [vmem:[#allocation4 + $0x130] sm:$0xff] %v1150
  %1215 = vst [vmem:[#allocation4 + $0x138] sm:$0xff] %v1151
  %1216 = vst [vmem:[#allocation4 + $0x140] sm:$0xff] %v1152
  %1217 = vst [vmem:[#allocation4 + $0x148] sm:$0xff] %v1153
  %1218 = vst [vmem:[#allocation4 + $0x150] sm:$0xff] %v1154
  %1219 = vst [vmem:[#allocation4 + $0x158] sm:$0xff] %v1155
  %1220 = vst [vmem:[#allocation4 + $0x160] sm:$0xff] %v1156
  %1221 = vst [vmem:[#allocation4 + $0x168] sm:$0xff] %v1157
  %1222 = vst [vmem:[#allocation4 + $0x170] sm:$0xff] %v1158
  %1223 = vst [vmem:[#allocation4 + $0x178] sm:$0xff] %v1159
  %1224 = vst [vmem:[#allocation4 + $0x180] sm:$0xff] %v1160
  %1225 = vst [vmem:[#allocation4 + $0x188] sm:$0xff] %v1161
  %1226 = vst [vmem:[#allocation4 + $0x190] sm:$0xff] %v1162
  %1227 = vst [vmem:[#allocation4 + $0x198] sm:$0xff] %v1163
  %1228 = vst [vmem:[#allocation4 + $0x1a0] sm:$0xff] %v1164
  %1229 = vst [vmem:[#allocation4 + $0x1a8] sm:$0xff] %v1165
  %1230 = vst [vmem:[#allocation4 + $0x1b0] sm:$0xff] %v1166
  %1231 = vst [vmem:[#allocation4 + $0x1b8] sm:$0xff] %v1167
  %1232 = vst [vmem:[#allocation4 + $0x1c0] sm:$0xff] %v1168
  %1233 = vst [vmem:[#allocation4 + $0x1c8] sm:$0xff] %v1169
  %1234 = vst [vmem:[#allocation4 + $0x1d0] sm:$0xff] %v1170
  %1235 = vst [vmem:[#allocation4 + $0x1d8] sm:$0xff] %v1171
  %1236 = vst [vmem:[#allocation4 + $0x1e0] sm:$0xff] %v1172
  %1237 = vst [vmem:[#allocation4 + $0x1e8] sm:$0xff] %v1173
  %1238 = vst [vmem:[#allocation4 + $0x1f0] sm:$0xff] %v1174
  %1239 = vst [vmem:[#allocation4 + $0x1f8] sm:$0xff] %v1175
  %v1240 = vld [vmem:[#allocation2 + $0x2] sm:$0xff]
  %v1241 = vld [vmem:[#allocation2 + $0xa] sm:$0xff]
  %v1242 = vld [vmem:[#allocation2 + $0x1a] sm:$0xff]
  %v1243 = vld [vmem:[#allocation2 + $0x22] sm:$0xff]
  %v1244 = vld [vmem:[#allocation2 + $0x32] sm:$0xff]
  %v1245 = vld [vmem:[#allocation2 + $0x3a] sm:$0xff]
  %v1246 = vld [vmem:[#allocation2 + $0x4a] sm:$0xff]
  %v1247 = vld [vmem:[#allocation2 + $0x52] sm:$0xff]
  %v1248 = vld [vmem:[#allocation2 + $0x62] sm:$0xff]
  %v1249 = vld [vmem:[#allocation2 + $0x6a] sm:$0xff]
  %v1250 = vld [vmem:[#allocation2 + $0x7a] sm:$0xff]
  %v1251 = vld [vmem:[#allocation2 + $0x82] sm:$0xff]
  %v1252 = vld [vmem:[#allocation2 + $0x92] sm:$0xff]
  %v1253 = vld [vmem:[#allocation2 + $0x9a] sm:$0xff]
  %v1254 = vld [vmem:[#allocation2 + $0xaa] sm:$0xff]
  %v1255 = vld [vmem:[#allocation2 + $0xb2] sm:$0xff]
  %v1256 = vld [vmem:[#allocation2 + $0xc2] sm:$0xff]
  %v1257 = vld [vmem:[#allocation2 + $0xca] sm:$0xff]
  %v1258 = vld [vmem:[#allocation2 + $0xda] sm:$0xff]
  %v1259 = vld [vmem:[#allocation2 + $0xe2] sm:$0xff]
  %v1260 = vld [vmem:[#allocation2 + $0xf2] sm:$0xff]
  %v1261 = vld [vmem:[#allocation2 + $0xfa] sm:$0xff]
  %v1262 = vld [vmem:[#allocation2 + $0x10a] sm:$0xff]
  %v1263 = vld [vmem:[#allocation2 + $0x112] sm:$0xff]
  %v1264 = vld [vmem:[#allocation2 + $0x122] sm:$0xff]
  %v1265 = vld [vmem:[#allocation2 + $0x12a] sm:$0xff]
  %v1266 = vld [vmem:[#allocation2 + $0x13a] sm:$0xff]
  %v1267 = vld [vmem:[#allocation2 + $0x142] sm:$0xff]
  %v1268 = vld [vmem:[#allocation2 + $0x152] sm:$0xff]
  %v1269 = vld [vmem:[#allocation2 + $0x15a] sm:$0xff]
  %v1270 = vld [vmem:[#allocation2 + $0x16a] sm:$0xff]
  %v1271 = vld [vmem:[#allocation2 + $0x172] sm:$0xff]
  %v1272 = vld [vmem:[#allocation2 + $0x1b2] sm:$0xff]
  %v1273 = vld [vmem:[#allocation2 + $0x1ba] sm:$0xff]
  %v1274 = vld [vmem:[#allocation2 + $0x1ca] sm:$0xff]
  %v1275 = vld [vmem:[#allocation2 + $0x1d2] sm:$0xff]
  %v1276 = vld [vmem:[#allocation2 + $0x1e2] sm:$0xff]
  %v1277 = vld [vmem:[#allocation2 + $0x1ea] sm:$0xff]
  %v1278 = vld [vmem:[#allocation2 + $0x1fa] sm:$0xff]
  %v1279 = vld [vmem:[#allocation2 + $0x202] sm:$0xff]
  %v1280 = vld [vmem:[#allocation2 + $0x212] sm:$0xff]
  %v1281 = vld [vmem:[#allocation2 + $0x21a] sm:$0xff]
  %v1282 = vld [vmem:[#allocation2 + $0x22a] sm:$0xff]
  %v1283 = vld [vmem:[#allocation2 + $0x232] sm:$0xff]
  %v1284 = vld [vmem:[#allocation2 + $0x242] sm:$0xff]
  %v1285 = vld [vmem:[#allocation2 + $0x24a] sm:$0xff]
  %v1286 = vld [vmem:[#allocation2 + $0x25a] sm:$0xff]
  %v1287 = vld [vmem:[#allocation2 + $0x262] sm:$0xff]
  %v1288 = vld [vmem:[#allocation2 + $0x272] sm:$0xff]
  %v1289 = vld [vmem:[#allocation2 + $0x27a] sm:$0xff]
  %v1290 = vld [vmem:[#allocation2 + $0x28a] sm:$0xff]
  %v1291 = vld [vmem:[#allocation2 + $0x292] sm:$0xff]
  %v1292 = vld [vmem:[#allocation2 + $0x2a2] sm:$0xff]
  %v1293 = vld [vmem:[#allocation2 + $0x2aa] sm:$0xff]
  %v1294 = vld [vmem:[#allocation2 + $0x2ba] sm:$0xff]
  %v1295 = vld [vmem:[#allocation2 + $0x2c2] sm:$0xff]
  %v1296 = vld [vmem:[#allocation2 + $0x2d2] sm:$0xff]
  %v1297 = vld [vmem:[#allocation2 + $0x2da] sm:$0xff]
  %v1298 = vld [vmem:[#allocation2 + $0x2ea] sm:$0xff]
  %v1299 = vld [vmem:[#allocation2 + $0x2f2] sm:$0xff]
  %v1300 = vld [vmem:[#allocation2 + $0x302] sm:$0xff]
  %v1301 = vld [vmem:[#allocation2 + $0x30a] sm:$0xff]
  %v1302 = vld [vmem:[#allocation2 + $0x31a] sm:$0xff]
  %v1303 = vld [vmem:[#allocation2 + $0x322] sm:$0xff]
  %v1304 = vpack.c.bf16 %v1241, %v1240
  %v1305 = vpack.c.bf16 %v1243, %v1242
  %v1306 = vpack.c.bf16 %v1245, %v1244
  %v1307 = vpack.c.bf16 %v1247, %v1246
  %v1308 = vpack.c.bf16 %v1249, %v1248
  %v1309 = vpack.c.bf16 %v1251, %v1250
  %v1310 = vpack.c.bf16 %v1253, %v1252
  %v1311 = vpack.c.bf16 %v1255, %v1254
  %v1312 = vpack.c.bf16 %v1257, %v1256
  %v1313 = vpack.c.bf16 %v1259, %v1258
  %v1314 = vpack.c.bf16 %v1261, %v1260
  %v1315 = vpack.c.bf16 %v1263, %v1262
  %v1316 = vpack.c.bf16 %v1265, %v1264
  %v1317 = vpack.c.bf16 %v1267, %v1266
  %v1318 = vpack.c.bf16 %v1269, %v1268
  %v1319 = vpack.c.bf16 %v1271, %v1270
  %v1320 = vpack.c.bf16 %v1273, %v1272
  %v1321 = vpack.c.bf16 %v1275, %v1274
  %v1322 = vpack.c.bf16 %v1277, %v1276
  %v1323 = vpack.c.bf16 %v1279, %v1278
  %v1324 = vpack.c.bf16 %v1281, %v1280
  %v1325 = vpack.c.bf16 %v1283, %v1282
  %v1326 = vpack.c.bf16 %v1285, %v1284
  %v1327 = vpack.c.bf16 %v1287, %v1286
  %v1328 = vpack.c.bf16 %v1289, %v1288
  %v1329 = vpack.c.bf16 %v1291, %v1290
  %v1330 = vpack.c.bf16 %v1293, %v1292
  %v1331 = vpack.c.bf16 %v1295, %v1294
  %v1332 = vpack.c.bf16 %v1297, %v1296
  %v1333 = vpack.c.bf16 %v1299, %v1298
  %v1334 = vpack.c.bf16 %v1301, %v1300
  %v1335 = vpack.c.bf16 %v1303, %v1302
  %s1336 = scalar_lea.vmem %s1, 128
  %v1337 = vld [vmem:[%s1336] sm:$0xf]
  %v1338 = vld [vmem:[%s1336 + $0x4] sm:$0xf]
  %v1339 = vld [vmem:[%s1336 + $0x8] sm:$0xf]
  %v1340 = vld [vmem:[%s1336 + $0xc] sm:$0xf]
  %v1341 = vld [vmem:[%s1336 + $0x10] sm:$0xf]
  %v1342 = vld [vmem:[%s1336 + $0x14] sm:$0xf]
  %v1343 = vld [vmem:[%s1336 + $0x18] sm:$0xf]
  %v1344 = vld [vmem:[%s1336 + $0x1c] sm:$0xf]
  %v1345 = vld [vmem:[%s1336 + $0x20] sm:$0xf]
  %v1346 = vld [vmem:[%s1336 + $0x24] sm:$0xf]
  %v1347 = vld [vmem:[%s1336 + $0x28] sm:$0xf]
  %v1348 = vld [vmem:[%s1336 + $0x2c] sm:$0xf]
  %v1349 = vld [vmem:[%s1336 + $0x30] sm:$0xf]
  %v1350 = vld [vmem:[%s1336 + $0x34] sm:$0xf]
  %v1351 = vld [vmem:[%s1336 + $0x38] sm:$0xf]
  %v1352 = vld [vmem:[%s1336 + $0x3c] sm:$0xf]
  %v1369 = vunpack.c.l.b16 %v1337
  %v1370 = vunpack.c.l.b16 %v1338
  %v1371 = vunpack.c.l.b16 %v1339
  %v1372 = vunpack.c.l.b16 %v1340
  %v1373 = vunpack.c.l.b16 %v1341
  %v1374 = vunpack.c.l.b16 %v1342
  %v1375 = vunpack.c.l.b16 %v1343
  %v1376 = vunpack.c.l.b16 %v1344
  %v1377 = vunpack.c.l.b16 %v1345
  %v1378 = vunpack.c.l.b16 %v1346
  %v1379 = vunpack.c.l.b16 %v1347
  %v1380 = vunpack.c.l.b16 %v1348
  %v1381 = vunpack.c.l.b16 %v1349
  %v1382 = vunpack.c.l.b16 %v1350
  %v1383 = vunpack.c.l.b16 %v1351
  %v1384 = vunpack.c.l.b16 %v1352
  %v1385 = vpack.c.b16 %v1370, %v1369
  %v1386 = vpack.c.b16 %v1372, %v1371
  %v1387 = vpack.c.b16 %v1374, %v1373
  %v1388 = vpack.c.b16 %v1376, %v1375
  %v1389 = vpack.c.b16 %v1378, %v1377
  %v1390 = vpack.c.b16 %v1380, %v1379
  %v1391 = vpack.c.b16 %v1382, %v1381
  %v1392 = vpack.c.b16 %v1384, %v1383
  %1401 = vmatpush.bf16.msra.mxu0 %v1392
  %1402 = vmatpush.bf16.msra.mxu0 %v1391
  %1403 = vmatpush.bf16.msra.mxu0 %v1390
  %1404 = vmatpush.bf16.msra.mxu0 %v1389
  %1405 = vmatpush.bf16.msra.mxu0 %v1388
  %1406 = vmatpush.bf16.msra.mxu0 %v1387
  %1407 = vmatpush.bf16.msra.mxu0 %v1386
  %1408 = vmatpush.bf16.msra.mxu0 %v1385
  %1409 = vmatmul.bf16.gmra.mxu0 %v1304
  %v1410 = vpop.f32.mrf.mxu0
  %v1411 = vadd.f32 0.0, %v1410
  %v1412 = vpop.f32.mrf.mxu0
  %v1413 = vadd.f32 0.0, %v1412
  %1414 = vmatmul.bf16.gmra.mxu0 %v1305
  %v1415 = vpop.f32.mrf.mxu0
  %v1416 = vadd.f32 0.0, %v1415
  %v1417 = vpop.f32.mrf.mxu0
  %v1418 = vadd.f32 0.0, %v1417
  %1419 = vmatmul.bf16.gmra.mxu0 %v1306
  %v1420 = vpop.f32.mrf.mxu0
  %v1421 = vadd.f32 0.0, %v1420
  %v1422 = vpop.f32.mrf.mxu0
  %v1423 = vadd.f32 0.0, %v1422
  %1424 = vmatmul.bf16.gmra.mxu0 %v1307
  %v1425 = vpop.f32.mrf.mxu0
  %v1426 = vadd.f32 0.0, %v1425
  %v1427 = vpop.f32.mrf.mxu0
  %v1428 = vadd.f32 0.0, %v1427
  %1429 = vmatmul.bf16.gmra.mxu0 %v1308
  %v1430 = vpop.f32.mrf.mxu0
  %v1431 = vadd.f32 0.0, %v1430
  %v1432 = vpop.f32.mrf.mxu0
  %v1433 = vadd.f32 0.0, %v1432
  %1434 = vmatmul.bf16.gmra.mxu0 %v1309
  %v1435 = vpop.f32.mrf.mxu0
  %v1436 = vadd.f32 0.0, %v1435
  %v1437 = vpop.f32.mrf.mxu0
  %v1438 = vadd.f32 0.0, %v1437
  %1439 = vmatmul.bf16.gmra.mxu0 %v1310
  %v1440 = vpop.f32.mrf.mxu0
  %v1441 = vadd.f32 0.0, %v1440
  %v1442 = vpop.f32.mrf.mxu0
  %v1443 = vadd.f32 0.0, %v1442
  %1444 = vmatmul.bf16.gmra.mxu0 %v1311
  %v1445 = vpop.f32.mrf.mxu0
  %v1446 = vadd.f32 0.0, %v1445
  %v1447 = vpop.f32.mrf.mxu0
  %v1448 = vadd.f32 0.0, %v1447
  %1449 = vmatmul.bf16.gmra.mxu0 %v1312
  %v1450 = vpop.f32.mrf.mxu0
  %v1451 = vadd.f32 0.0, %v1450
  %v1452 = vpop.f32.mrf.mxu0
  %v1453 = vadd.f32 0.0, %v1452
  %1454 = vmatmul.bf16.gmra.mxu0 %v1313
  %v1455 = vpop.f32.mrf.mxu0
  %v1456 = vadd.f32 0.0, %v1455
  %v1457 = vpop.f32.mrf.mxu0
  %v1458 = vadd.f32 0.0, %v1457
  %1459 = vmatmul.bf16.gmra.mxu0 %v1314
  %v1460 = vpop.f32.mrf.mxu0
  %v1461 = vadd.f32 0.0, %v1460
  %v1462 = vpop.f32.mrf.mxu0
  %v1463 = vadd.f32 0.0, %v1462
  %1464 = vmatmul.bf16.gmra.mxu0 %v1315
  %v1465 = vpop.f32.mrf.mxu0
  %v1466 = vadd.f32 0.0, %v1465
  %v1467 = vpop.f32.mrf.mxu0
  %v1468 = vadd.f32 0.0, %v1467
  %1469 = vmatmul.bf16.gmra.mxu0 %v1316
  %v1470 = vpop.f32.mrf.mxu0
  %v1471 = vadd.f32 0.0, %v1470
  %v1472 = vpop.f32.mrf.mxu0
  %v1473 = vadd.f32 0.0, %v1472
  %1474 = vmatmul.bf16.gmra.mxu0 %v1317
  %v1475 = vpop.f32.mrf.mxu0
  %v1476 = vadd.f32 0.0, %v1475
  %v1477 = vpop.f32.mrf.mxu0
  %v1478 = vadd.f32 0.0, %v1477
  %1479 = vmatmul.bf16.gmra.mxu0 %v1318
  %v1480 = vpop.f32.mrf.mxu0
  %v1481 = vadd.f32 0.0, %v1480
  %v1482 = vpop.f32.mrf.mxu0
  %v1483 = vadd.f32 0.0, %v1482
  %1484 = vmatmul.bf16.gmra.mxu0 %v1319
  %v1485 = vpop.f32.mrf.mxu0
  %v1486 = vadd.f32 0.0, %v1485
  %v1487 = vpop.f32.mrf.mxu0
  %v1488 = vadd.f32 0.0, %v1487
  %1489 = vmatmul.bf16.gmra.mxu0 %v1320
  %v1490 = vpop.f32.mrf.mxu0
  %v1491 = vadd.f32 0.0, %v1490
  %v1492 = vpop.f32.mrf.mxu0
  %v1493 = vadd.f32 0.0, %v1492
  %1494 = vmatmul.bf16.gmra.mxu0 %v1321
  %v1495 = vpop.f32.mrf.mxu0
  %v1496 = vadd.f32 0.0, %v1495
  %v1497 = vpop.f32.mrf.mxu0
  %v1498 = vadd.f32 0.0, %v1497
  %1499 = vmatmul.bf16.gmra.mxu0 %v1322
  %v1500 = vpop.f32.mrf.mxu0
  %v1501 = vadd.f32 0.0, %v1500
  %v1502 = vpop.f32.mrf.mxu0
  %v1503 = vadd.f32 0.0, %v1502
  %1504 = vmatmul.bf16.gmra.mxu0 %v1323
  %v1505 = vpop.f32.mrf.mxu0
  %v1506 = vadd.f32 0.0, %v1505
  %v1507 = vpop.f32.mrf.mxu0
  %v1508 = vadd.f32 0.0, %v1507
  %1509 = vmatmul.bf16.gmra.mxu0 %v1324
  %v1510 = vpop.f32.mrf.mxu0
  %v1511 = vadd.f32 0.0, %v1510
  %v1512 = vpop.f32.mrf.mxu0
  %v1513 = vadd.f32 0.0, %v1512
  %1514 = vmatmul.bf16.gmra.mxu0 %v1325
  %v1515 = vpop.f32.mrf.mxu0
  %v1516 = vadd.f32 0.0, %v1515
  %v1517 = vpop.f32.mrf.mxu0
  %v1518 = vadd.f32 0.0, %v1517
  %1519 = vmatmul.bf16.gmra.mxu0 %v1326
  %v1520 = vpop.f32.mrf.mxu0
  %v1521 = vadd.f32 0.0, %v1520
  %v1522 = vpop.f32.mrf.mxu0
  %v1523 = vadd.f32 0.0, %v1522
  %1524 = vmatmul.bf16.gmra.mxu0 %v1327
  %v1525 = vpop.f32.mrf.mxu0
  %v1526 = vadd.f32 0.0, %v1525
  %v1527 = vpop.f32.mrf.mxu0
  %v1528 = vadd.f32 0.0, %v1527
  %1529 = vmatmul.bf16.gmra.mxu0 %v1328
  %v1530 = vpop.f32.mrf.mxu0
  %v1531 = vadd.f32 0.0, %v1530
  %v1532 = vpop.f32.mrf.mxu0
  %v1533 = vadd.f32 0.0, %v1532
  %1534 = vmatmul.bf16.gmra.mxu0 %v1329
  %v1535 = vpop.f32.mrf.mxu0
  %v1536 = vadd.f32 0.0, %v1535
  %v1537 = vpop.f32.mrf.mxu0
  %v1538 = vadd.f32 0.0, %v1537
  %1539 = vmatmul.bf16.gmra.mxu0 %v1330
  %v1540 = vpop.f32.mrf.mxu0
  %v1541 = vadd.f32 0.0, %v1540
  %v1542 = vpop.f32.mrf.mxu0
  %v1543 = vadd.f32 0.0, %v1542
  %1544 = vmatmul.bf16.gmra.mxu0 %v1331
  %v1545 = vpop.f32.mrf.mxu0
  %v1546 = vadd.f32 0.0, %v1545
  %v1547 = vpop.f32.mrf.mxu0
  %v1548 = vadd.f32 0.0, %v1547
  %1549 = vmatmul.bf16.gmra.mxu0 %v1332
  %v1550 = vpop.f32.mrf.mxu0
  %v1551 = vadd.f32 0.0, %v1550
  %v1552 = vpop.f32.mrf.mxu0
  %v1553 = vadd.f32 0.0, %v1552
  %1554 = vmatmul.bf16.gmra.mxu0 %v1333
  %v1555 = vpop.f32.mrf.mxu0
  %v1556 = vadd.f32 0.0, %v1555
  %v1557 = vpop.f32.mrf.mxu0
  %v1558 = vadd.f32 0.0, %v1557
  %1559 = vmatmul.bf16.gmra.mxu0 %v1334
  %v1560 = vpop.f32.mrf.mxu0
  %v1561 = vadd.f32 0.0, %v1560
  %v1562 = vpop.f32.mrf.mxu0
  %v1563 = vadd.f32 0.0, %v1562
  %1564 = vmatmul.bf16.gmra.mxu0 %v1335
  %v1565 = vpop.f32.mrf.mxu0
  %v1566 = vadd.f32 0.0, %v1565
  %v1567 = vpop.f32.mrf.mxu0
  %v1568 = vadd.f32 0.0, %v1567
  %1569 = vdwg.mxu0
  %v1570 = vld [vmem:[#allocation4] sm:$0xff]
  %v1571 = vld [vmem:[#allocation4 + $0x8] sm:$0xff]
  %v1572 = vld [vmem:[#allocation4 + $0x10] sm:$0xff]
  %v1573 = vld [vmem:[#allocation4 + $0x18] sm:$0xff]
  %v1574 = vld [vmem:[#allocation4 + $0x20] sm:$0xff]
  %v1575 = vld [vmem:[#allocation4 + $0x28] sm:$0xff]
  %v1576 = vld [vmem:[#allocation4 + $0x30] sm:$0xff]
  %v1577 = vld [vmem:[#allocation4 + $0x38] sm:$0xff]
  %v1578 = vld [vmem:[#allocation4 + $0x40] sm:$0xff]
  %v1579 = vld [vmem:[#allocation4 + $0x48] sm:$0xff]
  %v1580 = vld [vmem:[#allocation4 + $0x50] sm:$0xff]
  %v1581 = vld [vmem:[#allocation4 + $0x58] sm:$0xff]
  %v1582 = vld [vmem:[#allocation4 + $0x60] sm:$0xff]
  %v1583 = vld [vmem:[#allocation4 + $0x68] sm:$0xff]
  %v1584 = vld [vmem:[#allocation4 + $0x70] sm:$0xff]
  %v1585 = vld [vmem:[#allocation4 + $0x78] sm:$0xff]
  %v1586 = vld [vmem:[#allocation4 + $0x80] sm:$0xff]
  %v1587 = vld [vmem:[#allocation4 + $0x88] sm:$0xff]
  %v1588 = vld [vmem:[#allocation4 + $0x90] sm:$0xff]
  %v1589 = vld [vmem:[#allocation4 + $0x98] sm:$0xff]
  %v1590 = vld [vmem:[#allocation4 + $0xa0] sm:$0xff]
  %v1591 = vld [vmem:[#allocation4 + $0xa8] sm:$0xff]
  %v1592 = vld [vmem:[#allocation4 + $0xb0] sm:$0xff]
  %v1593 = vld [vmem:[#allocation4 + $0xb8] sm:$0xff]
  %v1594 = vld [vmem:[#allocation4 + $0xc0] sm:$0xff]
  %v1595 = vld [vmem:[#allocation4 + $0xc8] sm:$0xff]
  %v1596 = vld [vmem:[#allocation4 + $0xd0] sm:$0xff]
  %v1597 = vld [vmem:[#allocation4 + $0xd8] sm:$0xff]
  %v1598 = vld [vmem:[#allocation4 + $0xe0] sm:$0xff]
  %v1599 = vld [vmem:[#allocation4 + $0xe8] sm:$0xff]
  %v1600 = vld [vmem:[#allocation4 + $0xf0] sm:$0xff]
  %v1601 = vld [vmem:[#allocation4 + $0xf8] sm:$0xff]
  %v1602 = vld [vmem:[#allocation4 + $0x100] sm:$0xff]
  %v1603 = vld [vmem:[#allocation4 + $0x108] sm:$0xff]
  %v1604 = vld [vmem:[#allocation4 + $0x110] sm:$0xff]
  %v1605 = vld [vmem:[#allocation4 + $0x118] sm:$0xff]
  %v1606 = vld [vmem:[#allocation4 + $0x120] sm:$0xff]
  %v1607 = vld [vmem:[#allocation4 + $0x128] sm:$0xff]
  %v1608 = vld [vmem:[#allocation4 + $0x130] sm:$0xff]
  %v1609 = vld [vmem:[#allocation4 + $0x138] sm:$0xff]
  %v1610 = vld [vmem:[#allocation4 + $0x140] sm:$0xff]
  %v1611 = vld [vmem:[#allocation4 + $0x148] sm:$0xff]
  %v1612 = vld [vmem:[#allocation4 + $0x150] sm:$0xff]
  %v1613 = vld [vmem:[#allocation4 + $0x158] sm:$0xff]
  %v1614 = vld [vmem:[#allocation4 + $0x160] sm:$0xff]
  %v1615 = vld [vmem:[#allocation4 + $0x168] sm:$0xff]
  %v1616 = vld [vmem:[#allocation4 + $0x170] sm:$0xff]
  %v1617 = vld [vmem:[#allocation4 + $0x178] sm:$0xff]
  %v1618 = vld [vmem:[#allocation4 + $0x180] sm:$0xff]
  %v1619 = vld [vmem:[#allocation4 + $0x188] sm:$0xff]
  %v1620 = vld [vmem:[#allocation4 + $0x190] sm:$0xff]
  %v1621 = vld [vmem:[#allocation4 + $0x198] sm:$0xff]
  %v1622 = vld [vmem:[#allocation4 + $0x1a0] sm:$0xff]
  %v1623 = vld [vmem:[#allocation4 + $0x1a8] sm:$0xff]
  %v1624 = vld [vmem:[#allocation4 + $0x1b0] sm:$0xff]
  %v1625 = vld [vmem:[#allocation4 + $0x1b8] sm:$0xff]
  %v1626 = vld [vmem:[#allocation4 + $0x1c0] sm:$0xff]
  %v1627 = vld [vmem:[#allocation4 + $0x1c8] sm:$0xff]
  %v1628 = vld [vmem:[#allocation4 + $0x1d0] sm:$0xff]
  %v1629 = vld [vmem:[#allocation4 + $0x1d8] sm:$0xff]
  %v1630 = vld [vmem:[#allocation4 + $0x1e0] sm:$0xff]
  %v1631 = vld [vmem:[#allocation4 + $0x1e8] sm:$0xff]
  %v1632 = vld [vmem:[#allocation4 + $0x1f0] sm:$0xff]
  %v1633 = vld [vmem:[#allocation4 + $0x1f8] sm:$0xff]
  %v1634 = vadd.f32 %v1570, %v1411
  %v1635 = vadd.f32 %v1571, %v1413
  %v1636 = vadd.f32 %v1572, %v1416
  %v1637 = vadd.f32 %v1573, %v1418
  %v1638 = vadd.f32 %v1574, %v1421
  %v1639 = vadd.f32 %v1575, %v1423
  %v1640 = vadd.f32 %v1576, %v1426
  %v1641 = vadd.f32 %v1577, %v1428
  %v1642 = vadd.f32 %v1578, %v1431
  %v1643 = vadd.f32 %v1579, %v1433
  %v1644 = vadd.f32 %v1580, %v1436
  %v1645 = vadd.f32 %v1581, %v1438
  %v1646 = vadd.f32 %v1582, %v1441
  %v1647 = vadd.f32 %v1583, %v1443
  %v1648 = vadd.f32 %v1584, %v1446
  %v1649 = vadd.f32 %v1585, %v1448
  %v1650 = vadd.f32 %v1586, %v1451
  %v1651 = vadd.f32 %v1587, %v1453
  %v1652 = vadd.f32 %v1588, %v1456
  %v1653 = vadd.f32 %v1589, %v1458
  %v1654 = vadd.f32 %v1590, %v1461
  %v1655 = vadd.f32 %v1591, %v1463
  %v1656 = vadd.f32 %v1592, %v1466
  %v1657 = vadd.f32 %v1593, %v1468
  %v1658 = vadd.f32 %v1594, %v1471
  %v1659 = vadd.f32 %v1595, %v1473
  %v1660 = vadd.f32 %v1596, %v1476
  %v1661 = vadd.f32 %v1597, %v1478
  %v1662 = vadd.f32 %v1598, %v1481
  %v1663 = vadd.f32 %v1599, %v1483
  %v1664 = vadd.f32 %v1600, %v1486
  %v1665 = vadd.f32 %v1601, %v1488
  %v1666 = vadd.f32 %v1602, %v1491
  %v1667 = vadd.f32 %v1603, %v1493
  %v1668 = vadd.f32 %v1604, %v1496
  %v1669 = vadd.f32 %v1605, %v1498
  %v1670 = vadd.f32 %v1606, %v1501
  %v1671 = vadd.f32 %v1607, %v1503
  %v1672 = vadd.f32 %v1608, %v1506
  %v1673 = vadd.f32 %v1609, %v1508
  %v1674 = vadd.f32 %v1610, %v1511
  %v1675 = vadd.f32 %v1611, %v1513
  %v1676 = vadd.f32 %v1612, %v1516
  %v1677 = vadd.f32 %v1613, %v1518
  %v1678 = vadd.f32 %v1614, %v1521
  %v1679 = vadd.f32 %v1615, %v1523
  %v1680 = vadd.f32 %v1616, %v1526
  %v1681 = vadd.f32 %v1617, %v1528
  %v1682 = vadd.f32 %v1618, %v1531
  %v1683 = vadd.f32 %v1619, %v1533
  %v1684 = vadd.f32 %v1620, %v1536
  %v1685 = vadd.f32 %v1621, %v1538
  %v1686 = vadd.f32 %v1622, %v1541
  %v1687 = vadd.f32 %v1623, %v1543
  %v1688 = vadd.f32 %v1624, %v1546
  %v1689 = vadd.f32 %v1625, %v1548
  %v1690 = vadd.f32 %v1626, %v1551
  %v1691 = vadd.f32 %v1627, %v1553
  %v1692 = vadd.f32 %v1628, %v1556
  %v1693 = vadd.f32 %v1629, %v1558
  %v1694 = vadd.f32 %v1630, %v1561
  %v1695 = vadd.f32 %v1631, %v1563
  %v1696 = vadd.f32 %v1632, %v1566
  %v1697 = vadd.f32 %v1633, %v1568
  %1698 = vst [vmem:[#allocation4] sm:$0xff] %v1634
  %1699 = vst [vmem:[#allocation4 + $0x8] sm:$0xff] %v1635
  %1700 = vst [vmem:[#allocation4 + $0x10] sm:$0xff] %v1636
  %1701 = vst [vmem:[#allocation4 + $0x18] sm:$0xff] %v1637
  %1702 = vst [vmem:[#allocation4 + $0x20] sm:$0xff] %v1638
  %1703 = vst [vmem:[#allocation4 + $0x28] sm:$0xff] %v1639
  %1704 = vst [vmem:[#allocation4 + $0x30] sm:$0xff] %v1640
  %1705 = vst [vmem:[#allocation4 + $0x38] sm:$0xff] %v1641
  %1706 = vst [vmem:[#allocation4 + $0x40] sm:$0xff] %v1642
  %1707 = vst [vmem:[#allocation4 + $0x48] sm:$0xff] %v1643
  %1708 = vst [vmem:[#allocation4 + $0x50] sm:$0xff] %v1644
  %1709 = vst [vmem:[#allocation4 + $0x58] sm:$0xff] %v1645
  %1710 = vst [vmem:[#allocation4 + $0x60] sm:$0xff] %v1646
  %1711 = vst [vmem:[#allocation4 + $0x68] sm:$0xff] %v1647
  %1712 = vst [vmem:[#allocation4 + $0x70] sm:$0xff] %v1648
  %1713 = vst [vmem:[#allocation4 + $0x78] sm:$0xff] %v1649
  %1714 = vst [vmem:[#allocation4 + $0x80] sm:$0xff] %v1650
  %1715 = vst [vmem:[#allocation4 + $0x88] sm:$0xff] %v1651
  %1716 = vst [vmem:[#allocation4 + $0x90] sm:$0xff] %v1652
  %1717 = vst [vmem:[#allocation4 + $0x98] sm:$0xff] %v1653
  %1718 = vst [vmem:[#allocation4 + $0xa0] sm:$0xff] %v1654
  %1719 = vst [vmem:[#allocation4 + $0xa8] sm:$0xff] %v1655
  %1720 = vst [vmem:[#allocation4 + $0xb0] sm:$0xff] %v1656
  %1721 = vst [vmem:[#allocation4 + $0xb8] sm:$0xff] %v1657
  %1722 = vst [vmem:[#allocation4 + $0xc0] sm:$0xff] %v1658
  %1723 = vst [vmem:[#allocation4 + $0xc8] sm:$0xff] %v1659
  %1724 = vst [vmem:[#allocation4 + $0xd0] sm:$0xff] %v1660
  %1725 = vst [vmem:[#allocation4 + $0xd8] sm:$0xff] %v1661
  %1726 = vst [vmem:[#allocation4 + $0xe0] sm:$0xff] %v1662
  %1727 = vst [vmem:[#allocation4 + $0xe8] sm:$0xff] %v1663
  %1728 = vst [vmem:[#allocation4 + $0xf0] sm:$0xff] %v1664
  %1729 = vst [vmem:[#allocation4 + $0xf8] sm:$0xff] %v1665
  %1730 = vst [vmem:[#allocation4 + $0x100] sm:$0xff] %v1666
  %1731 = vst [vmem:[#allocation4 + $0x108] sm:$0xff] %v1667
  %1732 = vst [vmem:[#allocation4 + $0x110] sm:$0xff] %v1668
  %1733 = vst [vmem:[#allocation4 + $0x118] sm:$0xff] %v1669
  %1734 = vst [vmem:[#allocation4 + $0x120] sm:$0xff] %v1670
  %1735 = vst [vmem:[#allocation4 + $0x128] sm:$0xff] %v1671
  %1736 = vst [vmem:[#allocation4 + $0x130] sm:$0xff] %v1672
  %1737 = vst [vmem:[#allocation4 + $0x138] sm:$0xff] %v1673
  %1738 = vst [vmem:[#allocation4 + $0x140] sm:$0xff] %v1674
  %1739 = vst [vmem:[#allocation4 + $0x148] sm:$0xff] %v1675
  %1740 = vst [vmem:[#allocation4 + $0x150] sm:$0xff] %v1676
  %1741 = vst [vmem:[#allocation4 + $0x158] sm:$0xff] %v1677
  %1742 = vst [vmem:[#allocation4 + $0x160] sm:$0xff] %v1678
  %1743 = vst [vmem:[#allocation4 + $0x168] sm:$0xff] %v1679
  %1744 = vst [vmem:[#allocation4 + $0x170] sm:$0xff] %v1680
  %1745 = vst [vmem:[#allocation4 + $0x178] sm:$0xff] %v1681
  %1746 = vst [vmem:[#allocation4 + $0x180] sm:$0xff] %v1682
  %1747 = vst [vmem:[#allocation4 + $0x188] sm:$0xff] %v1683
  %1748 = vst [vmem:[#allocation4 + $0x190] sm:$0xff] %v1684
  %1749 = vst [vmem:[#allocation4 + $0x198] sm:$0xff] %v1685
  %1750 = vst [vmem:[#allocation4 + $0x1a0] sm:$0xff] %v1686
  %1751 = vst [vmem:[#allocation4 + $0x1a8] sm:$0xff] %v1687
  %1752 = vst [vmem:[#allocation4 + $0x1b0] sm:$0xff] %v1688
  %1753 = vst [vmem:[#allocation4 + $0x1b8] sm:$0xff] %v1689
  %1754 = vst [vmem:[#allocation4 + $0x1c0] sm:$0xff] %v1690
  %1755 = vst [vmem:[#allocation4 + $0x1c8] sm:$0xff] %v1691
  %1756 = vst [vmem:[#allocation4 + $0x1d0] sm:$0xff] %v1692
  %1757 = vst [vmem:[#allocation4 + $0x1d8] sm:$0xff] %v1693
  %1758 = vst [vmem:[#allocation4 + $0x1e0] sm:$0xff] %v1694
  %1759 = vst [vmem:[#allocation4 + $0x1e8] sm:$0xff] %v1695
  %1760 = vst [vmem:[#allocation4 + $0x1f0] sm:$0xff] %v1696
  %1761 = vst [vmem:[#allocation4 + $0x1f8] sm:$0xff] %v1697
  %v1762 = vld [vmem:[%s260] sm:$0xff]
  %v1763 = vld [vmem:[%s260 + $0x8] sm:$0xff]
  %v1764 = vld [vmem:[%s260 + $0x18] sm:$0xff]
  %v1765 = vld [vmem:[%s260 + $0x20] sm:$0xff]
  %v1766 = vld [vmem:[%s260 + $0x30] sm:$0xff]
  %v1767 = vld [vmem:[%s260 + $0x38] sm:$0xff]
  %v1768 = vld [vmem:[%s260 + $0x48] sm:$0xff]
  %v1769 = vld [vmem:[%s260 + $0x50] sm:$0xff]
  %v1770 = vld [vmem:[%s260 + $0x60] sm:$0xff]
  %v1771 = vld [vmem:[%s260 + $0x68] sm:$0xff]
  %v1772 = vld [vmem:[%s260 + $0x78] sm:$0xff]
  %v1773 = vld [vmem:[%s260 + $0x80] sm:$0xff]
  %v1774 = vld [vmem:[%s260 + $0x90] sm:$0xff]
  %v1775 = vld [vmem:[%s260 + $0x98] sm:$0xff]
  %v1776 = vld [vmem:[%s260 + $0xa8] sm:$0xff]
  %v1777 = vld [vmem:[%s260 + $0xb0] sm:$0xff]
  %v1778 = vld [vmem:[%s260 + $0xc0] sm:$0xff]
  %v1779 = vld [vmem:[%s260 + $0xc8] sm:$0xff]
  %v1780 = vld [vmem:[%s260 + $0xd8] sm:$0xff]
  %v1781 = vld [vmem:[%s260 + $0xe0] sm:$0xff]
  %v1782 = vld [vmem:[%s260 + $0xf0] sm:$0xff]
  %v1783 = vld [vmem:[%s260 + $0xf8] sm:$0xff]
  %v1784 = vld [vmem:[%s260 + $0x108] sm:$0xff]
  %v1785 = vld [vmem:[%s260 + $0x110] sm:$0xff]
  %v1786 = vld [vmem:[%s260 + $0x120] sm:$0xff]
  %v1787 = vld [vmem:[%s260 + $0x128] sm:$0xff]
  %v1788 = vld [vmem:[%s260 + $0x138] sm:$0xff]
  %v1789 = vld [vmem:[%s260 + $0x140] sm:$0xff]
  %v1790 = vld [vmem:[%s260 + $0x150] sm:$0xff]
  %v1791 = vld [vmem:[%s260 + $0x158] sm:$0xff]
  %v1792 = vld [vmem:[%s260 + $0x168] sm:$0xff]
  %v1793 = vld [vmem:[%s260 + $0x170] sm:$0xff]
  %v1794 = vld [vmem:[%s260 + $0x1b0] sm:$0xff]
  %v1795 = vld [vmem:[%s260 + $0x1b8] sm:$0xff]
  %v1796 = vld [vmem:[%s260 + $0x1c8] sm:$0xff]
  %v1797 = vld [vmem:[%s260 + $0x1d0] sm:$0xff]
  %v1798 = vld [vmem:[%s260 + $0x1e0] sm:$0xff]
  %v1799 = vld [vmem:[%s260 + $0x1e8] sm:$0xff]
  %v1800 = vld [vmem:[%s260 + $0x1f8] sm:$0xff]
  %v1801 = vld [vmem:[%s260 + $0x200] sm:$0xff]
  %v1802 = vld [vmem:[%s260 + $0x210] sm:$0xff]
  %v1803 = vld [vmem:[%s260 + $0x218] sm:$0xff]
  %v1804 = vld [vmem:[%s260 + $0x228] sm:$0xff]
  %v1805 = vld [vmem:[%s260 + $0x230] sm:$0xff]
  %v1806 = vld [vmem:[%s260 + $0x240] sm:$0xff]
  %v1807 = vld [vmem:[%s260 + $0x248] sm:$0xff]
  %v1808 = vld [vmem:[%s260 + $0x258] sm:$0xff]
  %v1809 = vld [vmem:[%s260 + $0x260] sm:$0xff]
  %v1810 = vld [vmem:[%s260 + $0x270] sm:$0xff]
  %v1811 = vld [vmem:[%s260 + $0x278] sm:$0xff]
  %v1812 = vld [vmem:[%s260 + $0x288] sm:$0xff]
  %v1813 = vld [vmem:[%s260 + $0x290] sm:$0xff]
  %v1814 = vld [vmem:[%s260 + $0x2a0] sm:$0xff]
  %v1815 = vld [vmem:[%s260 + $0x2a8] sm:$0xff]
  %v1816 = vld [vmem:[%s260 + $0x2b8] sm:$0xff]
  %v1817 = vld [vmem:[%s260 + $0x2c0] sm:$0xff]
  %v1818 = vld [vmem:[%s260 + $0x2d0] sm:$0xff]
  %v1819 = vld [vmem:[%s260 + $0x2d8] sm:$0xff]
  %v1820 = vld [vmem:[%s260 + $0x2e8] sm:$0xff]
  %v1821 = vld [vmem:[%s260 + $0x2f0] sm:$0xff]
  %v1822 = vld [vmem:[%s260 + $0x300] sm:$0xff]
  %v1823 = vld [vmem:[%s260 + $0x308] sm:$0xff]
  %v1824 = vld [vmem:[%s260 + $0x318] sm:$0xff]
  %v1825 = vld [vmem:[%s260 + $0x320] sm:$0xff]
  %v1826 = vpack.c.bf16 %v1763, %v1762
  %v1827 = vpack.c.bf16 %v1765, %v1764
  %v1828 = vpack.c.bf16 %v1767, %v1766
  %v1829 = vpack.c.bf16 %v1769, %v1768
  %v1830 = vpack.c.bf16 %v1771, %v1770
  %v1831 = vpack.c.bf16 %v1773, %v1772
  %v1832 = vpack.c.bf16 %v1775, %v1774
  %v1833 = vpack.c.bf16 %v1777, %v1776
  %v1834 = vpack.c.bf16 %v1779, %v1778
  %v1835 = vpack.c.bf16 %v1781, %v1780
  %v1836 = vpack.c.bf16 %v1783, %v1782
  %v1837 = vpack.c.bf16 %v1785, %v1784
  %v1838 = vpack.c.bf16 %v1787, %v1786
  %v1839 = vpack.c.bf16 %v1789, %v1788
  %v1840 = vpack.c.bf16 %v1791, %v1790
  %v1841 = vpack.c.bf16 %v1793, %v1792
  %v1842 = vpack.c.bf16 %v1795, %v1794
  %v1843 = vpack.c.bf16 %v1797, %v1796
  %v1844 = vpack.c.bf16 %v1799, %v1798
  %v1845 = vpack.c.bf16 %v1801, %v1800
  %v1846 = vpack.c.bf16 %v1803, %v1802
  %v1847 = vpack.c.bf16 %v1805, %v1804
  %v1848 = vpack.c.bf16 %v1807, %v1806
  %v1849 = vpack.c.bf16 %v1809, %v1808
  %v1850 = vpack.c.bf16 %v1811, %v1810
  %v1851 = vpack.c.bf16 %v1813, %v1812
  %v1852 = vpack.c.bf16 %v1815, %v1814
  %v1853 = vpack.c.bf16 %v1817, %v1816
  %v1854 = vpack.c.bf16 %v1819, %v1818
  %v1855 = vpack.c.bf16 %v1821, %v1820
  %v1856 = vpack.c.bf16 %v1823, %v1822
  %v1857 = vpack.c.bf16 %v1825, %v1824
  %s1858 = scalar_lea.vmem %s1, 192
  %v1859 = vld [vmem:[%s1858] sm:$0xf]
  %v1860 = vld [vmem:[%s1858 + $0x4] sm:$0xf]
  %v1861 = vld [vmem:[%s1858 + $0x8] sm:$0xf]
  %v1862 = vld [vmem:[%s1858 + $0xc] sm:$0xf]
  %v1863 = vld [vmem:[%s1858 + $0x10] sm:$0xf]
  %v1864 = vld [vmem:[%s1858 + $0x14] sm:$0xf]
  %v1865 = vld [vmem:[%s1858 + $0x18] sm:$0xf]
  %v1866 = vld [vmem:[%s1858 + $0x1c] sm:$0xf]
  %v1867 = vld [vmem:[%s1858 + $0x20] sm:$0xf]
  %v1868 = vld [vmem:[%s1858 + $0x24] sm:$0xf]
  %v1869 = vld [vmem:[%s1858 + $0x28] sm:$0xf]
  %v1870 = vld [vmem:[%s1858 + $0x2c] sm:$0xf]
  %v1871 = vld [vmem:[%s1858 + $0x30] sm:$0xf]
  %v1872 = vld [vmem:[%s1858 + $0x34] sm:$0xf]
  %v1873 = vld [vmem:[%s1858 + $0x38] sm:$0xf]
  %v1874 = vld [vmem:[%s1858 + $0x3c] sm:$0xf]
  %v1891 = vunpack.c.l.b16 %v1859
  %v1892 = vunpack.c.l.b16 %v1860
  %v1893 = vunpack.c.l.b16 %v1861
  %v1894 = vunpack.c.l.b16 %v1862
  %v1895 = vunpack.c.l.b16 %v1863
  %v1896 = vunpack.c.l.b16 %v1864
  %v1897 = vunpack.c.l.b16 %v1865
  %v1898 = vunpack.c.l.b16 %v1866
  %v1899 = vunpack.c.l.b16 %v1867
  %v1900 = vunpack.c.l.b16 %v1868
  %v1901 = vunpack.c.l.b16 %v1869
  %v1902 = vunpack.c.l.b16 %v1870
  %v1903 = vunpack.c.l.b16 %v1871
  %v1904 = vunpack.c.l.b16 %v1872
  %v1905 = vunpack.c.l.b16 %v1873
  %v1906 = vunpack.c.l.b16 %v1874
  %v1907 = vpack.c.b16 %v1892, %v1891
  %v1908 = vpack.c.b16 %v1894, %v1893
  %v1909 = vpack.c.b16 %v1896, %v1895
  %v1910 = vpack.c.b16 %v1898, %v1897
  %v1911 = vpack.c.b16 %v1900, %v1899
  %v1912 = vpack.c.b16 %v1902, %v1901
  %v1913 = vpack.c.b16 %v1904, %v1903
  %v1914 = vpack.c.b16 %v1906, %v1905
  %1923 = vmatpush.bf16.msra.mxu0 %v1914
  %1924 = vmatpush.bf16.msra.mxu0 %v1913
  %1925 = vmatpush.bf16.msra.mxu0 %v1912
  %1926 = vmatpush.bf16.msra.mxu0 %v1911
  %1927 = vmatpush.bf16.msra.mxu0 %v1910
  %1928 = vmatpush.bf16.msra.mxu0 %v1909
  %1929 = vmatpush.bf16.msra.mxu0 %v1908
  %1930 = vmatpush.bf16.msra.mxu0 %v1907
  %1931 = vmatmul.bf16.gmra.mxu0 %v1826
  %v1932 = vpop.f32.mrf.mxu0
  %v1933 = vadd.f32 0.0, %v1932
  %v1934 = vpop.f32.mrf.mxu0
  %v1935 = vadd.f32 0.0, %v1934
  %1936 = vmatmul.bf16.gmra.mxu0 %v1827
  %v1937 = vpop.f32.mrf.mxu0
  %v1938 = vadd.f32 0.0, %v1937
  %v1939 = vpop.f32.mrf.mxu0
  %v1940 = vadd.f32 0.0, %v1939
  %1941 = vmatmul.bf16.gmra.mxu0 %v1828
  %v1942 = vpop.f32.mrf.mxu0
  %v1943 = vadd.f32 0.0, %v1942
  %v1944 = vpop.f32.mrf.mxu0
  %v1945 = vadd.f32 0.0, %v1944
  %1946 = vmatmul.bf16.gmra.mxu0 %v1829
  %v1947 = vpop.f32.mrf.mxu0
  %v1948 = vadd.f32 0.0, %v1947
  %v1949 = vpop.f32.mrf.mxu0
  %v1950 = vadd.f32 0.0, %v1949
  %1951 = vmatmul.bf16.gmra.mxu0 %v1830
  %v1952 = vpop.f32.mrf.mxu0
  %v1953 = vadd.f32 0.0, %v1952
  %v1954 = vpop.f32.mrf.mxu0
  %v1955 = vadd.f32 0.0, %v1954
  %1956 = vmatmul.bf16.gmra.mxu0 %v1831
  %v1957 = vpop.f32.mrf.mxu0
  %v1958 = vadd.f32 0.0, %v1957
  %v1959 = vpop.f32.mrf.mxu0
  %v1960 = vadd.f32 0.0, %v1959
  %1961 = vmatmul.bf16.gmra.mxu0 %v1832
  %v1962 = vpop.f32.mrf.mxu0
  %v1963 = vadd.f32 0.0, %v1962
  %v1964 = vpop.f32.mrf.mxu0
  %v1965 = vadd.f32 0.0, %v1964
  %1966 = vmatmul.bf16.gmra.mxu0 %v1833
  %v1967 = vpop.f32.mrf.mxu0
  %v1968 = vadd.f32 0.0, %v1967
  %v1969 = vpop.f32.mrf.mxu0
  %v1970 = vadd.f32 0.0, %v1969
  %1971 = vmatmul.bf16.gmra.mxu0 %v1834
  %v1972 = vpop.f32.mrf.mxu0
  %v1973 = vadd.f32 0.0, %v1972
  %v1974 = vpop.f32.mrf.mxu0
  %v1975 = vadd.f32 0.0, %v1974
  %1976 = vmatmul.bf16.gmra.mxu0 %v1835
  %v1977 = vpop.f32.mrf.mxu0
  %v1978 = vadd.f32 0.0, %v1977
  %v1979 = vpop.f32.mrf.mxu0
  %v1980 = vadd.f32 0.0, %v1979
  %1981 = vmatmul.bf16.gmra.mxu0 %v1836
  %v1982 = vpop.f32.mrf.mxu0
  %v1983 = vadd.f32 0.0, %v1982
  %v1984 = vpop.f32.mrf.mxu0
  %v1985 = vadd.f32 0.0, %v1984
  %1986 = vmatmul.bf16.gmra.mxu0 %v1837
  %v1987 = vpop.f32.mrf.mxu0
  %v1988 = vadd.f32 0.0, %v1987
  %v1989 = vpop.f32.mrf.mxu0
  %v1990 = vadd.f32 0.0, %v1989
  %1991 = vmatmul.bf16.gmra.mxu0 %v1838
  %v1992 = vpop.f32.mrf.mxu0
  %v1993 = vadd.f32 0.0, %v1992
  %v1994 = vpop.f32.mrf.mxu0
  %v1995 = vadd.f32 0.0, %v1994
  %1996 = vmatmul.bf16.gmra.mxu0 %v1839
  %v1997 = vpop.f32.mrf.mxu0
  %v1998 = vadd.f32 0.0, %v1997
  %v1999 = vpop.f32.mrf.mxu0
  %v2000 = vadd.f32 0.0, %v1999
  %2001 = vmatmul.bf16.gmra.mxu0 %v1840
  %v2002 = vpop.f32.mrf.mxu0
  %v2003 = vadd.f32 0.0, %v2002
  %v2004 = vpop.f32.mrf.mxu0
  %v2005 = vadd.f32 0.0, %v2004
  %2006 = vmatmul.bf16.gmra.mxu0 %v1841
  %v2007 = vpop.f32.mrf.mxu0
  %v2008 = vadd.f32 0.0, %v2007
  %v2009 = vpop.f32.mrf.mxu0
  %v2010 = vadd.f32 0.0, %v2009
  %2011 = vmatmul.bf16.gmra.mxu0 %v1842
  %v2012 = vpop.f32.mrf.mxu0
  %v2013 = vadd.f32 0.0, %v2012
  %v2014 = vpop.f32.mrf.mxu0
  %v2015 = vadd.f32 0.0, %v2014
  %2016 = vmatmul.bf16.gmra.mxu0 %v1843
  %v2017 = vpop.f32.mrf.mxu0
  %v2018 = vadd.f32 0.0, %v2017
  %v2019 = vpop.f32.mrf.mxu0
  %v2020 = vadd.f32 0.0, %v2019
  %2021 = vmatmul.bf16.gmra.mxu0 %v1844
  %v2022 = vpop.f32.mrf.mxu0
  %v2023 = vadd.f32 0.0, %v2022
  %v2024 = vpop.f32.mrf.mxu0
  %v2025 = vadd.f32 0.0, %v2024
  %2026 = vmatmul.bf16.gmra.mxu0 %v1845
  %v2027 = vpop.f32.mrf.mxu0
  %v2028 = vadd.f32 0.0, %v2027
  %v2029 = vpop.f32.mrf.mxu0
  %v2030 = vadd.f32 0.0, %v2029
  %2031 = vmatmul.bf16.gmra.mxu0 %v1846
  %v2032 = vpop.f32.mrf.mxu0
  %v2033 = vadd.f32 0.0, %v2032
  %v2034 = vpop.f32.mrf.mxu0
  %v2035 = vadd.f32 0.0, %v2034
  %2036 = vmatmul.bf16.gmra.mxu0 %v1847
  %v2037 = vpop.f32.mrf.mxu0
  %v2038 = vadd.f32 0.0, %v2037
  %v2039 = vpop.f32.mrf.mxu0
  %v2040 = vadd.f32 0.0, %v2039
  %2041 = vmatmul.bf16.gmra.mxu0 %v1848
  %v2042 = vpop.f32.mrf.mxu0
  %v2043 = vadd.f32 0.0, %v2042
  %v2044 = vpop.f32.mrf.mxu0
  %v2045 = vadd.f32 0.0, %v2044
  %2046 = vmatmul.bf16.gmra.mxu0 %v1849
  %v2047 = vpop.f32.mrf.mxu0
  %v2048 = vadd.f32 0.0, %v2047
  %v2049 = vpop.f32.mrf.mxu0
  %v2050 = vadd.f32 0.0, %v2049
  %2051 = vmatmul.bf16.gmra.mxu0 %v1850
  %v2052 = vpop.f32.mrf.mxu0
  %v2053 = vadd.f32 0.0, %v2052
  %v2054 = vpop.f32.mrf.mxu0
  %v2055 = vadd.f32 0.0, %v2054
  %2056 = vmatmul.bf16.gmra.mxu0 %v1851
  %v2057 = vpop.f32.mrf.mxu0
  %v2058 = vadd.f32 0.0, %v2057
  %v2059 = vpop.f32.mrf.mxu0
  %v2060 = vadd.f32 0.0, %v2059
  %2061 = vmatmul.bf16.gmra.mxu0 %v1852
  %v2062 = vpop.f32.mrf.mxu0
  %v2063 = vadd.f32 0.0, %v2062
  %v2064 = vpop.f32.mrf.mxu0
  %v2065 = vadd.f32 0.0, %v2064
  %2066 = vmatmul.bf16.gmra.mxu0 %v1853
  %v2067 = vpop.f32.mrf.mxu0
  %v2068 = vadd.f32 0.0, %v2067
  %v2069 = vpop.f32.mrf.mxu0
  %v2070 = vadd.f32 0.0, %v2069
  %2071 = vmatmul.bf16.gmra.mxu0 %v1854
  %v2072 = vpop.f32.mrf.mxu0
  %v2073 = vadd.f32 0.0, %v2072
  %v2074 = vpop.f32.mrf.mxu0
  %v2075 = vadd.f32 0.0, %v2074
  %2076 = vmatmul.bf16.gmra.mxu0 %v1855
  %v2077 = vpop.f32.mrf.mxu0
  %v2078 = vadd.f32 0.0, %v2077
  %v2079 = vpop.f32.mrf.mxu0
  %v2080 = vadd.f32 0.0, %v2079
  %2081 = vmatmul.bf16.gmra.mxu0 %v1856
  %v2082 = vpop.f32.mrf.mxu0
  %v2083 = vadd.f32 0.0, %v2082
  %v2084 = vpop.f32.mrf.mxu0
  %v2085 = vadd.f32 0.0, %v2084
  %2086 = vmatmul.bf16.gmra.mxu0 %v1857
  %v2087 = vpop.f32.mrf.mxu0
  %v2088 = vadd.f32 0.0, %v2087
  %v2089 = vpop.f32.mrf.mxu0
  %v2090 = vadd.f32 0.0, %v2089
  %2091 = vdwg.mxu0
  %v2092 = vld [vmem:[#allocation4] sm:$0xff]
  %v2093 = vld [vmem:[#allocation4 + $0x8] sm:$0xff]
  %v2094 = vld [vmem:[#allocation4 + $0x10] sm:$0xff]
  %v2095 = vld [vmem:[#allocation4 + $0x18] sm:$0xff]
  %v2096 = vld [vmem:[#allocation4 + $0x20] sm:$0xff]
  %v2097 = vld [vmem:[#allocation4 + $0x28] sm:$0xff]
  %v2098 = vld [vmem:[#allocation4 + $0x30] sm:$0xff]
  %v2099 = vld [vmem:[#allocation4 + $0x38] sm:$0xff]
  %v2100 = vld [vmem:[#allocation4 + $0x40] sm:$0xff]
  %v2101 = vld [vmem:[#allocation4 + $0x48] sm:$0xff]
  %v2102 = vld [vmem:[#allocation4 + $0x50] sm:$0xff]
  %v2103 = vld [vmem:[#allocation4 + $0x58] sm:$0xff]
  %v2104 = vld [vmem:[#allocation4 + $0x60] sm:$0xff]
  %v2105 = vld [vmem:[#allocation4 + $0x68] sm:$0xff]
  %v2106 = vld [vmem:[#allocation4 + $0x70] sm:$0xff]
  %v2107 = vld [vmem:[#allocation4 + $0x78] sm:$0xff]
  %v2108 = vld [vmem:[#allocation4 + $0x80] sm:$0xff]
  %v2109 = vld [vmem:[#allocation4 + $0x88] sm:$0xff]
  %v2110 = vld [vmem:[#allocation4 + $0x90] sm:$0xff]
  %v2111 = vld [vmem:[#allocation4 + $0x98] sm:$0xff]
  %v2112 = vld [vmem:[#allocation4 + $0xa0] sm:$0xff]
  %v2113 = vld [vmem:[#allocation4 + $0xa8] sm:$0xff]
  %v2114 = vld [vmem:[#allocation4 + $0xb0] sm:$0xff]
  %v2115 = vld [vmem:[#allocation4 + $0xb8] sm:$0xff]
  %v2116 = vld [vmem:[#allocation4 + $0xc0] sm:$0xff]
  %v2117 = vld [vmem:[#allocation4 + $0xc8] sm:$0xff]
  %v2118 = vld [vmem:[#allocation4 + $0xd0] sm:$0xff]
  %v2119 = vld [vmem:[#allocation4 + $0xd8] sm:$0xff]
  %v2120 = vld [vmem:[#allocation4 + $0xe0] sm:$0xff]
  %v2121 = vld [vmem:[#allocation4 + $0xe8] sm:$0xff]
  %v2122 = vld [vmem:[#allocation4 + $0xf0] sm:$0xff]
  %v2123 = vld [vmem:[#allocation4 + $0xf8] sm:$0xff]
  %v2124 = vld [vmem:[#allocation4 + $0x100] sm:$0xff]
  %v2125 = vld [vmem:[#allocation4 + $0x108] sm:$0xff]
  %v2126 = vld [vmem:[#allocation4 + $0x110] sm:$0xff]
  %v2127 = vld [vmem:[#allocation4 + $0x118] sm:$0xff]
  %v2128 = vld [vmem:[#allocation4 + $0x120] sm:$0xff]
  %v2129 = vld [vmem:[#allocation4 + $0x128] sm:$0xff]
  %v2130 = vld [vmem:[#allocation4 + $0x130] sm:$0xff]
  %v2131 = vld [vmem:[#allocation4 + $0x138] sm:$0xff]
  %v2132 = vld [vmem:[#allocation4 + $0x140] sm:$0xff]
  %v2133 = vld [vmem:[#allocation4 + $0x148] sm:$0xff]
  %v2134 = vld [vmem:[#allocation4 + $0x150] sm:$0xff]
  %v2135 = vld [vmem:[#allocation4 + $0x158] sm:$0xff]
  %v2136 = vld [vmem:[#allocation4 + $0x160] sm:$0xff]
  %v2137 = vld [vmem:[#allocation4 + $0x168] sm:$0xff]
  %v2138 = vld [vmem:[#allocation4 + $0x170] sm:$0xff]
  %v2139 = vld [vmem:[#allocation4 + $0x178] sm:$0xff]
  %v2140 = vld [vmem:[#allocation4 + $0x180] sm:$0xff]
  %v2141 = vld [vmem:[#allocation4 + $0x188] sm:$0xff]
  %v2142 = vld [vmem:[#allocation4 + $0x190] sm:$0xff]
  %v2143 = vld [vmem:[#allocation4 + $0x198] sm:$0xff]
  %v2144 = vld [vmem:[#allocation4 + $0x1a0] sm:$0xff]
  %v2145 = vld [vmem:[#allocation4 + $0x1a8] sm:$0xff]
  %v2146 = vld [vmem:[#allocation4 + $0x1b0] sm:$0xff]
  %v2147 = vld [vmem:[#allocation4 + $0x1b8] sm:$0xff]
  %v2148 = vld [vmem:[#allocation4 + $0x1c0] sm:$0xff]
  %v2149 = vld [vmem:[#allocation4 + $0x1c8] sm:$0xff]
  %v2150 = vld [vmem:[#allocation4 + $0x1d0] sm:$0xff]
  %v2151 = vld [vmem:[#allocation4 + $0x1d8] sm:$0xff]
  %v2152 = vld [vmem:[#allocation4 + $0x1e0] sm:$0xff]
  %v2153 = vld [vmem:[#allocation4 + $0x1e8] sm:$0xff]
  %v2154 = vld [vmem:[#allocation4 + $0x1f0] sm:$0xff]
  %v2155 = vld [vmem:[#allocation4 + $0x1f8] sm:$0xff]
  %v2156 = vadd.f32 %v2092, %v1933
  %v2157 = vadd.f32 %v2093, %v1935
  %v2158 = vadd.f32 %v2094, %v1938
  %v2159 = vadd.f32 %v2095, %v1940
  %v2160 = vadd.f32 %v2096, %v1943
  %v2161 = vadd.f32 %v2097, %v1945
  %v2162 = vadd.f32 %v2098, %v1948
  %v2163 = vadd.f32 %v2099, %v1950
  %v2164 = vadd.f32 %v2100, %v1953
  %v2165 = vadd.f32 %v2101, %v1955
  %v2166 = vadd.f32 %v2102, %v1958
  %v2167 = vadd.f32 %v2103, %v1960
  %v2168 = vadd.f32 %v2104, %v1963
  %v2169 = vadd.f32 %v2105, %v1965
  %v2170 = vadd.f32 %v2106, %v1968
  %v2171 = vadd.f32 %v2107, %v1970
  %v2172 = vadd.f32 %v2108, %v1973
  %v2173 = vadd.f32 %v2109, %v1975
  %v2174 = vadd.f32 %v2110, %v1978
  %v2175 = vadd.f32 %v2111, %v1980
  %v2176 = vadd.f32 %v2112, %v1983
  %v2177 = vadd.f32 %v2113, %v1985
  %v2178 = vadd.f32 %v2114, %v1988
  %v2179 = vadd.f32 %v2115, %v1990
  %v2180 = vadd.f32 %v2116, %v1993
  %v2181 = vadd.f32 %v2117, %v1995
  %v2182 = vadd.f32 %v2118, %v1998
  %v2183 = vadd.f32 %v2119, %v2000
  %v2184 = vadd.f32 %v2120, %v2003
  %v2185 = vadd.f32 %v2121, %v2005
  %v2186 = vadd.f32 %v2122, %v2008
  %v2187 = vadd.f32 %v2123, %v2010
  %v2188 = vadd.f32 %v2124, %v2013
  %v2189 = vadd.f32 %v2125, %v2015
  %v2190 = vadd.f32 %v2126, %v2018
  %v2191 = vadd.f32 %v2127, %v2020
  %v2192 = vadd.f32 %v2128, %v2023
  %v2193 = vadd.f32 %v2129, %v2025
  %v2194 = vadd.f32 %v2130, %v2028
  %v2195 = vadd.f32 %v2131, %v2030
  %v2196 = vadd.f32 %v2132, %v2033
  %v2197 = vadd.f32 %v2133, %v2035
  %v2198 = vadd.f32 %v2134, %v2038
  %v2199 = vadd.f32 %v2135, %v2040
  %v2200 = vadd.f32 %v2136, %v2043
  %v2201 = vadd.f32 %v2137, %v2045
  %v2202 = vadd.f32 %v2138, %v2048
  %v2203 = vadd.f32 %v2139, %v2050
  %v2204 = vadd.f32 %v2140, %v2053
  %v2205 = vadd.f32 %v2141, %v2055
  %v2206 = vadd.f32 %v2142, %v2058
  %v2207 = vadd.f32 %v2143, %v2060
  %v2208 = vadd.f32 %v2144, %v2063
  %v2209 = vadd.f32 %v2145, %v2065
  %v2210 = vadd.f32 %v2146, %v2068
  %v2211 = vadd.f32 %v2147, %v2070
  %v2212 = vadd.f32 %v2148, %v2073
  %v2213 = vadd.f32 %v2149, %v2075
  %v2214 = vadd.f32 %v2150, %v2078
  %v2215 = vadd.f32 %v2151, %v2080
  %v2216 = vadd.f32 %v2152, %v2083
  %v2217 = vadd.f32 %v2153, %v2085
  %v2218 = vadd.f32 %v2154, %v2088
  %v2219 = vadd.f32 %v2155, %v2090
  %2220 = vst [vmem:[#allocation4] sm:$0xff] %v2156
  %2221 = vst [vmem:[#allocation4 + $0x8] sm:$0xff] %v2157
  %2222 = vst [vmem:[#allocation4 + $0x10] sm:$0xff] %v2158
  %2223 = vst [vmem:[#allocation4 + $0x18] sm:$0xff] %v2159
  %2224 = vst [vmem:[#allocation4 + $0x20] sm:$0xff] %v2160
  %2225 = vst [vmem:[#allocation4 + $0x28] sm:$0xff] %v2161
  %2226 = vst [vmem:[#allocation4 + $0x30] sm:$0xff] %v2162
  %2227 = vst [vmem:[#allocation4 + $0x38] sm:$0xff] %v2163
  %2228 = vst [vmem:[#allocation4 + $0x40] sm:$0xff] %v2164
  %2229 = vst [vmem:[#allocation4 + $0x48] sm:$0xff] %v2165
  %2230 = vst [vmem:[#allocation4 + $0x50] sm:$0xff] %v2166
  %2231 = vst [vmem:[#allocation4 + $0x58] sm:$0xff] %v2167
  %2232 = vst [vmem:[#allocation4 + $0x60] sm:$0xff] %v2168
  %2233 = vst [vmem:[#allocation4 + $0x68] sm:$0xff] %v2169
  %2234 = vst [vmem:[#allocation4 + $0x70] sm:$0xff] %v2170
  %2235 = vst [vmem:[#allocation4 + $0x78] sm:$0xff] %v2171
  %2236 = vst [vmem:[#allocation4 + $0x80] sm:$0xff] %v2172
  %2237 = vst [vmem:[#allocation4 + $0x88] sm:$0xff] %v2173
  %2238 = vst [vmem:[#allocation4 + $0x90] sm:$0xff] %v2174
  %2239 = vst [vmem:[#allocation4 + $0x98] sm:$0xff] %v2175
  %2240 = vst [vmem:[#allocation4 + $0xa0] sm:$0xff] %v2176
  %2241 = vst [vmem:[#allocation4 + $0xa8] sm:$0xff] %v2177
  %2242 = vst [vmem:[#allocation4 + $0xb0] sm:$0xff] %v2178
  %2243 = vst [vmem:[#allocation4 + $0xb8] sm:$0xff] %v2179
  %2244 = vst [vmem:[#allocation4 + $0xc0] sm:$0xff] %v2180
  %2245 = vst [vmem:[#allocation4 + $0xc8] sm:$0xff] %v2181
  %2246 = vst [vmem:[#allocation4 + $0xd0] sm:$0xff] %v2182
  %2247 = vst [vmem:[#allocation4 + $0xd8] sm:$0xff] %v2183
  %2248 = vst [vmem:[#allocation4 + $0xe0] sm:$0xff] %v2184
  %2249 = vst [vmem:[#allocation4 + $0xe8] sm:$0xff] %v2185
  %2250 = vst [vmem:[#allocation4 + $0xf0] sm:$0xff] %v2186
  %2251 = vst [vmem:[#allocation4 + $0xf8] sm:$0xff] %v2187
  %2252 = vst [vmem:[#allocation4 + $0x100] sm:$0xff] %v2188
  %2253 = vst [vmem:[#allocation4 + $0x108] sm:$0xff] %v2189
  %2254 = vst [vmem:[#allocation4 + $0x110] sm:$0xff] %v2190
  %2255 = vst [vmem:[#allocation4 + $0x118] sm:$0xff] %v2191
  %2256 = vst [vmem:[#allocation4 + $0x120] sm:$0xff] %v2192
  %2257 = vst [vmem:[#allocation4 + $0x128] sm:$0xff] %v2193
  %2258 = vst [vmem:[#allocation4 + $0x130] sm:$0xff] %v2194
  %2259 = vst [vmem:[#allocation4 + $0x138] sm:$0xff] %v2195
  %2260 = vst [vmem:[#allocation4 + $0x140] sm:$0xff] %v2196
  %2261 = vst [vmem:[#allocation4 + $0x148] sm:$0xff] %v2197
  %2262 = vst [vmem:[#allocation4 + $0x150] sm:$0xff] %v2198
  %2263 = vst [vmem:[#allocation4 + $0x158] sm:$0xff] %v2199
  %2264 = vst [vmem:[#allocation4 + $0x160] sm:$0xff] %v2200
  %2265 = vst [vmem:[#allocation4 + $0x168] sm:$0xff] %v2201
  %2266 = vst [vmem:[#allocation4 + $0x170] sm:$0xff] %v2202
  %2267 = vst [vmem:[#allocation4 + $0x178] sm:$0xff] %v2203
  %2268 = vst [vmem:[#allocation4 + $0x180] sm:$0xff] %v2204
  %2269 = vst [vmem:[#allocation4 + $0x188] sm:$0xff] %v2205
  %2270 = vst [vmem:[#allocation4 + $0x190] sm:$0xff] %v2206
  %2271 = vst [vmem:[#allocation4 + $0x198] sm:$0xff] %v2207
  %2272 = vst [vmem:[#allocation4 + $0x1a0] sm:$0xff] %v2208
  %2273 = vst [vmem:[#allocation4 + $0x1a8] sm:$0xff] %v2209
  %2274 = vst [vmem:[#allocation4 + $0x1b0] sm:$0xff] %v2210
  %2275 = vst [vmem:[#allocation4 + $0x1b8] sm:$0xff] %v2211
  %2276 = vst [vmem:[#allocation4 + $0x1c0] sm:$0xff] %v2212
  %2277 = vst [vmem:[#allocation4 + $0x1c8] sm:$0xff] %v2213
  %2278 = vst [vmem:[#allocation4 + $0x1d0] sm:$0xff] %v2214
  %2279 = vst [vmem:[#allocation4 + $0x1d8] sm:$0xff] %v2215
  %2280 = vst [vmem:[#allocation4 + $0x1e0] sm:$0xff] %v2216
  %2281 = vst [vmem:[#allocation4 + $0x1e8] sm:$0xff] %v2217
  %2282 = vst [vmem:[#allocation4 + $0x1f0] sm:$0xff] %v2218
  %2283 = vst [vmem:[#allocation4 + $0x1f8] sm:$0xff] %v2219
  %v2284 = vld [vmem:[%s260 + $0x1] sm:$0xff]
  %v2285 = vld [vmem:[%s260 + $0x9] sm:$0xff]
  %v2286 = vld [vmem:[%s260 + $0x19] sm:$0xff]
  %v2287 = vld [vmem:[%s260 + $0x21] sm:$0xff]
  %v2288 = vld [vmem:[%s260 + $0x31] sm:$0xff]
  %v2289 = vld [vmem:[%s260 + $0x39] sm:$0xff]
  %v2290 = vld [vmem:[%s260 + $0x49] sm:$0xff]
  %v2291 = vld [vmem:[%s260 + $0x51] sm:$0xff]
  %v2292 = vld [vmem:[%s260 + $0x61] sm:$0xff]
  %v2293 = vld [vmem:[%s260 + $0x69] sm:$0xff]
  %v2294 = vld [vmem:[%s260 + $0x79] sm:$0xff]
  %v2295 = vld [vmem:[%s260 + $0x81] sm:$0xff]
  %v2296 = vld [vmem:[%s260 + $0x91] sm:$0xff]
  %v2297 = vld [vmem:[%s260 + $0x99] sm:$0xff]
  %v2298 = vld [vmem:[%s260 + $0xa9] sm:$0xff]
  %v2299 = vld [vmem:[%s260 + $0xb1] sm:$0xff]
  %v2300 = vld [vmem:[%s260 + $0xc1] sm:$0xff]
  %v2301 = vld [vmem:[%s260 + $0xc9] sm:$0xff]
  %v2302 = vld [vmem:[%s260 + $0xd9] sm:$0xff]
  %v2303 = vld [vmem:[%s260 + $0xe1] sm:$0xff]
  %v2304 = vld [vmem:[%s260 + $0xf1] sm:$0xff]
  %v2305 = vld [vmem:[%s260 + $0xf9] sm:$0xff]
  %v2306 = vld [vmem:[%s260 + $0x109] sm:$0xff]
  %v2307 = vld [vmem:[%s260 + $0x111] sm:$0xff]
  %v2308 = vld [vmem:[%s260 + $0x121] sm:$0xff]
  %v2309 = vld [vmem:[%s260 + $0x129] sm:$0xff]
  %v2310 = vld [vmem:[%s260 + $0x139] sm:$0xff]
  %v2311 = vld [vmem:[%s260 + $0x141] sm:$0xff]
  %v2312 = vld [vmem:[%s260 + $0x151] sm:$0xff]
  %v2313 = vld [vmem:[%s260 + $0x159] sm:$0xff]
  %v2314 = vld [vmem:[%s260 + $0x169] sm:$0xff]
  %v2315 = vld [vmem:[%s260 + $0x171] sm:$0xff]
  %v2316 = vld [vmem:[%s260 + $0x1b1] sm:$0xff]
  %v2317 = vld [vmem:[%s260 + $0x1b9] sm:$0xff]
  %v2318 = vld [vmem:[%s260 + $0x1c9] sm:$0xff]
  %v2319 = vld [vmem:[%s260 + $0x1d1] sm:$0xff]
  %v2320 = vld [vmem:[%s260 + $0x1e1] sm:$0xff]
  %v2321 = vld [vmem:[%s260 + $0x1e9] sm:$0xff]
  %v2322 = vld [vmem:[%s260 + $0x1f9] sm:$0xff]
  %v2323 = vld [vmem:[%s260 + $0x201] sm:$0xff]
  %v2324 = vld [vmem:[%s260 + $0x211] sm:$0xff]
  %v2325 = vld [vmem:[%s260 + $0x219] sm:$0xff]
  %v2326 = vld [vmem:[%s260 + $0x229] sm:$0xff]
  %v2327 = vld [vmem:[%s260 + $0x231] sm:$0xff]
  %v2328 = vld [vmem:[%s260 + $0x241] sm:$0xff]
  %v2329 = vld [vmem:[%s260 + $0x249] sm:$0xff]
  %v2330 = vld [vmem:[%s260 + $0x259] sm:$0xff]
  %v2331 = vld [vmem:[%s260 + $0x261] sm:$0xff]
  %v2332 = vld [vmem:[%s260 + $0x271] sm:$0xff]
  %v2333 = vld [vmem:[%s260 + $0x279] sm:$0xff]
  %v2334 = vld [vmem:[%s260 + $0x289] sm:$0xff]
  %v2335 = vld [vmem:[%s260 + $0x291] sm:$0xff]
  %v2336 = vld [vmem:[%s260 + $0x2a1] sm:$0xff]
  %v2337 = vld [vmem:[%s260 + $0x2a9] sm:$0xff]
  %v2338 = vld [vmem:[%s260 + $0x2b9] sm:$0xff]
  %v2339 = vld [vmem:[%s260 + $0x2c1] sm:$0xff]
  %v2340 = vld [vmem:[%s260 + $0x2d1] sm:$0xff]
  %v2341 = vld [vmem:[%s260 + $0x2d9] sm:$0xff]
  %v2342 = vld [vmem:[%s260 + $0x2e9] sm:$0xff]
  %v2343 = vld [vmem:[%s260 + $0x2f1] sm:$0xff]
  %v2344 = vld [vmem:[%s260 + $0x301] sm:$0xff]
  %v2345 = vld [vmem:[%s260 + $0x309] sm:$0xff]
  %v2346 = vld [vmem:[%s260 + $0x319] sm:$0xff]
  %v2347 = vld [vmem:[%s260 + $0x321] sm:$0xff]
  %v2348 = vpack.c.bf16 %v2285, %v2284
  %v2349 = vpack.c.bf16 %v2287, %v2286
  %v2350 = vpack.c.bf16 %v2289, %v2288
  %v2351 = vpack.c.bf16 %v2291, %v2290
  %v2352 = vpack.c.bf16 %v2293, %v2292
  %v2353 = vpack.c.bf16 %v2295, %v2294
  %v2354 = vpack.c.bf16 %v2297, %v2296
  %v2355 = vpack.c.bf16 %v2299, %v2298
  %v2356 = vpack.c.bf16 %v2301, %v2300
  %v2357 = vpack.c.bf16 %v2303, %v2302
  %v2358 = vpack.c.bf16 %v2305, %v2304
  %v2359 = vpack.c.bf16 %v2307, %v2306
  %v2360 = vpack.c.bf16 %v2309, %v2308
  %v2361 = vpack.c.bf16 %v2311, %v2310
  %v2362 = vpack.c.bf16 %v2313, %v2312
  %v2363 = vpack.c.bf16 %v2315, %v2314
  %v2364 = vpack.c.bf16 %v2317, %v2316
  %v2365 = vpack.c.bf16 %v2319, %v2318
  %v2366 = vpack.c.bf16 %v2321, %v2320
  %v2367 = vpack.c.bf16 %v2323, %v2322
  %v2368 = vpack.c.bf16 %v2325, %v2324
  %v2369 = vpack.c.bf16 %v2327, %v2326
  %v2370 = vpack.c.bf16 %v2329, %v2328
  %v2371 = vpack.c.bf16 %v2331, %v2330
  %v2372 = vpack.c.bf16 %v2333, %v2332
  %v2373 = vpack.c.bf16 %v2335, %v2334
  %v2374 = vpack.c.bf16 %v2337, %v2336
  %v2375 = vpack.c.bf16 %v2339, %v2338
  %v2376 = vpack.c.bf16 %v2341, %v2340
  %v2377 = vpack.c.bf16 %v2343, %v2342
  %v2378 = vpack.c.bf16 %v2345, %v2344
  %v2379 = vpack.c.bf16 %v2347, %v2346
  %s2380 = scalar_lea.vmem %s1, 256
  %v2381 = vld [vmem:[%s2380] sm:$0xf]
  %v2382 = vld [vmem:[%s2380 + $0x4] sm:$0xf]
  %v2383 = vld [vmem:[%s2380 + $0x8] sm:$0xf]
  %v2384 = vld [vmem:[%s2380 + $0xc] sm:$0xf]
  %v2385 = vld [vmem:[%s2380 + $0x10] sm:$0xf]
  %v2386 = vld [vmem:[%s2380 + $0x14] sm:$0xf]
  %v2387 = vld [vmem:[%s2380 + $0x18] sm:$0xf]
  %v2388 = vld [vmem:[%s2380 + $0x1c] sm:$0xf]
  %v2389 = vld [vmem:[%s2380 + $0x20] sm:$0xf]
  %v2390 = vld [vmem:[%s2380 + $0x24] sm:$0xf]
  %v2391 = vld [vmem:[%s2380 + $0x28] sm:$0xf]
  %v2392 = vld [vmem:[%s2380 + $0x2c] sm:$0xf]
  %v2393 = vld [vmem:[%s2380 + $0x30] sm:$0xf]
  %v2394 = vld [vmem:[%s2380 + $0x34] sm:$0xf]
  %v2395 = vld [vmem:[%s2380 + $0x38] sm:$0xf]
  %v2396 = vld [vmem:[%s2380 + $0x3c] sm:$0xf]
  %v2413 = vunpack.c.l.b16 %v2381
  %v2414 = vunpack.c.l.b16 %v2382
  %v2415 = vunpack.c.l.b16 %v2383
  %v2416 = vunpack.c.l.b16 %v2384
  %v2417 = vunpack.c.l.b16 %v2385
  %v2418 = vunpack.c.l.b16 %v2386
  %v2419 = vunpack.c.l.b16 %v2387
  %v2420 = vunpack.c.l.b16 %v2388
  %v2421 = vunpack.c.l.b16 %v2389
  %v2422 = vunpack.c.l.b16 %v2390
  %v2423 = vunpack.c.l.b16 %v2391
  %v2424 = vunpack.c.l.b16 %v2392
  %v2425 = vunpack.c.l.b16 %v2393
  %v2426 = vunpack.c.l.b16 %v2394
  %v2427 = vunpack.c.l.b16 %v2395
  %v2428 = vunpack.c.l.b16 %v2396
  %v2429 = vpack.c.b16 %v2414, %v2413
  %v2430 = vpack.c.b16 %v2416, %v2415
  %v2431 = vpack.c.b16 %v2418, %v2417
  %v2432 = vpack.c.b16 %v2420, %v2419
  %v2433 = vpack.c.b16 %v2422, %v2421
  %v2434 = vpack.c.b16 %v2424, %v2423
  %v2435 = vpack.c.b16 %v2426, %v2425
  %v2436 = vpack.c.b16 %v2428, %v2427
  %2445 = vmatpush.bf16.msra.mxu0 %v2436
  %2446 = vmatpush.bf16.msra.mxu0 %v2435
  %2447 = vmatpush.bf16.msra.mxu0 %v2434
  %2448 = vmatpush.bf16.msra.mxu0 %v2433
  %2449 = vmatpush.bf16.msra.mxu0 %v2432
  %2450 = vmatpush.bf16.msra.mxu0 %v2431
  %2451 = vmatpush.bf16.msra.mxu0 %v2430
  %2452 = vmatpush.bf16.msra.mxu0 %v2429
  %2453 = vmatmul.bf16.gmra.mxu0 %v2348
  %v2454 = vpop.f32.mrf.mxu0
  %v2455 = vadd.f32 0.0, %v2454
  %v2456 = vpop.f32.mrf.mxu0
  %v2457 = vadd.f32 0.0, %v2456
  %2458 = vmatmul.bf16.gmra.mxu0 %v2349
  %v2459 = vpop.f32.mrf.mxu0
  %v2460 = vadd.f32 0.0, %v2459
  %v2461 = vpop.f32.mrf.mxu0
  %v2462 = vadd.f32 0.0, %v2461
  %2463 = vmatmul.bf16.gmra.mxu0 %v2350
  %v2464 = vpop.f32.mrf.mxu0
  %v2465 = vadd.f32 0.0, %v2464
  %v2466 = vpop.f32.mrf.mxu0
  %v2467 = vadd.f32 0.0, %v2466
  %2468 = vmatmul.bf16.gmra.mxu0 %v2351
  %v2469 = vpop.f32.mrf.mxu0
  %v2470 = vadd.f32 0.0, %v2469
  %v2471 = vpop.f32.mrf.mxu0
  %v2472 = vadd.f32 0.0, %v2471
  %2473 = vmatmul.bf16.gmra.mxu0 %v2352
  %v2474 = vpop.f32.mrf.mxu0
  %v2475 = vadd.f32 0.0, %v2474
  %v2476 = vpop.f32.mrf.mxu0
  %v2477 = vadd.f32 0.0, %v2476
  %2478 = vmatmul.bf16.gmra.mxu0 %v2353
  %v2479 = vpop.f32.mrf.mxu0
  %v2480 = vadd.f32 0.0, %v2479
  %v2481 = vpop.f32.mrf.mxu0
  %v2482 = vadd.f32 0.0, %v2481
  %2483 = vmatmul.bf16.gmra.mxu0 %v2354
  %v2484 = vpop.f32.mrf.mxu0
  %v2485 = vadd.f32 0.0, %v2484
  %v2486 = vpop.f32.mrf.mxu0
  %v2487 = vadd.f32 0.0, %v2486
  %2488 = vmatmul.bf16.gmra.mxu0 %v2355
  %v2489 = vpop.f32.mrf.mxu0
  %v2490 = vadd.f32 0.0, %v2489
  %v2491 = vpop.f32.mrf.mxu0
  %v2492 = vadd.f32 0.0, %v2491
  %2493 = vmatmul.bf16.gmra.mxu0 %v2356
  %v2494 = vpop.f32.mrf.mxu0
  %v2495 = vadd.f32 0.0, %v2494
  %v2496 = vpop.f32.mrf.mxu0
  %v2497 = vadd.f32 0.0, %v2496
  %2498 = vmatmul.bf16.gmra.mxu0 %v2357
  %v2499 = vpop.f32.mrf.mxu0
  %v2500 = vadd.f32 0.0, %v2499
  %v2501 = vpop.f32.mrf.mxu0
  %v2502 = vadd.f32 0.0, %v2501
  %2503 = vmatmul.bf16.gmra.mxu0 %v2358
  %v2504 = vpop.f32.mrf.mxu0
  %v2505 = vadd.f32 0.0, %v2504
  %v2506 = vpop.f32.mrf.mxu0
  %v2507 = vadd.f32 0.0, %v2506
  %2508 = vmatmul.bf16.gmra.mxu0 %v2359
  %v2509 = vpop.f32.mrf.mxu0
  %v2510 = vadd.f32 0.0, %v2509
  %v2511 = vpop.f32.mrf.mxu0
  %v2512 = vadd.f32 0.0, %v2511
  %2513 = vmatmul.bf16.gmra.mxu0 %v2360
  %v2514 = vpop.f32.mrf.mxu0
  %v2515 = vadd.f32 0.0, %v2514
  %v2516 = vpop.f32.mrf.mxu0
  %v2517 = vadd.f32 0.0, %v2516
  %2518 = vmatmul.bf16.gmra.mxu0 %v2361
  %v2519 = vpop.f32.mrf.mxu0
  %v2520 = vadd.f32 0.0, %v2519
  %v2521 = vpop.f32.mrf.mxu0
  %v2522 = vadd.f32 0.0, %v2521
  %2523 = vmatmul.bf16.gmra.mxu0 %v2362
  %v2524 = vpop.f32.mrf.mxu0
  %v2525 = vadd.f32 0.0, %v2524
  %v2526 = vpop.f32.mrf.mxu0
  %v2527 = vadd.f32 0.0, %v2526
  %2528 = vmatmul.bf16.gmra.mxu0 %v2363
  %v2529 = vpop.f32.mrf.mxu0
  %v2530 = vadd.f32 0.0, %v2529
  %v2531 = vpop.f32.mrf.mxu0
  %v2532 = vadd.f32 0.0, %v2531
  %2533 = vmatmul.bf16.gmra.mxu0 %v2364
  %v2534 = vpop.f32.mrf.mxu0
  %v2535 = vadd.f32 0.0, %v2534
  %v2536 = vpop.f32.mrf.mxu0
  %v2537 = vadd.f32 0.0, %v2536
  %2538 = vmatmul.bf16.gmra.mxu0 %v2365
  %v2539 = vpop.f32.mrf.mxu0
  %v2540 = vadd.f32 0.0, %v2539
  %v2541 = vpop.f32.mrf.mxu0
  %v2542 = vadd.f32 0.0, %v2541
  %2543 = vmatmul.bf16.gmra.mxu0 %v2366
  %v2544 = vpop.f32.mrf.mxu0
  %v2545 = vadd.f32 0.0, %v2544
  %v2546 = vpop.f32.mrf.mxu0
  %v2547 = vadd.f32 0.0, %v2546
  %2548 = vmatmul.bf16.gmra.mxu0 %v2367
  %v2549 = vpop.f32.mrf.mxu0
  %v2550 = vadd.f32 0.0, %v2549
  %v2551 = vpop.f32.mrf.mxu0
  %v2552 = vadd.f32 0.0, %v2551
  %2553 = vmatmul.bf16.gmra.mxu0 %v2368
  %v2554 = vpop.f32.mrf.mxu0
  %v2555 = vadd.f32 0.0, %v2554
  %v2556 = vpop.f32.mrf.mxu0
  %v2557 = vadd.f32 0.0, %v2556
  %2558 = vmatmul.bf16.gmra.mxu0 %v2369
  %v2559 = vpop.f32.mrf.mxu0
  %v2560 = vadd.f32 0.0, %v2559
  %v2561 = vpop.f32.mrf.mxu0
  %v2562 = vadd.f32 0.0, %v2561
  %2563 = vmatmul.bf16.gmra.mxu0 %v2370
  %v2564 = vpop.f32.mrf.mxu0
  %v2565 = vadd.f32 0.0, %v2564
  %v2566 = vpop.f32.mrf.mxu0
  %v2567 = vadd.f32 0.0, %v2566
  %2568 = vmatmul.bf16.gmra.mxu0 %v2371
  %v2569 = vpop.f32.mrf.mxu0
  %v2570 = vadd.f32 0.0, %v2569
  %v2571 = vpop.f32.mrf.mxu0
  %v2572 = vadd.f32 0.0, %v2571
  %2573 = vmatmul.bf16.gmra.mxu0 %v2372
  %v2574 = vpop.f32.mrf.mxu0
  %v2575 = vadd.f32 0.0, %v2574
  %v2576 = vpop.f32.mrf.mxu0
  %v2577 = vadd.f32 0.0, %v2576
  %2578 = vmatmul.bf16.gmra.mxu0 %v2373
  %v2579 = vpop.f32.mrf.mxu0
  %v2580 = vadd.f32 0.0, %v2579
  %v2581 = vpop.f32.mrf.mxu0
  %v2582 = vadd.f32 0.0, %v2581
  %2583 = vmatmul.bf16.gmra.mxu0 %v2374
  %v2584 = vpop.f32.mrf.mxu0
  %v2585 = vadd.f32 0.0, %v2584
  %v2586 = vpop.f32.mrf.mxu0
  %v2587 = vadd.f32 0.0, %v2586
  %2588 = vmatmul.bf16.gmra.mxu0 %v2375
  %v2589 = vpop.f32.mrf.mxu0
  %v2590 = vadd.f32 0.0, %v2589
  %v2591 = vpop.f32.mrf.mxu0
  %v2592 = vadd.f32 0.0, %v2591
  %2593 = vmatmul.bf16.gmra.mxu0 %v2376
  %v2594 = vpop.f32.mrf.mxu0
  %v2595 = vadd.f32 0.0, %v2594
  %v2596 = vpop.f32.mrf.mxu0
  %v2597 = vadd.f32 0.0, %v2596
  %2598 = vmatmul.bf16.gmra.mxu0 %v2377
  %v2599 = vpop.f32.mrf.mxu0
  %v2600 = vadd.f32 0.0, %v2599
  %v2601 = vpop.f32.mrf.mxu0
  %v2602 = vadd.f32 0.0, %v2601
  %2603 = vmatmul.bf16.gmra.mxu0 %v2378
  %v2604 = vpop.f32.mrf.mxu0
  %v2605 = vadd.f32 0.0, %v2604
  %v2606 = vpop.f32.mrf.mxu0
  %v2607 = vadd.f32 0.0, %v2606
  %2608 = vmatmul.bf16.gmra.mxu0 %v2379
  %v2609 = vpop.f32.mrf.mxu0
  %v2610 = vadd.f32 0.0, %v2609
  %v2611 = vpop.f32.mrf.mxu0
  %v2612 = vadd.f32 0.0, %v2611
  %2613 = vdwg.mxu0
  %v2614 = vld [vmem:[#allocation4] sm:$0xff]
  %v2615 = vld [vmem:[#allocation4 + $0x8] sm:$0xff]
  %v2616 = vld [vmem:[#allocation4 + $0x10] sm:$0xff]
  %v2617 = vld [vmem:[#allocation4 + $0x18] sm:$0xff]
  %v2618 = vld [vmem:[#allocation4 + $0x20] sm:$0xff]
  %v2619 = vld [vmem:[#allocation4 + $0x28] sm:$0xff]
  %v2620 = vld [vmem:[#allocation4 + $0x30] sm:$0xff]
  %v2621 = vld [vmem:[#allocation4 + $0x38] sm:$0xff]
  %v2622 = vld [vmem:[#allocation4 + $0x40] sm:$0xff]
  %v2623 = vld [vmem:[#allocation4 + $0x48] sm:$0xff]
  %v2624 = vld [vmem:[#allocation4 + $0x50] sm:$0xff]
  %v2625 = vld [vmem:[#allocation4 + $0x58] sm:$0xff]
  %v2626 = vld [vmem:[#allocation4 + $0x60] sm:$0xff]
  %v2627 = vld [vmem:[#allocation4 + $0x68] sm:$0xff]
  %v2628 = vld [vmem:[#allocation4 + $0x70] sm:$0xff]
  %v2629 = vld [vmem:[#allocation4 + $0x78] sm:$0xff]
  %v2630 = vld [vmem:[#allocation4 + $0x80] sm:$0xff]
  %v2631 = vld [vmem:[#allocation4 + $0x88] sm:$0xff]
  %v2632 = vld [vmem:[#allocation4 + $0x90] sm:$0xff]
  %v2633 = vld [vmem:[#allocation4 + $0x98] sm:$0xff]
  %v2634 = vld [vmem:[#allocation4 + $0xa0] sm:$0xff]
  %v2635 = vld [vmem:[#allocation4 + $0xa8] sm:$0xff]
  %v2636 = vld [vmem:[#allocation4 + $0xb0] sm:$0xff]
  %v2637 = vld [vmem:[#allocation4 + $0xb8] sm:$0xff]
  %v2638 = vld [vmem:[#allocation4 + $0xc0] sm:$0xff]
  %v2639 = vld [vmem:[#allocation4 + $0xc8] sm:$0xff]
  %v2640 = vld [vmem:[#allocation4 + $0xd0] sm:$0xff]
  %v2641 = vld [vmem:[#allocation4 + $0xd8] sm:$0xff]
  %v2642 = vld [vmem:[#allocation4 + $0xe0] sm:$0xff]
  %v2643 = vld [vmem:[#allocation4 + $0xe8] sm:$0xff]
  %v2644 = vld [vmem:[#allocation4 + $0xf0] sm:$0xff]
  %v2645 = vld [vmem:[#allocation4 + $0xf8] sm:$0xff]
  %v2646 = vld [vmem:[#allocation4 + $0x100] sm:$0xff]
  %v2647 = vld [vmem:[#allocation4 + $0x108] sm:$0xff]
  %v2648 = vld [vmem:[#allocation4 + $0x110] sm:$0xff]
  %v2649 = vld [vmem:[#allocation4 + $0x118] sm:$0xff]
  %v2650 = vld [vmem:[#allocation4 + $0x120] sm:$0xff]
  %v2651 = vld [vmem:[#allocation4 + $0x128] sm:$0xff]
  %v2652 = vld [vmem:[#allocation4 + $0x130] sm:$0xff]
  %v2653 = vld [vmem:[#allocation4 + $0x138] sm:$0xff]
  %v2654 = vld [vmem:[#allocation4 + $0x140] sm:$0xff]
  %v2655 = vld [vmem:[#allocation4 + $0x148] sm:$0xff]
  %v2656 = vld [vmem:[#allocation4 + $0x150] sm:$0xff]
  %v2657 = vld [vmem:[#allocation4 + $0x158] sm:$0xff]
  %v2658 = vld [vmem:[#allocation4 + $0x160] sm:$0xff]
  %v2659 = vld [vmem:[#allocation4 + $0x168] sm:$0xff]
  %v2660 = vld [vmem:[#allocation4 + $0x170] sm:$0xff]
  %v2661 = vld [vmem:[#allocation4 + $0x178] sm:$0xff]
  %v2662 = vld [vmem:[#allocation4 + $0x180] sm:$0xff]
  %v2663 = vld [vmem:[#allocation4 + $0x188] sm:$0xff]
  %v2664 = vld [vmem:[#allocation4 + $0x190] sm:$0xff]
  %v2665 = vld [vmem:[#allocation4 + $0x198] sm:$0xff]
  %v2666 = vld [vmem:[#allocation4 + $0x1a0] sm:$0xff]
  %v2667 = vld [vmem:[#allocation4 + $0x1a8] sm:$0xff]
  %v2668 = vld [vmem:[#allocation4 + $0x1b0] sm:$0xff]
  %v2669 = vld [vmem:[#allocation4 + $0x1b8] sm:$0xff]
  %v2670 = vld [vmem:[#allocation4 + $0x1c0] sm:$0xff]
  %v2671 = vld [vmem:[#allocation4 + $0x1c8] sm:$0xff]
  %v2672 = vld [vmem:[#allocation4 + $0x1d0] sm:$0xff]
  %v2673 = vld [vmem:[#allocation4 + $0x1d8] sm:$0xff]
  %v2674 = vld [vmem:[#allocation4 + $0x1e0] sm:$0xff]
  %v2675 = vld [vmem:[#allocation4 + $0x1e8] sm:$0xff]
  %v2676 = vld [vmem:[#allocation4 + $0x1f0] sm:$0xff]
  %v2677 = vld [vmem:[#allocation4 + $0x1f8] sm:$0xff]
  %v2678 = vadd.f32 %v2614, %v2455
  %v2679 = vadd.f32 %v2615, %v2457
  %v2680 = vadd.f32 %v2616, %v2460
  %v2681 = vadd.f32 %v2617, %v2462
  %v2682 = vadd.f32 %v2618, %v2465
  %v2683 = vadd.f32 %v2619, %v2467
  %v2684 = vadd.f32 %v2620, %v2470
  %v2685 = vadd.f32 %v2621, %v2472
  %v2686 = vadd.f32 %v2622, %v2475
  %v2687 = vadd.f32 %v2623, %v2477
  %v2688 = vadd.f32 %v2624, %v2480
  %v2689 = vadd.f32 %v2625, %v2482
  %v2690 = vadd.f32 %v2626, %v2485
  %v2691 = vadd.f32 %v2627, %v2487
  %v2692 = vadd.f32 %v2628, %v2490
  %v2693 = vadd.f32 %v2629, %v2492
  %v2694 = vadd.f32 %v2630, %v2495
  %v2695 = vadd.f32 %v2631, %v2497
  %v2696 = vadd.f32 %v2632, %v2500
  %v2697 = vadd.f32 %v2633, %v2502
  %v2698 = vadd.f32 %v2634, %v2505
  %v2699 = vadd.f32 %v2635, %v2507
  %v2700 = vadd.f32 %v2636, %v2510
  %v2701 = vadd.f32 %v2637, %v2512
  %v2702 = vadd.f32 %v2638, %v2515
  %v2703 = vadd.f32 %v2639, %v2517
  %v2704 = vadd.f32 %v2640, %v2520
  %v2705 = vadd.f32 %v2641, %v2522
  %v2706 = vadd.f32 %v2642, %v2525
  %v2707 = vadd.f32 %v2643, %v2527
  %v2708 = vadd.f32 %v2644, %v2530
  %v2709 = vadd.f32 %v2645, %v2532
  %v2710 = vadd.f32 %v2646, %v2535
  %v2711 = vadd.f32 %v2647, %v2537
  %v2712 = vadd.f32 %v2648, %v2540
  %v2713 = vadd.f32 %v2649, %v2542
  %v2714 = vadd.f32 %v2650, %v2545
  %v2715 = vadd.f32 %v2651, %v2547
  %v2716 = vadd.f32 %v2652, %v2550
  %v2717 = vadd.f32 %v2653, %v2552
  %v2718 = vadd.f32 %v2654, %v2555
  %v2719 = vadd.f32 %v2655, %v2557
  %v2720 = vadd.f32 %v2656, %v2560
  %v2721 = vadd.f32 %v2657, %v2562
  %v2722 = vadd.f32 %v2658, %v2565
  %v2723 = vadd.f32 %v2659, %v2567
  %v2724 = vadd.f32 %v2660, %v2570
  %v2725 = vadd.f32 %v2661, %v2572
  %v2726 = vadd.f32 %v2662, %v2575
  %v2727 = vadd.f32 %v2663, %v2577
  %v2728 = vadd.f32 %v2664, %v2580
  %v2729 = vadd.f32 %v2665, %v2582
  %v2730 = vadd.f32 %v2666, %v2585
  %v2731 = vadd.f32 %v2667, %v2587
  %v2732 = vadd.f32 %v2668, %v2590
  %v2733 = vadd.f32 %v2669, %v2592
  %v2734 = vadd.f32 %v2670, %v2595
  %v2735 = vadd.f32 %v2671, %v2597
  %v2736 = vadd.f32 %v2672, %v2600
  %v2737 = vadd.f32 %v2673, %v2602
  %v2738 = vadd.f32 %v2674, %v2605
  %v2739 = vadd.f32 %v2675, %v2607
  %v2740 = vadd.f32 %v2676, %v2610
  %v2741 = vadd.f32 %v2677, %v2612
  %2742 = vst [vmem:[#allocation4] sm:$0xff] %v2678
  %2743 = vst [vmem:[#allocation4 + $0x8] sm:$0xff] %v2679
  %2744 = vst [vmem:[#allocation4 + $0x10] sm:$0xff] %v2680
  %2745 = vst [vmem:[#allocation4 + $0x18] sm:$0xff] %v2681
  %2746 = vst [vmem:[#allocation4 + $0x20] sm:$0xff] %v2682
  %2747 = vst [vmem:[#allocation4 + $0x28] sm:$0xff] %v2683
  %2748 = vst [vmem:[#allocation4 + $0x30] sm:$0xff] %v2684
  %2749 = vst [vmem:[#allocation4 + $0x38] sm:$0xff] %v2685
  %2750 = vst [vmem:[#allocation4 + $0x40] sm:$0xff] %v2686
  %2751 = vst [vmem:[#allocation4 + $0x48] sm:$0xff] %v2687
  %2752 = vst [vmem:[#allocation4 + $0x50] sm:$0xff] %v2688
  %2753 = vst [vmem:[#allocation4 + $0x58] sm:$0xff] %v2689
  %2754 = vst [vmem:[#allocation4 + $0x60] sm:$0xff] %v2690
  %2755 = vst [vmem:[#allocation4 + $0x68] sm:$0xff] %v2691
  %2756 = vst [vmem:[#allocation4 + $0x70] sm:$0xff] %v2692
  %2757 = vst [vmem:[#allocation4 + $0x78] sm:$0xff] %v2693
  %2758 = vst [vmem:[#allocation4 + $0x80] sm:$0xff] %v2694
  %2759 = vst [vmem:[#allocation4 + $0x88] sm:$0xff] %v2695
  %2760 = vst [vmem:[#allocation4 + $0x90] sm:$0xff] %v2696
  %2761 = vst [vmem:[#allocation4 + $0x98] sm:$0xff] %v2697
  %2762 = vst [vmem:[#allocation4 + $0xa0] sm:$0xff] %v2698
  %2763 = vst [vmem:[#allocation4 + $0xa8] sm:$0xff] %v2699
  %2764 = vst [vmem:[#allocation4 + $0xb0] sm:$0xff] %v2700
  %2765 = vst [vmem:[#allocation4 + $0xb8] sm:$0xff] %v2701
  %2766 = vst [vmem:[#allocation4 + $0xc0] sm:$0xff] %v2702
  %2767 = vst [vmem:[#allocation4 + $0xc8] sm:$0xff] %v2703
  %2768 = vst [vmem:[#allocation4 + $0xd0] sm:$0xff] %v2704
  %2769 = vst [vmem:[#allocation4 + $0xd8] sm:$0xff] %v2705
  %2770 = vst [vmem:[#allocation4 + $0xe0] sm:$0xff] %v2706
  %2771 = vst [vmem:[#allocation4 + $0xe8] sm:$0xff] %v2707
  %2772 = vst [vmem:[#allocation4 + $0xf0] sm:$0xff] %v2708
  %2773 = vst [vmem:[#allocation4 + $0xf8] sm:$0xff] %v2709
  %2774 = vst [vmem:[#allocation4 + $0x100] sm:$0xff] %v2710
  %2775 = vst [vmem:[#allocation4 + $0x108] sm:$0xff] %v2711
  %2776 = vst [vmem:[#allocation4 + $0x110] sm:$0xff] %v2712
  %2777 = vst [vmem:[#allocation4 + $0x118] sm:$0xff] %v2713
  %2778 = vst [vmem:[#allocation4 + $0x120] sm:$0xff] %v2714
  %2779 = vst [vmem:[#allocation4 + $0x128] sm:$0xff] %v2715
  %2780 = vst [vmem:[#allocation4 + $0x130] sm:$0xff] %v2716
  %2781 = vst [vmem:[#allocation4 + $0x138] sm:$0xff] %v2717
  %2782 = vst [vmem:[#allocation4 + $0x140] sm:$0xff] %v2718
  %2783 = vst [vmem:[#allocation4 + $0x148] sm:$0xff] %v2719
  %2784 = vst [vmem:[#allocation4 + $0x150] sm:$0xff] %v2720
  %2785 = vst [vmem:[#allocation4 + $0x158] sm:$0xff] %v2721
  %2786 = vst [vmem:[#allocation4 + $0x160] sm:$0xff] %v2722
  %2787 = vst [vmem:[#allocation4 + $0x168] sm:$0xff] %v2723
  %2788 = vst [vmem:[#allocation4 + $0x170] sm:$0xff] %v2724
  %2789 = vst [vmem:[#allocation4 + $0x178] sm:$0xff] %v2725
  %2790 = vst [vmem:[#allocation4 + $0x180] sm:$0xff] %v2726
  %2791 = vst [vmem:[#allocation4 + $0x188] sm:$0xff] %v2727
  %2792 = vst [vmem:[#allocation4 + $0x190] sm:$0xff] %v2728
  %2793 = vst [vmem:[#allocation4 + $0x198] sm:$0xff] %v2729
  %2794 = vst [vmem:[#allocation4 + $0x1a0] sm:$0xff] %v2730
  %2795 = vst [vmem:[#allocation4 + $0x1a8] sm:$0xff] %v2731
  %2796 = vst [vmem:[#allocation4 + $0x1b0] sm:$0xff] %v2732
  %2797 = vst [vmem:[#allocation4 + $0x1b8] sm:$0xff] %v2733
  %2798 = vst [vmem:[#allocation4 + $0x1c0] sm:$0xff] %v2734
  %2799 = vst [vmem:[#allocation4 + $0x1c8] sm:$0xff] %v2735
  %2800 = vst [vmem:[#allocation4 + $0x1d0] sm:$0xff] %v2736
  %2801 = vst [vmem:[#allocation4 + $0x1d8] sm:$0xff] %v2737
  %2802 = vst [vmem:[#allocation4 + $0x1e0] sm:$0xff] %v2738
  %2803 = vst [vmem:[#allocation4 + $0x1e8] sm:$0xff] %v2739
  %2804 = vst [vmem:[#allocation4 + $0x1f0] sm:$0xff] %v2740
  %2805 = vst [vmem:[#allocation4 + $0x1f8] sm:$0xff] %v2741
  %v2806 = vld [vmem:[%s260 + $0x2] sm:$0xff]
  %v2807 = vld [vmem:[%s260 + $0xa] sm:$0xff]
  %v2808 = vld [vmem:[%s260 + $0x1a] sm:$0xff]
  %v2809 = vld [vmem:[%s260 + $0x22] sm:$0xff]
  %v2810 = vld [vmem:[%s260 + $0x32] sm:$0xff]
  %v2811 = vld [vmem:[%s260 + $0x3a] sm:$0xff]
  %v2812 = vld [vmem:[%s260 + $0x4a] sm:$0xff]
  %v2813 = vld [vmem:[%s260 + $0x52] sm:$0xff]
  %v2814 = vld [vmem:[%s260 + $0x62] sm:$0xff]
  %v2815 = vld [vmem:[%s260 + $0x6a] sm:$0xff]
  %v2816 = vld [vmem:[%s260 + $0x7a] sm:$0xff]
  %v2817 = vld [vmem:[%s260 + $0x82] sm:$0xff]
  %v2818 = vld [vmem:[%s260 + $0x92] sm:$0xff]
  %v2819 = vld [vmem:[%s260 + $0x9a] sm:$0xff]
  %v2820 = vld [vmem:[%s260 + $0xaa] sm:$0xff]
  %v2821 = vld [vmem:[%s260 + $0xb2] sm:$0xff]
  %v2822 = vld [vmem:[%s260 + $0xc2] sm:$0xff]
  %v2823 = vld [vmem:[%s260 + $0xca] sm:$0xff]
  %v2824 = vld [vmem:[%s260 + $0xda] sm:$0xff]
  %v2825 = vld [vmem:[%s260 + $0xe2] sm:$0xff]
  %v2826 = vld [vmem:[%s260 + $0xf2] sm:$0xff]
  %v2827 = vld [vmem:[%s260 + $0xfa] sm:$0xff]
  %v2828 = vld [vmem:[%s260 + $0x10a] sm:$0xff]
  %v2829 = vld [vmem:[%s260 + $0x112] sm:$0xff]
  %v2830 = vld [vmem:[%s260 + $0x122] sm:$0xff]
  %v2831 = vld [vmem:[%s260 + $0x12a] sm:$0xff]
  %v2832 = vld [vmem:[%s260 + $0x13a] sm:$0xff]
  %v2833 = vld [vmem:[%s260 + $0x142] sm:$0xff]
  %v2834 = vld [vmem:[%s260 + $0x152] sm:$0xff]
  %v2835 = vld [vmem:[%s260 + $0x15a] sm:$0xff]
  %v2836 = vld [vmem:[%s260 + $0x16a] sm:$0xff]
  %v2837 = vld [vmem:[%s260 + $0x172] sm:$0xff]
  %v2838 = vld [vmem:[%s260 + $0x1b2] sm:$0xff]
  %v2839 = vld [vmem:[%s260 + $0x1ba] sm:$0xff]
  %v2840 = vld [vmem:[%s260 + $0x1ca] sm:$0xff]
  %v2841 = vld [vmem:[%s260 + $0x1d2] sm:$0xff]
  %v2842 = vld [vmem:[%s260 + $0x1e2] sm:$0xff]
  %v2843 = vld [vmem:[%s260 + $0x1ea] sm:$0xff]
  %v2844 = vld [vmem:[%s260 + $0x1fa] sm:$0xff]
  %v2845 = vld [vmem:[%s260 + $0x202] sm:$0xff]
  %v2846 = vld [vmem:[%s260 + $0x212] sm:$0xff]
  %v2847 = vld [vmem:[%s260 + $0x21a] sm:$0xff]
  %v2848 = vld [vmem:[%s260 + $0x22a] sm:$0xff]
  %v2849 = vld [vmem:[%s260 + $0x232] sm:$0xff]
  %v2850 = vld [vmem:[%s260 + $0x242] sm:$0xff]
  %v2851 = vld [vmem:[%s260 + $0x24a] sm:$0xff]
  %v2852 = vld [vmem:[%s260 + $0x25a] sm:$0xff]
  %v2853 = vld [vmem:[%s260 + $0x262] sm:$0xff]
  %v2854 = vld [vmem:[%s260 + $0x272] sm:$0xff]
  %v2855 = vld [vmem:[%s260 + $0x27a] sm:$0xff]
  %v2856 = vld [vmem:[%s260 + $0x28a] sm:$0xff]
  %v2857 = vld [vmem:[%s260 + $0x292] sm:$0xff]
  %v2858 = vld [vmem:[%s260 + $0x2a2] sm:$0xff]
  %v2859 = vld [vmem:[%s260 + $0x2aa] sm:$0xff]
  %v2860 = vld [vmem:[%s260 + $0x2ba] sm:$0xff]
  %v2861 = vld [vmem:[%s260 + $0x2c2] sm:$0xff]
  %v2862 = vld [vmem:[%s260 + $0x2d2] sm:$0xff]
  %v2863 = vld [vmem:[%s260 + $0x2da] sm:$0xff]
  %v2864 = vld [vmem:[%s260 + $0x2ea] sm:$0xff]
  %v2865 = vld [vmem:[%s260 + $0x2f2] sm:$0xff]
  %v2866 = vld [vmem:[%s260 + $0x302] sm:$0xff]
  %v2867 = vld [vmem:[%s260 + $0x30a] sm:$0xff]
  %v2868 = vld [vmem:[%s260 + $0x31a] sm:$0xff]
  %v2869 = vld [vmem:[%s260 + $0x322] sm:$0xff]
  %v2870 = vpack.c.bf16 %v2807, %v2806
  %v2871 = vpack.c.bf16 %v2809, %v2808
  %v2872 = vpack.c.bf16 %v2811, %v2810
  %v2873 = vpack.c.bf16 %v2813, %v2812
  %v2874 = vpack.c.bf16 %v2815, %v2814
  %v2875 = vpack.c.bf16 %v2817, %v2816
  %v2876 = vpack.c.bf16 %v2819, %v2818
  %v2877 = vpack.c.bf16 %v2821, %v2820
  %v2878 = vpack.c.bf16 %v2823, %v2822
  %v2879 = vpack.c.bf16 %v2825, %v2824
  %v2880 = vpack.c.bf16 %v2827, %v2826
  %v2881 = vpack.c.bf16 %v2829, %v2828
  %v2882 = vpack.c.bf16 %v2831, %v2830
  %v2883 = vpack.c.bf16 %v2833, %v2832
  %v2884 = vpack.c.bf16 %v2835, %v2834
  %v2885 = vpack.c.bf16 %v2837, %v2836
  %v2886 = vpack.c.bf16 %v2839, %v2838
  %v2887 = vpack.c.bf16 %v2841, %v2840
  %v2888 = vpack.c.bf16 %v2843, %v2842
  %v2889 = vpack.c.bf16 %v2845, %v2844
  %v2890 = vpack.c.bf16 %v2847, %v2846
  %v2891 = vpack.c.bf16 %v2849, %v2848
  %v2892 = vpack.c.bf16 %v2851, %v2850
  %v2893 = vpack.c.bf16 %v2853, %v2852
  %v2894 = vpack.c.bf16 %v2855, %v2854
  %v2895 = vpack.c.bf16 %v2857, %v2856
  %v2896 = vpack.c.bf16 %v2859, %v2858
  %v2897 = vpack.c.bf16 %v2861, %v2860
  %v2898 = vpack.c.bf16 %v2863, %v2862
  %v2899 = vpack.c.bf16 %v2865, %v2864
  %v2900 = vpack.c.bf16 %v2867, %v2866
  %v2901 = vpack.c.bf16 %v2869, %v2868
  %s2902 = scalar_lea.vmem %s1, 320
  %v2903 = vld [vmem:[%s2902] sm:$0xf]
  %v2904 = vld [vmem:[%s2902 + $0x4] sm:$0xf]
  %v2905 = vld [vmem:[%s2902 + $0x8] sm:$0xf]
  %v2906 = vld [vmem:[%s2902 + $0xc] sm:$0xf]
  %v2907 = vld [vmem:[%s2902 + $0x10] sm:$0xf]
  %v2908 = vld [vmem:[%s2902 + $0x14] sm:$0xf]
  %v2909 = vld [vmem:[%s2902 + $0x18] sm:$0xf]
  %v2910 = vld [vmem:[%s2902 + $0x1c] sm:$0xf]
  %v2911 = vld [vmem:[%s2902 + $0x20] sm:$0xf]
  %v2912 = vld [vmem:[%s2902 + $0x24] sm:$0xf]
  %v2913 = vld [vmem:[%s2902 + $0x28] sm:$0xf]
  %v2914 = vld [vmem:[%s2902 + $0x2c] sm:$0xf]
  %v2915 = vld [vmem:[%s2902 + $0x30] sm:$0xf]
  %v2916 = vld [vmem:[%s2902 + $0x34] sm:$0xf]
  %v2917 = vld [vmem:[%s2902 + $0x38] sm:$0xf]
  %v2918 = vld [vmem:[%s2902 + $0x3c] sm:$0xf]
  %v2935 = vunpack.c.l.b16 %v2903
  %v2936 = vunpack.c.l.b16 %v2904
  %v2937 = vunpack.c.l.b16 %v2905
  %v2938 = vunpack.c.l.b16 %v2906
  %v2939 = vunpack.c.l.b16 %v2907
  %v2940 = vunpack.c.l.b16 %v2908
  %v2941 = vunpack.c.l.b16 %v2909
  %v2942 = vunpack.c.l.b16 %v2910
  %v2943 = vunpack.c.l.b16 %v2911
  %v2944 = vunpack.c.l.b16 %v2912
  %v2945 = vunpack.c.l.b16 %v2913
  %v2946 = vunpack.c.l.b16 %v2914
  %v2947 = vunpack.c.l.b16 %v2915
  %v2948 = vunpack.c.l.b16 %v2916
  %v2949 = vunpack.c.l.b16 %v2917
  %v2950 = vunpack.c.l.b16 %v2918
  %v2951 = vpack.c.b16 %v2936, %v2935
  %v2952 = vpack.c.b16 %v2938, %v2937
  %v2953 = vpack.c.b16 %v2940, %v2939
  %v2954 = vpack.c.b16 %v2942, %v2941
  %v2955 = vpack.c.b16 %v2944, %v2943
  %v2956 = vpack.c.b16 %v2946, %v2945
  %v2957 = vpack.c.b16 %v2948, %v2947
  %v2958 = vpack.c.b16 %v2950, %v2949
  %2967 = vmatpush.bf16.msra.mxu0 %v2958
  %2968 = vmatpush.bf16.msra.mxu0 %v2957
  %2969 = vmatpush.bf16.msra.mxu0 %v2956
  %2970 = vmatpush.bf16.msra.mxu0 %v2955
  %2971 = vmatpush.bf16.msra.mxu0 %v2954
  %2972 = vmatpush.bf16.msra.mxu0 %v2953
  %2973 = vmatpush.bf16.msra.mxu0 %v2952
  %2974 = vmatpush.bf16.msra.mxu0 %v2951
  %2975 = vmatmul.bf16.gmra.mxu0 %v2870
  %v2976 = vpop.f32.mrf.mxu0
  %v2977 = vadd.f32 0.0, %v2976
  %v2978 = vpop.f32.mrf.mxu0
  %v2979 = vadd.f32 0.0, %v2978
  %2980 = vmatmul.bf16.gmra.mxu0 %v2871
  %v2981 = vpop.f32.mrf.mxu0
  %v2982 = vadd.f32 0.0, %v2981
  %v2983 = vpop.f32.mrf.mxu0
  %v2984 = vadd.f32 0.0, %v2983
  %2985 = vmatmul.bf16.gmra.mxu0 %v2872
  %v2986 = vpop.f32.mrf.mxu0
  %v2987 = vadd.f32 0.0, %v2986
  %v2988 = vpop.f32.mrf.mxu0
  %v2989 = vadd.f32 0.0, %v2988
  %2990 = vmatmul.bf16.gmra.mxu0 %v2873
  %v2991 = vpop.f32.mrf.mxu0
  %v2992 = vadd.f32 0.0, %v2991
  %v2993 = vpop.f32.mrf.mxu0
  %v2994 = vadd.f32 0.0, %v2993
  %2995 = vmatmul.bf16.gmra.mxu0 %v2874
  %v2996 = vpop.f32.mrf.mxu0
  %v2997 = vadd.f32 0.0, %v2996
  %v2998 = vpop.f32.mrf.mxu0
  %v2999 = vadd.f32 0.0, %v2998
  %3000 = vmatmul.bf16.gmra.mxu0 %v2875
  %v3001 = vpop.f32.mrf.mxu0
  %v3002 = vadd.f32 0.0, %v3001
  %v3003 = vpop.f32.mrf.mxu0
  %v3004 = vadd.f32 0.0, %v3003
  %3005 = vmatmul.bf16.gmra.mxu0 %v2876
  %v3006 = vpop.f32.mrf.mxu0
  %v3007 = vadd.f32 0.0, %v3006
  %v3008 = vpop.f32.mrf.mxu0
  %v3009 = vadd.f32 0.0, %v3008
  %3010 = vmatmul.bf16.gmra.mxu0 %v2877
  %v3011 = vpop.f32.mrf.mxu0
  %v3012 = vadd.f32 0.0, %v3011
  %v3013 = vpop.f32.mrf.mxu0
  %v3014 = vadd.f32 0.0, %v3013
  %3015 = vmatmul.bf16.gmra.mxu0 %v2878
  %v3016 = vpop.f32.mrf.mxu0
  %v3017 = vadd.f32 0.0, %v3016
  %v3018 = vpop.f32.mrf.mxu0
  %v3019 = vadd.f32 0.0, %v3018
  %3020 = vmatmul.bf16.gmra.mxu0 %v2879
  %v3021 = vpop.f32.mrf.mxu0
  %v3022 = vadd.f32 0.0, %v3021
  %v3023 = vpop.f32.mrf.mxu0
  %v3024 = vadd.f32 0.0, %v3023
  %3025 = vmatmul.bf16.gmra.mxu0 %v2880
  %v3026 = vpop.f32.mrf.mxu0
  %v3027 = vadd.f32 0.0, %v3026
  %v3028 = vpop.f32.mrf.mxu0
  %v3029 = vadd.f32 0.0, %v3028
  %3030 = vmatmul.bf16.gmra.mxu0 %v2881
  %v3031 = vpop.f32.mrf.mxu0
  %v3032 = vadd.f32 0.0, %v3031
  %v3033 = vpop.f32.mrf.mxu0
  %v3034 = vadd.f32 0.0, %v3033
  %3035 = vmatmul.bf16.gmra.mxu0 %v2882
  %v3036 = vpop.f32.mrf.mxu0
  %v3037 = vadd.f32 0.0, %v3036
  %v3038 = vpop.f32.mrf.mxu0
  %v3039 = vadd.f32 0.0, %v3038
  %3040 = vmatmul.bf16.gmra.mxu0 %v2883
  %v3041 = vpop.f32.mrf.mxu0
  %v3042 = vadd.f32 0.0, %v3041
  %v3043 = vpop.f32.mrf.mxu0
  %v3044 = vadd.f32 0.0, %v3043
  %3045 = vmatmul.bf16.gmra.mxu0 %v2884
  %v3046 = vpop.f32.mrf.mxu0
  %v3047 = vadd.f32 0.0, %v3046
  %v3048 = vpop.f32.mrf.mxu0
  %v3049 = vadd.f32 0.0, %v3048
  %3050 = vmatmul.bf16.gmra.mxu0 %v2885
  %v3051 = vpop.f32.mrf.mxu0
  %v3052 = vadd.f32 0.0, %v3051
  %v3053 = vpop.f32.mrf.mxu0
  %v3054 = vadd.f32 0.0, %v3053
  %3055 = vmatmul.bf16.gmra.mxu0 %v2886
  %v3056 = vpop.f32.mrf.mxu0
  %v3057 = vadd.f32 0.0, %v3056
  %v3058 = vpop.f32.mrf.mxu0
  %v3059 = vadd.f32 0.0, %v3058
  %3060 = vmatmul.bf16.gmra.mxu0 %v2887
  %v3061 = vpop.f32.mrf.mxu0
  %v3062 = vadd.f32 0.0, %v3061
  %v3063 = vpop.f32.mrf.mxu0
  %v3064 = vadd.f32 0.0, %v3063
  %3065 = vmatmul.bf16.gmra.mxu0 %v2888
  %v3066 = vpop.f32.mrf.mxu0
  %v3067 = vadd.f32 0.0, %v3066
  %v3068 = vpop.f32.mrf.mxu0
  %v3069 = vadd.f32 0.0, %v3068
  %3070 = vmatmul.bf16.gmra.mxu0 %v2889
  %v3071 = vpop.f32.mrf.mxu0
  %v3072 = vadd.f32 0.0, %v3071
  %v3073 = vpop.f32.mrf.mxu0
  %v3074 = vadd.f32 0.0, %v3073
  %3075 = vmatmul.bf16.gmra.mxu0 %v2890
  %v3076 = vpop.f32.mrf.mxu0
  %v3077 = vadd.f32 0.0, %v3076
  %v3078 = vpop.f32.mrf.mxu0
  %v3079 = vadd.f32 0.0, %v3078
  %3080 = vmatmul.bf16.gmra.mxu0 %v2891
  %v3081 = vpop.f32.mrf.mxu0
  %v3082 = vadd.f32 0.0, %v3081
  %v3083 = vpop.f32.mrf.mxu0
  %v3084 = vadd.f32 0.0, %v3083
  %3085 = vmatmul.bf16.gmra.mxu0 %v2892
  %v3086 = vpop.f32.mrf.mxu0
  %v3087 = vadd.f32 0.0, %v3086
  %v3088 = vpop.f32.mrf.mxu0
  %v3089 = vadd.f32 0.0, %v3088
  %3090 = vmatmul.bf16.gmra.mxu0 %v2893
  %v3091 = vpop.f32.mrf.mxu0
  %v3092 = vadd.f32 0.0, %v3091
  %v3093 = vpop.f32.mrf.mxu0
  %v3094 = vadd.f32 0.0, %v3093
  %3095 = vmatmul.bf16.gmra.mxu0 %v2894
  %v3096 = vpop.f32.mrf.mxu0
  %v3097 = vadd.f32 0.0, %v3096
  %v3098 = vpop.f32.mrf.mxu0
  %v3099 = vadd.f32 0.0, %v3098
  %3100 = vmatmul.bf16.gmra.mxu0 %v2895
  %v3101 = vpop.f32.mrf.mxu0
  %v3102 = vadd.f32 0.0, %v3101
  %v3103 = vpop.f32.mrf.mxu0
  %v3104 = vadd.f32 0.0, %v3103
  %3105 = vmatmul.bf16.gmra.mxu0 %v2896
  %v3106 = vpop.f32.mrf.mxu0
  %v3107 = vadd.f32 0.0, %v3106
  %v3108 = vpop.f32.mrf.mxu0
  %v3109 = vadd.f32 0.0, %v3108
  %3110 = vmatmul.bf16.gmra.mxu0 %v2897
  %v3111 = vpop.f32.mrf.mxu0
  %v3112 = vadd.f32 0.0, %v3111
  %v3113 = vpop.f32.mrf.mxu0
  %v3114 = vadd.f32 0.0, %v3113
  %3115 = vmatmul.bf16.gmra.mxu0 %v2898
  %v3116 = vpop.f32.mrf.mxu0
  %v3117 = vadd.f32 0.0, %v3116
  %v3118 = vpop.f32.mrf.mxu0
  %v3119 = vadd.f32 0.0, %v3118
  %3120 = vmatmul.bf16.gmra.mxu0 %v2899
  %v3121 = vpop.f32.mrf.mxu0
  %v3122 = vadd.f32 0.0, %v3121
  %v3123 = vpop.f32.mrf.mxu0
  %v3124 = vadd.f32 0.0, %v3123
  %3125 = vmatmul.bf16.gmra.mxu0 %v2900
  %v3126 = vpop.f32.mrf.mxu0
  %v3127 = vadd.f32 0.0, %v3126
  %v3128 = vpop.f32.mrf.mxu0
  %v3129 = vadd.f32 0.0, %v3128
  %3130 = vmatmul.bf16.gmra.mxu0 %v2901
  %v3131 = vpop.f32.mrf.mxu0
  %v3132 = vadd.f32 0.0, %v3131
  %v3133 = vpop.f32.mrf.mxu0
  %v3134 = vadd.f32 0.0, %v3133
  %3135 = vdwg.mxu0
  %v3136 = vld [vmem:[#allocation4] sm:$0xff]
  %v3137 = vld [vmem:[#allocation4 + $0x8] sm:$0xff]
  %v3138 = vld [vmem:[#allocation4 + $0x10] sm:$0xff]
  %v3139 = vld [vmem:[#allocation4 + $0x18] sm:$0xff]
  %v3140 = vld [vmem:[#allocation4 + $0x20] sm:$0xff]
  %v3141 = vld [vmem:[#allocation4 + $0x28] sm:$0xff]
  %v3142 = vld [vmem:[#allocation4 + $0x30] sm:$0xff]
  %v3143 = vld [vmem:[#allocation4 + $0x38] sm:$0xff]
  %v3144 = vld [vmem:[#allocation4 + $0x40] sm:$0xff]
  %v3145 = vld [vmem:[#allocation4 + $0x48] sm:$0xff]
  %v3146 = vld [vmem:[#allocation4 + $0x50] sm:$0xff]
  %v3147 = vld [vmem:[#allocation4 + $0x58] sm:$0xff]
  %v3148 = vld [vmem:[#allocation4 + $0x60] sm:$0xff]
  %v3149 = vld [vmem:[#allocation4 + $0x68] sm:$0xff]
  %v3150 = vld [vmem:[#allocation4 + $0x70] sm:$0xff]
  %v3151 = vld [vmem:[#allocation4 + $0x78] sm:$0xff]
  %v3152 = vld [vmem:[#allocation4 + $0x80] sm:$0xff]
  %v3153 = vld [vmem:[#allocation4 + $0x88] sm:$0xff]
  %v3154 = vld [vmem:[#allocation4 + $0x90] sm:$0xff]
  %v3155 = vld [vmem:[#allocation4 + $0x98] sm:$0xff]
  %v3156 = vld [vmem:[#allocation4 + $0xa0] sm:$0xff]
  %v3157 = vld [vmem:[#allocation4 + $0xa8] sm:$0xff]
  %v3158 = vld [vmem:[#allocation4 + $0xb0] sm:$0xff]
  %v3159 = vld [vmem:[#allocation4 + $0xb8] sm:$0xff]
  %v3160 = vld [vmem:[#allocation4 + $0xc0] sm:$0xff]
  %v3161 = vld [vmem:[#allocation4 + $0xc8] sm:$0xff]
  %v3162 = vld [vmem:[#allocation4 + $0xd0] sm:$0xff]
  %v3163 = vld [vmem:[#allocation4 + $0xd8] sm:$0xff]
  %v3164 = vld [vmem:[#allocation4 + $0xe0] sm:$0xff]
  %v3165 = vld [vmem:[#allocation4 + $0xe8] sm:$0xff]
  %v3166 = vld [vmem:[#allocation4 + $0xf0] sm:$0xff]
  %v3167 = vld [vmem:[#allocation4 + $0xf8] sm:$0xff]
  %v3168 = vld [vmem:[#allocation4 + $0x100] sm:$0xff]
  %v3169 = vld [vmem:[#allocation4 + $0x108] sm:$0xff]
  %v3170 = vld [vmem:[#allocation4 + $0x110] sm:$0xff]
  %v3171 = vld [vmem:[#allocation4 + $0x118] sm:$0xff]
  %v3172 = vld [vmem:[#allocation4 + $0x120] sm:$0xff]
  %v3173 = vld [vmem:[#allocation4 + $0x128] sm:$0xff]
  %v3174 = vld [vmem:[#allocation4 + $0x130] sm:$0xff]
  %v3175 = vld [vmem:[#allocation4 + $0x138] sm:$0xff]
  %v3176 = vld [vmem:[#allocation4 + $0x140] sm:$0xff]
  %v3177 = vld [vmem:[#allocation4 + $0x148] sm:$0xff]
  %v3178 = vld [vmem:[#allocation4 + $0x150] sm:$0xff]
  %v3179 = vld [vmem:[#allocation4 + $0x158] sm:$0xff]
  %v3180 = vld [vmem:[#allocation4 + $0x160] sm:$0xff]
  %v3181 = vld [vmem:[#allocation4 + $0x168] sm:$0xff]
  %v3182 = vld [vmem:[#allocation4 + $0x170] sm:$0xff]
  %v3183 = vld [vmem:[#allocation4 + $0x178] sm:$0xff]
  %v3184 = vld [vmem:[#allocation4 + $0x180] sm:$0xff]
  %v3185 = vld [vmem:[#allocation4 + $0x188] sm:$0xff]
  %v3186 = vld [vmem:[#allocation4 + $0x190] sm:$0xff]
  %v3187 = vld [vmem:[#allocation4 + $0x198] sm:$0xff]
  %v3188 = vld [vmem:[#allocation4 + $0x1a0] sm:$0xff]
  %v3189 = vld [vmem:[#allocation4 + $0x1a8] sm:$0xff]
  %v3190 = vld [vmem:[#allocation4 + $0x1b0] sm:$0xff]
  %v3191 = vld [vmem:[#allocation4 + $0x1b8] sm:$0xff]
  %v3192 = vld [vmem:[#allocation4 + $0x1c0] sm:$0xff]
  %v3193 = vld [vmem:[#allocation4 + $0x1c8] sm:$0xff]
  %v3194 = vld [vmem:[#allocation4 + $0x1d0] sm:$0xff]
  %v3195 = vld [vmem:[#allocation4 + $0x1d8] sm:$0xff]
  %v3196 = vld [vmem:[#allocation4 + $0x1e0] sm:$0xff]
  %v3197 = vld [vmem:[#allocation4 + $0x1e8] sm:$0xff]
  %v3198 = vld [vmem:[#allocation4 + $0x1f0] sm:$0xff]
  %v3199 = vld [vmem:[#allocation4 + $0x1f8] sm:$0xff]
  %v3200 = vadd.f32 %v3136, %v2977
  %v3201 = vadd.f32 %v3137, %v2979
  %v3202 = vadd.f32 %v3138, %v2982
  %v3203 = vadd.f32 %v3139, %v2984
  %v3204 = vadd.f32 %v3140, %v2987
  %v3205 = vadd.f32 %v3141, %v2989
  %v3206 = vadd.f32 %v3142, %v2992
  %v3207 = vadd.f32 %v3143, %v2994
  %v3208 = vadd.f32 %v3144, %v2997
  %v3209 = vadd.f32 %v3145, %v2999
  %v3210 = vadd.f32 %v3146, %v3002
  %v3211 = vadd.f32 %v3147, %v3004
  %v3212 = vadd.f32 %v3148, %v3007
  %v3213 = vadd.f32 %v3149, %v3009
  %v3214 = vadd.f32 %v3150, %v3012
  %v3215 = vadd.f32 %v3151, %v3014
  %v3216 = vadd.f32 %v3152, %v3017
  %v3217 = vadd.f32 %v3153, %v3019
  %v3218 = vadd.f32 %v3154, %v3022
  %v3219 = vadd.f32 %v3155, %v3024
  %v3220 = vadd.f32 %v3156, %v3027
  %v3221 = vadd.f32 %v3157, %v3029
  %v3222 = vadd.f32 %v3158, %v3032
  %v3223 = vadd.f32 %v3159, %v3034
  %v3224 = vadd.f32 %v3160, %v3037
  %v3225 = vadd.f32 %v3161, %v3039
  %v3226 = vadd.f32 %v3162, %v3042
  %v3227 = vadd.f32 %v3163, %v3044
  %v3228 = vadd.f32 %v3164, %v3047
  %v3229 = vadd.f32 %v3165, %v3049
  %v3230 = vadd.f32 %v3166, %v3052
  %v3231 = vadd.f32 %v3167, %v3054
  %v3232 = vadd.f32 %v3168, %v3057
  %v3233 = vadd.f32 %v3169, %v3059
  %v3234 = vadd.f32 %v3170, %v3062
  %v3235 = vadd.f32 %v3171, %v3064
  %v3236 = vadd.f32 %v3172, %v3067
  %v3237 = vadd.f32 %v3173, %v3069
  %v3238 = vadd.f32 %v3174, %v3072
  %v3239 = vadd.f32 %v3175, %v3074
  %v3240 = vadd.f32 %v3176, %v3077
  %v3241 = vadd.f32 %v3177, %v3079
  %v3242 = vadd.f32 %v3178, %v3082
  %v3243 = vadd.f32 %v3179, %v3084
  %v3244 = vadd.f32 %v3180, %v3087
  %v3245 = vadd.f32 %v3181, %v3089
  %v3246 = vadd.f32 %v3182, %v3092
  %v3247 = vadd.f32 %v3183, %v3094
  %v3248 = vadd.f32 %v3184, %v3097
  %v3249 = vadd.f32 %v3185, %v3099
  %v3250 = vadd.f32 %v3186, %v3102
  %v3251 = vadd.f32 %v3187, %v3104
  %v3252 = vadd.f32 %v3188, %v3107
  %v3253 = vadd.f32 %v3189, %v3109
  %v3254 = vadd.f32 %v3190, %v3112
  %v3255 = vadd.f32 %v3191, %v3114
  %v3256 = vadd.f32 %v3192, %v3117
  %v3257 = vadd.f32 %v3193, %v3119
  %v3258 = vadd.f32 %v3194, %v3122
  %v3259 = vadd.f32 %v3195, %v3124
  %v3260 = vadd.f32 %v3196, %v3127
  %v3261 = vadd.f32 %v3197, %v3129
  %v3262 = vadd.f32 %v3198, %v3132
  %v3263 = vadd.f32 %v3199, %v3134
  %3264 = vst [vmem:[#allocation4] sm:$0xff] %v3200
  %3265 = vst [vmem:[#allocation4 + $0x8] sm:$0xff] %v3201
  %3266 = vst [vmem:[#allocation4 + $0x10] sm:$0xff] %v3202
  %3267 = vst [vmem:[#allocation4 + $0x18] sm:$0xff] %v3203
  %3268 = vst [vmem:[#allocation4 + $0x20] sm:$0xff] %v3204
  %3269 = vst [vmem:[#allocation4 + $0x28] sm:$0xff] %v3205
  %3270 = vst [vmem:[#allocation4 + $0x30] sm:$0xff] %v3206
  %3271 = vst [vmem:[#allocation4 + $0x38] sm:$0xff] %v3207
  %3272 = vst [vmem:[#allocation4 + $0x40] sm:$0xff] %v3208
  %3273 = vst [vmem:[#allocation4 + $0x48] sm:$0xff] %v3209
  %3274 = vst [vmem:[#allocation4 + $0x50] sm:$0xff] %v3210
  %3275 = vst [vmem:[#allocation4 + $0x58] sm:$0xff] %v3211
  %3276 = vst [vmem:[#allocation4 + $0x60] sm:$0xff] %v3212
  %3277 = vst [vmem:[#allocation4 + $0x68] sm:$0xff] %v3213
  %3278 = vst [vmem:[#allocation4 + $0x70] sm:$0xff] %v3214
  %3279 = vst [vmem:[#allocation4 + $0x78] sm:$0xff] %v3215
  %3280 = vst [vmem:[#allocation4 + $0x80] sm:$0xff] %v3216
  %3281 = vst [vmem:[#allocation4 + $0x88] sm:$0xff] %v3217
  %3282 = vst [vmem:[#allocation4 + $0x90] sm:$0xff] %v3218
  %3283 = vst [vmem:[#allocation4 + $0x98] sm:$0xff] %v3219
  %3284 = vst [vmem:[#allocation4 + $0xa0] sm:$0xff] %v3220
  %3285 = vst [vmem:[#allocation4 + $0xa8] sm:$0xff] %v3221
  %3286 = vst [vmem:[#allocation4 + $0xb0] sm:$0xff] %v3222
  %3287 = vst [vmem:[#allocation4 + $0xb8] sm:$0xff] %v3223
  %3288 = vst [vmem:[#allocation4 + $0xc0] sm:$0xff] %v3224
  %3289 = vst [vmem:[#allocation4 + $0xc8] sm:$0xff] %v3225
  %3290 = vst [vmem:[#allocation4 + $0xd0] sm:$0xff] %v3226
  %3291 = vst [vmem:[#allocation4 + $0xd8] sm:$0xff] %v3227
  %3292 = vst [vmem:[#allocation4 + $0xe0] sm:$0xff] %v3228
  %3293 = vst [vmem:[#allocation4 + $0xe8] sm:$0xff] %v3229
  %3294 = vst [vmem:[#allocation4 + $0xf0] sm:$0xff] %v3230
  %3295 = vst [vmem:[#allocation4 + $0xf8] sm:$0xff] %v3231
  %3296 = vst [vmem:[#allocation4 + $0x100] sm:$0xff] %v3232
  %3297 = vst [vmem:[#allocation4 + $0x108] sm:$0xff] %v3233
  %3298 = vst [vmem:[#allocation4 + $0x110] sm:$0xff] %v3234
  %3299 = vst [vmem:[#allocation4 + $0x118] sm:$0xff] %v3235
  %3300 = vst [vmem:[#allocation4 + $0x120] sm:$0xff] %v3236
  %3301 = vst [vmem:[#allocation4 + $0x128] sm:$0xff] %v3237
  %3302 = vst [vmem:[#allocation4 + $0x130] sm:$0xff] %v3238
  %3303 = vst [vmem:[#allocation4 + $0x138] sm:$0xff] %v3239
  %3304 = vst [vmem:[#allocation4 + $0x140] sm:$0xff] %v3240
  %3305 = vst [vmem:[#allocation4 + $0x148] sm:$0xff] %v3241
  %3306 = vst [vmem:[#allocation4 + $0x150] sm:$0xff] %v3242
  %3307 = vst [vmem:[#allocation4 + $0x158] sm:$0xff] %v3243
  %3308 = vst [vmem:[#allocation4 + $0x160] sm:$0xff] %v3244
  %3309 = vst [vmem:[#allocation4 + $0x168] sm:$0xff] %v3245
  %3310 = vst [vmem:[#allocation4 + $0x170] sm:$0xff] %v3246
  %3311 = vst [vmem:[#allocation4 + $0x178] sm:$0xff] %v3247
  %3312 = vst [vmem:[#allocation4 + $0x180] sm:$0xff] %v3248
  %3313 = vst [vmem:[#allocation4 + $0x188] sm:$0xff] %v3249
  %3314 = vst [vmem:[#allocation4 + $0x190] sm:$0xff] %v3250
  %3315 = vst [vmem:[#allocation4 + $0x198] sm:$0xff] %v3251
  %3316 = vst [vmem:[#allocation4 + $0x1a0] sm:$0xff] %v3252
  %3317 = vst [vmem:[#allocation4 + $0x1a8] sm:$0xff] %v3253
  %3318 = vst [vmem:[#allocation4 + $0x1b0] sm:$0xff] %v3254
  %3319 = vst [vmem:[#allocation4 + $0x1b8] sm:$0xff] %v3255
  %3320 = vst [vmem:[#allocation4 + $0x1c0] sm:$0xff] %v3256
  %3321 = vst [vmem:[#allocation4 + $0x1c8] sm:$0xff] %v3257
  %3322 = vst [vmem:[#allocation4 + $0x1d0] sm:$0xff] %v3258
  %3323 = vst [vmem:[#allocation4 + $0x1d8] sm:$0xff] %v3259
  %3324 = vst [vmem:[#allocation4 + $0x1e0] sm:$0xff] %v3260
  %3325 = vst [vmem:[#allocation4 + $0x1e8] sm:$0xff] %v3261
  %3326 = vst [vmem:[#allocation4 + $0x1f0] sm:$0xff] %v3262
  %3327 = vst [vmem:[#allocation4 + $0x1f8] sm:$0xff] %v3263
  %s3328 = scalar_lea.vmem [#allocation2], 48
  %v3329 = vld [vmem:[%s3328] sm:$0xff]
  %v3330 = vld [vmem:[%s3328 + $0x8] sm:$0xff]
  %v3331 = vld [vmem:[%s3328 + $0x18] sm:$0xff]
  %v3332 = vld [vmem:[%s3328 + $0x20] sm:$0xff]
  %v3333 = vld [vmem:[%s3328 + $0x30] sm:$0xff]
  %v3334 = vld [vmem:[%s3328 + $0x38] sm:$0xff]
  %v3335 = vld [vmem:[%s3328 + $0x48] sm:$0xff]
  %v3336 = vld [vmem:[%s3328 + $0x50] sm:$0xff]
  %v3337 = vld [vmem:[%s3328 + $0x60] sm:$0xff]
  %v3338 = vld [vmem:[%s3328 + $0x68] sm:$0xff]
  %v3339 = vld [vmem:[%s3328 + $0x78] sm:$0xff]
  %v3340 = vld [vmem:[%s3328 + $0x80] sm:$0xff]
  %v3341 = vld [vmem:[%s3328 + $0x90] sm:$0xff]
  %v3342 = vld [vmem:[%s3328 + $0x98] sm:$0xff]
  %v3343 = vld [vmem:[%s3328 + $0xa8] sm:$0xff]
  %v3344 = vld [vmem:[%s3328 + $0xb0] sm:$0xff]
  %v3345 = vld [vmem:[%s3328 + $0xc0] sm:$0xff]
  %v3346 = vld [vmem:[%s3328 + $0xc8] sm:$0xff]
  %v3347 = vld [vmem:[%s3328 + $0xd8] sm:$0xff]
  %v3348 = vld [vmem:[%s3328 + $0xe0] sm:$0xff]
  %v3349 = vld [vmem:[%s3328 + $0xf0] sm:$0xff]
  %v3350 = vld [vmem:[%s3328 + $0xf8] sm:$0xff]
  %v3351 = vld [vmem:[%s3328 + $0x108] sm:$0xff]
  %v3352 = vld [vmem:[%s3328 + $0x110] sm:$0xff]
  %v3353 = vld [vmem:[%s3328 + $0x120] sm:$0xff]
  %v3354 = vld [vmem:[%s3328 + $0x128] sm:$0xff]
  %v3355 = vld [vmem:[%s3328 + $0x138] sm:$0xff]
  %v3356 = vld [vmem:[%s3328 + $0x140] sm:$0xff]
  %v3357 = vld [vmem:[%s3328 + $0x150] sm:$0xff]
  %v3358 = vld [vmem:[%s3328 + $0x158] sm:$0xff]
  %v3359 = vld [vmem:[%s3328 + $0x168] sm:$0xff]
  %v3360 = vld [vmem:[%s3328 + $0x170] sm:$0xff]
  %v3361 = vld [vmem:[%s3328 + $0x1b0] sm:$0xff]
  %v3362 = vld [vmem:[%s3328 + $0x1b8] sm:$0xff]
  %v3363 = vld [vmem:[%s3328 + $0x1c8] sm:$0xff]
  %v3364 = vld [vmem:[%s3328 + $0x1d0] sm:$0xff]
  %v3365 = vld [vmem:[%s3328 + $0x1e0] sm:$0xff]
  %v3366 = vld [vmem:[%s3328 + $0x1e8] sm:$0xff]
  %v3367 = vld [vmem:[%s3328 + $0x1f8] sm:$0xff]
  %v3368 = vld [vmem:[%s3328 + $0x200] sm:$0xff]
  %v3369 = vld [vmem:[%s3328 + $0x210] sm:$0xff]
  %v3370 = vld [vmem:[%s3328 + $0x218] sm:$0xff]
  %v3371 = vld [vmem:[%s3328 + $0x228] sm:$0xff]
  %v3372 = vld [vmem:[%s3328 + $0x230] sm:$0xff]
  %v3373 = vld [vmem:[%s3328 + $0x240] sm:$0xff]
  %v3374 = vld [vmem:[%s3328 + $0x248] sm:$0xff]
  %v3375 = vld [vmem:[%s3328 + $0x258] sm:$0xff]
  %v3376 = vld [vmem:[%s3328 + $0x260] sm:$0xff]
  %v3377 = vld [vmem:[%s3328 + $0x270] sm:$0xff]
  %v3378 = vld [vmem:[%s3328 + $0x278] sm:$0xff]
  %v3379 = vld [vmem:[%s3328 + $0x288] sm:$0xff]
  %v3380 = vld [vmem:[%s3328 + $0x290] sm:$0xff]
  %v3381 = vld [vmem:[%s3328 + $0x2a0] sm:$0xff]
  %v3382 = vld [vmem:[%s3328 + $0x2a8] sm:$0xff]
  %v3383 = vld [vmem:[%s3328 + $0x2b8] sm:$0xff]
  %v3384 = vld [vmem:[%s3328 + $0x2c0] sm:$0xff]
  %v3385 = vld [vmem:[%s3328 + $0x2d0] sm:$0xff]
  %v3386 = vld [vmem:[%s3328 + $0x2d8] sm:$0xff]
  %v3387 = vld [vmem:[%s3328 + $0x2e8] sm:$0xff]
  %v3388 = vld [vmem:[%s3328 + $0x2f0] sm:$0xff]
  %v3389 = vld [vmem:[%s3328 + $0x300] sm:$0xff]
  %v3390 = vld [vmem:[%s3328 + $0x308] sm:$0xff]
  %v3391 = vld [vmem:[%s3328 + $0x318] sm:$0xff]
  %v3392 = vld [vmem:[%s3328 + $0x320] sm:$0xff]
  %v3393 = vpack.c.bf16 %v3330, %v3329
  %v3394 = vpack.c.bf16 %v3332, %v3331
  %v3395 = vpack.c.bf16 %v3334, %v3333
  %v3396 = vpack.c.bf16 %v3336, %v3335
  %v3397 = vpack.c.bf16 %v3338, %v3337
  %v3398 = vpack.c.bf16 %v3340, %v3339
  %v3399 = vpack.c.bf16 %v3342, %v3341
  %v3400 = vpack.c.bf16 %v3344, %v3343
  %v3401 = vpack.c.bf16 %v3346, %v3345
  %v3402 = vpack.c.bf16 %v3348, %v3347
  %v3403 = vpack.c.bf16 %v3350, %v3349
  %v3404 = vpack.c.bf16 %v3352, %v3351
  %v3405 = vpack.c.bf16 %v3354, %v3353
  %v3406 = vpack.c.bf16 %v3356, %v3355
  %v3407 = vpack.c.bf16 %v3358, %v3357
  %v3408 = vpack.c.bf16 %v3360, %v3359
  %v3409 = vpack.c.bf16 %v3362, %v3361
  %v3410 = vpack.c.bf16 %v3364, %v3363
  %v3411 = vpack.c.bf16 %v3366, %v3365
  %v3412 = vpack.c.bf16 %v3368, %v3367
  %v3413 = vpack.c.bf16 %v3370, %v3369
  %v3414 = vpack.c.bf16 %v3372, %v3371
  %v3415 = vpack.c.bf16 %v3374, %v3373
  %v3416 = vpack.c.bf16 %v3376, %v3375
  %v3417 = vpack.c.bf16 %v3378, %v3377
  %v3418 = vpack.c.bf16 %v3380, %v3379
  %v3419 = vpack.c.bf16 %v3382, %v3381
  %v3420 = vpack.c.bf16 %v3384, %v3383
  %v3421 = vpack.c.bf16 %v3386, %v3385
  %v3422 = vpack.c.bf16 %v3388, %v3387
  %v3423 = vpack.c.bf16 %v3390, %v3389
  %v3424 = vpack.c.bf16 %v3392, %v3391
  %s3425 = scalar_lea.vmem %s1, 384
  %v3426 = vld [vmem:[%s3425] sm:$0xf]
  %v3427 = vld [vmem:[%s3425 + $0x4] sm:$0xf]
  %v3428 = vld [vmem:[%s3425 + $0x8] sm:$0xf]
  %v3429 = vld [vmem:[%s3425 + $0xc] sm:$0xf]
  %v3430 = vld [vmem:[%s3425 + $0x10] sm:$0xf]
  %v3431 = vld [vmem:[%s3425 + $0x14] sm:$0xf]
  %v3432 = vld [vmem:[%s3425 + $0x18] sm:$0xf]
  %v3433 = vld [vmem:[%s3425 + $0x1c] sm:$0xf]
  %v3434 = vld [vmem:[%s3425 + $0x20] sm:$0xf]
  %v3435 = vld [vmem:[%s3425 + $0x24] sm:$0xf]
  %v3436 = vld [vmem:[%s3425 + $0x28] sm:$0xf]
  %v3437 = vld [vmem:[%s3425 + $0x2c] sm:$0xf]
  %v3438 = vld [vmem:[%s3425 + $0x30] sm:$0xf]
  %v3439 = vld [vmem:[%s3425 + $0x34] sm:$0xf]
  %v3440 = vld [vmem:[%s3425 + $0x38] sm:$0xf]
  %v3441 = vld [vmem:[%s3425 + $0x3c] sm:$0xf]
  %v3458 = vunpack.c.l.b16 %v3426
  %v3459 = vunpack.c.l.b16 %v3427
  %v3460 = vunpack.c.l.b16 %v3428
  %v3461 = vunpack.c.l.b16 %v3429
  %v3462 = vunpack.c.l.b16 %v3430
  %v3463 = vunpack.c.l.b16 %v3431
  %v3464 = vunpack.c.l.b16 %v3432
  %v3465 = vunpack.c.l.b16 %v3433
  %v3466 = vunpack.c.l.b16 %v3434
  %v3467 = vunpack.c.l.b16 %v3435
  %v3468 = vunpack.c.l.b16 %v3436
  %v3469 = vunpack.c.l.b16 %v3437
  %v3470 = vunpack.c.l.b16 %v3438
  %v3471 = vunpack.c.l.b16 %v3439
  %v3472 = vunpack.c.l.b16 %v3440
  %v3473 = vunpack.c.l.b16 %v3441
  %v3474 = vpack.c.b16 %v3459, %v3458
  %v3475 = vpack.c.b16 %v3461, %v3460
  %v3476 = vpack.c.b16 %v3463, %v3462
  %v3477 = vpack.c.b16 %v3465, %v3464
  %v3478 = vpack.c.b16 %v3467, %v3466
  %v3479 = vpack.c.b16 %v3469, %v3468
  %v3480 = vpack.c.b16 %v3471, %v3470
  %v3481 = vpack.c.b16 %v3473, %v3472
  %3490 = vmatpush.bf16.msra.mxu0 %v3481
  %3491 = vmatpush.bf16.msra.mxu0 %v3480
  %3492 = vmatpush.bf16.msra.mxu0 %v3479
  %3493 = vmatpush.bf16.msra.mxu0 %v3478
  %3494 = vmatpush.bf16.msra.mxu0 %v3477
  %3495 = vmatpush.bf16.msra.mxu0 %v3476
  %3496 = vmatpush.bf16.msra.mxu0 %v3475
  %3497 = vmatpush.bf16.msra.mxu0 %v3474
  %3498 = vmatmul.bf16.gmra.mxu0 %v3393
  %v3499 = vpop.f32.mrf.mxu0
  %v3500 = vadd.f32 0.0, %v3499
  %v3501 = vpop.f32.mrf.mxu0
  %v3502 = vadd.f32 0.0, %v3501
  %3503 = vmatmul.bf16.gmra.mxu0 %v3394
  %v3504 = vpop.f32.mrf.mxu0
  %v3505 = vadd.f32 0.0, %v3504
  %v3506 = vpop.f32.mrf.mxu0
  %v3507 = vadd.f32 0.0, %v3506
  %3508 = vmatmul.bf16.gmra.mxu0 %v3395
  %v3509 = vpop.f32.mrf.mxu0
  %v3510 = vadd.f32 0.0, %v3509
  %v3511 = vpop.f32.mrf.mxu0
  %v3512 = vadd.f32 0.0, %v3511
  %3513 = vmatmul.bf16.gmra.mxu0 %v3396
  %v3514 = vpop.f32.mrf.mxu0
  %v3515 = vadd.f32 0.0, %v3514
  %v3516 = vpop.f32.mrf.mxu0
  %v3517 = vadd.f32 0.0, %v3516
  %3518 = vmatmul.bf16.gmra.mxu0 %v3397
  %v3519 = vpop.f32.mrf.mxu0
  %v3520 = vadd.f32 0.0, %v3519
  %v3521 = vpop.f32.mrf.mxu0
  %v3522 = vadd.f32 0.0, %v3521
  %3523 = vmatmul.bf16.gmra.mxu0 %v3398
  %v3524 = vpop.f32.mrf.mxu0
  %v3525 = vadd.f32 0.0, %v3524
  %v3526 = vpop.f32.mrf.mxu0
  %v3527 = vadd.f32 0.0, %v3526
  %3528 = vmatmul.bf16.gmra.mxu0 %v3399
  %v3529 = vpop.f32.mrf.mxu0
  %v3530 = vadd.f32 0.0, %v3529
  %v3531 = vpop.f32.mrf.mxu0
  %v3532 = vadd.f32 0.0, %v3531
  %3533 = vmatmul.bf16.gmra.mxu0 %v3400
  %v3534 = vpop.f32.mrf.mxu0
  %v3535 = vadd.f32 0.0, %v3534
  %v3536 = vpop.f32.mrf.mxu0
  %v3537 = vadd.f32 0.0, %v3536
  %3538 = vmatmul.bf16.gmra.mxu0 %v3401
  %v3539 = vpop.f32.mrf.mxu0
  %v3540 = vadd.f32 0.0, %v3539
  %v3541 = vpop.f32.mrf.mxu0
  %v3542 = vadd.f32 0.0, %v3541
  %3543 = vmatmul.bf16.gmra.mxu0 %v3402
  %v3544 = vpop.f32.mrf.mxu0
  %v3545 = vadd.f32 0.0, %v3544
  %v3546 = vpop.f32.mrf.mxu0
  %v3547 = vadd.f32 0.0, %v3546
  %3548 = vmatmul.bf16.gmra.mxu0 %v3403
  %v3549 = vpop.f32.mrf.mxu0
  %v3550 = vadd.f32 0.0, %v3549
  %v3551 = vpop.f32.mrf.mxu0
  %v3552 = vadd.f32 0.0, %v3551
  %3553 = vmatmul.bf16.gmra.mxu0 %v3404
  %v3554 = vpop.f32.mrf.mxu0
  %v3555 = vadd.f32 0.0, %v3554
  %v3556 = vpop.f32.mrf.mxu0
  %v3557 = vadd.f32 0.0, %v3556
  %3558 = vmatmul.bf16.gmra.mxu0 %v3405
  %v3559 = vpop.f32.mrf.mxu0
  %v3560 = vadd.f32 0.0, %v3559
  %v3561 = vpop.f32.mrf.mxu0
  %v3562 = vadd.f32 0.0, %v3561
  %3563 = vmatmul.bf16.gmra.mxu0 %v3406
  %v3564 = vpop.f32.mrf.mxu0
  %v3565 = vadd.f32 0.0, %v3564
  %v3566 = vpop.f32.mrf.mxu0
  %v3567 = vadd.f32 0.0, %v3566
  %3568 = vmatmul.bf16.gmra.mxu0 %v3407
  %v3569 = vpop.f32.mrf.mxu0
  %v3570 = vadd.f32 0.0, %v3569
  %v3571 = vpop.f32.mrf.mxu0
  %v3572 = vadd.f32 0.0, %v3571
  %3573 = vmatmul.bf16.gmra.mxu0 %v3408
  %v3574 = vpop.f32.mrf.mxu0
  %v3575 = vadd.f32 0.0, %v3574
  %v3576 = vpop.f32.mrf.mxu0
  %v3577 = vadd.f32 0.0, %v3576
  %3578 = vmatmul.bf16.gmra.mxu0 %v3409
  %v3579 = vpop.f32.mrf.mxu0
  %v3580 = vadd.f32 0.0, %v3579
  %v3581 = vpop.f32.mrf.mxu0
  %v3582 = vadd.f32 0.0, %v3581
  %3583 = vmatmul.bf16.gmra.mxu0 %v3410
  %v3584 = vpop.f32.mrf.mxu0
  %v3585 = vadd.f32 0.0, %v3584
  %v3586 = vpop.f32.mrf.mxu0
  %v3587 = vadd.f32 0.0, %v3586
  %3588 = vmatmul.bf16.gmra.mxu0 %v3411
  %v3589 = vpop.f32.mrf.mxu0
  %v3590 = vadd.f32 0.0, %v3589
  %v3591 = vpop.f32.mrf.mxu0
  %v3592 = vadd.f32 0.0, %v3591
  %3593 = vmatmul.bf16.gmra.mxu0 %v3412
  %v3594 = vpop.f32.mrf.mxu0
  %v3595 = vadd.f32 0.0, %v3594
  %v3596 = vpop.f32.mrf.mxu0
  %v3597 = vadd.f32 0.0, %v3596
  %3598 = vmatmul.bf16.gmra.mxu0 %v3413
  %v3599 = vpop.f32.mrf.mxu0
  %v3600 = vadd.f32 0.0, %v3599
  %v3601 = vpop.f32.mrf.mxu0
  %v3602 = vadd.f32 0.0, %v3601
  %3603 = vmatmul.bf16.gmra.mxu0 %v3414
  %v3604 = vpop.f32.mrf.mxu0
  %v3605 = vadd.f32 0.0, %v3604
  %v3606 = vpop.f32.mrf.mxu0
  %v3607 = vadd.f32 0.0, %v3606
  %3608 = vmatmul.bf16.gmra.mxu0 %v3415
  %v3609 = vpop.f32.mrf.mxu0
  %v3610 = vadd.f32 0.0, %v3609
  %v3611 = vpop.f32.mrf.mxu0
  %v3612 = vadd.f32 0.0, %v3611
  %3613 = vmatmul.bf16.gmra.mxu0 %v3416
  %v3614 = vpop.f32.mrf.mxu0
  %v3615 = vadd.f32 0.0, %v3614
  %v3616 = vpop.f32.mrf.mxu0
  %v3617 = vadd.f32 0.0, %v3616
  %3618 = vmatmul.bf16.gmra.mxu0 %v3417
  %v3619 = vpop.f32.mrf.mxu0
  %v3620 = vadd.f32 0.0, %v3619
  %v3621 = vpop.f32.mrf.mxu0
  %v3622 = vadd.f32 0.0, %v3621
  %3623 = vmatmul.bf16.gmra.mxu0 %v3418
  %v3624 = vpop.f32.mrf.mxu0
  %v3625 = vadd.f32 0.0, %v3624
  %v3626 = vpop.f32.mrf.mxu0
  %v3627 = vadd.f32 0.0, %v3626
  %3628 = vmatmul.bf16.gmra.mxu0 %v3419
  %v3629 = vpop.f32.mrf.mxu0
  %v3630 = vadd.f32 0.0, %v3629
  %v3631 = vpop.f32.mrf.mxu0
  %v3632 = vadd.f32 0.0, %v3631
  %3633 = vmatmul.bf16.gmra.mxu0 %v3420
  %v3634 = vpop.f32.mrf.mxu0
  %v3635 = vadd.f32 0.0, %v3634
  %v3636 = vpop.f32.mrf.mxu0
  %v3637 = vadd.f32 0.0, %v3636
  %3638 = vmatmul.bf16.gmra.mxu0 %v3421
  %v3639 = vpop.f32.mrf.mxu0
  %v3640 = vadd.f32 0.0, %v3639
  %v3641 = vpop.f32.mrf.mxu0
  %v3642 = vadd.f32 0.0, %v3641
  %3643 = vmatmul.bf16.gmra.mxu0 %v3422
  %v3644 = vpop.f32.mrf.mxu0
  %v3645 = vadd.f32 0.0, %v3644
  %v3646 = vpop.f32.mrf.mxu0
  %v3647 = vadd.f32 0.0, %v3646
  %3648 = vmatmul.bf16.gmra.mxu0 %v3423
  %v3649 = vpop.f32.mrf.mxu0
  %v3650 = vadd.f32 0.0, %v3649
  %v3651 = vpop.f32.mrf.mxu0
  %v3652 = vadd.f32 0.0, %v3651
  %3653 = vmatmul.bf16.gmra.mxu0 %v3424
  %v3654 = vpop.f32.mrf.mxu0
  %v3655 = vadd.f32 0.0, %v3654
  %v3656 = vpop.f32.mrf.mxu0
  %v3657 = vadd.f32 0.0, %v3656
  %3658 = vdwg.mxu0
  %v3659 = vld [vmem:[#allocation4] sm:$0xff]
  %v3660 = vld [vmem:[#allocation4 + $0x8] sm:$0xff]
  %v3661 = vld [vmem:[#allocation4 + $0x10] sm:$0xff]
  %v3662 = vld [vmem:[#allocation4 + $0x18] sm:$0xff]
  %v3663 = vld [vmem:[#allocation4 + $0x20] sm:$0xff]
  %v3664 = vld [vmem:[#allocation4 + $0x28] sm:$0xff]
  %v3665 = vld [vmem:[#allocation4 + $0x30] sm:$0xff]
  %v3666 = vld [vmem:[#allocation4 + $0x38] sm:$0xff]
  %v3667 = vld [vmem:[#allocation4 + $0x40] sm:$0xff]
  %v3668 = vld [vmem:[#allocation4 + $0x48] sm:$0xff]
  %v3669 = vld [vmem:[#allocation4 + $0x50] sm:$0xff]
  %v3670 = vld [vmem:[#allocation4 + $0x58] sm:$0xff]
  %v3671 = vld [vmem:[#allocation4 + $0x60] sm:$0xff]
  %v3672 = vld [vmem:[#allocation4 + $0x68] sm:$0xff]
  %v3673 = vld [vmem:[#allocation4 + $0x70] sm:$0xff]
  %v3674 = vld [vmem:[#allocation4 + $0x78] sm:$0xff]
  %v3675 = vld [vmem:[#allocation4 + $0x80] sm:$0xff]
  %v3676 = vld [vmem:[#allocation4 + $0x88] sm:$0xff]
  %v3677 = vld [vmem:[#allocation4 + $0x90] sm:$0xff]
  %v3678 = vld [vmem:[#allocation4 + $0x98] sm:$0xff]
  %v3679 = vld [vmem:[#allocation4 + $0xa0] sm:$0xff]
  %v3680 = vld [vmem:[#allocation4 + $0xa8] sm:$0xff]
  %v3681 = vld [vmem:[#allocation4 + $0xb0] sm:$0xff]
  %v3682 = vld [vmem:[#allocation4 + $0xb8] sm:$0xff]
  %v3683 = vld [vmem:[#allocation4 + $0xc0] sm:$0xff]
  %v3684 = vld [vmem:[#allocation4 + $0xc8] sm:$0xff]
  %v3685 = vld [vmem:[#allocation4 + $0xd0] sm:$0xff]
  %v3686 = vld [vmem:[#allocation4 + $0xd8] sm:$0xff]
  %v3687 = vld [vmem:[#allocation4 + $0xe0] sm:$0xff]
  %v3688 = vld [vmem:[#allocation4 + $0xe8] sm:$0xff]
  %v3689 = vld [vmem:[#allocation4 + $0xf0] sm:$0xff]
  %v3690 = vld [vmem:[#allocation4 + $0xf8] sm:$0xff]
  %v3691 = vld [vmem:[#allocation4 + $0x100] sm:$0xff]
  %v3692 = vld [vmem:[#allocation4 + $0x108] sm:$0xff]
  %v3693 = vld [vmem:[#allocation4 + $0x110] sm:$0xff]
  %v3694 = vld [vmem:[#allocation4 + $0x118] sm:$0xff]
  %v3695 = vld [vmem:[#allocation4 + $0x120] sm:$0xff]
  %v3696 = vld [vmem:[#allocation4 + $0x128] sm:$0xff]
  %v3697 = vld [vmem:[#allocation4 + $0x130] sm:$0xff]
  %v3698 = vld [vmem:[#allocation4 + $0x138] sm:$0xff]
  %v3699 = vld [vmem:[#allocation4 + $0x140] sm:$0xff]
  %v3700 = vld [vmem:[#allocation4 + $0x148] sm:$0xff]
  %v3701 = vld [vmem:[#allocation4 + $0x150] sm:$0xff]
  %v3702 = vld [vmem:[#allocation4 + $0x158] sm:$0xff]
  %v3703 = vld [vmem:[#allocation4 + $0x160] sm:$0xff]
  %v3704 = vld [vmem:[#allocation4 + $0x168] sm:$0xff]
  %v3705 = vld [vmem:[#allocation4 + $0x170] sm:$0xff]
  %v3706 = vld [vmem:[#allocation4 + $0x178] sm:$0xff]
  %v3707 = vld [vmem:[#allocation4 + $0x180] sm:$0xff]
  %v3708 = vld [vmem:[#allocation4 + $0x188] sm:$0xff]
  %v3709 = vld [vmem:[#allocation4 + $0x190] sm:$0xff]
  %v3710 = vld [vmem:[#allocation4 + $0x198] sm:$0xff]
  %v3711 = vld [vmem:[#allocation4 + $0x1a0] sm:$0xff]
  %v3712 = vld [vmem:[#allocation4 + $0x1a8] sm:$0xff]
  %v3713 = vld [vmem:[#allocation4 + $0x1b0] sm:$0xff]
  %v3714 = vld [vmem:[#allocation4 + $0x1b8] sm:$0xff]
  %v3715 = vld [vmem:[#allocation4 + $0x1c0] sm:$0xff]
  %v3716 = vld [vmem:[#allocation4 + $0x1c8] sm:$0xff]
  %v3717 = vld [vmem:[#allocation4 + $0x1d0] sm:$0xff]
  %v3718 = vld [vmem:[#allocation4 + $0x1d8] sm:$0xff]
  %v3719 = vld [vmem:[#allocation4 + $0x1e0] sm:$0xff]
  %v3720 = vld [vmem:[#allocation4 + $0x1e8] sm:$0xff]
  %v3721 = vld [vmem:[#allocation4 + $0x1f0] sm:$0xff]
  %v3722 = vld [vmem:[#allocation4 + $0x1f8] sm:$0xff]
  %v3723 = vadd.f32 %v3659, %v3500
  %v3724 = vadd.f32 %v3660, %v3502
  %v3725 = vadd.f32 %v3661, %v3505
  %v3726 = vadd.f32 %v3662, %v3507
  %v3727 = vadd.f32 %v3663, %v3510
  %v3728 = vadd.f32 %v3664, %v3512
  %v3729 = vadd.f32 %v3665, %v3515
  %v3730 = vadd.f32 %v3666, %v3517
  %v3731 = vadd.f32 %v3667, %v3520
  %v3732 = vadd.f32 %v3668, %v3522
  %v3733 = vadd.f32 %v3669, %v3525
  %v3734 = vadd.f32 %v3670, %v3527
  %v3735 = vadd.f32 %v3671, %v3530
  %v3736 = vadd.f32 %v3672, %v3532
  %v3737 = vadd.f32 %v3673, %v3535
  %v3738 = vadd.f32 %v3674, %v3537
  %v3739 = vadd.f32 %v3675, %v3540
  %v3740 = vadd.f32 %v3676, %v3542
  %v3741 = vadd.f32 %v3677, %v3545
  %v3742 = vadd.f32 %v3678, %v3547
  %v3743 = vadd.f32 %v3679, %v3550
  %v3744 = vadd.f32 %v3680, %v3552
  %v3745 = vadd.f32 %v3681, %v3555
  %v3746 = vadd.f32 %v3682, %v3557
  %v3747 = vadd.f32 %v3683, %v3560
  %v3748 = vadd.f32 %v3684, %v3562
  %v3749 = vadd.f32 %v3685, %v3565
  %v3750 = vadd.f32 %v3686, %v3567
  %v3751 = vadd.f32 %v3687, %v3570
  %v3752 = vadd.f32 %v3688, %v3572
  %v3753 = vadd.f32 %v3689, %v3575
  %v3754 = vadd.f32 %v3690, %v3577
  %v3755 = vadd.f32 %v3691, %v3580
  %v3756 = vadd.f32 %v3692, %v3582
  %v3757 = vadd.f32 %v3693, %v3585
  %v3758 = vadd.f32 %v3694, %v3587
  %v3759 = vadd.f32 %v3695, %v3590
  %v3760 = vadd.f32 %v3696, %v3592
  %v3761 = vadd.f32 %v3697, %v3595
  %v3762 = vadd.f32 %v3698, %v3597
  %v3763 = vadd.f32 %v3699, %v3600
  %v3764 = vadd.f32 %v3700, %v3602
  %v3765 = vadd.f32 %v3701, %v3605
  %v3766 = vadd.f32 %v3702, %v3607
  %v3767 = vadd.f32 %v3703, %v3610
  %v3768 = vadd.f32 %v3704, %v3612
  %v3769 = vadd.f32 %v3705, %v3615
  %v3770 = vadd.f32 %v3706, %v3617
  %v3771 = vadd.f32 %v3707, %v3620
  %v3772 = vadd.f32 %v3708, %v3622
  %v3773 = vadd.f32 %v3709, %v3625
  %v3774 = vadd.f32 %v3710, %v3627
  %v3775 = vadd.f32 %v3711, %v3630
  %v3776 = vadd.f32 %v3712, %v3632
  %v3777 = vadd.f32 %v3713, %v3635
  %v3778 = vadd.f32 %v3714, %v3637
  %v3779 = vadd.f32 %v3715, %v3640
  %v3780 = vadd.f32 %v3716, %v3642
  %v3781 = vadd.f32 %v3717, %v3645
  %v3782 = vadd.f32 %v3718, %v3647
  %v3783 = vadd.f32 %v3719, %v3650
  %v3784 = vadd.f32 %v3720, %v3652
  %v3785 = vadd.f32 %v3721, %v3655
  %v3786 = vadd.f32 %v3722, %v3657
  %3787 = vst [vmem:[#allocation4] sm:$0xff] %v3723
  %3788 = vst [vmem:[#allocation4 + $0x8] sm:$0xff] %v3724
  %3789 = vst [vmem:[#allocation4 + $0x10] sm:$0xff] %v3725
  %3790 = vst [vmem:[#allocation4 + $0x18] sm:$0xff] %v3726
  %3791 = vst [vmem:[#allocation4 + $0x20] sm:$0xff] %v3727
  %3792 = vst [vmem:[#allocation4 + $0x28] sm:$0xff] %v3728
  %3793 = vst [vmem:[#allocation4 + $0x30] sm:$0xff] %v3729
  %3794 = vst [vmem:[#allocation4 + $0x38] sm:$0xff] %v3730
  %3795 = vst [vmem:[#allocation4 + $0x40] sm:$0xff] %v3731
  %3796 = vst [vmem:[#allocation4 + $0x48] sm:$0xff] %v3732
  %3797 = vst [vmem:[#allocation4 + $0x50] sm:$0xff] %v3733
  %3798 = vst [vmem:[#allocation4 + $0x58] sm:$0xff] %v3734
  %3799 = vst [vmem:[#allocation4 + $0x60] sm:$0xff] %v3735
  %3800 = vst [vmem:[#allocation4 + $0x68] sm:$0xff] %v3736
  %3801 = vst [vmem:[#allocation4 + $0x70] sm:$0xff] %v3737
  %3802 = vst [vmem:[#allocation4 + $0x78] sm:$0xff] %v3738
  %3803 = vst [vmem:[#allocation4 + $0x80] sm:$0xff] %v3739
  %3804 = vst [vmem:[#allocation4 + $0x88] sm:$0xff] %v3740
  %3805 = vst [vmem:[#allocation4 + $0x90] sm:$0xff] %v3741
  %3806 = vst [vmem:[#allocation4 + $0x98] sm:$0xff] %v3742
  %3807 = vst [vmem:[#allocation4 + $0xa0] sm:$0xff] %v3743
  %3808 = vst [vmem:[#allocation4 + $0xa8] sm:$0xff] %v3744
  %3809 = vst [vmem:[#allocation4 + $0xb0] sm:$0xff] %v3745
  %3810 = vst [vmem:[#allocation4 + $0xb8] sm:$0xff] %v3746
  %3811 = vst [vmem:[#allocation4 + $0xc0] sm:$0xff] %v3747
  %3812 = vst [vmem:[#allocation4 + $0xc8] sm:$0xff] %v3748
  %3813 = vst [vmem:[#allocation4 + $0xd0] sm:$0xff] %v3749
  %3814 = vst [vmem:[#allocation4 + $0xd8] sm:$0xff] %v3750
  %3815 = vst [vmem:[#allocation4 + $0xe0] sm:$0xff] %v3751
  %3816 = vst [vmem:[#allocation4 + $0xe8] sm:$0xff] %v3752
  %3817 = vst [vmem:[#allocation4 + $0xf0] sm:$0xff] %v3753
  %3818 = vst [vmem:[#allocation4 + $0xf8] sm:$0xff] %v3754
  %3819 = vst [vmem:[#allocation4 + $0x100] sm:$0xff] %v3755
  %3820 = vst [vmem:[#allocation4 + $0x108] sm:$0xff] %v3756
  %3821 = vst [vmem:[#allocation4 + $0x110] sm:$0xff] %v3757
  %3822 = vst [vmem:[#allocation4 + $0x118] sm:$0xff] %v3758
  %3823 = vst [vmem:[#allocation4 + $0x120] sm:$0xff] %v3759
  %3824 = vst [vmem:[#allocation4 + $0x128] sm:$0xff] %v3760
  %3825 = vst [vmem:[#allocation4 + $0x130] sm:$0xff] %v3761
  %3826 = vst [vmem:[#allocation4 + $0x138] sm:$0xff] %v3762
  %3827 = vst [vmem:[#allocation4 + $0x140] sm:$0xff] %v3763
  %3828 = vst [vmem:[#allocation4 + $0x148] sm:$0xff] %v3764
  %3829 = vst [vmem:[#allocation4 + $0x150] sm:$0xff] %v3765
  %3830 = vst [vmem:[#allocation4 + $0x158] sm:$0xff] %v3766
  %3831 = vst [vmem:[#allocation4 + $0x160] sm:$0xff] %v3767
  %3832 = vst [vmem:[#allocation4 + $0x168] sm:$0xff] %v3768
  %3833 = vst [vmem:[#allocation4 + $0x170] sm:$0xff] %v3769
  %3834 = vst [vmem:[#allocation4 + $0x178] sm:$0xff] %v3770
  %3835 = vst [vmem:[#allocation4 + $0x180] sm:$0xff] %v3771
  %3836 = vst [vmem:[#allocation4 + $0x188] sm:$0xff] %v3772
  %3837 = vst [vmem:[#allocation4 + $0x190] sm:$0xff] %v3773
  %3838 = vst [vmem:[#allocation4 + $0x198] sm:$0xff] %v3774
  %3839 = vst [vmem:[#allocation4 + $0x1a0] sm:$0xff] %v3775
  %3840 = vst [vmem:[#allocation4 + $0x1a8] sm:$0xff] %v3776
  %3841 = vst [vmem:[#allocation4 + $0x1b0] sm:$0xff] %v3777
  %3842 = vst [vmem:[#allocation4 + $0x1b8] sm:$0xff] %v3778
  %3843 = vst [vmem:[#allocation4 + $0x1c0] sm:$0xff] %v3779
  %3844 = vst [vmem:[#allocation4 + $0x1c8] sm:$0xff] %v3780
  %3845 = vst [vmem:[#allocation4 + $0x1d0] sm:$0xff] %v3781
  %3846 = vst [vmem:[#allocation4 + $0x1d8] sm:$0xff] %v3782
  %3847 = vst [vmem:[#allocation4 + $0x1e0] sm:$0xff] %v3783
  %3848 = vst [vmem:[#allocation4 + $0x1e8] sm:$0xff] %v3784
  %3849 = vst [vmem:[#allocation4 + $0x1f0] sm:$0xff] %v3785
  %3850 = vst [vmem:[#allocation4 + $0x1f8] sm:$0xff] %v3786
  %v3851 = vld [vmem:[%s3328 + $0x1] sm:$0xff]
  %v3852 = vld [vmem:[%s3328 + $0x9] sm:$0xff]
  %v3853 = vld [vmem:[%s3328 + $0x19] sm:$0xff]
  %v3854 = vld [vmem:[%s3328 + $0x21] sm:$0xff]
  %v3855 = vld [vmem:[%s3328 + $0x31] sm:$0xff]
  %v3856 = vld [vmem:[%s3328 + $0x39] sm:$0xff]
  %v3857 = vld [vmem:[%s3328 + $0x49] sm:$0xff]
  %v3858 = vld [vmem:[%s3328 + $0x51] sm:$0xff]
  %v3859 = vld [vmem:[%s3328 + $0x61] sm:$0xff]
  %v3860 = vld [vmem:[%s3328 + $0x69] sm:$0xff]
  %v3861 = vld [vmem:[%s3328 + $0x79] sm:$0xff]
  %v3862 = vld [vmem:[%s3328 + $0x81] sm:$0xff]
  %v3863 = vld [vmem:[%s3328 + $0x91] sm:$0xff]
  %v3864 = vld [vmem:[%s3328 + $0x99] sm:$0xff]
  %v3865 = vld [vmem:[%s3328 + $0xa9] sm:$0xff]
  %v3866 = vld [vmem:[%s3328 + $0xb1] sm:$0xff]
  %v3867 = vld [vmem:[%s3328 + $0xc1] sm:$0xff]
  %v3868 = vld [vmem:[%s3328 + $0xc9] sm:$0xff]
  %v3869 = vld [vmem:[%s3328 + $0xd9] sm:$0xff]
  %v3870 = vld [vmem:[%s3328 + $0xe1] sm:$0xff]
  %v3871 = vld [vmem:[%s3328 + $0xf1] sm:$0xff]
  %v3872 = vld [vmem:[%s3328 + $0xf9] sm:$0xff]
  %v3873 = vld [vmem:[%s3328 + $0x109] sm:$0xff]
  %v3874 = vld [vmem:[%s3328 + $0x111] sm:$0xff]
  %v3875 = vld [vmem:[%s3328 + $0x121] sm:$0xff]
  %v3876 = vld [vmem:[%s3328 + $0x129] sm:$0xff]
  %v3877 = vld [vmem:[%s3328 + $0x139] sm:$0xff]
  %v3878 = vld [vmem:[%s3328 + $0x141] sm:$0xff]
  %v3879 = vld [vmem:[%s3328 + $0x151] sm:$0xff]
  %v3880 = vld [vmem:[%s3328 + $0x159] sm:$0xff]
  %v3881 = vld [vmem:[%s3328 + $0x169] sm:$0xff]
  %v3882 = vld [vmem:[%s3328 + $0x171] sm:$0xff]
  %v3883 = vld [vmem:[%s3328 + $0x1b1] sm:$0xff]
  %v3884 = vld [vmem:[%s3328 + $0x1b9] sm:$0xff]
  %v3885 = vld [vmem:[%s3328 + $0x1c9] sm:$0xff]
  %v3886 = vld [vmem:[%s3328 + $0x1d1] sm:$0xff]
  %v3887 = vld [vmem:[%s3328 + $0x1e1] sm:$0xff]
  %v3888 = vld [vmem:[%s3328 + $0x1e9] sm:$0xff]
  %v3889 = vld [vmem:[%s3328 + $0x1f9] sm:$0xff]
  %v3890 = vld [vmem:[%s3328 + $0x201] sm:$0xff]
  %v3891 = vld [vmem:[%s3328 + $0x211] sm:$0xff]
  %v3892 = vld [vmem:[%s3328 + $0x219] sm:$0xff]
  %v3893 = vld [vmem:[%s3328 + $0x229] sm:$0xff]
  %v3894 = vld [vmem:[%s3328 + $0x231] sm:$0xff]
  %v3895 = vld [vmem:[%s3328 + $0x241] sm:$0xff]
  %v3896 = vld [vmem:[%s3328 + $0x249] sm:$0xff]
  %v3897 = vld [vmem:[%s3328 + $0x259] sm:$0xff]
  %v3898 = vld [vmem:[%s3328 + $0x261] sm:$0xff]
  %v3899 = vld [vmem:[%s3328 + $0x271] sm:$0xff]
  %v3900 = vld [vmem:[%s3328 + $0x279] sm:$0xff]
  %v3901 = vld [vmem:[%s3328 + $0x289] sm:$0xff]
  %v3902 = vld [vmem:[%s3328 + $0x291] sm:$0xff]
  %v3903 = vld [vmem:[%s3328 + $0x2a1] sm:$0xff]
  %v3904 = vld [vmem:[%s3328 + $0x2a9] sm:$0xff]
  %v3905 = vld [vmem:[%s3328 + $0x2b9] sm:$0xff]
  %v3906 = vld [vmem:[%s3328 + $0x2c1] sm:$0xff]
  %v3907 = vld [vmem:[%s3328 + $0x2d1] sm:$0xff]
  %v3908 = vld [vmem:[%s3328 + $0x2d9] sm:$0xff]
  %v3909 = vld [vmem:[%s3328 + $0x2e9] sm:$0xff]
  %v3910 = vld [vmem:[%s3328 + $0x2f1] sm:$0xff]
  %v3911 = vld [vmem:[%s3328 + $0x301] sm:$0xff]
  %v3912 = vld [vmem:[%s3328 + $0x309] sm:$0xff]
  %v3913 = vld [vmem:[%s3328 + $0x319] sm:$0xff]
  %v3914 = vld [vmem:[%s3328 + $0x321] sm:$0xff]
  %v3915 = vpack.c.bf16 %v3852, %v3851
  %v3916 = vpack.c.bf16 %v3854, %v3853
  %v3917 = vpack.c.bf16 %v3856, %v3855
  %v3918 = vpack.c.bf16 %v3858, %v3857
  %v3919 = vpack.c.bf16 %v3860, %v3859
  %v3920 = vpack.c.bf16 %v3862, %v3861
  %v3921 = vpack.c.bf16 %v3864, %v3863
  %v3922 = vpack.c.bf16 %v3866, %v3865
  %v3923 = vpack.c.bf16 %v3868, %v3867
  %v3924 = vpack.c.bf16 %v3870, %v3869
  %v3925 = vpack.c.bf16 %v3872, %v3871
  %v3926 = vpack.c.bf16 %v3874, %v3873
  %v3927 = vpack.c.bf16 %v3876, %v3875
  %v3928 = vpack.c.bf16 %v3878, %v3877
  %v3929 = vpack.c.bf16 %v3880, %v3879
  %v3930 = vpack.c.bf16 %v3882, %v3881
  %v3931 = vpack.c.bf16 %v3884, %v3883
  %v3932 = vpack.c.bf16 %v3886, %v3885
  %v3933 = vpack.c.bf16 %v3888, %v3887
  %v3934 = vpack.c.bf16 %v3890, %v3889
  %v3935 = vpack.c.bf16 %v3892, %v3891
  %v3936 = vpack.c.bf16 %v3894, %v3893
  %v3937 = vpack.c.bf16 %v3896, %v3895
  %v3938 = vpack.c.bf16 %v3898, %v3897
  %v3939 = vpack.c.bf16 %v3900, %v3899
  %v3940 = vpack.c.bf16 %v3902, %v3901
  %v3941 = vpack.c.bf16 %v3904, %v3903
  %v3942 = vpack.c.bf16 %v3906, %v3905
  %v3943 = vpack.c.bf16 %v3908, %v3907
  %v3944 = vpack.c.bf16 %v3910, %v3909
  %v3945 = vpack.c.bf16 %v3912, %v3911
  %v3946 = vpack.c.bf16 %v3914, %v3913
  %s3947 = scalar_lea.vmem %s1, 448
  %v3948 = vld [vmem:[%s3947] sm:$0xf]
  %v3949 = vld [vmem:[%s3947 + $0x4] sm:$0xf]
  %v3950 = vld [vmem:[%s3947 + $0x8] sm:$0xf]
  %v3951 = vld [vmem:[%s3947 + $0xc] sm:$0xf]
  %v3952 = vld [vmem:[%s3947 + $0x10] sm:$0xf]
  %v3953 = vld [vmem:[%s3947 + $0x14] sm:$0xf]
  %v3954 = vld [vmem:[%s3947 + $0x18] sm:$0xf]
  %v3955 = vld [vmem:[%s3947 + $0x1c] sm:$0xf]
  %v3956 = vld [vmem:[%s3947 + $0x20] sm:$0xf]
  %v3957 = vld [vmem:[%s3947 + $0x24] sm:$0xf]
  %v3958 = vld [vmem:[%s3947 + $0x28] sm:$0xf]
  %v3959 = vld [vmem:[%s3947 + $0x2c] sm:$0xf]
  %v3960 = vld [vmem:[%s3947 + $0x30] sm:$0xf]
  %v3961 = vld [vmem:[%s3947 + $0x34] sm:$0xf]
  %v3962 = vld [vmem:[%s3947 + $0x38] sm:$0xf]
  %v3963 = vld [vmem:[%s3947 + $0x3c] sm:$0xf]
  %v3980 = vunpack.c.l.b16 %v3948
  %v3981 = vunpack.c.l.b16 %v3949
  %v3982 = vunpack.c.l.b16 %v3950
  %v3983 = vunpack.c.l.b16 %v3951
  %v3984 = vunpack.c.l.b16 %v3952
  %v3985 = vunpack.c.l.b16 %v3953
  %v3986 = vunpack.c.l.b16 %v3954
  %v3987 = vunpack.c.l.b16 %v3955
  %v3988 = vunpack.c.l.b16 %v3956
  %v3989 = vunpack.c.l.b16 %v3957
  %v3990 = vunpack.c.l.b16 %v3958
  %v3991 = vunpack.c.l.b16 %v3959
  %v3992 = vunpack.c.l.b16 %v3960
  %v3993 = vunpack.c.l.b16 %v3961
  %v3994 = vunpack.c.l.b16 %v3962
  %v3995 = vunpack.c.l.b16 %v3963
  %v3996 = vpack.c.b16 %v3981, %v3980
  %v3997 = vpack.c.b16 %v3983, %v3982
  %v3998 = vpack.c.b16 %v3985, %v3984
  %v3999 = vpack.c.b16 %v3987, %v3986
  %v4000 = vpack.c.b16 %v3989, %v3988
  %v4001 = vpack.c.b16 %v3991, %v3990
  %v4002 = vpack.c.b16 %v3993, %v3992
  %v4003 = vpack.c.b16 %v3995, %v3994
  %4012 = vmatpush.bf16.msra.mxu0 %v4003
  %4013 = vmatpush.bf16.msra.mxu0 %v4002
  %4014 = vmatpush.bf16.msra.mxu0 %v4001
  %4015 = vmatpush.bf16.msra.mxu0 %v4000
  %4016 = vmatpush.bf16.msra.mxu0 %v3999
  %4017 = vmatpush.bf16.msra.mxu0 %v3998
  %4018 = vmatpush.bf16.msra.mxu0 %v3997
  %4019 = vmatpush.bf16.msra.mxu0 %v3996
  %4020 = vmatmul.bf16.gmra.mxu0 %v3915
  %v4021 = vpop.f32.mrf.mxu0
  %v4022 = vadd.f32 0.0, %v4021
  %v4023 = vpop.f32.mrf.mxu0
  %v4024 = vadd.f32 0.0, %v4023
  %4025 = vmatmul.bf16.gmra.mxu0 %v3916
  %v4026 = vpop.f32.mrf.mxu0
  %v4027 = vadd.f32 0.0, %v4026
  %v4028 = vpop.f32.mrf.mxu0
  %v4029 = vadd.f32 0.0, %v4028
  %4030 = vmatmul.bf16.gmra.mxu0 %v3917
  %v4031 = vpop.f32.mrf.mxu0
  %v4032 = vadd.f32 0.0, %v4031
  %v4033 = vpop.f32.mrf.mxu0
  %v4034 = vadd.f32 0.0, %v4033
  %4035 = vmatmul.bf16.gmra.mxu0 %v3918
  %v4036 = vpop.f32.mrf.mxu0
  %v4037 = vadd.f32 0.0, %v4036
  %v4038 = vpop.f32.mrf.mxu0
  %v4039 = vadd.f32 0.0, %v4038
  %4040 = vmatmul.bf16.gmra.mxu0 %v3919
  %v4041 = vpop.f32.mrf.mxu0
  %v4042 = vadd.f32 0.0, %v4041
  %v4043 = vpop.f32.mrf.mxu0
  %v4044 = vadd.f32 0.0, %v4043
  %4045 = vmatmul.bf16.gmra.mxu0 %v3920
  %v4046 = vpop.f32.mrf.mxu0
  %v4047 = vadd.f32 0.0, %v4046
  %v4048 = vpop.f32.mrf.mxu0
  %v4049 = vadd.f32 0.0, %v4048
  %4050 = vmatmul.bf16.gmra.mxu0 %v3921
  %v4051 = vpop.f32.mrf.mxu0
  %v4052 = vadd.f32 0.0, %v4051
  %v4053 = vpop.f32.mrf.mxu0
  %v4054 = vadd.f32 0.0, %v4053
  %4055 = vmatmul.bf16.gmra.mxu0 %v3922
  %v4056 = vpop.f32.mrf.mxu0
  %v4057 = vadd.f32 0.0, %v4056
  %v4058 = vpop.f32.mrf.mxu0
  %v4059 = vadd.f32 0.0, %v4058
  %4060 = vmatmul.bf16.gmra.mxu0 %v3923
  %v4061 = vpop.f32.mrf.mxu0
  %v4062 = vadd.f32 0.0, %v4061
  %v4063 = vpop.f32.mrf.mxu0
  %v4064 = vadd.f32 0.0, %v4063
  %4065 = vmatmul.bf16.gmra.mxu0 %v3924
  %v4066 = vpop.f32.mrf.mxu0
  %v4067 = vadd.f32 0.0, %v4066
  %v4068 = vpop.f32.mrf.mxu0
  %v4069 = vadd.f32 0.0, %v4068
  %4070 = vmatmul.bf16.gmra.mxu0 %v3925
  %v4071 = vpop.f32.mrf.mxu0
  %v4072 = vadd.f32 0.0, %v4071
  %v4073 = vpop.f32.mrf.mxu0
  %v4074 = vadd.f32 0.0, %v4073
  %4075 = vmatmul.bf16.gmra.mxu0 %v3926
  %v4076 = vpop.f32.mrf.mxu0
  %v4077 = vadd.f32 0.0, %v4076
  %v4078 = vpop.f32.mrf.mxu0
  %v4079 = vadd.f32 0.0, %v4078
  %4080 = vmatmul.bf16.gmra.mxu0 %v3927
  %v4081 = vpop.f32.mrf.mxu0
  %v4082 = vadd.f32 0.0, %v4081
  %v4083 = vpop.f32.mrf.mxu0
  %v4084 = vadd.f32 0.0, %v4083
  %4085 = vmatmul.bf16.gmra.mxu0 %v3928
  %v4086 = vpop.f32.mrf.mxu0
  %v4087 = vadd.f32 0.0, %v4086
  %v4088 = vpop.f32.mrf.mxu0
  %v4089 = vadd.f32 0.0, %v4088
  %4090 = vmatmul.bf16.gmra.mxu0 %v3929
  %v4091 = vpop.f32.mrf.mxu0
  %v4092 = vadd.f32 0.0, %v4091
  %v4093 = vpop.f32.mrf.mxu0
  %v4094 = vadd.f32 0.0, %v4093
  %4095 = vmatmul.bf16.gmra.mxu0 %v3930
  %v4096 = vpop.f32.mrf.mxu0
  %v4097 = vadd.f32 0.0, %v4096
  %v4098 = vpop.f32.mrf.mxu0
  %v4099 = vadd.f32 0.0, %v4098
  %4100 = vmatmul.bf16.gmra.mxu0 %v3931
  %v4101 = vpop.f32.mrf.mxu0
  %v4102 = vadd.f32 0.0, %v4101
  %v4103 = vpop.f32.mrf.mxu0
  %v4104 = vadd.f32 0.0, %v4103
  %4105 = vmatmul.bf16.gmra.mxu0 %v3932
  %v4106 = vpop.f32.mrf.mxu0
  %v4107 = vadd.f32 0.0, %v4106
  %v4108 = vpop.f32.mrf.mxu0
  %v4109 = vadd.f32 0.0, %v4108
  %4110 = vmatmul.bf16.gmra.mxu0 %v3933
  %v4111 = vpop.f32.mrf.mxu0
  %v4112 = vadd.f32 0.0, %v4111
  %v4113 = vpop.f32.mrf.mxu0
  %v4114 = vadd.f32 0.0, %v4113
  %4115 = vmatmul.bf16.gmra.mxu0 %v3934
  %v4116 = vpop.f32.mrf.mxu0
  %v4117 = vadd.f32 0.0, %v4116
  %v4118 = vpop.f32.mrf.mxu0
  %v4119 = vadd.f32 0.0, %v4118
  %4120 = vmatmul.bf16.gmra.mxu0 %v3935
  %v4121 = vpop.f32.mrf.mxu0
  %v4122 = vadd.f32 0.0, %v4121
  %v4123 = vpop.f32.mrf.mxu0
  %v4124 = vadd.f32 0.0, %v4123
  %4125 = vmatmul.bf16.gmra.mxu0 %v3936
  %v4126 = vpop.f32.mrf.mxu0
  %v4127 = vadd.f32 0.0, %v4126
  %v4128 = vpop.f32.mrf.mxu0
  %v4129 = vadd.f32 0.0, %v4128
  %4130 = vmatmul.bf16.gmra.mxu0 %v3937
  %v4131 = vpop.f32.mrf.mxu0
  %v4132 = vadd.f32 0.0, %v4131
  %v4133 = vpop.f32.mrf.mxu0
  %v4134 = vadd.f32 0.0, %v4133
  %4135 = vmatmul.bf16.gmra.mxu0 %v3938
  %v4136 = vpop.f32.mrf.mxu0
  %v4137 = vadd.f32 0.0, %v4136
  %v4138 = vpop.f32.mrf.mxu0
  %v4139 = vadd.f32 0.0, %v4138
  %4140 = vmatmul.bf16.gmra.mxu0 %v3939
  %v4141 = vpop.f32.mrf.mxu0
  %v4142 = vadd.f32 0.0, %v4141
  %v4143 = vpop.f32.mrf.mxu0
  %v4144 = vadd.f32 0.0, %v4143
  %4145 = vmatmul.bf16.gmra.mxu0 %v3940
  %v4146 = vpop.f32.mrf.mxu0
  %v4147 = vadd.f32 0.0, %v4146
  %v4148 = vpop.f32.mrf.mxu0
  %v4149 = vadd.f32 0.0, %v4148
  %4150 = vmatmul.bf16.gmra.mxu0 %v3941
  %v4151 = vpop.f32.mrf.mxu0
  %v4152 = vadd.f32 0.0, %v4151
  %v4153 = vpop.f32.mrf.mxu0
  %v4154 = vadd.f32 0.0, %v4153
  %4155 = vmatmul.bf16.gmra.mxu0 %v3942
  %v4156 = vpop.f32.mrf.mxu0
  %v4157 = vadd.f32 0.0, %v4156
  %v4158 = vpop.f32.mrf.mxu0
  %v4159 = vadd.f32 0.0, %v4158
  %4160 = vmatmul.bf16.gmra.mxu0 %v3943
  %v4161 = vpop.f32.mrf.mxu0
  %v4162 = vadd.f32 0.0, %v4161
  %v4163 = vpop.f32.mrf.mxu0
  %v4164 = vadd.f32 0.0, %v4163
  %4165 = vmatmul.bf16.gmra.mxu0 %v3944
  %v4166 = vpop.f32.mrf.mxu0
  %v4167 = vadd.f32 0.0, %v4166
  %v4168 = vpop.f32.mrf.mxu0
  %v4169 = vadd.f32 0.0, %v4168
  %4170 = vmatmul.bf16.gmra.mxu0 %v3945
  %v4171 = vpop.f32.mrf.mxu0
  %v4172 = vadd.f32 0.0, %v4171
  %v4173 = vpop.f32.mrf.mxu0
  %v4174 = vadd.f32 0.0, %v4173
  %4175 = vmatmul.bf16.gmra.mxu0 %v3946
  %v4176 = vpop.f32.mrf.mxu0
  %v4177 = vadd.f32 0.0, %v4176
  %v4178 = vpop.f32.mrf.mxu0
  %v4179 = vadd.f32 0.0, %v4178
  %4180 = vdwg.mxu0
  %v4181 = vld [vmem:[#allocation4] sm:$0xff]
  %v4182 = vld [vmem:[#allocation4 + $0x8] sm:$0xff]
  %v4183 = vld [vmem:[#allocation4 + $0x10] sm:$0xff]
  %v4184 = vld [vmem:[#allocation4 + $0x18] sm:$0xff]
  %v4185 = vld [vmem:[#allocation4 + $0x20] sm:$0xff]
  %v4186 = vld [vmem:[#allocation4 + $0x28] sm:$0xff]
  %v4187 = vld [vmem:[#allocation4 + $0x30] sm:$0xff]
  %v4188 = vld [vmem:[#allocation4 + $0x38] sm:$0xff]
  %v4189 = vld [vmem:[#allocation4 + $0x40] sm:$0xff]
  %v4190 = vld [vmem:[#allocation4 + $0x48] sm:$0xff]
  %v4191 = vld [vmem:[#allocation4 + $0x50] sm:$0xff]
  %v4192 = vld [vmem:[#allocation4 + $0x58] sm:$0xff]
  %v4193 = vld [vmem:[#allocation4 + $0x60] sm:$0xff]
  %v4194 = vld [vmem:[#allocation4 + $0x68] sm:$0xff]
  %v4195 = vld [vmem:[#allocation4 + $0x70] sm:$0xff]
  %v4196 = vld [vmem:[#allocation4 + $0x78] sm:$0xff]
  %v4197 = vld [vmem:[#allocation4 + $0x80] sm:$0xff]
  %v4198 = vld [vmem:[#allocation4 + $0x88] sm:$0xff]
  %v4199 = vld [vmem:[#allocation4 + $0x90] sm:$0xff]
  %v4200 = vld [vmem:[#allocation4 + $0x98] sm:$0xff]
  %v4201 = vld [vmem:[#allocation4 + $0xa0] sm:$0xff]
  %v4202 = vld [vmem:[#allocation4 + $0xa8] sm:$0xff]
  %v4203 = vld [vmem:[#allocation4 + $0xb0] sm:$0xff]
  %v4204 = vld [vmem:[#allocation4 + $0xb8] sm:$0xff]
  %v4205 = vld [vmem:[#allocation4 + $0xc0] sm:$0xff]
  %v4206 = vld [vmem:[#allocation4 + $0xc8] sm:$0xff]
  %v4207 = vld [vmem:[#allocation4 + $0xd0] sm:$0xff]
  %v4208 = vld [vmem:[#allocation4 + $0xd8] sm:$0xff]
  %v4209 = vld [vmem:[#allocation4 + $0xe0] sm:$0xff]
  %v4210 = vld [vmem:[#allocation4 + $0xe8] sm:$0xff]
  %v4211 = vld [vmem:[#allocation4 + $0xf0] sm:$0xff]
  %v4212 = vld [vmem:[#allocation4 + $0xf8] sm:$0xff]
  %v4213 = vld [vmem:[#allocation4 + $0x100] sm:$0xff]
  %v4214 = vld [vmem:[#allocation4 + $0x108] sm:$0xff]
  %v4215 = vld [vmem:[#allocation4 + $0x110] sm:$0xff]
  %v4216 = vld [vmem:[#allocation4 + $0x118] sm:$0xff]
  %v4217 = vld [vmem:[#allocation4 + $0x120] sm:$0xff]
  %v4218 = vld [vmem:[#allocation4 + $0x128] sm:$0xff]
  %v4219 = vld [vmem:[#allocation4 + $0x130] sm:$0xff]
  %v4220 = vld [vmem:[#allocation4 + $0x138] sm:$0xff]
  %v4221 = vld [vmem:[#allocation4 + $0x140] sm:$0xff]
  %v4222 = vld [vmem:[#allocation4 + $0x148] sm:$0xff]
  %v4223 = vld [vmem:[#allocation4 + $0x150] sm:$0xff]
  %v4224 = vld [vmem:[#allocation4 + $0x158] sm:$0xff]
  %v4225 = vld [vmem:[#allocation4 + $0x160] sm:$0xff]
  %v4226 = vld [vmem:[#allocation4 + $0x168] sm:$0xff]
  %v4227 = vld [vmem:[#allocation4 + $0x170] sm:$0xff]
  %v4228 = vld [vmem:[#allocation4 + $0x178] sm:$0xff]
  %v4229 = vld [vmem:[#allocation4 + $0x180] sm:$0xff]
  %v4230 = vld [vmem:[#allocation4 + $0x188] sm:$0xff]
  %v4231 = vld [vmem:[#allocation4 + $0x190] sm:$0xff]
  %v4232 = vld [vmem:[#allocation4 + $0x198] sm:$0xff]
  %v4233 = vld [vmem:[#allocation4 + $0x1a0] sm:$0xff]
  %v4234 = vld [vmem:[#allocation4 + $0x1a8] sm:$0xff]
  %v4235 = vld [vmem:[#allocation4 + $0x1b0] sm:$0xff]
  %v4236 = vld [vmem:[#allocation4 + $0x1b8] sm:$0xff]
  %v4237 = vld [vmem:[#allocation4 + $0x1c0] sm:$0xff]
  %v4238 = vld [vmem:[#allocation4 + $0x1c8] sm:$0xff]
  %v4239 = vld [vmem:[#allocation4 + $0x1d0] sm:$0xff]
  %v4240 = vld [vmem:[#allocation4 + $0x1d8] sm:$0xff]
  %v4241 = vld [vmem:[#allocation4 + $0x1e0] sm:$0xff]
  %v4242 = vld [vmem:[#allocation4 + $0x1e8] sm:$0xff]
  %v4243 = vld [vmem:[#allocation4 + $0x1f0] sm:$0xff]
  %v4244 = vld [vmem:[#allocation4 + $0x1f8] sm:$0xff]
  %v4245 = vadd.f32 %v4181, %v4022
  %v4246 = vadd.f32 %v4182, %v4024
  %v4247 = vadd.f32 %v4183, %v4027
  %v4248 = vadd.f32 %v4184, %v4029
  %v4249 = vadd.f32 %v4185, %v4032
  %v4250 = vadd.f32 %v4186, %v4034
  %v4251 = vadd.f32 %v4187, %v4037
  %v4252 = vadd.f32 %v4188, %v4039
  %v4253 = vadd.f32 %v4189, %v4042
  %v4254 = vadd.f32 %v4190, %v4044
  %v4255 = vadd.f32 %v4191, %v4047
  %v4256 = vadd.f32 %v4192, %v4049
  %v4257 = vadd.f32 %v4193, %v4052
  %v4258 = vadd.f32 %v4194, %v4054
  %v4259 = vadd.f32 %v4195, %v4057
  %v4260 = vadd.f32 %v4196, %v4059
  %v4261 = vadd.f32 %v4197, %v4062
  %v4262 = vadd.f32 %v4198, %v4064
  %v4263 = vadd.f32 %v4199, %v4067
  %v4264 = vadd.f32 %v4200, %v4069
  %v4265 = vadd.f32 %v4201, %v4072
  %v4266 = vadd.f32 %v4202, %v4074
  %v4267 = vadd.f32 %v4203, %v4077
  %v4268 = vadd.f32 %v4204, %v4079
  %v4269 = vadd.f32 %v4205, %v4082
  %v4270 = vadd.f32 %v4206, %v4084
  %v4271 = vadd.f32 %v4207, %v4087
  %v4272 = vadd.f32 %v4208, %v4089
  %v4273 = vadd.f32 %v4209, %v4092
  %v4274 = vadd.f32 %v4210, %v4094
  %v4275 = vadd.f32 %v4211, %v4097
  %v4276 = vadd.f32 %v4212, %v4099
  %v4277 = vadd.f32 %v4213, %v4102
  %v4278 = vadd.f32 %v4214, %v4104
  %v4279 = vadd.f32 %v4215, %v4107
  %v4280 = vadd.f32 %v4216, %v4109
  %v4281 = vadd.f32 %v4217, %v4112
  %v4282 = vadd.f32 %v4218, %v4114
  %v4283 = vadd.f32 %v4219, %v4117
  %v4284 = vadd.f32 %v4220, %v4119
  %v4285 = vadd.f32 %v4221, %v4122
  %v4286 = vadd.f32 %v4222, %v4124
  %v4287 = vadd.f32 %v4223, %v4127
  %v4288 = vadd.f32 %v4224, %v4129
  %v4289 = vadd.f32 %v4225, %v4132
  %v4290 = vadd.f32 %v4226, %v4134
  %v4291 = vadd.f32 %v4227, %v4137
  %v4292 = vadd.f32 %v4228, %v4139
  %v4293 = vadd.f32 %v4229, %v4142
  %v4294 = vadd.f32 %v4230, %v4144
  %v4295 = vadd.f32 %v4231, %v4147
  %v4296 = vadd.f32 %v4232, %v4149
  %v4297 = vadd.f32 %v4233, %v4152
  %v4298 = vadd.f32 %v4234, %v4154
  %v4299 = vadd.f32 %v4235, %v4157
  %v4300 = vadd.f32 %v4236, %v4159
  %v4301 = vadd.f32 %v4237, %v4162
  %v4302 = vadd.f32 %v4238, %v4164
  %v4303 = vadd.f32 %v4239, %v4167
  %v4304 = vadd.f32 %v4240, %v4169
  %v4305 = vadd.f32 %v4241, %v4172
  %v4306 = vadd.f32 %v4242, %v4174
  %v4307 = vadd.f32 %v4243, %v4177
  %v4308 = vadd.f32 %v4244, %v4179
  %4309 = vst [vmem:[#allocation4] sm:$0xff] %v4245
  %4310 = vst [vmem:[#allocation4 + $0x8] sm:$0xff] %v4246
  %4311 = vst [vmem:[#allocation4 + $0x10] sm:$0xff] %v4247
  %4312 = vst [vmem:[#allocation4 + $0x18] sm:$0xff] %v4248
  %4313 = vst [vmem:[#allocation4 + $0x20] sm:$0xff] %v4249
  %4314 = vst [vmem:[#allocation4 + $0x28] sm:$0xff] %v4250
  %4315 = vst [vmem:[#allocation4 + $0x30] sm:$0xff] %v4251
  %4316 = vst [vmem:[#allocation4 + $0x38] sm:$0xff] %v4252
  %4317 = vst [vmem:[#allocation4 + $0x40] sm:$0xff] %v4253
  %4318 = vst [vmem:[#allocation4 + $0x48] sm:$0xff] %v4254
  %4319 = vst [vmem:[#allocation4 + $0x50] sm:$0xff] %v4255
  %4320 = vst [vmem:[#allocation4 + $0x58] sm:$0xff] %v4256
  %4321 = vst [vmem:[#allocation4 + $0x60] sm:$0xff] %v4257
  %4322 = vst [vmem:[#allocation4 + $0x68] sm:$0xff] %v4258
  %4323 = vst [vmem:[#allocation4 + $0x70] sm:$0xff] %v4259
  %4324 = vst [vmem:[#allocation4 + $0x78] sm:$0xff] %v4260
  %4325 = vst [vmem:[#allocation4 + $0x80] sm:$0xff] %v4261
  %4326 = vst [vmem:[#allocation4 + $0x88] sm:$0xff] %v4262
  %4327 = vst [vmem:[#allocation4 + $0x90] sm:$0xff] %v4263
  %4328 = vst [vmem:[#allocation4 + $0x98] sm:$0xff] %v4264
  %4329 = vst [vmem:[#allocation4 + $0xa0] sm:$0xff] %v4265
  %4330 = vst [vmem:[#allocation4 + $0xa8] sm:$0xff] %v4266
  %4331 = vst [vmem:[#allocation4 + $0xb0] sm:$0xff] %v4267
  %4332 = vst [vmem:[#allocation4 + $0xb8] sm:$0xff] %v4268
  %4333 = vst [vmem:[#allocation4 + $0xc0] sm:$0xff] %v4269
  %4334 = vst [vmem:[#allocation4 + $0xc8] sm:$0xff] %v4270
  %4335 = vst [vmem:[#allocation4 + $0xd0] sm:$0xff] %v4271
  %4336 = vst [vmem:[#allocation4 + $0xd8] sm:$0xff] %v4272
  %4337 = vst [vmem:[#allocation4 + $0xe0] sm:$0xff] %v4273
  %4338 = vst [vmem:[#allocation4 + $0xe8] sm:$0xff] %v4274
  %4339 = vst [vmem:[#allocation4 + $0xf0] sm:$0xff] %v4275
  %4340 = vst [vmem:[#allocation4 + $0xf8] sm:$0xff] %v4276
  %4341 = vst [vmem:[#allocation4 + $0x100] sm:$0xff] %v4277
  %4342 = vst [vmem:[#allocation4 + $0x108] sm:$0xff] %v4278
  %4343 = vst [vmem:[#allocation4 + $0x110] sm:$0xff] %v4279
  %4344 = vst [vmem:[#allocation4 + $0x118] sm:$0xff] %v4280
  %4345 = vst [vmem:[#allocation4 + $0x120] sm:$0xff] %v4281
  %4346 = vst [vmem:[#allocation4 + $0x128] sm:$0xff] %v4282
  %4347 = vst [vmem:[#allocation4 + $0x130] sm:$0xff] %v4283
  %4348 = vst [vmem:[#allocation4 + $0x138] sm:$0xff] %v4284
  %4349 = vst [vmem:[#allocation4 + $0x140] sm:$0xff] %v4285
  %4350 = vst [vmem:[#allocation4 + $0x148] sm:$0xff] %v4286
  %4351 = vst [vmem:[#allocation4 + $0x150] sm:$0xff] %v4287
  %4352 = vst [vmem:[#allocation4 + $0x158] sm:$0xff] %v4288
  %4353 = vst [vmem:[#allocation4 + $0x160] sm:$0xff] %v4289
  %4354 = vst [vmem:[#allocation4 + $0x168] sm:$0xff] %v4290
  %4355 = vst [vmem:[#allocation4 + $0x170] sm:$0xff] %v4291
  %4356 = vst [vmem:[#allocation4 + $0x178] sm:$0xff] %v4292
  %4357 = vst [vmem:[#allocation4 + $0x180] sm:$0xff] %v4293
  %4358 = vst [vmem:[#allocation4 + $0x188] sm:$0xff] %v4294
  %4359 = vst [vmem:[#allocation4 + $0x190] sm:$0xff] %v4295
  %4360 = vst [vmem:[#allocation4 + $0x198] sm:$0xff] %v4296
  %4361 = vst [vmem:[#allocation4 + $0x1a0] sm:$0xff] %v4297
  %4362 = vst [vmem:[#allocation4 + $0x1a8] sm:$0xff] %v4298
  %4363 = vst [vmem:[#allocation4 + $0x1b0] sm:$0xff] %v4299
  %4364 = vst [vmem:[#allocation4 + $0x1b8] sm:$0xff] %v4300
  %4365 = vst [vmem:[#allocation4 + $0x1c0] sm:$0xff] %v4301
  %4366 = vst [vmem:[#allocation4 + $0x1c8] sm:$0xff] %v4302
  %4367 = vst [vmem:[#allocation4 + $0x1d0] sm:$0xff] %v4303
  %4368 = vst [vmem:[#allocation4 + $0x1d8] sm:$0xff] %v4304
  %4369 = vst [vmem:[#allocation4 + $0x1e0] sm:$0xff] %v4305
  %4370 = vst [vmem:[#allocation4 + $0x1e8] sm:$0xff] %v4306
  %4371 = vst [vmem:[#allocation4 + $0x1f0] sm:$0xff] %v4307
  %4372 = vst [vmem:[#allocation4 + $0x1f8] sm:$0xff] %v4308
  %v4373 = vld [vmem:[%s3328 + $0x2] sm:$0xff]
  %v4374 = vld [vmem:[%s3328 + $0xa] sm:$0xff]
  %v4375 = vld [vmem:[%s3328 + $0x1a] sm:$0xff]
  %v4376 = vld [vmem:[%s3328 + $0x22] sm:$0xff]
  %v4377 = vld [vmem:[%s3328 + $0x32] sm:$0xff]
  %v4378 = vld [vmem:[%s3328 + $0x3a] sm:$0xff]
  %v4379 = vld [vmem:[%s3328 + $0x4a] sm:$0xff]
  %v4380 = vld [vmem:[%s3328 + $0x52] sm:$0xff]
  %v4381 = vld [vmem:[%s3328 + $0x62] sm:$0xff]
  %v4382 = vld [vmem:[%s3328 + $0x6a] sm:$0xff]
  %v4383 = vld [vmem:[%s3328 + $0x7a] sm:$0xff]
  %v4384 = vld [vmem:[%s3328 + $0x82] sm:$0xff]
  %v4385 = vld [vmem:[%s3328 + $0x92] sm:$0xff]
  %v4386 = vld [vmem:[%s3328 + $0x9a] sm:$0xff]
  %v4387 = vld [vmem:[%s3328 + $0xaa] sm:$0xff]
  %v4388 = vld [vmem:[%s3328 + $0xb2] sm:$0xff]
  %v4389 = vld [vmem:[%s3328 + $0xc2] sm:$0xff]
  %v4390 = vld [vmem:[%s3328 + $0xca] sm:$0xff]
  %v4391 = vld [vmem:[%s3328 + $0xda] sm:$0xff]
  %v4392 = vld [vmem:[%s3328 + $0xe2] sm:$0xff]
  %v4393 = vld [vmem:[%s3328 + $0xf2] sm:$0xff]
  %v4394 = vld [vmem:[%s3328 + $0xfa] sm:$0xff]
  %v4395 = vld [vmem:[%s3328 + $0x10a] sm:$0xff]
  %v4396 = vld [vmem:[%s3328 + $0x112] sm:$0xff]
  %v4397 = vld [vmem:[%s3328 + $0x122] sm:$0xff]
  %v4398 = vld [vmem:[%s3328 + $0x12a] sm:$0xff]
  %v4399 = vld [vmem:[%s3328 + $0x13a] sm:$0xff]
  %v4400 = vld [vmem:[%s3328 + $0x142] sm:$0xff]
  %v4401 = vld [vmem:[%s3328 + $0x152] sm:$0xff]
  %v4402 = vld [vmem:[%s3328 + $0x15a] sm:$0xff]
  %v4403 = vld [vmem:[%s3328 + $0x16a] sm:$0xff]
  %v4404 = vld [vmem:[%s3328 + $0x172] sm:$0xff]
  %v4405 = vld [vmem:[%s3328 + $0x1b2] sm:$0xff]
  %v4406 = vld [vmem:[%s3328 + $0x1ba] sm:$0xff]
  %v4407 = vld [vmem:[%s3328 + $0x1ca] sm:$0xff]
  %v4408 = vld [vmem:[%s3328 + $0x1d2] sm:$0xff]
  %v4409 = vld [vmem:[%s3328 + $0x1e2] sm:$0xff]
  %v4410 = vld [vmem:[%s3328 + $0x1ea] sm:$0xff]
  %v4411 = vld [vmem:[%s3328 + $0x1fa] sm:$0xff]
  %v4412 = vld [vmem:[%s3328 + $0x202] sm:$0xff]
  %v4413 = vld [vmem:[%s3328 + $0x212] sm:$0xff]
  %v4414 = vld [vmem:[%s3328 + $0x21a] sm:$0xff]
  %v4415 = vld [vmem:[%s3328 + $0x22a] sm:$0xff]
  %v4416 = vld [vmem:[%s3328 + $0x232] sm:$0xff]
  %v4417 = vld [vmem:[%s3328 + $0x242] sm:$0xff]
  %v4418 = vld [vmem:[%s3328 + $0x24a] sm:$0xff]
  %v4419 = vld [vmem:[%s3328 + $0x25a] sm:$0xff]
  %v4420 = vld [vmem:[%s3328 + $0x262] sm:$0xff]
  %v4421 = vld [vmem:[%s3328 + $0x272] sm:$0xff]
  %v4422 = vld [vmem:[%s3328 + $0x27a] sm:$0xff]
  %v4423 = vld [vmem:[%s3328 + $0x28a] sm:$0xff]
  %v4424 = vld [vmem:[%s3328 + $0x292] sm:$0xff]
  %v4425 = vld [vmem:[%s3328 + $0x2a2] sm:$0xff]
  %v4426 = vld [vmem:[%s3328 + $0x2aa] sm:$0xff]
  %v4427 = vld [vmem:[%s3328 + $0x2ba] sm:$0xff]
  %v4428 = vld [vmem:[%s3328 + $0x2c2] sm:$0xff]
  %v4429 = vld [vmem:[%s3328 + $0x2d2] sm:$0xff]
  %v4430 = vld [vmem:[%s3328 + $0x2da] sm:$0xff]
  %v4431 = vld [vmem:[%s3328 + $0x2ea] sm:$0xff]
  %v4432 = vld [vmem:[%s3328 + $0x2f2] sm:$0xff]
  %v4433 = vld [vmem:[%s3328 + $0x302] sm:$0xff]
  %v4434 = vld [vmem:[%s3328 + $0x30a] sm:$0xff]
  %v4435 = vld [vmem:[%s3328 + $0x31a] sm:$0xff]
  %v4436 = vld [vmem:[%s3328 + $0x322] sm:$0xff]
  %v4437 = vpack.c.bf16 %v4374, %v4373
  %v4438 = vpack.c.bf16 %v4376, %v4375
  %v4439 = vpack.c.bf16 %v4378, %v4377
  %v4440 = vpack.c.bf16 %v4380, %v4379
  %v4441 = vpack.c.bf16 %v4382, %v4381
  %v4442 = vpack.c.bf16 %v4384, %v4383
  %v4443 = vpack.c.bf16 %v4386, %v4385
  %v4444 = vpack.c.bf16 %v4388, %v4387
  %v4445 = vpack.c.bf16 %v4390, %v4389
  %v4446 = vpack.c.bf16 %v4392, %v4391
  %v4447 = vpack.c.bf16 %v4394, %v4393
  %v4448 = vpack.c.bf16 %v4396, %v4395
  %v4449 = vpack.c.bf16 %v4398, %v4397
  %v4450 = vpack.c.bf16 %v4400, %v4399
  %v4451 = vpack.c.bf16 %v4402, %v4401
  %v4452 = vpack.c.bf16 %v4404, %v4403
  %v4453 = vpack.c.bf16 %v4406, %v4405
  %v4454 = vpack.c.bf16 %v4408, %v4407
  %v4455 = vpack.c.bf16 %v4410, %v4409
  %v4456 = vpack.c.bf16 %v4412, %v4411
  %v4457 = vpack.c.bf16 %v4414, %v4413
  %v4458 = vpack.c.bf16 %v4416, %v4415
  %v4459 = vpack.c.bf16 %v4418, %v4417
  %v4460 = vpack.c.bf16 %v4420, %v4419
  %v4461 = vpack.c.bf16 %v4422, %v4421
  %v4462 = vpack.c.bf16 %v4424, %v4423
  %v4463 = vpack.c.bf16 %v4426, %v4425
  %v4464 = vpack.c.bf16 %v4428, %v4427
  %v4465 = vpack.c.bf16 %v4430, %v4429
  %v4466 = vpack.c.bf16 %v4432, %v4431
  %v4467 = vpack.c.bf16 %v4434, %v4433
  %v4468 = vpack.c.bf16 %v4436, %v4435
  %s4469 = scalar_lea.vmem %s1, 512
  %v4470 = vld [vmem:[%s4469] sm:$0xf]
  %v4471 = vld [vmem:[%s4469 + $0x4] sm:$0xf]
  %v4472 = vld [vmem:[%s4469 + $0x8] sm:$0xf]
  %v4473 = vld [vmem:[%s4469 + $0xc] sm:$0xf]
  %v4474 = vld [vmem:[%s4469 + $0x10] sm:$0xf]
  %v4475 = vld [vmem:[%s4469 + $0x14] sm:$0xf]
  %v4476 = vld [vmem:[%s4469 + $0x18] sm:$0xf]
  %v4477 = vld [vmem:[%s4469 + $0x1c] sm:$0xf]
  %v4478 = vld [vmem:[%s4469 + $0x20] sm:$0xf]
  %v4479 = vld [vmem:[%s4469 + $0x24] sm:$0xf]
  %v4480 = vld [vmem:[%s4469 + $0x28] sm:$0xf]
  %v4481 = vld [vmem:[%s4469 + $0x2c] sm:$0xf]
  %v4482 = vld [vmem:[%s4469 + $0x30] sm:$0xf]
  %v4483 = vld [vmem:[%s4469 + $0x34] sm:$0xf]
  %v4484 = vld [vmem:[%s4469 + $0x38] sm:$0xf]
  %v4485 = vld [vmem:[%s4469 + $0x3c] sm:$0xf]
  %v4502 = vunpack.c.l.b16 %v4470
  %v4503 = vunpack.c.l.b16 %v4471
  %v4504 = vunpack.c.l.b16 %v4472
  %v4505 = vunpack.c.l.b16 %v4473
  %v4506 = vunpack.c.l.b16 %v4474
  %v4507 = vunpack.c.l.b16 %v4475
  %v4508 = vunpack.c.l.b16 %v4476
  %v4509 = vunpack.c.l.b16 %v4477
  %v4510 = vunpack.c.l.b16 %v4478
  %v4511 = vunpack.c.l.b16 %v4479
  %v4512 = vunpack.c.l.b16 %v4480
  %v4513 = vunpack.c.l.b16 %v4481
  %v4514 = vunpack.c.l.b16 %v4482
  %v4515 = vunpack.c.l.b16 %v4483
  %v4516 = vunpack.c.l.b16 %v4484
  %v4517 = vunpack.c.l.b16 %v4485
  %v4518 = vpack.c.b16 %v4503, %v4502
  %v4519 = vpack.c.b16 %v4505, %v4504
  %v4520 = vpack.c.b16 %v4507, %v4506
  %v4521 = vpack.c.b16 %v4509, %v4508
  %v4522 = vpack.c.b16 %v4511, %v4510
  %v4523 = vpack.c.b16 %v4513, %v4512
  %v4524 = vpack.c.b16 %v4515, %v4514
  %v4525 = vpack.c.b16 %v4517, %v4516
  %4534 = vmatpush.bf16.msra.mxu0 %v4525
  %4535 = vmatpush.bf16.msra.mxu0 %v4524
  %4536 = vmatpush.bf16.msra.mxu0 %v4523
  %4537 = vmatpush.bf16.msra.mxu0 %v4522
  %4538 = vmatpush.bf16.msra.mxu0 %v4521
  %4539 = vmatpush.bf16.msra.mxu0 %v4520
  %4540 = vmatpush.bf16.msra.mxu0 %v4519
  %4541 = vmatpush.bf16.msra.mxu0 %v4518
  %4542 = vmatmul.bf16.gmra.mxu0 %v4437
  %v4543 = vpop.f32.mrf.mxu0
  %v4544 = vadd.f32 0.0, %v4543
  %v4545 = vpop.f32.mrf.mxu0
  %v4546 = vadd.f32 0.0, %v4545
  %4547 = vmatmul.bf16.gmra.mxu0 %v4438
  %v4548 = vpop.f32.mrf.mxu0
  %v4549 = vadd.f32 0.0, %v4548
  %v4550 = vpop.f32.mrf.mxu0
  %v4551 = vadd.f32 0.0, %v4550
  %4552 = vmatmul.bf16.gmra.mxu0 %v4439
  %v4553 = vpop.f32.mrf.mxu0
  %v4554 = vadd.f32 0.0, %v4553
  %v4555 = vpop.f32.mrf.mxu0
  %v4556 = vadd.f32 0.0, %v4555
  %4557 = vmatmul.bf16.gmra.mxu0 %v4440
  %v4558 = vpop.f32.mrf.mxu0
  %v4559 = vadd.f32 0.0, %v4558
  %v4560 = vpop.f32.mrf.mxu0
  %v4561 = vadd.f32 0.0, %v4560
  %4562 = vmatmul.bf16.gmra.mxu0 %v4441
  %v4563 = vpop.f32.mrf.mxu0
  %v4564 = vadd.f32 0.0, %v4563
  %v4565 = vpop.f32.mrf.mxu0
  %v4566 = vadd.f32 0.0, %v4565
  %4567 = vmatmul.bf16.gmra.mxu0 %v4442
  %v4568 = vpop.f32.mrf.mxu0
  %v4569 = vadd.f32 0.0, %v4568
  %v4570 = vpop.f32.mrf.mxu0
  %v4571 = vadd.f32 0.0, %v4570
  %4572 = vmatmul.bf16.gmra.mxu0 %v4443
  %v4573 = vpop.f32.mrf.mxu0
  %v4574 = vadd.f32 0.0, %v4573
  %v4575 = vpop.f32.mrf.mxu0
  %v4576 = vadd.f32 0.0, %v4575
  %4577 = vmatmul.bf16.gmra.mxu0 %v4444
  %v4578 = vpop.f32.mrf.mxu0
  %v4579 = vadd.f32 0.0, %v4578
  %v4580 = vpop.f32.mrf.mxu0
  %v4581 = vadd.f32 0.0, %v4580
  %4582 = vmatmul.bf16.gmra.mxu0 %v4445
  %v4583 = vpop.f32.mrf.mxu0
  %v4584 = vadd.f32 0.0, %v4583
  %v4585 = vpop.f32.mrf.mxu0
  %v4586 = vadd.f32 0.0, %v4585
  %4587 = vmatmul.bf16.gmra.mxu0 %v4446
  %v4588 = vpop.f32.mrf.mxu0
  %v4589 = vadd.f32 0.0, %v4588
  %v4590 = vpop.f32.mrf.mxu0
  %v4591 = vadd.f32 0.0, %v4590
  %4592 = vmatmul.bf16.gmra.mxu0 %v4447
  %v4593 = vpop.f32.mrf.mxu0
  %v4594 = vadd.f32 0.0, %v4593
  %v4595 = vpop.f32.mrf.mxu0
  %v4596 = vadd.f32 0.0, %v4595
  %4597 = vmatmul.bf16.gmra.mxu0 %v4448
  %v4598 = vpop.f32.mrf.mxu0
  %v4599 = vadd.f32 0.0, %v4598
  %v4600 = vpop.f32.mrf.mxu0
  %v4601 = vadd.f32 0.0, %v4600
  %4602 = vmatmul.bf16.gmra.mxu0 %v4449
  %v4603 = vpop.f32.mrf.mxu0
  %v4604 = vadd.f32 0.0, %v4603
  %v4605 = vpop.f32.mrf.mxu0
  %v4606 = vadd.f32 0.0, %v4605
  %4607 = vmatmul.bf16.gmra.mxu0 %v4450
  %v4608 = vpop.f32.mrf.mxu0
  %v4609 = vadd.f32 0.0, %v4608
  %v4610 = vpop.f32.mrf.mxu0
  %v4611 = vadd.f32 0.0, %v4610
  %4612 = vmatmul.bf16.gmra.mxu0 %v4451
  %v4613 = vpop.f32.mrf.mxu0
  %v4614 = vadd.f32 0.0, %v4613
  %v4615 = vpop.f32.mrf.mxu0
  %v4616 = vadd.f32 0.0, %v4615
  %4617 = vmatmul.bf16.gmra.mxu0 %v4452
  %v4618 = vpop.f32.mrf.mxu0
  %v4619 = vadd.f32 0.0, %v4618
  %v4620 = vpop.f32.mrf.mxu0
  %v4621 = vadd.f32 0.0, %v4620
  %4622 = vmatmul.bf16.gmra.mxu0 %v4453
  %v4623 = vpop.f32.mrf.mxu0
  %v4624 = vadd.f32 0.0, %v4623
  %v4625 = vpop.f32.mrf.mxu0
  %v4626 = vadd.f32 0.0, %v4625
  %4627 = vmatmul.bf16.gmra.mxu0 %v4454
  %v4628 = vpop.f32.mrf.mxu0
  %v4629 = vadd.f32 0.0, %v4628
  %v4630 = vpop.f32.mrf.mxu0
  %v4631 = vadd.f32 0.0, %v4630
  %4632 = vmatmul.bf16.gmra.mxu0 %v4455
  %v4633 = vpop.f32.mrf.mxu0
  %v4634 = vadd.f32 0.0, %v4633
  %v4635 = vpop.f32.mrf.mxu0
  %v4636 = vadd.f32 0.0, %v4635
  %4637 = vmatmul.bf16.gmra.mxu0 %v4456
  %v4638 = vpop.f32.mrf.mxu0
  %v4639 = vadd.f32 0.0, %v4638
  %v4640 = vpop.f32.mrf.mxu0
  %v4641 = vadd.f32 0.0, %v4640
  %4642 = vmatmul.bf16.gmra.mxu0 %v4457
  %v4643 = vpop.f32.mrf.mxu0
  %v4644 = vadd.f32 0.0, %v4643
  %v4645 = vpop.f32.mrf.mxu0
  %v4646 = vadd.f32 0.0, %v4645
  %4647 = vmatmul.bf16.gmra.mxu0 %v4458
  %v4648 = vpop.f32.mrf.mxu0
  %v4649 = vadd.f32 0.0, %v4648
  %v4650 = vpop.f32.mrf.mxu0
  %v4651 = vadd.f32 0.0, %v4650
  %4652 = vmatmul.bf16.gmra.mxu0 %v4459
  %v4653 = vpop.f32.mrf.mxu0
  %v4654 = vadd.f32 0.0, %v4653
  %v4655 = vpop.f32.mrf.mxu0
  %v4656 = vadd.f32 0.0, %v4655
  %4657 = vmatmul.bf16.gmra.mxu0 %v4460
  %v4658 = vpop.f32.mrf.mxu0
  %v4659 = vadd.f32 0.0, %v4658
  %v4660 = vpop.f32.mrf.mxu0
  %v4661 = vadd.f32 0.0, %v4660
  %4662 = vmatmul.bf16.gmra.mxu0 %v4461
  %v4663 = vpop.f32.mrf.mxu0
  %v4664 = vadd.f32 0.0, %v4663
  %v4665 = vpop.f32.mrf.mxu0
  %v4666 = vadd.f32 0.0, %v4665
  %4667 = vmatmul.bf16.gmra.mxu0 %v4462
  %v4668 = vpop.f32.mrf.mxu0
  %v4669 = vadd.f32 0.0, %v4668
  %v4670 = vpop.f32.mrf.mxu0
  %v4671 = vadd.f32 0.0, %v4670
  %4672 = vmatmul.bf16.gmra.mxu0 %v4463
  %v4673 = vpop.f32.mrf.mxu0
  %v4674 = vadd.f32 0.0, %v4673
  %v4675 = vpop.f32.mrf.mxu0
  %v4676 = vadd.f32 0.0, %v4675
  %4677 = vmatmul.bf16.gmra.mxu0 %v4464
  %v4678 = vpop.f32.mrf.mxu0
  %v4679 = vadd.f32 0.0, %v4678
  %v4680 = vpop.f32.mrf.mxu0
  %v4681 = vadd.f32 0.0, %v4680
  %4682 = vmatmul.bf16.gmra.mxu0 %v4465
  %v4683 = vpop.f32.mrf.mxu0
  %v4684 = vadd.f32 0.0, %v4683
  %v4685 = vpop.f32.mrf.mxu0
  %v4686 = vadd.f32 0.0, %v4685
  %4687 = vmatmul.bf16.gmra.mxu0 %v4466
  %v4688 = vpop.f32.mrf.mxu0
  %v4689 = vadd.f32 0.0, %v4688
  %v4690 = vpop.f32.mrf.mxu0
  %v4691 = vadd.f32 0.0, %v4690
  %4692 = vmatmul.bf16.gmra.mxu0 %v4467
  %v4693 = vpop.f32.mrf.mxu0
  %v4694 = vadd.f32 0.0, %v4693
  %v4695 = vpop.f32.mrf.mxu0
  %v4696 = vadd.f32 0.0, %v4695
  %4697 = vmatmul.bf16.gmra.mxu0 %v4468
  %v4698 = vpop.f32.mrf.mxu0
  %v4699 = vadd.f32 0.0, %v4698
  %v4700 = vpop.f32.mrf.mxu0
  %v4701 = vadd.f32 0.0, %v4700
  %4702 = vdwg.mxu0
  %v4703 = vld [vmem:[#allocation4] sm:$0xff]
  %v4704 = vld [vmem:[#allocation4 + $0x8] sm:$0xff]
  %v4705 = vld [vmem:[#allocation4 + $0x10] sm:$0xff]
  %v4706 = vld [vmem:[#allocation4 + $0x18] sm:$0xff]
  %v4707 = vld [vmem:[#allocation4 + $0x20] sm:$0xff]
  %v4708 = vld [vmem:[#allocation4 + $0x28] sm:$0xff]
  %v4709 = vld [vmem:[#allocation4 + $0x30] sm:$0xff]
  %v4710 = vld [vmem:[#allocation4 + $0x38] sm:$0xff]
  %v4711 = vld [vmem:[#allocation4 + $0x40] sm:$0xff]
  %v4712 = vld [vmem:[#allocation4 + $0x48] sm:$0xff]
  %v4713 = vld [vmem:[#allocation4 + $0x50] sm:$0xff]
  %v4714 = vld [vmem:[#allocation4 + $0x58] sm:$0xff]
  %v4715 = vld [vmem:[#allocation4 + $0x60] sm:$0xff]
  %v4716 = vld [vmem:[#allocation4 + $0x68] sm:$0xff]
  %v4717 = vld [vmem:[#allocation4 + $0x70] sm:$0xff]
  %v4718 = vld [vmem:[#allocation4 + $0x78] sm:$0xff]
  %v4719 = vld [vmem:[#allocation4 + $0x80] sm:$0xff]
  %v4720 = vld [vmem:[#allocation4 + $0x88] sm:$0xff]
  %v4721 = vld [vmem:[#allocation4 + $0x90] sm:$0xff]
  %v4722 = vld [vmem:[#allocation4 + $0x98] sm:$0xff]
  %v4723 = vld [vmem:[#allocation4 + $0xa0] sm:$0xff]
  %v4724 = vld [vmem:[#allocation4 + $0xa8] sm:$0xff]
  %v4725 = vld [vmem:[#allocation4 + $0xb0] sm:$0xff]
  %v4726 = vld [vmem:[#allocation4 + $0xb8] sm:$0xff]
  %v4727 = vld [vmem:[#allocation4 + $0xc0] sm:$0xff]
  %v4728 = vld [vmem:[#allocation4 + $0xc8] sm:$0xff]
  %v4729 = vld [vmem:[#allocation4 + $0xd0] sm:$0xff]
  %v4730 = vld [vmem:[#allocation4 + $0xd8] sm:$0xff]
  %v4731 = vld [vmem:[#allocation4 + $0xe0] sm:$0xff]
  %v4732 = vld [vmem:[#allocation4 + $0xe8] sm:$0xff]
  %v4733 = vld [vmem:[#allocation4 + $0xf0] sm:$0xff]
  %v4734 = vld [vmem:[#allocation4 + $0xf8] sm:$0xff]
  %v4735 = vld [vmem:[#allocation4 + $0x100] sm:$0xff]
  %v4736 = vld [vmem:[#allocation4 + $0x108] sm:$0xff]
  %v4737 = vld [vmem:[#allocation4 + $0x110] sm:$0xff]
  %v4738 = vld [vmem:[#allocation4 + $0x118] sm:$0xff]
  %v4739 = vld [vmem:[#allocation4 + $0x120] sm:$0xff]
  %v4740 = vld [vmem:[#allocation4 + $0x128] sm:$0xff]
  %v4741 = vld [vmem:[#allocation4 + $0x130] sm:$0xff]
  %v4742 = vld [vmem:[#allocation4 + $0x138] sm:$0xff]
  %v4743 = vld [vmem:[#allocation4 + $0x140] sm:$0xff]
  %v4744 = vld [vmem:[#allocation4 + $0x148] sm:$0xff]
  %v4745 = vld [vmem:[#allocation4 + $0x150] sm:$0xff]
  %v4746 = vld [vmem:[#allocation4 + $0x158] sm:$0xff]
  %v4747 = vld [vmem:[#allocation4 + $0x160] sm:$0xff]
  %v4748 = vld [vmem:[#allocation4 + $0x168] sm:$0xff]
  %v4749 = vld [vmem:[#allocation4 + $0x170] sm:$0xff]
  %v4750 = vld [vmem:[#allocation4 + $0x178] sm:$0xff]
  %v4751 = vld [vmem:[#allocation4 + $0x180] sm:$0xff]
  %v4752 = vld [vmem:[#allocation4 + $0x188] sm:$0xff]
  %v4753 = vld [vmem:[#allocation4 + $0x190] sm:$0xff]
  %v4754 = vld [vmem:[#allocation4 + $0x198] sm:$0xff]
  %v4755 = vld [vmem:[#allocation4 + $0x1a0] sm:$0xff]
  %v4756 = vld [vmem:[#allocation4 + $0x1a8] sm:$0xff]
  %v4757 = vld [vmem:[#allocation4 + $0x1b0] sm:$0xff]
  %v4758 = vld [vmem:[#allocation4 + $0x1b8] sm:$0xff]
  %v4759 = vld [vmem:[#allocation4 + $0x1c0] sm:$0xff]
  %v4760 = vld [vmem:[#allocation4 + $0x1c8] sm:$0xff]
  %v4761 = vld [vmem:[#allocation4 + $0x1d0] sm:$0xff]
  %v4762 = vld [vmem:[#allocation4 + $0x1d8] sm:$0xff]
  %v4763 = vld [vmem:[#allocation4 + $0x1e0] sm:$0xff]
  %v4764 = vld [vmem:[#allocation4 + $0x1e8] sm:$0xff]
  %v4765 = vld [vmem:[#allocation4 + $0x1f0] sm:$0xff]
  %v4766 = vld [vmem:[#allocation4 + $0x1f8] sm:$0xff]
  %v4767 = vadd.f32 %v4703, %v4544
  %v4768 = vadd.f32 %v4704, %v4546
  %v4769 = vadd.f32 %v4705, %v4549
  %v4770 = vadd.f32 %v4706, %v4551
  %v4771 = vadd.f32 %v4707, %v4554
  %v4772 = vadd.f32 %v4708, %v4556
  %v4773 = vadd.f32 %v4709, %v4559
  %v4774 = vadd.f32 %v4710, %v4561
  %v4775 = vadd.f32 %v4711, %v4564
  %v4776 = vadd.f32 %v4712, %v4566
  %v4777 = vadd.f32 %v4713, %v4569
  %v4778 = vadd.f32 %v4714, %v4571
  %v4779 = vadd.f32 %v4715, %v4574
  %v4780 = vadd.f32 %v4716, %v4576
  %v4781 = vadd.f32 %v4717, %v4579
  %v4782 = vadd.f32 %v4718, %v4581
  %v4783 = vadd.f32 %v4719, %v4584
  %v4784 = vadd.f32 %v4720, %v4586
  %v4785 = vadd.f32 %v4721, %v4589
  %v4786 = vadd.f32 %v4722, %v4591
  %v4787 = vadd.f32 %v4723, %v4594
  %v4788 = vadd.f32 %v4724, %v4596
  %v4789 = vadd.f32 %v4725, %v4599
  %v4790 = vadd.f32 %v4726, %v4601
  %v4791 = vadd.f32 %v4727, %v4604
  %v4792 = vadd.f32 %v4728, %v4606
  %v4793 = vadd.f32 %v4729, %v4609
  %v4794 = vadd.f32 %v4730, %v4611
  %v4795 = vadd.f32 %v4731, %v4614
  %v4796 = vadd.f32 %v4732, %v4616
  %v4797 = vadd.f32 %v4733, %v4619
  %v4798 = vadd.f32 %v4734, %v4621
  %v4799 = vadd.f32 %v4735, %v4624
  %v4800 = vadd.f32 %v4736, %v4626
  %v4801 = vadd.f32 %v4737, %v4629
  %v4802 = vadd.f32 %v4738, %v4631
  %v4803 = vadd.f32 %v4739, %v4634
  %v4804 = vadd.f32 %v4740, %v4636
  %v4805 = vadd.f32 %v4741, %v4639
  %v4806 = vadd.f32 %v4742, %v4641
  %v4807 = vadd.f32 %v4743, %v4644
  %v4808 = vadd.f32 %v4744, %v4646
  %v4809 = vadd.f32 %v4745, %v4649
  %v4810 = vadd.f32 %v4746, %v4651
  %v4811 = vadd.f32 %v4747, %v4654
  %v4812 = vadd.f32 %v4748, %v4656
  %v4813 = vadd.f32 %v4749, %v4659
  %v4814 = vadd.f32 %v4750, %v4661
  %v4815 = vadd.f32 %v4751, %v4664
  %v4816 = vadd.f32 %v4752, %v4666
  %v4817 = vadd.f32 %v4753, %v4669
  %v4818 = vadd.f32 %v4754, %v4671
  %v4819 = vadd.f32 %v4755, %v4674
  %v4820 = vadd.f32 %v4756, %v4676
  %v4821 = vadd.f32 %v4757, %v4679
  %v4822 = vadd.f32 %v4758, %v4681
  %v4823 = vadd.f32 %v4759, %v4684
  %v4824 = vadd.f32 %v4760, %v4686
  %v4825 = vadd.f32 %v4761, %v4689
  %v4826 = vadd.f32 %v4762, %v4691
  %v4827 = vadd.f32 %v4763, %v4694
  %v4828 = vadd.f32 %v4764, %v4696
  %v4829 = vadd.f32 %v4765, %v4699
  %v4830 = vadd.f32 %v4766, %v4701
  %4831 = vst [vmem:[#allocation4] sm:$0xff] %v4767
  %4832 = vst [vmem:[#allocation4 + $0x8] sm:$0xff] %v4768
  %4833 = vst [vmem:[#allocation4 + $0x10] sm:$0xff] %v4769
  %4834 = vst [vmem:[#allocation4 + $0x18] sm:$0xff] %v4770
  %4835 = vst [vmem:[#allocation4 + $0x20] sm:$0xff] %v4771
  %4836 = vst [vmem:[#allocation4 + $0x28] sm:$0xff] %v4772
  %4837 = vst [vmem:[#allocation4 + $0x30] sm:$0xff] %v4773
  %4838 = vst [vmem:[#allocation4 + $0x38] sm:$0xff] %v4774
  %4839 = vst [vmem:[#allocation4 + $0x40] sm:$0xff] %v4775
  %4840 = vst [vmem:[#allocation4 + $0x48] sm:$0xff] %v4776
  %4841 = vst [vmem:[#allocation4 + $0x50] sm:$0xff] %v4777
  %4842 = vst [vmem:[#allocation4 + $0x58] sm:$0xff] %v4778
  %4843 = vst [vmem:[#allocation4 + $0x60] sm:$0xff] %v4779
  %4844 = vst [vmem:[#allocation4 + $0x68] sm:$0xff] %v4780
  %4845 = vst [vmem:[#allocation4 + $0x70] sm:$0xff] %v4781
  %4846 = vst [vmem:[#allocation4 + $0x78] sm:$0xff] %v4782
  %4847 = vst [vmem:[#allocation4 + $0x80] sm:$0xff] %v4783
  %4848 = vst [vmem:[#allocation4 + $0x88] sm:$0xff] %v4784
  %4849 = vst [vmem:[#allocation4 + $0x90] sm:$0xff] %v4785
  %4850 = vst [vmem:[#allocation4 + $0x98] sm:$0xff] %v4786
  %4851 = vst [vmem:[#allocation4 + $0xa0] sm:$0xff] %v4787
  %4852 = vst [vmem:[#allocation4 + $0xa8] sm:$0xff] %v4788
  %4853 = vst [vmem:[#allocation4 + $0xb0] sm:$0xff] %v4789
  %4854 = vst [vmem:[#allocation4 + $0xb8] sm:$0xff] %v4790
  %4855 = vst [vmem:[#allocation4 + $0xc0] sm:$0xff] %v4791
  %4856 = vst [vmem:[#allocation4 + $0xc8] sm:$0xff] %v4792
  %4857 = vst [vmem:[#allocation4 + $0xd0] sm:$0xff] %v4793
  %4858 = vst [vmem:[#allocation4 + $0xd8] sm:$0xff] %v4794
  %4859 = vst [vmem:[#allocation4 + $0xe0] sm:$0xff] %v4795
  %4860 = vst [vmem:[#allocation4 + $0xe8] sm:$0xff] %v4796
  %4861 = vst [vmem:[#allocation4 + $0xf0] sm:$0xff] %v4797
  %4862 = vst [vmem:[#allocation4 + $0xf8] sm:$0xff] %v4798
  %4863 = vst [vmem:[#allocation4 + $0x100] sm:$0xff] %v4799
  %4864 = vst [vmem:[#allocation4 + $0x108] sm:$0xff] %v4800
  %4865 = vst [vmem:[#allocation4 + $0x110] sm:$0xff] %v4801
  %4866 = vst [vmem:[#allocation4 + $0x118] sm:$0xff] %v4802
  %4867 = vst [vmem:[#allocation4 + $0x120] sm:$0xff] %v4803
  %4868 = vst [vmem:[#allocation4 + $0x128] sm:$0xff] %v4804
  %4869 = vst [vmem:[#allocation4 + $0x130] sm:$0xff] %v4805
  %4870 = vst [vmem:[#allocation4 + $0x138] sm:$0xff] %v4806
  %4871 = vst [vmem:[#allocation4 + $0x140] sm:$0xff] %v4807
  %4872 = vst [vmem:[#allocation4 + $0x148] sm:$0xff] %v4808
  %4873 = vst [vmem:[#allocation4 + $0x150] sm:$0xff] %v4809
  %4874 = vst [vmem:[#allocation4 + $0x158] sm:$0xff] %v4810
  %4875 = vst [vmem:[#allocation4 + $0x160] sm:$0xff] %v4811
  %4876 = vst [vmem:[#allocation4 + $0x168] sm:$0xff] %v4812
  %4877 = vst [vmem:[#allocation4 + $0x170] sm:$0xff] %v4813
  %4878 = vst [vmem:[#allocation4 + $0x178] sm:$0xff] %v4814
  %4879 = vst [vmem:[#allocation4 + $0x180] sm:$0xff] %v4815
  %4880 = vst [vmem:[#allocation4 + $0x188] sm:$0xff] %v4816
  %4881 = vst [vmem:[#allocation4 + $0x190] sm:$0xff] %v4817
  %4882 = vst [vmem:[#allocation4 + $0x198] sm:$0xff] %v4818
  %4883 = vst [vmem:[#allocation4 + $0x1a0] sm:$0xff] %v4819
  %4884 = vst [vmem:[#allocation4 + $0x1a8] sm:$0xff] %v4820
  %4885 = vst [vmem:[#allocation4 + $0x1b0] sm:$0xff] %v4821
  %4886 = vst [vmem:[#allocation4 + $0x1b8] sm:$0xff] %v4822
  %4887 = vst [vmem:[#allocation4 + $0x1c0] sm:$0xff] %v4823
  %4888 = vst [vmem:[#allocation4 + $0x1c8] sm:$0xff] %v4824
  %4889 = vst [vmem:[#allocation4 + $0x1d0] sm:$0xff] %v4825
  %4890 = vst [vmem:[#allocation4 + $0x1d8] sm:$0xff] %v4826
  %4891 = vst [vmem:[#allocation4 + $0x1e0] sm:$0xff] %v4827
  %4892 = vst [vmem:[#allocation4 + $0x1e8] sm:$0xff] %v4828
  %4893 = vst [vmem:[#allocation4 + $0x1f0] sm:$0xff] %v4829
  %4894 = vst [vmem:[#allocation4 + $0x1f8] sm:$0xff] %v4830
  %v4895 = vld [vmem:[#allocation4] sm:$0xff]
  %v4896 = vld [vmem:[#allocation4 + $0x8] sm:$0xff]
  %v4897 = vld [vmem:[#allocation4 + $0x10] sm:$0xff]
  %v4898 = vld [vmem:[#allocation4 + $0x18] sm:$0xff]
  %v4899 = vld [vmem:[#allocation4 + $0x20] sm:$0xff]
  %v4900 = vld [vmem:[#allocation4 + $0x28] sm:$0xff]
  %v4901 = vld [vmem:[#allocation4 + $0x30] sm:$0xff]
  %v4902 = vld [vmem:[#allocation4 + $0x38] sm:$0xff]
  %v4903 = vld [vmem:[#allocation4 + $0x40] sm:$0xff]
  %v4904 = vld [vmem:[#allocation4 + $0x48] sm:$0xff]
  %v4905 = vld [vmem:[#allocation4 + $0x50] sm:$0xff]
  %v4906 = vld [vmem:[#allocation4 + $0x58] sm:$0xff]
  %v4907 = vld [vmem:[#allocation4 + $0x60] sm:$0xff]
  %v4908 = vld [vmem:[#allocation4 + $0x68] sm:$0xff]
  %v4909 = vld [vmem:[#allocation4 + $0x70] sm:$0xff]
  %v4910 = vld [vmem:[#allocation4 + $0x78] sm:$0xff]
  %v4911 = vld [vmem:[#allocation4 + $0x80] sm:$0xff]
  %v4912 = vld [vmem:[#allocation4 + $0x88] sm:$0xff]
  %v4913 = vld [vmem:[#allocation4 + $0x90] sm:$0xff]
  %v4914 = vld [vmem:[#allocation4 + $0x98] sm:$0xff]
  %v4915 = vld [vmem:[#allocation4 + $0xa0] sm:$0xff]
  %v4916 = vld [vmem:[#allocation4 + $0xa8] sm:$0xff]
  %v4917 = vld [vmem:[#allocation4 + $0xb0] sm:$0xff]
  %v4918 = vld [vmem:[#allocation4 + $0xb8] sm:$0xff]
  %v4919 = vld [vmem:[#allocation4 + $0xc0] sm:$0xff]
  %v4920 = vld [vmem:[#allocation4 + $0xc8] sm:$0xff]
  %v4921 = vld [vmem:[#allocation4 + $0xd0] sm:$0xff]
  %v4922 = vld [vmem:[#allocation4 + $0xd8] sm:$0xff]
  %v4923 = vld [vmem:[#allocation4 + $0xe0] sm:$0xff]
  %v4924 = vld [vmem:[#allocation4 + $0xe8] sm:$0xff]
  %v4925 = vld [vmem:[#allocation4 + $0xf0] sm:$0xff]
  %v4926 = vld [vmem:[#allocation4 + $0xf8] sm:$0xff]
  %v4927 = vld [vmem:[#allocation4 + $0x100] sm:$0xff]
  %v4928 = vld [vmem:[#allocation4 + $0x108] sm:$0xff]
  %v4929 = vld [vmem:[#allocation4 + $0x110] sm:$0xff]
  %v4930 = vld [vmem:[#allocation4 + $0x118] sm:$0xff]
  %v4931 = vld [vmem:[#allocation4 + $0x120] sm:$0xff]
  %v4932 = vld [vmem:[#allocation4 + $0x128] sm:$0xff]
  %v4933 = vld [vmem:[#allocation4 + $0x130] sm:$0xff]
  %v4934 = vld [vmem:[#allocation4 + $0x138] sm:$0xff]
  %v4935 = vld [vmem:[#allocation4 + $0x140] sm:$0xff]
  %v4936 = vld [vmem:[#allocation4 + $0x148] sm:$0xff]
  %v4937 = vld [vmem:[#allocation4 + $0x150] sm:$0xff]
  %v4938 = vld [vmem:[#allocation4 + $0x158] sm:$0xff]
  %v4939 = vld [vmem:[#allocation4 + $0x160] sm:$0xff]
  %v4940 = vld [vmem:[#allocation4 + $0x168] sm:$0xff]
  %v4941 = vld [vmem:[#allocation4 + $0x170] sm:$0xff]
  %v4942 = vld [vmem:[#allocation4 + $0x178] sm:$0xff]
  %v4943 = vld [vmem:[#allocation4 + $0x180] sm:$0xff]
  %v4944 = vld [vmem:[#allocation4 + $0x188] sm:$0xff]
  %v4945 = vld [vmem:[#allocation4 + $0x190] sm:$0xff]
  %v4946 = vld [vmem:[#allocation4 + $0x198] sm:$0xff]
  %v4947 = vld [vmem:[#allocation4 + $0x1a0] sm:$0xff]
  %v4948 = vld [vmem:[#allocation4 + $0x1a8] sm:$0xff]
  %v4949 = vld [vmem:[#allocation4 + $0x1b0] sm:$0xff]
  %v4950 = vld [vmem:[#allocation4 + $0x1b8] sm:$0xff]
  %v4951 = vld [vmem:[#allocation4 + $0x1c0] sm:$0xff]
  %v4952 = vld [vmem:[#allocation4 + $0x1c8] sm:$0xff]
  %v4953 = vld [vmem:[#allocation4 + $0x1d0] sm:$0xff]
  %v4954 = vld [vmem:[#allocation4 + $0x1d8] sm:$0xff]
  %v4955 = vld [vmem:[#allocation4 + $0x1e0] sm:$0xff]
  %v4956 = vld [vmem:[#allocation4 + $0x1e8] sm:$0xff]
  %v4957 = vld [vmem:[#allocation4 + $0x1f0] sm:$0xff]
  %v4958 = vld [vmem:[#allocation4 + $0x1f8] sm:$0xff]
  %v4959 = vadd.f32 %v4895, %v4896
  %v4960 = vadd.f32 %v4959, %v4897
  %v4961 = vadd.f32 %v4960, %v4898
  %v4962 = vadd.f32 %v4961, %v4899
  %v4963 = vadd.f32 %v4962, %v4900
  %v4964 = vadd.f32 %v4963, %v4901
  %v4965 = vadd.f32 %v4964, %v4902
  %v4966 = vadd.f32 %v4965, %v4903
  %v4967 = vadd.f32 %v4966, %v4904
  %v4968 = vadd.f32 %v4967, %v4905
  %v4969 = vadd.f32 %v4968, %v4906
  %v4970 = vadd.f32 %v4969, %v4907
  %v4971 = vadd.f32 %v4970, %v4908
  %v4972 = vadd.f32 %v4971, %v4909
  %v4973 = vadd.f32 %v4972, %v4910
  %v4974 = vadd.f32 %v4973, %v4911
  %v4975 = vadd.f32 %v4974, %v4912
  %v4976 = vadd.f32 %v4975, %v4913
  %v4977 = vadd.f32 %v4976, %v4914
  %v4978 = vadd.f32 %v4977, %v4915
  %v4979 = vadd.f32 %v4978, %v4916
  %v4980 = vadd.f32 %v4979, %v4917
  %v4981 = vadd.f32 %v4980, %v4918
  %v4982 = vadd.f32 %v4981, %v4919
  %v4983 = vadd.f32 %v4982, %v4920
  %v4984 = vadd.f32 %v4983, %v4921
  %v4985 = vadd.f32 %v4984, %v4922
  %v4986 = vadd.f32 %v4985, %v4923
  %v4987 = vadd.f32 %v4986, %v4924
  %v4988 = vadd.f32 %v4987, %v4925
  %v4989 = vadd.f32 %v4988, %v4926
  %v4990 = vadd.f32 %v4989, %v4927
  %v4991 = vadd.f32 %v4990, %v4928
  %v4992 = vadd.f32 %v4991, %v4929
  %v4993 = vadd.f32 %v4992, %v4930
  %v4994 = vadd.f32 %v4993, %v4931
  %v4995 = vadd.f32 %v4994, %v4932
  %v4996 = vadd.f32 %v4995, %v4933
  %v4997 = vadd.f32 %v4996, %v4934
  %v4998 = vadd.f32 %v4997, %v4935
  %v4999 = vadd.f32 %v4998, %v4936
  %v5000 = vadd.f32 %v4999, %v4937
  %v5001 = vadd.f32 %v5000, %v4938
  %v5002 = vadd.f32 %v5001, %v4939
  %v5003 = vadd.f32 %v5002, %v4940
  %v5004 = vadd.f32 %v5003, %v4941
  %v5005 = vadd.f32 %v5004, %v4942
  %v5006 = vadd.f32 %v5005, %v4943
  %v5007 = vadd.f32 %v5006, %v4944
  %v5008 = vadd.f32 %v5007, %v4945
  %v5009 = vadd.f32 %v5008, %v4946
  %v5010 = vadd.f32 %v5009, %v4947
  %v5011 = vadd.f32 %v5010, %v4948
  %v5012 = vadd.f32 %v5011, %v4949
  %v5013 = vadd.f32 %v5012, %v4950
  %v5014 = vadd.f32 %v5013, %v4951
  %v5015 = vadd.f32 %v5014, %v4952
  %v5016 = vadd.f32 %v5015, %v4953
  %v5017 = vadd.f32 %v5016, %v4954
  %v5018 = vadd.f32 %v5017, %v4955
  %v5019 = vadd.f32 %v5018, %v4956
  %v5020 = vadd.f32 %v5019, %v4957
  %v5021 = vadd.f32 %v5020, %v4958
  %v5022 = vrot.slane %v5021, 4
  %v5023 = vadd.f32 %v5021, %v5022
  %v5024 = vrot.slane %v5023, 2
  %v5025 = vadd.f32 %v5023, %v5024
  %v5026 = vrot.slane %v5025, 1
  %v5027 = vadd.f32 %v5025, %v5026
  %v5028 = vrcp.pop 512.0
  %v5029 = vmul.f32 512.0, %v5028
  %v5030 = vsub.f32 1.0, %v5029
  %v5031 = vmul.f32 %v5028, %v5030
  %v5032 = vadd.f32 %v5028, %v5031
  %vm5033 = vweird.f32 %v5028
  %v5034 = vsel %vm5033, %v5028, %v5032
  %v5035 = vmul.f32 %v5027, %v5034
  %v5036 = vsub.f32 %v4895, %v5035
  %v5037 = vsub.f32 %v4896, %v5035
  %v5038 = vsub.f32 %v4897, %v5035
  %v5039 = vsub.f32 %v4898, %v5035
  %v5040 = vsub.f32 %v4899, %v5035
  %v5041 = vsub.f32 %v4900, %v5035
  %v5042 = vsub.f32 %v4901, %v5035
  %v5043 = vsub.f32 %v4902, %v5035
  %v5044 = vsub.f32 %v4903, %v5035
  %v5045 = vsub.f32 %v4904, %v5035
  %v5046 = vsub.f32 %v4905, %v5035
  %v5047 = vsub.f32 %v4906, %v5035
  %v5048 = vsub.f32 %v4907, %v5035
  %v5049 = vsub.f32 %v4908, %v5035
  %v5050 = vsub.f32 %v4909, %v5035
  %v5051 = vsub.f32 %v4910, %v5035
  %v5052 = vsub.f32 %v4911, %v5035
  %v5053 = vsub.f32 %v4912, %v5035
  %v5054 = vsub.f32 %v4913, %v5035
  %v5055 = vsub.f32 %v4914, %v5035
  %v5056 = vsub.f32 %v4915, %v5035
  %v5057 = vsub.f32 %v4916, %v5035
  %v5058 = vsub.f32 %v4917, %v5035
  %v5059 = vsub.f32 %v4918, %v5035
  %v5060 = vsub.f32 %v4919, %v5035
  %v5061 = vsub.f32 %v4920, %v5035
  %v5062 = vsub.f32 %v4921, %v5035
  %v5063 = vsub.f32 %v4922, %v5035
  %v5064 = vsub.f32 %v4923, %v5035
  %v5065 = vsub.f32 %v4924, %v5035
  %v5066 = vsub.f32 %v4925, %v5035
  %v5067 = vsub.f32 %v4926, %v5035
  %v5068 = vsub.f32 %v4927, %v5035
  %v5069 = vsub.f32 %v4928, %v5035
  %v5070 = vsub.f32 %v4929, %v5035
  %v5071 = vsub.f32 %v4930, %v5035
  %v5072 = vsub.f32 %v4931, %v5035
  %v5073 = vsub.f32 %v4932, %v5035
  %v5074 = vsub.f32 %v4933, %v5035
  %v5075 = vsub.f32 %v4934, %v5035
  %v5076 = vsub.f32 %v4935, %v5035
  %v5077 = vsub.f32 %v4936, %v5035
  %v5078 = vsub.f32 %v4937, %v5035
  %v5079 = vsub.f32 %v4938, %v5035
  %v5080 = vsub.f32 %v4939, %v5035
  %v5081 = vsub.f32 %v4940, %v5035
  %v5082 = vsub.f32 %v4941, %v5035
  %v5083 = vsub.f32 %v4942, %v5035
  %v5084 = vsub.f32 %v4943, %v5035
  %v5085 = vsub.f32 %v4944, %v5035
  %v5086 = vsub.f32 %v4945, %v5035
  %v5087 = vsub.f32 %v4946, %v5035
  %v5088 = vsub.f32 %v4947, %v5035
  %v5089 = vsub.f32 %v4948, %v5035
  %v5090 = vsub.f32 %v4949, %v5035
  %v5091 = vsub.f32 %v4950, %v5035
  %v5092 = vsub.f32 %v4951, %v5035
  %v5093 = vsub.f32 %v4952, %v5035
  %v5094 = vsub.f32 %v4953, %v5035
  %v5095 = vsub.f32 %v4954, %v5035
  %v5096 = vsub.f32 %v4955, %v5035
  %v5097 = vsub.f32 %v4956, %v5035
  %v5098 = vsub.f32 %v4957, %v5035
  %v5099 = vsub.f32 %v4958, %v5035
  %v5100 = vmul.f32 %v5036, %v5036
  %v5101 = vmul.f32 %v5037, %v5037
  %v5102 = vmul.f32 %v5038, %v5038
  %v5103 = vmul.f32 %v5039, %v5039
  %v5104 = vmul.f32 %v5040, %v5040
  %v5105 = vmul.f32 %v5041, %v5041
  %v5106 = vmul.f32 %v5042, %v5042
  %v5107 = vmul.f32 %v5043, %v5043
  %v5108 = vmul.f32 %v5044, %v5044
  %v5109 = vmul.f32 %v5045, %v5045
  %v5110 = vmul.f32 %v5046, %v5046
  %v5111 = vmul.f32 %v5047, %v5047
  %v5112 = vmul.f32 %v5048, %v5048
  %v5113 = vmul.f32 %v5049, %v5049
  %v5114 = vmul.f32 %v5050, %v5050
  %v5115 = vmul.f32 %v5051, %v5051
  %v5116 = vmul.f32 %v5052, %v5052
  %v5117 = vmul.f32 %v5053, %v5053
  %v5118 = vmul.f32 %v5054, %v5054
  %v5119 = vmul.f32 %v5055, %v5055
  %v5120 = vmul.f32 %v5056, %v5056
  %v5121 = vmul.f32 %v5057, %v5057
  %v5122 = vmul.f32 %v5058, %v5058
  %v5123 = vmul.f32 %v5059, %v5059
  %v5124 = vmul.f32 %v5060, %v5060
  %v5125 = vmul.f32 %v5061, %v5061
  %v5126 = vmul.f32 %v5062, %v5062
  %v5127 = vmul.f32 %v5063, %v5063
  %v5128 = vmul.f32 %v5064, %v5064
  %v5129 = vmul.f32 %v5065, %v5065
  %v5130 = vmul.f32 %v5066, %v5066
  %v5131 = vmul.f32 %v5067, %v5067
  %v5132 = vmul.f32 %v5068, %v5068
  %v5133 = vmul.f32 %v5069, %v5069
  %v5134 = vmul.f32 %v5070, %v5070
  %v5135 = vmul.f32 %v5071, %v5071
  %v5136 = vmul.f32 %v5072, %v5072
  %v5137 = vmul.f32 %v5073, %v5073
  %v5138 = vmul.f32 %v5074, %v5074
  %v5139 = vmul.f32 %v5075, %v5075
  %v5140 = vmul.f32 %v5076, %v5076
  %v5141 = vmul.f32 %v5077, %v5077
  %v5142 = vmul.f32 %v5078, %v5078
  %v5143 = vmul.f32 %v5079, %v5079
  %v5144 = vmul.f32 %v5080, %v5080
  %v5145 = vmul.f32 %v5081, %v5081
  %v5146 = vmul.f32 %v5082, %v5082
  %v5147 = vmul.f32 %v5083, %v5083
  %v5148 = vmul.f32 %v5084, %v5084
  %v5149 = vmul.f32 %v5085, %v5085
  %v5150 = vmul.f32 %v5086, %v5086
  %v5151 = vmul.f32 %v5087, %v5087
  %v5152 = vmul.f32 %v5088, %v5088
  %v5153 = vmul.f32 %v5089, %v5089
  %v5154 = vmul.f32 %v5090, %v5090
  %v5155 = vmul.f32 %v5091, %v5091
  %v5156 = vmul.f32 %v5092, %v5092
  %v5157 = vmul.f32 %v5093, %v5093
  %v5158 = vmul.f32 %v5094, %v5094
  %v5159 = vmul.f32 %v5095, %v5095
  %v5160 = vmul.f32 %v5096, %v5096
  %v5161 = vmul.f32 %v5097, %v5097
  %v5162 = vmul.f32 %v5098, %v5098
  %v5163 = vmul.f32 %v5099, %v5099
  %v5164 = vadd.f32 %v5100, %v5101
  %v5165 = vadd.f32 %v5164, %v5102
  %v5166 = vadd.f32 %v5165, %v5103
  %v5167 = vadd.f32 %v5166, %v5104
  %v5168 = vadd.f32 %v5167, %v5105
  %v5169 = vadd.f32 %v5168, %v5106
  %v5170 = vadd.f32 %v5169, %v5107
  %v5171 = vadd.f32 %v5170, %v5108
  %v5172 = vadd.f32 %v5171, %v5109
  %v5173 = vadd.f32 %v5172, %v5110
  %v5174 = vadd.f32 %v5173, %v5111
  %v5175 = vadd.f32 %v5174, %v5112
  %v5176 = vadd.f32 %v5175, %v5113
  %v5177 = vadd.f32 %v5176, %v5114
  %v5178 = vadd.f32 %v5177, %v5115
  %v5179 = vadd.f32 %v5178, %v5116
  %v5180 = vadd.f32 %v5179, %v5117
  %v5181 = vadd.f32 %v5180, %v5118
  %v5182 = vadd.f32 %v5181, %v5119
  %v5183 = vadd.f32 %v5182, %v5120
  %v5184 = vadd.f32 %v5183, %v5121
  %v5185 = vadd.f32 %v5184, %v5122
  %v5186 = vadd.f32 %v5185, %v5123
  %v5187 = vadd.f32 %v5186, %v5124
  %v5188 = vadd.f32 %v5187, %v5125
  %v5189 = vadd.f32 %v5188, %v5126
  %v5190 = vadd.f32 %v5189, %v5127
  %v5191 = vadd.f32 %v5190, %v5128
  %v5192 = vadd.f32 %v5191, %v5129
  %v5193 = vadd.f32 %v5192, %v5130
  %v5194 = vadd.f32 %v5193, %v5131
  %v5195 = vadd.f32 %v5194, %v5132
  %v5196 = vadd.f32 %v5195, %v5133
  %v5197 = vadd.f32 %v5196, %v5134
  %v5198 = vadd.f32 %v5197, %v5135
  %v5199 = vadd.f32 %v5198, %v5136
  %v5200 = vadd.f32 %v5199, %v5137
  %v5201 = vadd.f32 %v5200, %v5138
  %v5202 = vadd.f32 %v5201, %v5139
  %v5203 = vadd.f32 %v5202, %v5140
  %v5204 = vadd.f32 %v5203, %v5141
  %v5205 = vadd.f32 %v5204, %v5142
  %v5206 = vadd.f32 %v5205, %v5143
  %v5207 = vadd.f32 %v5206, %v5144
  %v5208 = vadd.f32 %v5207, %v5145
  %v5209 = vadd.f32 %v5208, %v5146
  %v5210 = vadd.f32 %v5209, %v5147
  %v5211 = vadd.f32 %v5210, %v5148
  %v5212 = vadd.f32 %v5211, %v5149
  %v5213 = vadd.f32 %v5212, %v5150
  %v5214 = vadd.f32 %v5213, %v5151
  %v5215 = vadd.f32 %v5214, %v5152
  %v5216 = vadd.f32 %v5215, %v5153
  %v5217 = vadd.f32 %v5216, %v5154
  %v5218 = vadd.f32 %v5217, %v5155
  %v5219 = vadd.f32 %v5218, %v5156
  %v5220 = vadd.f32 %v5219, %v5157
  %v5221 = vadd.f32 %v5220, %v5158
  %v5222 = vadd.f32 %v5221, %v5159
  %v5223 = vadd.f32 %v5222, %v5160
  %v5224 = vadd.f32 %v5223, %v5161
  %v5225 = vadd.f32 %v5224, %v5162
  %v5226 = vadd.f32 %v5225, %v5163
  %v5227 = vrot.slane %v5226, 4
  %v5228 = vadd.f32 %v5226, %v5227
  %v5229 = vrot.slane %v5228, 2
  %v5230 = vadd.f32 %v5228, %v5229
  %v5231 = vrot.slane %v5230, 1
  %v5232 = vadd.f32 %v5230, %v5231
  %v5233 = vmul.f32 %v5232, %v5034
  %v5234 = vld [vmem:[%s2] sm:$0x1]
  %v5235 = vadd.f32 %v5233, 1e-05
  %v5236 = vrsqrt.pop %v5235
  %v5237 = vmul.f32 %v5236, %v5235
  %v5238 = vmul.f32 %v5237, %v5236
  %v5239 = vmul.f32 0.5, %v5238
  %v5240 = vsub.f32 1.5, %v5239
  %v5241 = vmul.f32 %v5236, %v5240
  %vm5242 = vweird.f32 %v5235
  %vm5243 = vweird.f32 %v5236
  %vm5244 = vmor %vm5242, %vm5243
  %v5245 = vsel %vm5244, %v5236, %v5241
  %v5246 = vmul.f32 %v5234, %v5245
  %v5247 = vld [vmem:[%s3] sm:$0x1]
  %v5248 = vmul.f32 %v5035, %v5246
  %v5249 = vsub.f32 %v5247, %v5248
  %v5251 = vperm.slane %v5246, 0
  %v5253 = vmul.f32 %v4895, %v5251
  %v5254 = vmul.f32 %v4896, %v5251
  %v5255 = vmul.f32 %v4897, %v5251
  %v5256 = vmul.f32 %v4898, %v5251
  %v5257 = vmul.f32 %v4899, %v5251
  %v5258 = vmul.f32 %v4900, %v5251
  %v5259 = vmul.f32 %v4901, %v5251
  %v5260 = vmul.f32 %v4902, %v5251
  %v5261 = vmul.f32 %v4903, %v5251
  %v5262 = vmul.f32 %v4904, %v5251
  %v5263 = vmul.f32 %v4905, %v5251
  %v5264 = vmul.f32 %v4906, %v5251
  %v5265 = vmul.f32 %v4907, %v5251
  %v5266 = vmul.f32 %v4908, %v5251
  %v5267 = vmul.f32 %v4909, %v5251
  %v5268 = vmul.f32 %v4910, %v5251
  %v5269 = vmul.f32 %v4911, %v5251
  %v5270 = vmul.f32 %v4912, %v5251
  %v5271 = vmul.f32 %v4913, %v5251
  %v5272 = vmul.f32 %v4914, %v5251
  %v5273 = vmul.f32 %v4915, %v5251
  %v5274 = vmul.f32 %v4916, %v5251
  %v5275 = vmul.f32 %v4917, %v5251
  %v5276 = vmul.f32 %v4918, %v5251
  %v5277 = vmul.f32 %v4919, %v5251
  %v5278 = vmul.f32 %v4920, %v5251
  %v5279 = vmul.f32 %v4921, %v5251
  %v5280 = vmul.f32 %v4922, %v5251
  %v5281 = vmul.f32 %v4923, %v5251
  %v5282 = vmul.f32 %v4924, %v5251
  %v5283 = vmul.f32 %v4925, %v5251
  %v5284 = vmul.f32 %v4926, %v5251
  %v5285 = vmul.f32 %v4927, %v5251
  %v5286 = vmul.f32 %v4928, %v5251
  %v5287 = vmul.f32 %v4929, %v5251
  %v5288 = vmul.f32 %v4930, %v5251
  %v5289 = vmul.f32 %v4931, %v5251
  %v5290 = vmul.f32 %v4932, %v5251
  %v5291 = vmul.f32 %v4933, %v5251
  %v5292 = vmul.f32 %v4934, %v5251
  %v5293 = vmul.f32 %v4935, %v5251
  %v5294 = vmul.f32 %v4936, %v5251
  %v5295 = vmul.f32 %v4937, %v5251
  %v5296 = vmul.f32 %v4938, %v5251
  %v5297 = vmul.f32 %v4939, %v5251
  %v5298 = vmul.f32 %v4940, %v5251
  %v5299 = vmul.f32 %v4941, %v5251
  %v5300 = vmul.f32 %v4942, %v5251
  %v5301 = vmul.f32 %v4943, %v5251
  %v5302 = vmul.f32 %v4944, %v5251
  %v5303 = vmul.f32 %v4945, %v5251
  %v5304 = vmul.f32 %v4946, %v5251
  %v5305 = vmul.f32 %v4947, %v5251
  %v5306 = vmul.f32 %v4948, %v5251
  %v5307 = vmul.f32 %v4949, %v5251
  %v5308 = vmul.f32 %v4950, %v5251
  %v5309 = vmul.f32 %v4951, %v5251
  %v5310 = vmul.f32 %v4952, %v5251
  %v5311 = vmul.f32 %v4953, %v5251
  %v5312 = vmul.f32 %v4954, %v5251
  %v5313 = vmul.f32 %v4955, %v5251
  %v5314 = vmul.f32 %v4956, %v5251
  %v5315 = vmul.f32 %v4957, %v5251
  %v5316 = vmul.f32 %v4958, %v5251
  %v5318 = vperm.slane %v5249, 0
  %v5320 = vadd.f32 %v5253, %v5318
  %v5321 = vadd.f32 %v5254, %v5318
  %v5322 = vadd.f32 %v5255, %v5318
  %v5323 = vadd.f32 %v5256, %v5318
  %v5324 = vadd.f32 %v5257, %v5318
  %v5325 = vadd.f32 %v5258, %v5318
  %v5326 = vadd.f32 %v5259, %v5318
  %v5327 = vadd.f32 %v5260, %v5318
  %v5328 = vadd.f32 %v5261, %v5318
  %v5329 = vadd.f32 %v5262, %v5318
  %v5330 = vadd.f32 %v5263, %v5318
  %v5331 = vadd.f32 %v5264, %v5318
  %v5332 = vadd.f32 %v5265, %v5318
  %v5333 = vadd.f32 %v5266, %v5318
  %v5334 = vadd.f32 %v5267, %v5318
  %v5335 = vadd.f32 %v5268, %v5318
  %v5336 = vadd.f32 %v5269, %v5318
  %v5337 = vadd.f32 %v5270, %v5318
  %v5338 = vadd.f32 %v5271, %v5318
  %v5339 = vadd.f32 %v5272, %v5318
  %v5340 = vadd.f32 %v5273, %v5318
  %v5341 = vadd.f32 %v5274, %v5318
  %v5342 = vadd.f32 %v5275, %v5318
  %v5343 = vadd.f32 %v5276, %v5318
  %v5344 = vadd.f32 %v5277, %v5318
  %v5345 = vadd.f32 %v5278, %v5318
  %v5346 = vadd.f32 %v5279, %v5318
  %v5347 = vadd.f32 %v5280, %v5318
  %v5348 = vadd.f32 %v5281, %v5318
  %v5349 = vadd.f32 %v5282, %v5318
  %v5350 = vadd.f32 %v5283, %v5318
  %v5351 = vadd.f32 %v5284, %v5318
  %v5352 = vadd.f32 %v5285, %v5318
  %v5353 = vadd.f32 %v5286, %v5318
  %v5354 = vadd.f32 %v5287, %v5318
  %v5355 = vadd.f32 %v5288, %v5318
  %v5356 = vadd.f32 %v5289, %v5318
  %v5357 = vadd.f32 %v5290, %v5318
  %v5358 = vadd.f32 %v5291, %v5318
  %v5359 = vadd.f32 %v5292, %v5318
  %v5360 = vadd.f32 %v5293, %v5318
  %v5361 = vadd.f32 %v5294, %v5318
  %v5362 = vadd.f32 %v5295, %v5318
  %v5363 = vadd.f32 %v5296, %v5318
  %v5364 = vadd.f32 %v5297, %v5318
  %v5365 = vadd.f32 %v5298, %v5318
  %v5366 = vadd.f32 %v5299, %v5318
  %v5367 = vadd.f32 %v5300, %v5318
  %v5368 = vadd.f32 %v5301, %v5318
  %v5369 = vadd.f32 %v5302, %v5318
  %v5370 = vadd.f32 %v5303, %v5318
  %v5371 = vadd.f32 %v5304, %v5318
  %v5372 = vadd.f32 %v5305, %v5318
  %v5373 = vadd.f32 %v5306, %v5318
  %v5374 = vadd.f32 %v5307, %v5318
  %v5375 = vadd.f32 %v5308, %v5318
  %v5376 = vadd.f32 %v5309, %v5318
  %v5377 = vadd.f32 %v5310, %v5318
  %v5378 = vadd.f32 %v5311, %v5318
  %v5379 = vadd.f32 %v5312, %v5318
  %v5380 = vadd.f32 %v5313, %v5318
  %v5381 = vadd.f32 %v5314, %v5318
  %v5382 = vadd.f32 %v5315, %v5318
  %v5383 = vadd.f32 %v5316, %v5318
  %v5384 = vmax.f32 %v5320, 0.0
  %v5385 = vmax.f32 %v5321, 0.0
  %v5386 = vmax.f32 %v5322, 0.0
  %v5387 = vmax.f32 %v5323, 0.0
  %v5388 = vmax.f32 %v5324, 0.0
  %v5389 = vmax.f32 %v5325, 0.0
  %v5390 = vmax.f32 %v5326, 0.0
  %v5391 = vmax.f32 %v5327, 0.0
  %v5392 = vmax.f32 %v5328, 0.0
  %v5393 = vmax.f32 %v5329, 0.0
  %v5394 = vmax.f32 %v5330, 0.0
  %v5395 = vmax.f32 %v5331, 0.0
  %v5396 = vmax.f32 %v5332, 0.0
  %v5397 = vmax.f32 %v5333, 0.0
  %v5398 = vmax.f32 %v5334, 0.0
  %v5399 = vmax.f32 %v5335, 0.0
  %v5400 = vmax.f32 %v5336, 0.0
  %v5401 = vmax.f32 %v5337, 0.0
  %v5402 = vmax.f32 %v5338, 0.0
  %v5403 = vmax.f32 %v5339, 0.0
  %v5404 = vmax.f32 %v5340, 0.0
  %v5405 = vmax.f32 %v5341, 0.0
  %v5406 = vmax.f32 %v5342, 0.0
  %v5407 = vmax.f32 %v5343, 0.0
  %v5408 = vmax.f32 %v5344, 0.0
  %v5409 = vmax.f32 %v5345, 0.0
  %v5410 = vmax.f32 %v5346, 0.0
  %v5411 = vmax.f32 %v5347, 0.0
  %v5412 = vmax.f32 %v5348, 0.0
  %v5413 = vmax.f32 %v5349, 0.0
  %v5414 = vmax.f32 %v5350, 0.0
  %v5415 = vmax.f32 %v5351, 0.0
  %v5416 = vmax.f32 %v5352, 0.0
  %v5417 = vmax.f32 %v5353, 0.0
  %v5418 = vmax.f32 %v5354, 0.0
  %v5419 = vmax.f32 %v5355, 0.0
  %v5420 = vmax.f32 %v5356, 0.0
  %v5421 = vmax.f32 %v5357, 0.0
  %v5422 = vmax.f32 %v5358, 0.0
  %v5423 = vmax.f32 %v5359, 0.0
  %v5424 = vmax.f32 %v5360, 0.0
  %v5425 = vmax.f32 %v5361, 0.0
  %v5426 = vmax.f32 %v5362, 0.0
  %v5427 = vmax.f32 %v5363, 0.0
  %v5428 = vmax.f32 %v5364, 0.0
  %v5429 = vmax.f32 %v5365, 0.0
  %v5430 = vmax.f32 %v5366, 0.0
  %v5431 = vmax.f32 %v5367, 0.0
  %v5432 = vmax.f32 %v5368, 0.0
  %v5433 = vmax.f32 %v5369, 0.0
  %v5434 = vmax.f32 %v5370, 0.0
  %v5435 = vmax.f32 %v5371, 0.0
  %v5436 = vmax.f32 %v5372, 0.0
  %v5437 = vmax.f32 %v5373, 0.0
  %v5438 = vmax.f32 %v5374, 0.0
  %v5439 = vmax.f32 %v5375, 0.0
  %v5440 = vmax.f32 %v5376, 0.0
  %v5441 = vmax.f32 %v5377, 0.0
  %v5442 = vmax.f32 %v5378, 0.0
  %v5443 = vmax.f32 %v5379, 0.0
  %v5444 = vmax.f32 %v5380, 0.0
  %v5445 = vmax.f32 %v5381, 0.0
  %v5446 = vmax.f32 %v5382, 0.0
  %v5447 = vmax.f32 %v5383, 0.0
  %s5448 = scalar_lea.vmem [#allocation3], 24
  %5449 = vst [vmem:[%s5448 + $0x1] sm:$0xff] %v5384
  %5450 = vst [vmem:[%s5448 + $0x9] sm:$0xff] %v5385
  %5451 = vst [vmem:[%s5448 + $0x19] sm:$0xff] %v5386
  %5452 = vst [vmem:[%s5448 + $0x21] sm:$0xff] %v5387
  %5453 = vst [vmem:[%s5448 + $0x31] sm:$0xff] %v5388
  %5454 = vst [vmem:[%s5448 + $0x39] sm:$0xff] %v5389
  %5455 = vst [vmem:[%s5448 + $0x49] sm:$0xff] %v5390
  %5456 = vst [vmem:[%s5448 + $0x51] sm:$0xff] %v5391
  %5457 = vst [vmem:[%s5448 + $0x61] sm:$0xff] %v5392
  %5458 = vst [vmem:[%s5448 + $0x69] sm:$0xff] %v5393
  %5459 = vst [vmem:[%s5448 + $0x79] sm:$0xff] %v5394
  %5460 = vst [vmem:[%s5448 + $0x81] sm:$0xff] %v5395
  %5461 = vst [vmem:[%s5448 + $0x91] sm:$0xff] %v5396
  %5462 = vst [vmem:[%s5448 + $0x99] sm:$0xff] %v5397
  %5463 = vst [vmem:[%s5448 + $0xa9] sm:$0xff] %v5398
  %5464 = vst [vmem:[%s5448 + $0xb1] sm:$0xff] %v5399
  %5465 = vst [vmem:[%s5448 + $0xc1] sm:$0xff] %v5400
  %5466 = vst [vmem:[%s5448 + $0xc9] sm:$0xff] %v5401
  %5467 = vst [vmem:[%s5448 + $0xd9] sm:$0xff] %v5402
  %5468 = vst [vmem:[%s5448 + $0xe1] sm:$0xff] %v5403
  %5469 = vst [vmem:[%s5448 + $0xf1] sm:$0xff] %v5404
  %5470 = vst [vmem:[%s5448 + $0xf9] sm:$0xff] %v5405
  %5471 = vst [vmem:[%s5448 + $0x109] sm:$0xff] %v5406
  %5472 = vst [vmem:[%s5448 + $0x111] sm:$0xff] %v5407
  %5473 = vst [vmem:[%s5448 + $0x121] sm:$0xff] %v5408
  %5474 = vst [vmem:[%s5448 + $0x129] sm:$0xff] %v5409
  %5475 = vst [vmem:[%s5448 + $0x139] sm:$0xff] %v5410
  %5476 = vst [vmem:[%s5448 + $0x141] sm:$0xff] %v5411
  %5477 = vst [vmem:[%s5448 + $0x151] sm:$0xff] %v5412
  %5478 = vst [vmem:[%s5448 + $0x159] sm:$0xff] %v5413
  %5479 = vst [vmem:[%s5448 + $0x169] sm:$0xff] %v5414
  %5480 = vst [vmem:[%s5448 + $0x171] sm:$0xff] %v5415
  %5481 = vst [vmem:[%s5448 + $0x1b1] sm:$0xff] %v5416
  %5482 = vst [vmem:[%s5448 + $0x1b9] sm:$0xff] %v5417
  %5483 = vst [vmem:[%s5448 + $0x1c9] sm:$0xff] %v5418
  %5484 = vst [vmem:[%s5448 + $0x1d1] sm:$0xff] %v5419
  %5485 = vst [vmem:[%s5448 + $0x1e1] sm:$0xff] %v5420
  %5486 = vst [vmem:[%s5448 + $0x1e9] sm:$0xff] %v5421
  %5487 = vst [vmem:[%s5448 + $0x1f9] sm:$0xff] %v5422
  %5488 = vst [vmem:[%s5448 + $0x201] sm:$0xff] %v5423
  %5489 = vst [vmem:[%s5448 + $0x211] sm:$0xff] %v5424
  %5490 = vst [vmem:[%s5448 + $0x219] sm:$0xff] %v5425
  %5491 = vst [vmem:[%s5448 + $0x229] sm:$0xff] %v5426
  %5492 = vst [vmem:[%s5448 + $0x231] sm:$0xff] %v5427
  %5493 = vst [vmem:[%s5448 + $0x241] sm:$0xff] %v5428
  %5494 = vst [vmem:[%s5448 + $0x249] sm:$0xff] %v5429
  %5495 = vst [vmem:[%s5448 + $0x259] sm:$0xff] %v5430
  %5496 = vst [vmem:[%s5448 + $0x261] sm:$0xff] %v5431
  %5497 = vst [vmem:[%s5448 + $0x271] sm:$0xff] %v5432
  %5498 = vst [vmem:[%s5448 + $0x279] sm:$0xff] %v5433
  %5499 = vst [vmem:[%s5448 + $0x289] sm:$0xff] %v5434
  %5500 = vst [vmem:[%s5448 + $0x291] sm:$0xff] %v5435
  %5501 = vst [vmem:[%s5448 + $0x2a1] sm:$0xff] %v5436
  %5502 = vst [vmem:[%s5448 + $0x2a9] sm:$0xff] %v5437
  %5503 = vst [vmem:[%s5448 + $0x2b9] sm:$0xff] %v5438
  %5504 = vst [vmem:[%s5448 + $0x2c1] sm:$0xff] %v5439
  %5505 = vst [vmem:[%s5448 + $0x2d1] sm:$0xff] %v5440
  %5506 = vst [vmem:[%s5448 + $0x2d9] sm:$0xff] %v5441
  %5507 = vst [vmem:[%s5448 + $0x2e9] sm:$0xff] %v5442
  %5508 = vst [vmem:[%s5448 + $0x2f1] sm:$0xff] %v5443
  %5509 = vst [vmem:[%s5448 + $0x301] sm:$0xff] %v5444
  %5510 = vst [vmem:[%s5448 + $0x309] sm:$0xff] %v5445
  %5511 = vst [vmem:[%s5448 + $0x319] sm:$0xff] %v5446
  %5512 = vst [vmem:[%s5448 + $0x321] sm:$0xff] %v5447
  %v5513 = vld [vmem:[#allocation3] sm:$0xff]
  %v5514 = vld [vmem:[#allocation3 + $0x8] sm:$0xff]
  %v5515 = vld [vmem:[#allocation3 + $0x18] sm:$0xff]
  %v5516 = vld [vmem:[#allocation3 + $0x20] sm:$0xff]
  %v5517 = vld [vmem:[#allocation3 + $0x30] sm:$0xff]
  %v5518 = vld [vmem:[#allocation3 + $0x38] sm:$0xff]
  %v5519 = vld [vmem:[#allocation3 + $0x48] sm:$0xff]
  %v5520 = vld [vmem:[#allocation3 + $0x50] sm:$0xff]
  %v5521 = vld [vmem:[#allocation3 + $0x60] sm:$0xff]
  %v5522 = vld [vmem:[#allocation3 + $0x68] sm:$0xff]
  %v5523 = vld [vmem:[#allocation3 + $0x78] sm:$0xff]
  %v5524 = vld [vmem:[#allocation3 + $0x80] sm:$0xff]
  %v5525 = vld [vmem:[#allocation3 + $0x90] sm:$0xff]
  %v5526 = vld [vmem:[#allocation3 + $0x98] sm:$0xff]
  %v5527 = vld [vmem:[#allocation3 + $0xa8] sm:$0xff]
  %v5528 = vld [vmem:[#allocation3 + $0xb0] sm:$0xff]
  %v5529 = vld [vmem:[#allocation3 + $0xc0] sm:$0xff]
  %v5530 = vld [vmem:[#allocation3 + $0xc8] sm:$0xff]
  %v5531 = vld [vmem:[#allocation3 + $0xd8] sm:$0xff]
  %v5532 = vld [vmem:[#allocation3 + $0xe0] sm:$0xff]
  %v5533 = vld [vmem:[#allocation3 + $0xf0] sm:$0xff]
  %v5534 = vld [vmem:[#allocation3 + $0xf8] sm:$0xff]
  %v5535 = vld [vmem:[#allocation3 + $0x108] sm:$0xff]
  %v5536 = vld [vmem:[#allocation3 + $0x110] sm:$0xff]
  %v5537 = vld [vmem:[#allocation3 + $0x120] sm:$0xff]
  %v5538 = vld [vmem:[#allocation3 + $0x128] sm:$0xff]
  %v5539 = vld [vmem:[#allocation3 + $0x138] sm:$0xff]
  %v5540 = vld [vmem:[#allocation3 + $0x140] sm:$0xff]
  %v5541 = vld [vmem:[#allocation3 + $0x150] sm:$0xff]
  %v5542 = vld [vmem:[#allocation3 + $0x158] sm:$0xff]
  %v5543 = vld [vmem:[#allocation3 + $0x168] sm:$0xff]
  %v5544 = vld [vmem:[#allocation3 + $0x170] sm:$0xff]
  %v5545 = vld [vmem:[#allocation3 + $0x1b0] sm:$0xff]
  %v5546 = vld [vmem:[#allocation3 + $0x1b8] sm:$0xff]
  %v5547 = vld [vmem:[#allocation3 + $0x1c8] sm:$0xff]
  %v5548 = vld [vmem:[#allocation3 + $0x1d0] sm:$0xff]
  %v5549 = vld [vmem:[#allocation3 + $0x1e0] sm:$0xff]
  %v5550 = vld [vmem:[#allocation3 + $0x1e8] sm:$0xff]
  %v5551 = vld [vmem:[#allocation3 + $0x1f8] sm:$0xff]
  %v5552 = vld [vmem:[#allocation3 + $0x200] sm:$0xff]
  %v5553 = vld [vmem:[#allocation3 + $0x210] sm:$0xff]
  %v5554 = vld [vmem:[#allocation3 + $0x218] sm:$0xff]
  %v5555 = vld [vmem:[#allocation3 + $0x228] sm:$0xff]
  %v5556 = vld [vmem:[#allocation3 + $0x230] sm:$0xff]
  %v5557 = vld [vmem:[#allocation3 + $0x240] sm:$0xff]
  %v5558 = vld [vmem:[#allocation3 + $0x248] sm:$0xff]
  %v5559 = vld [vmem:[#allocation3 + $0x258] sm:$0xff]
  %v5560 = vld [vmem:[#allocation3 + $0x260] sm:$0xff]
  %v5561 = vld [vmem:[#allocation3 + $0x270] sm:$0xff]
  %v5562 = vld [vmem:[#allocation3 + $0x278] sm:$0xff]
  %v5563 = vld [vmem:[#allocation3 + $0x288] sm:$0xff]
  %v5564 = vld [vmem:[#allocation3 + $0x290] sm:$0xff]
  %v5565 = vld [vmem:[#allocation3 + $0x2a0] sm:$0xff]
  %v5566 = vld [vmem:[#allocation3 + $0x2a8] sm:$0xff]
  %v5567 = vld [vmem:[#allocation3 + $0x2b8] sm:$0xff]
  %v5568 = vld [vmem:[#allocation3 + $0x2c0] sm:$0xff]
  %v5569 = vld [vmem:[#allocation3 + $0x2d0] sm:$0xff]
  %v5570 = vld [vmem:[#allocation3 + $0x2d8] sm:$0xff]
  %v5571 = vld [vmem:[#allocation3 + $0x2e8] sm:$0xff]
  %v5572 = vld [vmem:[#allocation3 + $0x2f0] sm:$0xff]
  %v5573 = vld [vmem:[#allocation3 + $0x300] sm:$0xff]
  %v5574 = vld [vmem:[#allocation3 + $0x308] sm:$0xff]
  %v5575 = vld [vmem:[#allocation3 + $0x318] sm:$0xff]
  %v5576 = vld [vmem:[#allocation3 + $0x320] sm:$0xff]
  %v5577 = vpack.c.bf16 %v5514, %v5513
  %v5578 = vpack.c.bf16 %v5516, %v5515
  %v5579 = vpack.c.bf16 %v5518, %v5517
  %v5580 = vpack.c.bf16 %v5520, %v5519
  %v5581 = vpack.c.bf16 %v5522, %v5521
  %v5582 = vpack.c.bf16 %v5524, %v5523
  %v5583 = vpack.c.bf16 %v5526, %v5525
  %v5584 = vpack.c.bf16 %v5528, %v5527
  %v5585 = vpack.c.bf16 %v5530, %v5529
  %v5586 = vpack.c.bf16 %v5532, %v5531
  %v5587 = vpack.c.bf16 %v5534, %v5533
  %v5588 = vpack.c.bf16 %v5536, %v5535
  %v5589 = vpack.c.bf16 %v5538, %v5537
  %v5590 = vpack.c.bf16 %v5540, %v5539
  %v5591 = vpack.c.bf16 %v5542, %v5541
  %v5592 = vpack.c.bf16 %v5544, %v5543
  %v5593 = vpack.c.bf16 %v5546, %v5545
  %v5594 = vpack.c.bf16 %v5548, %v5547
  %v5595 = vpack.c.bf16 %v5550, %v5549
  %v5596 = vpack.c.bf16 %v5552, %v5551
  %v5597 = vpack.c.bf16 %v5554, %v5553
  %v5598 = vpack.c.bf16 %v5556, %v5555
  %v5599 = vpack.c.bf16 %v5558, %v5557
  %v5600 = vpack.c.bf16 %v5560, %v5559
  %v5601 = vpack.c.bf16 %v5562, %v5561
  %v5602 = vpack.c.bf16 %v5564, %v5563
  %v5603 = vpack.c.bf16 %v5566, %v5565
  %v5604 = vpack.c.bf16 %v5568, %v5567
  %v5605 = vpack.c.bf16 %v5570, %v5569
  %v5606 = vpack.c.bf16 %v5572, %v5571
  %v5607 = vpack.c.bf16 %v5574, %v5573
  %v5608 = vpack.c.bf16 %v5576, %v5575
  %v5609 = vld [vmem:[%s4] sm:$0xf]
  %v5610 = vld [vmem:[%s4 + $0x4] sm:$0xf]
  %v5611 = vld [vmem:[%s4 + $0x8] sm:$0xf]
  %v5612 = vld [vmem:[%s4 + $0xc] sm:$0xf]
  %v5613 = vld [vmem:[%s4 + $0x10] sm:$0xf]
  %v5614 = vld [vmem:[%s4 + $0x14] sm:$0xf]
  %v5615 = vld [vmem:[%s4 + $0x18] sm:$0xf]
  %v5616 = vld [vmem:[%s4 + $0x1c] sm:$0xf]
  %v5617 = vld [vmem:[%s4 + $0x20] sm:$0xf]
  %v5618 = vld [vmem:[%s4 + $0x24] sm:$0xf]
  %v5619 = vld [vmem:[%s4 + $0x28] sm:$0xf]
  %v5620 = vld [vmem:[%s4 + $0x2c] sm:$0xf]
  %v5621 = vld [vmem:[%s4 + $0x30] sm:$0xf]
  %v5622 = vld [vmem:[%s4 + $0x34] sm:$0xf]
  %v5623 = vld [vmem:[%s4 + $0x38] sm:$0xf]
  %v5624 = vld [vmem:[%s4 + $0x3c] sm:$0xf]
  %v5641 = vunpack.c.l.b16 %v5609
  %v5642 = vunpack.c.l.b16 %v5610
  %v5643 = vunpack.c.l.b16 %v5611
  %v5644 = vunpack.c.l.b16 %v5612
  %v5645 = vunpack.c.l.b16 %v5613
  %v5646 = vunpack.c.l.b16 %v5614
  %v5647 = vunpack.c.l.b16 %v5615
  %v5648 = vunpack.c.l.b16 %v5616
  %v5649 = vunpack.c.l.b16 %v5617
  %v5650 = vunpack.c.l.b16 %v5618
  %v5651 = vunpack.c.l.b16 %v5619
  %v5652 = vunpack.c.l.b16 %v5620
  %v5653 = vunpack.c.l.b16 %v5621
  %v5654 = vunpack.c.l.b16 %v5622
  %v5655 = vunpack.c.l.b16 %v5623
  %v5656 = vunpack.c.l.b16 %v5624
  %v5657 = vpack.c.b16 %v5642, %v5641
  %v5658 = vpack.c.b16 %v5644, %v5643
  %v5659 = vpack.c.b16 %v5646, %v5645
  %v5660 = vpack.c.b16 %v5648, %v5647
  %v5661 = vpack.c.b16 %v5650, %v5649
  %v5662 = vpack.c.b16 %v5652, %v5651
  %v5663 = vpack.c.b16 %v5654, %v5653
  %v5664 = vpack.c.b16 %v5656, %v5655
  %5673 = vmatpush.bf16.msra.mxu0 %v5664
  %5674 = vmatpush.bf16.msra.mxu0 %v5663
  %5675 = vmatpush.bf16.msra.mxu0 %v5662
  %5676 = vmatpush.bf16.msra.mxu0 %v5661
  %5677 = vmatpush.bf16.msra.mxu0 %v5660
  %5678 = vmatpush.bf16.msra.mxu0 %v5659
  %5679 = vmatpush.bf16.msra.mxu0 %v5658
  %5680 = vmatpush.bf16.msra.mxu0 %v5657
  %5681 = vmatmul.bf16.gmra.mxu0 %v5577
  %v5682 = vpop.f32.mrf.mxu0
  %v5683 = vadd.f32 0.0, %v5682
  %v5684 = vpop.f32.mrf.mxu0
  %v5685 = vadd.f32 0.0, %v5684
  %5686 = vmatmul.bf16.gmra.mxu0 %v5578
  %v5687 = vpop.f32.mrf.mxu0
  %v5688 = vadd.f32 0.0, %v5687
  %v5689 = vpop.f32.mrf.mxu0
  %v5690 = vadd.f32 0.0, %v5689
  %5691 = vmatmul.bf16.gmra.mxu0 %v5579
  %v5692 = vpop.f32.mrf.mxu0
  %v5693 = vadd.f32 0.0, %v5692
  %v5694 = vpop.f32.mrf.mxu0
  %v5695 = vadd.f32 0.0, %v5694
  %5696 = vmatmul.bf16.gmra.mxu0 %v5580
  %v5697 = vpop.f32.mrf.mxu0
  %v5698 = vadd.f32 0.0, %v5697
  %v5699 = vpop.f32.mrf.mxu0
  %v5700 = vadd.f32 0.0, %v5699
  %5701 = vmatmul.bf16.gmra.mxu0 %v5581
  %v5702 = vpop.f32.mrf.mxu0
  %v5703 = vadd.f32 0.0, %v5702
  %v5704 = vpop.f32.mrf.mxu0
  %v5705 = vadd.f32 0.0, %v5704
  %5706 = vmatmul.bf16.gmra.mxu0 %v5582
  %v5707 = vpop.f32.mrf.mxu0
  %v5708 = vadd.f32 0.0, %v5707
  %v5709 = vpop.f32.mrf.mxu0
  %v5710 = vadd.f32 0.0, %v5709
  %5711 = vmatmul.bf16.gmra.mxu0 %v5583
  %v5712 = vpop.f32.mrf.mxu0
  %v5713 = vadd.f32 0.0, %v5712
  %v5714 = vpop.f32.mrf.mxu0
  %v5715 = vadd.f32 0.0, %v5714
  %5716 = vmatmul.bf16.gmra.mxu0 %v5584
  %v5717 = vpop.f32.mrf.mxu0
  %v5718 = vadd.f32 0.0, %v5717
  %v5719 = vpop.f32.mrf.mxu0
  %v5720 = vadd.f32 0.0, %v5719
  %5721 = vmatmul.bf16.gmra.mxu0 %v5585
  %v5722 = vpop.f32.mrf.mxu0
  %v5723 = vadd.f32 0.0, %v5722
  %v5724 = vpop.f32.mrf.mxu0
  %v5725 = vadd.f32 0.0, %v5724
  %5726 = vmatmul.bf16.gmra.mxu0 %v5586
  %v5727 = vpop.f32.mrf.mxu0
  %v5728 = vadd.f32 0.0, %v5727
  %v5729 = vpop.f32.mrf.mxu0
  %v5730 = vadd.f32 0.0, %v5729
  %5731 = vmatmul.bf16.gmra.mxu0 %v5587
  %v5732 = vpop.f32.mrf.mxu0
  %v5733 = vadd.f32 0.0, %v5732
  %v5734 = vpop.f32.mrf.mxu0
  %v5735 = vadd.f32 0.0, %v5734
  %5736 = vmatmul.bf16.gmra.mxu0 %v5588
  %v5737 = vpop.f32.mrf.mxu0
  %v5738 = vadd.f32 0.0, %v5737
  %v5739 = vpop.f32.mrf.mxu0
  %v5740 = vadd.f32 0.0, %v5739
  %5741 = vmatmul.bf16.gmra.mxu0 %v5589
  %v5742 = vpop.f32.mrf.mxu0
  %v5743 = vadd.f32 0.0, %v5742
  %v5744 = vpop.f32.mrf.mxu0
  %v5745 = vadd.f32 0.0, %v5744
  %5746 = vmatmul.bf16.gmra.mxu0 %v5590
  %v5747 = vpop.f32.mrf.mxu0
  %v5748 = vadd.f32 0.0, %v5747
  %v5749 = vpop.f32.mrf.mxu0
  %v5750 = vadd.f32 0.0, %v5749
  %5751 = vmatmul.bf16.gmra.mxu0 %v5591
  %v5752 = vpop.f32.mrf.mxu0
  %v5753 = vadd.f32 0.0, %v5752
  %v5754 = vpop.f32.mrf.mxu0
  %v5755 = vadd.f32 0.0, %v5754
  %5756 = vmatmul.bf16.gmra.mxu0 %v5592
  %v5757 = vpop.f32.mrf.mxu0
  %v5758 = vadd.f32 0.0, %v5757
  %v5759 = vpop.f32.mrf.mxu0
  %v5760 = vadd.f32 0.0, %v5759
  %5761 = vmatmul.bf16.gmra.mxu0 %v5593
  %v5762 = vpop.f32.mrf.mxu0
  %v5763 = vadd.f32 0.0, %v5762
  %v5764 = vpop.f32.mrf.mxu0
  %v5765 = vadd.f32 0.0, %v5764
  %5766 = vmatmul.bf16.gmra.mxu0 %v5594
  %v5767 = vpop.f32.mrf.mxu0
  %v5768 = vadd.f32 0.0, %v5767
  %v5769 = vpop.f32.mrf.mxu0
  %v5770 = vadd.f32 0.0, %v5769
  %5771 = vmatmul.bf16.gmra.mxu0 %v5595
  %v5772 = vpop.f32.mrf.mxu0
  %v5773 = vadd.f32 0.0, %v5772
  %v5774 = vpop.f32.mrf.mxu0
  %v5775 = vadd.f32 0.0, %v5774
  %5776 = vmatmul.bf16.gmra.mxu0 %v5596
  %v5777 = vpop.f32.mrf.mxu0
  %v5778 = vadd.f32 0.0, %v5777
  %v5779 = vpop.f32.mrf.mxu0
  %v5780 = vadd.f32 0.0, %v5779
  %5781 = vmatmul.bf16.gmra.mxu0 %v5597
  %v5782 = vpop.f32.mrf.mxu0
  %v5783 = vadd.f32 0.0, %v5782
  %v5784 = vpop.f32.mrf.mxu0
  %v5785 = vadd.f32 0.0, %v5784
  %5786 = vmatmul.bf16.gmra.mxu0 %v5598
  %v5787 = vpop.f32.mrf.mxu0
  %v5788 = vadd.f32 0.0, %v5787
  %v5789 = vpop.f32.mrf.mxu0
  %v5790 = vadd.f32 0.0, %v5789
  %5791 = vmatmul.bf16.gmra.mxu0 %v5599
  %v5792 = vpop.f32.mrf.mxu0
  %v5793 = vadd.f32 0.0, %v5792
  %v5794 = vpop.f32.mrf.mxu0
  %v5795 = vadd.f32 0.0, %v5794
  %5796 = vmatmul.bf16.gmra.mxu0 %v5600
  %v5797 = vpop.f32.mrf.mxu0
  %v5798 = vadd.f32 0.0, %v5797
  %v5799 = vpop.f32.mrf.mxu0
  %v5800 = vadd.f32 0.0, %v5799
  %5801 = vmatmul.bf16.gmra.mxu0 %v5601
  %v5802 = vpop.f32.mrf.mxu0
  %v5803 = vadd.f32 0.0, %v5802
  %v5804 = vpop.f32.mrf.mxu0
  %v5805 = vadd.f32 0.0, %v5804
  %5806 = vmatmul.bf16.gmra.mxu0 %v5602
  %v5807 = vpop.f32.mrf.mxu0
  %v5808 = vadd.f32 0.0, %v5807
  %v5809 = vpop.f32.mrf.mxu0
  %v5810 = vadd.f32 0.0, %v5809
  %5811 = vmatmul.bf16.gmra.mxu0 %v5603
  %v5812 = vpop.f32.mrf.mxu0
  %v5813 = vadd.f32 0.0, %v5812
  %v5814 = vpop.f32.mrf.mxu0
  %v5815 = vadd.f32 0.0, %v5814
  %5816 = vmatmul.bf16.gmra.mxu0 %v5604
  %v5817 = vpop.f32.mrf.mxu0
  %v5818 = vadd.f32 0.0, %v5817
  %v5819 = vpop.f32.mrf.mxu0
  %v5820 = vadd.f32 0.0, %v5819
  %5821 = vmatmul.bf16.gmra.mxu0 %v5605
  %v5822 = vpop.f32.mrf.mxu0
  %v5823 = vadd.f32 0.0, %v5822
  %v5824 = vpop.f32.mrf.mxu0
  %v5825 = vadd.f32 0.0, %v5824
  %5826 = vmatmul.bf16.gmra.mxu0 %v5606
  %v5827 = vpop.f32.mrf.mxu0
  %v5828 = vadd.f32 0.0, %v5827
  %v5829 = vpop.f32.mrf.mxu0
  %v5830 = vadd.f32 0.0, %v5829
  %5831 = vmatmul.bf16.gmra.mxu0 %v5607
  %v5832 = vpop.f32.mrf.mxu0
  %v5833 = vadd.f32 0.0, %v5832
  %v5834 = vpop.f32.mrf.mxu0
  %v5835 = vadd.f32 0.0, %v5834
  %5836 = vmatmul.bf16.gmra.mxu0 %v5608
  %v5837 = vpop.f32.mrf.mxu0
  %v5838 = vadd.f32 0.0, %v5837
  %v5839 = vpop.f32.mrf.mxu0
  %v5840 = vadd.f32 0.0, %v5839
  %5841 = vdwg.mxu0
  %5842 = vst [vmem:[#allocation4] sm:$0xff] %v5683
  %5843 = vst [vmem:[#allocation4 + $0x8] sm:$0xff] %v5685
  %5844 = vst [vmem:[#allocation4 + $0x10] sm:$0xff] %v5688
  %5845 = vst [vmem:[#allocation4 + $0x18] sm:$0xff] %v5690
  %5846 = vst [vmem:[#allocation4 + $0x20] sm:$0xff] %v5693
  %5847 = vst [vmem:[#allocation4 + $0x28] sm:$0xff] %v5695
  %5848 = vst [vmem:[#allocation4 + $0x30] sm:$0xff] %v5698
  %5849 = vst [vmem:[#allocation4 + $0x38] sm:$0xff] %v5700
  %5850 = vst [vmem:[#allocation4 + $0x40] sm:$0xff] %v5703
  %5851 = vst [vmem:[#allocation4 + $0x48] sm:$0xff] %v5705
  %5852 = vst [vmem:[#allocation4 + $0x50] sm:$0xff] %v5708
  %5853 = vst [vmem:[#allocation4 + $0x58] sm:$0xff] %v5710
  %5854 = vst [vmem:[#allocation4 + $0x60] sm:$0xff] %v5713
  %5855 = vst [vmem:[#allocation4 + $0x68] sm:$0xff] %v5715
  %5856 = vst [vmem:[#allocation4 + $0x70] sm:$0xff] %v5718
  %5857 = vst [vmem:[#allocation4 + $0x78] sm:$0xff] %v5720
  %5858 = vst [vmem:[#allocation4 + $0x80] sm:$0xff] %v5723
  %5859 = vst [vmem:[#allocation4 + $0x88] sm:$0xff] %v5725
  %5860 = vst [vmem:[#allocation4 + $0x90] sm:$0xff] %v5728
  %5861 = vst [vmem:[#allocation4 + $0x98] sm:$0xff] %v5730
  %5862 = vst [vmem:[#allocation4 + $0xa0] sm:$0xff] %v5733
  %5863 = vst [vmem:[#allocation4 + $0xa8] sm:$0xff] %v5735
  %5864 = vst [vmem:[#allocation4 + $0xb0] sm:$0xff] %v5738
  %5865 = vst [vmem:[#allocation4 + $0xb8] sm:$0xff] %v5740
  %5866 = vst [vmem:[#allocation4 + $0xc0] sm:$0xff] %v5743
  %5867 = vst [vmem:[#allocation4 + $0xc8] sm:$0xff] %v5745
  %5868 = vst [vmem:[#allocation4 + $0xd0] sm:$0xff] %v5748
  %5869 = vst [vmem:[#allocation4 + $0xd8] sm:$0xff] %v5750
  %5870 = vst [vmem:[#allocation4 + $0xe0] sm:$0xff] %v5753
  %5871 = vst [vmem:[#allocation4 + $0xe8] sm:$0xff] %v5755
  %5872 = vst [vmem:[#allocation4 + $0xf0] sm:$0xff] %v5758
  %5873 = vst [vmem:[#allocation4 + $0xf8] sm:$0xff] %v5760
  %5874 = vst [vmem:[#allocation4 + $0x100] sm:$0xff] %v5763
  %5875 = vst [vmem:[#allocation4 + $0x108] sm:$0xff] %v5765
  %5876 = vst [vmem:[#allocation4 + $0x110] sm:$0xff] %v5768
  %5877 = vst [vmem:[#allocation4 + $0x118] sm:$0xff] %v5770
  %5878 = vst [vmem:[#allocation4 + $0x120] sm:$0xff] %v5773
  %5879 = vst [vmem:[#allocation4 + $0x128] sm:$0xff] %v5775
  %5880 = vst [vmem:[#allocation4 + $0x130] sm:$0xff] %v5778
  %5881 = vst [vmem:[#allocation4 + $0x138] sm:$0xff] %v5780
  %5882 = vst [vmem:[#allocation4 + $0x140] sm:$0xff] %v5783
  %5883 = vst [vmem:[#allocation4 + $0x148] sm:$0xff] %v5785
  %5884 = vst [vmem:[#allocation4 + $0x150] sm:$0xff] %v5788
  %5885 = vst [vmem:[#allocation4 + $0x158] sm:$0xff] %v5790
  %5886 = vst [vmem:[#allocation4 + $0x160] sm:$0xff] %v5793
  %5887 = vst [vmem:[#allocation4 + $0x168] sm:$0xff] %v5795
  %5888 = vst [vmem:[#allocation4 + $0x170] sm:$0xff] %v5798
  %5889 = vst [vmem:[#allocation4 + $0x178] sm:$0xff] %v5800
  %5890 = vst [vmem:[#allocation4 + $0x180] sm:$0xff] %v5803
  %5891 = vst [vmem:[#allocation4 + $0x188] sm:$0xff] %v5805
  %5892 = vst [vmem:[#allocation4 + $0x190] sm:$0xff] %v5808
  %5893 = vst [vmem:[#allocation4 + $0x198] sm:$0xff] %v5810
  %5894 = vst [vmem:[#allocation4 + $0x1a0] sm:$0xff] %v5813
  %5895 = vst [vmem:[#allocation4 + $0x1a8] sm:$0xff] %v5815
  %5896 = vst [vmem:[#allocation4 + $0x1b0] sm:$0xff] %v5818
  %5897 = vst [vmem:[#allocation4 + $0x1b8] sm:$0xff] %v5820
  %5898 = vst [vmem:[#allocation4 + $0x1c0] sm:$0xff] %v5823
  %5899 = vst [vmem:[#allocation4 + $0x1c8] sm:$0xff] %v5825
  %5900 = vst [vmem:[#allocation4 + $0x1d0] sm:$0xff] %v5828
  %5901 = vst [vmem:[#allocation4 + $0x1d8] sm:$0xff] %v5830
  %5902 = vst [vmem:[#allocation4 + $0x1e0] sm:$0xff] %v5833
  %5903 = vst [vmem:[#allocation4 + $0x1e8] sm:$0xff] %v5835
  %5904 = vst [vmem:[#allocation4 + $0x1f0] sm:$0xff] %v5838
  %5905 = vst [vmem:[#allocation4 + $0x1f8] sm:$0xff] %v5840
  %v5906 = vld [vmem:[#allocation3 + $0x1] sm:$0xff]
  %v5907 = vld [vmem:[#allocation3 + $0x9] sm:$0xff]
  %v5908 = vld [vmem:[#allocation3 + $0x19] sm:$0xff]
  %v5909 = vld [vmem:[#allocation3 + $0x21] sm:$0xff]
  %v5910 = vld [vmem:[#allocation3 + $0x31] sm:$0xff]
  %v5911 = vld [vmem:[#allocation3 + $0x39] sm:$0xff]
  %v5912 = vld [vmem:[#allocation3 + $0x49] sm:$0xff]
  %v5913 = vld [vmem:[#allocation3 + $0x51] sm:$0xff]
  %v5914 = vld [vmem:[#allocation3 + $0x61] sm:$0xff]
  %v5915 = vld [vmem:[#allocation3 + $0x69] sm:$0xff]
  %v5916 = vld [vmem:[#allocation3 + $0x79] sm:$0xff]
  %v5917 = vld [vmem:[#allocation3 + $0x81] sm:$0xff]
  %v5918 = vld [vmem:[#allocation3 + $0x91] sm:$0xff]
  %v5919 = vld [vmem:[#allocation3 + $0x99] sm:$0xff]
  %v5920 = vld [vmem:[#allocation3 + $0xa9] sm:$0xff]
  %v5921 = vld [vmem:[#allocation3 + $0xb1] sm:$0xff]
  %v5922 = vld [vmem:[#allocation3 + $0xc1] sm:$0xff]
  %v5923 = vld [vmem:[#allocation3 + $0xc9] sm:$0xff]
  %v5924 = vld [vmem:[#allocation3 + $0xd9] sm:$0xff]
  %v5925 = vld [vmem:[#allocation3 + $0xe1] sm:$0xff]
  %v5926 = vld [vmem:[#allocation3 + $0xf1] sm:$0xff]
  %v5927 = vld [vmem:[#allocation3 + $0xf9] sm:$0xff]
  %v5928 = vld [vmem:[#allocation3 + $0x109] sm:$0xff]
  %v5929 = vld [vmem:[#allocation3 + $0x111] sm:$0xff]
  %v5930 = vld [vmem:[#allocation3 + $0x121] sm:$0xff]
  %v5931 = vld [vmem:[#allocation3 + $0x129] sm:$0xff]
  %v5932 = vld [vmem:[#allocation3 + $0x139] sm:$0xff]
  %v5933 = vld [vmem:[#allocation3 + $0x141] sm:$0xff]
  %v5934 = vld [vmem:[#allocation3 + $0x151] sm:$0xff]
  %v5935 = vld [vmem:[#allocation3 + $0x159] sm:$0xff]
  %v5936 = vld [vmem:[#allocation3 + $0x169] sm:$0xff]
  %v5937 = vld [vmem:[#allocation3 + $0x171] sm:$0xff]
  %v5938 = vld [vmem:[#allocation3 + $0x1b1] sm:$0xff]
  %v5939 = vld [vmem:[#allocation3 + $0x1b9] sm:$0xff]
  %v5940 = vld [vmem:[#allocation3 + $0x1c9] sm:$0xff]
  %v5941 = vld [vmem:[#allocation3 + $0x1d1] sm:$0xff]
  %v5942 = vld [vmem:[#allocation3 + $0x1e1] sm:$0xff]
  %v5943 = vld [vmem:[#allocation3 + $0x1e9] sm:$0xff]
  %v5944 = vld [vmem:[#allocation3 + $0x1f9] sm:$0xff]
  %v5945 = vld [vmem:[#allocation3 + $0x201] sm:$0xff]
  %v5946 = vld [vmem:[#allocation3 + $0x211] sm:$0xff]
  %v5947 = vld [vmem:[#allocation3 + $0x219] sm:$0xff]
  %v5948 = vld [vmem:[#allocation3 + $0x229] sm:$0xff]
  %v5949 = vld [vmem:[#allocation3 + $0x231] sm:$0xff]
  %v5950 = vld [vmem:[#allocation3 + $0x241] sm:$0xff]
  %v5951 = vld [vmem:[#allocation3 + $0x249] sm:$0xff]
  %v5952 = vld [vmem:[#allocation3 + $0x259] sm:$0xff]
  %v5953 = vld [vmem:[#allocation3 + $0x261] sm:$0xff]
  %v5954 = vld [vmem:[#allocation3 + $0x271] sm:$0xff]
  %v5955 = vld [vmem:[#allocation3 + $0x279] sm:$0xff]
  %v5956 = vld [vmem:[#allocation3 + $0x289] sm:$0xff]
  %v5957 = vld [vmem:[#allocation3 + $0x291] sm:$0xff]
  %v5958 = vld [vmem:[#allocation3 + $0x2a1] sm:$0xff]
  %v5959 = vld [vmem:[#allocation3 + $0x2a9] sm:$0xff]
  %v5960 = vld [vmem:[#allocation3 + $0x2b9] sm:$0xff]
  %v5961 = vld [vmem:[#allocation3 + $0x2c1] sm:$0xff]
  %v5962 = vld [vmem:[#allocation3 + $0x2d1] sm:$0xff]
  %v5963 = vld [vmem:[#allocation3 + $0x2d9] sm:$0xff]
  %v5964 = vld [vmem:[#allocation3 + $0x2e9] sm:$0xff]
  %v5965 = vld [vmem:[#allocation3 + $0x2f1] sm:$0xff]
  %v5966 = vld [vmem:[#allocation3 + $0x301] sm:$0xff]
  %v5967 = vld [vmem:[#allocation3 + $0x309] sm:$0xff]
  %v5968 = vld [vmem:[#allocation3 + $0x319] sm:$0xff]
  %v5969 = vld [vmem:[#allocation3 + $0x321] sm:$0xff]
  %v5970 = vpack.c.bf16 %v5907, %v5906
  %v5971 = vpack.c.bf16 %v5909, %v5908
  %v5972 = vpack.c.bf16 %v5911, %v5910
  %v5973 = vpack.c.bf16 %v5913, %v5912
  %v5974 = vpack.c.bf16 %v5915, %v5914
  %v5975 = vpack.c.bf16 %v5917, %v5916
  %v5976 = vpack.c.bf16 %v5919, %v5918
  %v5977 = vpack.c.bf16 %v5921, %v5920
  %v5978 = vpack.c.bf16 %v5923, %v5922
  %v5979 = vpack.c.bf16 %v5925, %v5924
  %v5980 = vpack.c.bf16 %v5927, %v5926
  %v5981 = vpack.c.bf16 %v5929, %v5928
  %v5982 = vpack.c.bf16 %v5931, %v5930
  %v5983 = vpack.c.bf16 %v5933, %v5932
  %v5984 = vpack.c.bf16 %v5935, %v5934
  %v5985 = vpack.c.bf16 %v5937, %v5936
  %v5986 = vpack.c.bf16 %v5939, %v5938
  %v5987 = vpack.c.bf16 %v5941, %v5940
  %v5988 = vpack.c.bf16 %v5943, %v5942
  %v5989 = vpack.c.bf16 %v5945, %v5944
  %v5990 = vpack.c.bf16 %v5947, %v5946
  %v5991 = vpack.c.bf16 %v5949, %v5948
  %v5992 = vpack.c.bf16 %v5951, %v5950
  %v5993 = vpack.c.bf16 %v5953, %v5952
  %v5994 = vpack.c.bf16 %v5955, %v5954
  %v5995 = vpack.c.bf16 %v5957, %v5956
  %v5996 = vpack.c.bf16 %v5959, %v5958
  %v5997 = vpack.c.bf16 %v5961, %v5960
  %v5998 = vpack.c.bf16 %v5963, %v5962
  %v5999 = vpack.c.bf16 %v5965, %v5964
  %v6000 = vpack.c.bf16 %v5967, %v5966
  %v6001 = vpack.c.bf16 %v5969, %v5968
  %s6002 = scalar_lea.vmem %s4, 64
  %v6003 = vld [vmem:[%s6002] sm:$0xf]
  %v6004 = vld [vmem:[%s6002 + $0x4] sm:$0xf]
  %v6005 = vld [vmem:[%s6002 + $0x8] sm:$0xf]
  %v6006 = vld [vmem:[%s6002 + $0xc] sm:$0xf]
  %v6007 = vld [vmem:[%s6002 + $0x10] sm:$0xf]
  %v6008 = vld [vmem:[%s6002 + $0x14] sm:$0xf]
  %v6009 = vld [vmem:[%s6002 + $0x18] sm:$0xf]
  %v6010 = vld [vmem:[%s6002 + $0x1c] sm:$0xf]
  %v6011 = vld [vmem:[%s6002 + $0x20] sm:$0xf]
  %v6012 = vld [vmem:[%s6002 + $0x24] sm:$0xf]
  %v6013 = vld [vmem:[%s6002 + $0x28] sm:$0xf]
  %v6014 = vld [vmem:[%s6002 + $0x2c] sm:$0xf]
  %v6015 = vld [vmem:[%s6002 + $0x30] sm:$0xf]
  %v6016 = vld [vmem:[%s6002 + $0x34] sm:$0xf]
  %v6017 = vld [vmem:[%s6002 + $0x38] sm:$0xf]
  %v6018 = vld [vmem:[%s6002 + $0x3c] sm:$0xf]
  %v6035 = vunpack.c.l.b16 %v6003
  %v6036 = vunpack.c.l.b16 %v6004
  %v6037 = vunpack.c.l.b16 %v6005
  %v6038 = vunpack.c.l.b16 %v6006
  %v6039 = vunpack.c.l.b16 %v6007
  %v6040 = vunpack.c.l.b16 %v6008
  %v6041 = vunpack.c.l.b16 %v6009
  %v6042 = vunpack.c.l.b16 %v6010
  %v6043 = vunpack.c.l.b16 %v6011
  %v6044 = vunpack.c.l.b16 %v6012
  %v6045 = vunpack.c.l.b16 %v6013
  %v6046 = vunpack.c.l.b16 %v6014
  %v6047 = vunpack.c.l.b16 %v6015
  %v6048 = vunpack.c.l.b16 %v6016
  %v6049 = vunpack.c.l.b16 %v6017
  %v6050 = vunpack.c.l.b16 %v6018
  %v6051 = vpack.c.b16 %v6036, %v6035
  %v6052 = vpack.c.b16 %v6038, %v6037
  %v6053 = vpack.c.b16 %v6040, %v6039
  %v6054 = vpack.c.b16 %v6042, %v6041
  %v6055 = vpack.c.b16 %v6044, %v6043
  %v6056 = vpack.c.b16 %v6046, %v6045
  %v6057 = vpack.c.b16 %v6048, %v6047
  %v6058 = vpack.c.b16 %v6050, %v6049
  %6067 = vmatpush.bf16.msra.mxu0 %v6058
  %6068 = vmatpush.bf16.msra.mxu0 %v6057
  %6069 = vmatpush.bf16.msra.mxu0 %v6056
  %6070 = vmatpush.bf16.msra.mxu0 %v6055
  %6071 = vmatpush.bf16.msra.mxu0 %v6054
  %6072 = vmatpush.bf16.msra.mxu0 %v6053
  %6073 = vmatpush.bf16.msra.mxu0 %v6052
  %6074 = vmatpush.bf16.msra.mxu0 %v6051
  %6075 = vmatmul.bf16.gmra.mxu0 %v5970
  %v6076 = vpop.f32.mrf.mxu0
  %v6077 = vadd.f32 0.0, %v6076
  %v6078 = vpop.f32.mrf.mxu0
  %v6079 = vadd.f32 0.0, %v6078
  %6080 = vmatmul.bf16.gmra.mxu0 %v5971
  %v6081 = vpop.f32.mrf.mxu0
  %v6082 = vadd.f32 0.0, %v6081
  %v6083 = vpop.f32.mrf.mxu0
  %v6084 = vadd.f32 0.0, %v6083
  %6085 = vmatmul.bf16.gmra.mxu0 %v5972
  %v6086 = vpop.f32.mrf.mxu0
  %v6087 = vadd.f32 0.0, %v6086
  %v6088 = vpop.f32.mrf.mxu0
  %v6089 = vadd.f32 0.0, %v6088
  %6090 = vmatmul.bf16.gmra.mxu0 %v5973
  %v6091 = vpop.f32.mrf.mxu0
  %v6092 = vadd.f32 0.0, %v6091
  %v6093 = vpop.f32.mrf.mxu0
  %v6094 = vadd.f32 0.0, %v6093
  %6095 = vmatmul.bf16.gmra.mxu0 %v5974
  %v6096 = vpop.f32.mrf.mxu0
  %v6097 = vadd.f32 0.0, %v6096
  %v6098 = vpop.f32.mrf.mxu0
  %v6099 = vadd.f32 0.0, %v6098
  %6100 = vmatmul.bf16.gmra.mxu0 %v5975
  %v6101 = vpop.f32.mrf.mxu0
  %v6102 = vadd.f32 0.0, %v6101
  %v6103 = vpop.f32.mrf.mxu0
  %v6104 = vadd.f32 0.0, %v6103
  %6105 = vmatmul.bf16.gmra.mxu0 %v5976
  %v6106 = vpop.f32.mrf.mxu0
  %v6107 = vadd.f32 0.0, %v6106
  %v6108 = vpop.f32.mrf.mxu0
  %v6109 = vadd.f32 0.0, %v6108
  %6110 = vmatmul.bf16.gmra.mxu0 %v5977
  %v6111 = vpop.f32.mrf.mxu0
  %v6112 = vadd.f32 0.0, %v6111
  %v6113 = vpop.f32.mrf.mxu0
  %v6114 = vadd.f32 0.0, %v6113
  %6115 = vmatmul.bf16.gmra.mxu0 %v5978
  %v6116 = vpop.f32.mrf.mxu0
  %v6117 = vadd.f32 0.0, %v6116
  %v6118 = vpop.f32.mrf.mxu0
  %v6119 = vadd.f32 0.0, %v6118
  %6120 = vmatmul.bf16.gmra.mxu0 %v5979
  %v6121 = vpop.f32.mrf.mxu0
  %v6122 = vadd.f32 0.0, %v6121
  %v6123 = vpop.f32.mrf.mxu0
  %v6124 = vadd.f32 0.0, %v6123
  %6125 = vmatmul.bf16.gmra.mxu0 %v5980
  %v6126 = vpop.f32.mrf.mxu0
  %v6127 = vadd.f32 0.0, %v6126
  %v6128 = vpop.f32.mrf.mxu0
  %v6129 = vadd.f32 0.0, %v6128
  %6130 = vmatmul.bf16.gmra.mxu0 %v5981
  %v6131 = vpop.f32.mrf.mxu0
  %v6132 = vadd.f32 0.0, %v6131
  %v6133 = vpop.f32.mrf.mxu0
  %v6134 = vadd.f32 0.0, %v6133
  %6135 = vmatmul.bf16.gmra.mxu0 %v5982
  %v6136 = vpop.f32.mrf.mxu0
  %v6137 = vadd.f32 0.0, %v6136
  %v6138 = vpop.f32.mrf.mxu0
  %v6139 = vadd.f32 0.0, %v6138
  %6140 = vmatmul.bf16.gmra.mxu0 %v5983
  %v6141 = vpop.f32.mrf.mxu0
  %v6142 = vadd.f32 0.0, %v6141
  %v6143 = vpop.f32.mrf.mxu0
  %v6144 = vadd.f32 0.0, %v6143
  %6145 = vmatmul.bf16.gmra.mxu0 %v5984
  %v6146 = vpop.f32.mrf.mxu0
  %v6147 = vadd.f32 0.0, %v6146
  %v6148 = vpop.f32.mrf.mxu0
  %v6149 = vadd.f32 0.0, %v6148
  %6150 = vmatmul.bf16.gmra.mxu0 %v5985
  %v6151 = vpop.f32.mrf.mxu0
  %v6152 = vadd.f32 0.0, %v6151
  %v6153 = vpop.f32.mrf.mxu0
  %v6154 = vadd.f32 0.0, %v6153
  %6155 = vmatmul.bf16.gmra.mxu0 %v5986
  %v6156 = vpop.f32.mrf.mxu0
  %v6157 = vadd.f32 0.0, %v6156
  %v6158 = vpop.f32.mrf.mxu0
  %v6159 = vadd.f32 0.0, %v6158
  %6160 = vmatmul.bf16.gmra.mxu0 %v5987
  %v6161 = vpop.f32.mrf.mxu0
  %v6162 = vadd.f32 0.0, %v6161
  %v6163 = vpop.f32.mrf.mxu0
  %v6164 = vadd.f32 0.0, %v6163
  %6165 = vmatmul.bf16.gmra.mxu0 %v5988
  %v6166 = vpop.f32.mrf.mxu0
  %v6167 = vadd.f32 0.0, %v6166
  %v6168 = vpop.f32.mrf.mxu0
  %v6169 = vadd.f32 0.0, %v6168
  %6170 = vmatmul.bf16.gmra.mxu0 %v5989
  %v6171 = vpop.f32.mrf.mxu0
  %v6172 = vadd.f32 0.0, %v6171
  %v6173 = vpop.f32.mrf.mxu0
  %v6174 = vadd.f32 0.0, %v6173
  %6175 = vmatmul.bf16.gmra.mxu0 %v5990
  %v6176 = vpop.f32.mrf.mxu0
  %v6177 = vadd.f32 0.0, %v6176
  %v6178 = vpop.f32.mrf.mxu0
  %v6179 = vadd.f32 0.0, %v6178
  %6180 = vmatmul.bf16.gmra.mxu0 %v5991
  %v6181 = vpop.f32.mrf.mxu0
  %v6182 = vadd.f32 0.0, %v6181
  %v6183 = vpop.f32.mrf.mxu0
  %v6184 = vadd.f32 0.0, %v6183
  %6185 = vmatmul.bf16.gmra.mxu0 %v5992
  %v6186 = vpop.f32.mrf.mxu0
  %v6187 = vadd.f32 0.0, %v6186
  %v6188 = vpop.f32.mrf.mxu0
  %v6189 = vadd.f32 0.0, %v6188
  %6190 = vmatmul.bf16.gmra.mxu0 %v5993
  %v6191 = vpop.f32.mrf.mxu0
  %v6192 = vadd.f32 0.0, %v6191
  %v6193 = vpop.f32.mrf.mxu0
  %v6194 = vadd.f32 0.0, %v6193
  %6195 = vmatmul.bf16.gmra.mxu0 %v5994
  %v6196 = vpop.f32.mrf.mxu0
  %v6197 = vadd.f32 0.0, %v6196
  %v6198 = vpop.f32.mrf.mxu0
  %v6199 = vadd.f32 0.0, %v6198
  %6200 = vmatmul.bf16.gmra.mxu0 %v5995
  %v6201 = vpop.f32.mrf.mxu0
  %v6202 = vadd.f32 0.0, %v6201
  %v6203 = vpop.f32.mrf.mxu0
  %v6204 = vadd.f32 0.0, %v6203
  %6205 = vmatmul.bf16.gmra.mxu0 %v5996
  %v6206 = vpop.f32.mrf.mxu0
  %v6207 = vadd.f32 0.0, %v6206
  %v6208 = vpop.f32.mrf.mxu0
  %v6209 = vadd.f32 0.0, %v6208
  %6210 = vmatmul.bf16.gmra.mxu0 %v5997
  %v6211 = vpop.f32.mrf.mxu0
  %v6212 = vadd.f32 0.0, %v6211
  %v6213 = vpop.f32.mrf.mxu0
  %v6214 = vadd.f32 0.0, %v6213
  %6215 = vmatmul.bf16.gmra.mxu0 %v5998
  %v6216 = vpop.f32.mrf.mxu0
  %v6217 = vadd.f32 0.0, %v6216
  %v6218 = vpop.f32.mrf.mxu0
  %v6219 = vadd.f32 0.0, %v6218
  %6220 = vmatmul.bf16.gmra.mxu0 %v5999
  %v6221 = vpop.f32.mrf.mxu0
  %v6222 = vadd.f32 0.0, %v6221
  %v6223 = vpop.f32.mrf.mxu0
  %v6224 = vadd.f32 0.0, %v6223
  %6225 = vmatmul.bf16.gmra.mxu0 %v6000
  %v6226 = vpop.f32.mrf.mxu0
  %v6227 = vadd.f32 0.0, %v6226
  %v6228 = vpop.f32.mrf.mxu0
  %v6229 = vadd.f32 0.0, %v6228
  %6230 = vmatmul.bf16.gmra.mxu0 %v6001
  %v6231 = vpop.f32.mrf.mxu0
  %v6232 = vadd.f32 0.0, %v6231
  %v6233 = vpop.f32.mrf.mxu0
  %v6234 = vadd.f32 0.0, %v6233
  %6235 = vdwg.mxu0
  %v6236 = vld [vmem:[#allocation4] sm:$0xff]
  %v6237 = vld [vmem:[#allocation4 + $0x8] sm:$0xff]
  %v6238 = vld [vmem:[#allocation4 + $0x10] sm:$0xff]
  %v6239 = vld [vmem:[#allocation4 + $0x18] sm:$0xff]
  %v6240 = vld [vmem:[#allocation4 + $0x20] sm:$0xff]
  %v6241 = vld [vmem:[#allocation4 + $0x28] sm:$0xff]
  %v6242 = vld [vmem:[#allocation4 + $0x30] sm:$0xff]
  %v6243 = vld [vmem:[#allocation4 + $0x38] sm:$0xff]
  %v6244 = vld [vmem:[#allocation4 + $0x40] sm:$0xff]
  %v6245 = vld [vmem:[#allocation4 + $0x48] sm:$0xff]
  %v6246 = vld [vmem:[#allocation4 + $0x50] sm:$0xff]
  %v6247 = vld [vmem:[#allocation4 + $0x58] sm:$0xff]
  %v6248 = vld [vmem:[#allocation4 + $0x60] sm:$0xff]
  %v6249 = vld [vmem:[#allocation4 + $0x68] sm:$0xff]
  %v6250 = vld [vmem:[#allocation4 + $0x70] sm:$0xff]
  %v6251 = vld [vmem:[#allocation4 + $0x78] sm:$0xff]
  %v6252 = vld [vmem:[#allocation4 + $0x80] sm:$0xff]
  %v6253 = vld [vmem:[#allocation4 + $0x88] sm:$0xff]
  %v6254 = vld [vmem:[#allocation4 + $0x90] sm:$0xff]
  %v6255 = vld [vmem:[#allocation4 + $0x98] sm:$0xff]
  %v6256 = vld [vmem:[#allocation4 + $0xa0] sm:$0xff]
  %v6257 = vld [vmem:[#allocation4 + $0xa8] sm:$0xff]
  %v6258 = vld [vmem:[#allocation4 + $0xb0] sm:$0xff]
  %v6259 = vld [vmem:[#allocation4 + $0xb8] sm:$0xff]
  %v6260 = vld [vmem:[#allocation4 + $0xc0] sm:$0xff]
  %v6261 = vld [vmem:[#allocation4 + $0xc8] sm:$0xff]
  %v6262 = vld [vmem:[#allocation4 + $0xd0] sm:$0xff]
  %v6263 = vld [vmem:[#allocation4 + $0xd8] sm:$0xff]
  %v6264 = vld [vmem:[#allocation4 + $0xe0] sm:$0xff]
  %v6265 = vld [vmem:[#allocation4 + $0xe8] sm:$0xff]
  %v6266 = vld [vmem:[#allocation4 + $0xf0] sm:$0xff]
  %v6267 = vld [vmem:[#allocation4 + $0xf8] sm:$0xff]
  %v6268 = vld [vmem:[#allocation4 + $0x100] sm:$0xff]
  %v6269 = vld [vmem:[#allocation4 + $0x108] sm:$0xff]
  %v6270 = vld [vmem:[#allocation4 + $0x110] sm:$0xff]
  %v6271 = vld [vmem:[#allocation4 + $0x118] sm:$0xff]
  %v6272 = vld [vmem:[#allocation4 + $0x120] sm:$0xff]
  %v6273 = vld [vmem:[#allocation4 + $0x128] sm:$0xff]
  %v6274 = vld [vmem:[#allocation4 + $0x130] sm:$0xff]
  %v6275 = vld [vmem:[#allocation4 + $0x138] sm:$0xff]
  %v6276 = vld [vmem:[#allocation4 + $0x140] sm:$0xff]
  %v6277 = vld [vmem:[#allocation4 + $0x148] sm:$0xff]
  %v6278 = vld [vmem:[#allocation4 + $0x150] sm:$0xff]
  %v6279 = vld [vmem:[#allocation4 + $0x158] sm:$0xff]
  %v6280 = vld [vmem:[#allocation4 + $0x160] sm:$0xff]
  %v6281 = vld [vmem:[#allocation4 + $0x168] sm:$0xff]
  %v6282 = vld [vmem:[#allocation4 + $0x170] sm:$0xff]
  %v6283 = vld [vmem:[#allocation4 + $0x178] sm:$0xff]
  %v6284 = vld [vmem:[#allocation4 + $0x180] sm:$0xff]
  %v6285 = vld [vmem:[#allocation4 + $0x188] sm:$0xff]
  %v6286 = vld [vmem:[#allocation4 + $0x190] sm:$0xff]
  %v6287 = vld [vmem:[#allocation4 + $0x198] sm:$0xff]
  %v6288 = vld [vmem:[#allocation4 + $0x1a0] sm:$0xff]
  %v6289 = vld [vmem:[#allocation4 + $0x1a8] sm:$0xff]
  %v6290 = vld [vmem:[#allocation4 + $0x1b0] sm:$0xff]
  %v6291 = vld [vmem:[#allocation4 + $0x1b8] sm:$0xff]
  %v6292 = vld [vmem:[#allocation4 + $0x1c0] sm:$0xff]
  %v6293 = vld [vmem:[#allocation4 + $0x1c8] sm:$0xff]
  %v6294 = vld [vmem:[#allocation4 + $0x1d0] sm:$0xff]
  %v6295 = vld [vmem:[#allocation4 + $0x1d8] sm:$0xff]
  %v6296 = vld [vmem:[#allocation4 + $0x1e0] sm:$0xff]
  %v6297 = vld [vmem:[#allocation4 + $0x1e8] sm:$0xff]
  %v6298 = vld [vmem:[#allocation4 + $0x1f0] sm:$0xff]
  %v6299 = vld [vmem:[#allocation4 + $0x1f8] sm:$0xff]
  %v6300 = vadd.f32 %v6236, %v6077
  %v6301 = vadd.f32 %v6237, %v6079
  %v6302 = vadd.f32 %v6238, %v6082
  %v6303 = vadd.f32 %v6239, %v6084
  %v6304 = vadd.f32 %v6240, %v6087
  %v6305 = vadd.f32 %v6241, %v6089
  %v6306 = vadd.f32 %v6242, %v6092
  %v6307 = vadd.f32 %v6243, %v6094
  %v6308 = vadd.f32 %v6244, %v6097
  %v6309 = vadd.f32 %v6245, %v6099
  %v6310 = vadd.f32 %v6246, %v6102
  %v6311 = vadd.f32 %v6247, %v6104
  %v6312 = vadd.f32 %v6248, %v6107
  %v6313 = vadd.f32 %v6249, %v6109
  %v6314 = vadd.f32 %v6250, %v6112
  %v6315 = vadd.f32 %v6251, %v6114
  %v6316 = vadd.f32 %v6252, %v6117
  %v6317 = vadd.f32 %v6253, %v6119
  %v6318 = vadd.f32 %v6254, %v6122
  %v6319 = vadd.f32 %v6255, %v6124
  %v6320 = vadd.f32 %v6256, %v6127
  %v6321 = vadd.f32 %v6257, %v6129
  %v6322 = vadd.f32 %v6258, %v6132
  %v6323 = vadd.f32 %v6259, %v6134
  %v6324 = vadd.f32 %v6260, %v6137
  %v6325 = vadd.f32 %v6261, %v6139
  %v6326 = vadd.f32 %v6262, %v6142
  %v6327 = vadd.f32 %v6263, %v6144
  %v6328 = vadd.f32 %v6264, %v6147
  %v6329 = vadd.f32 %v6265, %v6149
  %v6330 = vadd.f32 %v6266, %v6152
  %v6331 = vadd.f32 %v6267, %v6154
  %v6332 = vadd.f32 %v6268, %v6157
  %v6333 = vadd.f32 %v6269, %v6159
  %v6334 = vadd.f32 %v6270, %v6162
  %v6335 = vadd.f32 %v6271, %v6164
  %v6336 = vadd.f32 %v6272, %v6167
  %v6337 = vadd.f32 %v6273, %v6169
  %v6338 = vadd.f32 %v6274, %v6172
  %v6339 = vadd.f32 %v6275, %v6174
  %v6340 = vadd.f32 %v6276, %v6177
  %v6341 = vadd.f32 %v6277, %v6179
  %v6342 = vadd.f32 %v6278, %v6182
  %v6343 = vadd.f32 %v6279, %v6184
  %v6344 = vadd.f32 %v6280, %v6187
  %v6345 = vadd.f32 %v6281, %v6189
  %v6346 = vadd.f32 %v6282, %v6192
  %v6347 = vadd.f32 %v6283, %v6194
  %v6348 = vadd.f32 %v6284, %v6197
  %v6349 = vadd.f32 %v6285, %v6199
  %v6350 = vadd.f32 %v6286, %v6202
  %v6351 = vadd.f32 %v6287, %v6204
  %v6352 = vadd.f32 %v6288, %v6207
  %v6353 = vadd.f32 %v6289, %v6209
  %v6354 = vadd.f32 %v6290, %v6212
  %v6355 = vadd.f32 %v6291, %v6214
  %v6356 = vadd.f32 %v6292, %v6217
  %v6357 = vadd.f32 %v6293, %v6219
  %v6358 = vadd.f32 %v6294, %v6222
  %v6359 = vadd.f32 %v6295, %v6224
  %v6360 = vadd.f32 %v6296, %v6227
  %v6361 = vadd.f32 %v6297, %v6229
  %v6362 = vadd.f32 %v6298, %v6232
  %v6363 = vadd.f32 %v6299, %v6234
  %6364 = vst [vmem:[#allocation4] sm:$0xff] %v6300
  %6365 = vst [vmem:[#allocation4 + $0x8] sm:$0xff] %v6301
  %6366 = vst [vmem:[#allocation4 + $0x10] sm:$0xff] %v6302
  %6367 = vst [vmem:[#allocation4 + $0x18] sm:$0xff] %v6303
  %6368 = vst [vmem:[#allocation4 + $0x20] sm:$0xff] %v6304
  %6369 = vst [vmem:[#allocation4 + $0x28] sm:$0xff] %v6305
  %6370 = vst [vmem:[#allocation4 + $0x30] sm:$0xff] %v6306
  %6371 = vst [vmem:[#allocation4 + $0x38] sm:$0xff] %v6307
  %6372 = vst [vmem:[#allocation4 + $0x40] sm:$0xff] %v6308
  %6373 = vst [vmem:[#allocation4 + $0x48] sm:$0xff] %v6309
  %6374 = vst [vmem:[#allocation4 + $0x50] sm:$0xff] %v6310
  %6375 = vst [vmem:[#allocation4 + $0x58] sm:$0xff] %v6311
  %6376 = vst [vmem:[#allocation4 + $0x60] sm:$0xff] %v6312
  %6377 = vst [vmem:[#allocation4 + $0x68] sm:$0xff] %v6313
  %6378 = vst [vmem:[#allocation4 + $0x70] sm:$0xff] %v6314
  %6379 = vst [vmem:[#allocation4 + $0x78] sm:$0xff] %v6315
  %6380 = vst [vmem:[#allocation4 + $0x80] sm:$0xff] %v6316
  %6381 = vst [vmem:[#allocation4 + $0x88] sm:$0xff] %v6317
  %6382 = vst [vmem:[#allocation4 + $0x90] sm:$0xff] %v6318
  %6383 = vst [vmem:[#allocation4 + $0x98] sm:$0xff] %v6319
  %6384 = vst [vmem:[#allocation4 + $0xa0] sm:$0xff] %v6320
  %6385 = vst [vmem:[#allocation4 + $0xa8] sm:$0xff] %v6321
  %6386 = vst [vmem:[#allocation4 + $0xb0] sm:$0xff] %v6322
  %6387 = vst [vmem:[#allocation4 + $0xb8] sm:$0xff] %v6323
  %6388 = vst [vmem:[#allocation4 + $0xc0] sm:$0xff] %v6324
  %6389 = vst [vmem:[#allocation4 + $0xc8] sm:$0xff] %v6325
  %6390 = vst [vmem:[#allocation4 + $0xd0] sm:$0xff] %v6326
  %6391 = vst [vmem:[#allocation4 + $0xd8] sm:$0xff] %v6327
  %6392 = vst [vmem:[#allocation4 + $0xe0] sm:$0xff] %v6328
  %6393 = vst [vmem:[#allocation4 + $0xe8] sm:$0xff] %v6329
  %6394 = vst [vmem:[#allocation4 + $0xf0] sm:$0xff] %v6330
  %6395 = vst [vmem:[#allocation4 + $0xf8] sm:$0xff] %v6331
  %6396 = vst [vmem:[#allocation4 + $0x100] sm:$0xff] %v6332
  %6397 = vst [vmem:[#allocation4 + $0x108] sm:$0xff] %v6333
  %6398 = vst [vmem:[#allocation4 + $0x110] sm:$0xff] %v6334
  %6399 = vst [vmem:[#allocation4 + $0x118] sm:$0xff] %v6335
  %6400 = vst [vmem:[#allocation4 + $0x120] sm:$0xff] %v6336
  %6401 = vst [vmem:[#allocation4 + $0x128] sm:$0xff] %v6337
  %6402 = vst [vmem:[#allocation4 + $0x130] sm:$0xff] %v6338
  %6403 = vst [vmem:[#allocation4 + $0x138] sm:$0xff] %v6339
  %6404 = vst [vmem:[#allocation4 + $0x140] sm:$0xff] %v6340
  %6405 = vst [vmem:[#allocation4 + $0x148] sm:$0xff] %v6341
  %6406 = vst [vmem:[#allocation4 + $0x150] sm:$0xff] %v6342
  %6407 = vst [vmem:[#allocation4 + $0x158] sm:$0xff] %v6343
  %6408 = vst [vmem:[#allocation4 + $0x160] sm:$0xff] %v6344
  %6409 = vst [vmem:[#allocation4 + $0x168] sm:$0xff] %v6345
  %6410 = vst [vmem:[#allocation4 + $0x170] sm:$0xff] %v6346
  %6411 = vst [vmem:[#allocation4 + $0x178] sm:$0xff] %v6347
  %6412 = vst [vmem:[#allocation4 + $0x180] sm:$0xff] %v6348
  %6413 = vst [vmem:[#allocation4 + $0x188] sm:$0xff] %v6349
  %6414 = vst [vmem:[#allocation4 + $0x190] sm:$0xff] %v6350
  %6415 = vst [vmem:[#allocation4 + $0x198] sm:$0xff] %v6351
  %6416 = vst [vmem:[#allocation4 + $0x1a0] sm:$0xff] %v6352
  %6417 = vst [vmem:[#allocation4 + $0x1a8] sm:$0xff] %v6353
  %6418 = vst [vmem:[#allocation4 + $0x1b0] sm:$0xff] %v6354
  %6419 = vst [vmem:[#allocation4 + $0x1b8] sm:$0xff] %v6355
  %6420 = vst [vmem:[#allocation4 + $0x1c0] sm:$0xff] %v6356
  %6421 = vst [vmem:[#allocation4 + $0x1c8] sm:$0xff] %v6357
  %6422 = vst [vmem:[#allocation4 + $0x1d0] sm:$0xff] %v6358
  %6423 = vst [vmem:[#allocation4 + $0x1d8] sm:$0xff] %v6359
  %6424 = vst [vmem:[#allocation4 + $0x1e0] sm:$0xff] %v6360
  %6425 = vst [vmem:[#allocation4 + $0x1e8] sm:$0xff] %v6361
  %6426 = vst [vmem:[#allocation4 + $0x1f0] sm:$0xff] %v6362
  %6427 = vst [vmem:[#allocation4 + $0x1f8] sm:$0xff] %v6363
  %v6428 = vld [vmem:[#allocation3 + $0x2] sm:$0xff]
  %v6429 = vld [vmem:[#allocation3 + $0xa] sm:$0xff]
  %v6430 = vld [vmem:[#allocation3 + $0x1a] sm:$0xff]
  %v6431 = vld [vmem:[#allocation3 + $0x22] sm:$0xff]
  %v6432 = vld [vmem:[#allocation3 + $0x32] sm:$0xff]
  %v6433 = vld [vmem:[#allocation3 + $0x3a] sm:$0xff]
  %v6434 = vld [vmem:[#allocation3 + $0x4a] sm:$0xff]
  %v6435 = vld [vmem:[#allocation3 + $0x52] sm:$0xff]
  %v6436 = vld [vmem:[#allocation3 + $0x62] sm:$0xff]
  %v6437 = vld [vmem:[#allocation3 + $0x6a] sm:$0xff]
  %v6438 = vld [vmem:[#allocation3 + $0x7a] sm:$0xff]
  %v6439 = vld [vmem:[#allocation3 + $0x82] sm:$0xff]
  %v6440 = vld [vmem:[#allocation3 + $0x92] sm:$0xff]
  %v6441 = vld [vmem:[#allocation3 + $0x9a] sm:$0xff]
  %v6442 = vld [vmem:[#allocation3 + $0xaa] sm:$0xff]
  %v6443 = vld [vmem:[#allocation3 + $0xb2] sm:$0xff]
  %v6444 = vld [vmem:[#allocation3 + $0xc2] sm:$0xff]
  %v6445 = vld [vmem:[#allocation3 + $0xca] sm:$0xff]
  %v6446 = vld [vmem:[#allocation3 + $0xda] sm:$0xff]
  %v6447 = vld [vmem:[#allocation3 + $0xe2] sm:$0xff]
  %v6448 = vld [vmem:[#allocation3 + $0xf2] sm:$0xff]
  %v6449 = vld [vmem:[#allocation3 + $0xfa] sm:$0xff]
  %v6450 = vld [vmem:[#allocation3 + $0x10a] sm:$0xff]
  %v6451 = vld [vmem:[#allocation3 + $0x112] sm:$0xff]
  %v6452 = vld [vmem:[#allocation3 + $0x122] sm:$0xff]
  %v6453 = vld [vmem:[#allocation3 + $0x12a] sm:$0xff]
  %v6454 = vld [vmem:[#allocation3 + $0x13a] sm:$0xff]
  %v6455 = vld [vmem:[#allocation3 + $0x142] sm:$0xff]
  %v6456 = vld [vmem:[#allocation3 + $0x152] sm:$0xff]
  %v6457 = vld [vmem:[#allocation3 + $0x15a] sm:$0xff]
  %v6458 = vld [vmem:[#allocation3 + $0x16a] sm:$0xff]
  %v6459 = vld [vmem:[#allocation3 + $0x172] sm:$0xff]
  %v6460 = vld [vmem:[#allocation3 + $0x1b2] sm:$0xff]
  %v6461 = vld [vmem:[#allocation3 + $0x1ba] sm:$0xff]
  %v6462 = vld [vmem:[#allocation3 + $0x1ca] sm:$0xff]
  %v6463 = vld [vmem:[#allocation3 + $0x1d2] sm:$0xff]
  %v6464 = vld [vmem:[#allocation3 + $0x1e2] sm:$0xff]
  %v6465 = vld [vmem:[#allocation3 + $0x1ea] sm:$0xff]
  %v6466 = vld [vmem:[#allocation3 + $0x1fa] sm:$0xff]
  %v6467 = vld [vmem:[#allocation3 + $0x202] sm:$0xff]
  %v6468 = vld [vmem:[#allocation3 + $0x212] sm:$0xff]
  %v6469 = vld [vmem:[#allocation3 + $0x21a] sm:$0xff]
  %v6470 = vld [vmem:[#allocation3 + $0x22a] sm:$0xff]
  %v6471 = vld [vmem:[#allocation3 + $0x232] sm:$0xff]
  %v6472 = vld [vmem:[#allocation3 + $0x242] sm:$0xff]
  %v6473 = vld [vmem:[#allocation3 + $0x24a] sm:$0xff]
  %v6474 = vld [vmem:[#allocation3 + $0x25a] sm:$0xff]
  %v6475 = vld [vmem:[#allocation3 + $0x262] sm:$0xff]
  %v6476 = vld [vmem:[#allocation3 + $0x272] sm:$0xff]
  %v6477 = vld [vmem:[#allocation3 + $0x27a] sm:$0xff]
  %v6478 = vld [vmem:[#allocation3 + $0x28a] sm:$0xff]
  %v6479 = vld [vmem:[#allocation3 + $0x292] sm:$0xff]
  %v6480 = vld [vmem:[#allocation3 + $0x2a2] sm:$0xff]
  %v6481 = vld [vmem:[#allocation3 + $0x2aa] sm:$0xff]
  %v6482 = vld [vmem:[#allocation3 + $0x2ba] sm:$0xff]
  %v6483 = vld [vmem:[#allocation3 + $0x2c2] sm:$0xff]
  %v6484 = vld [vmem:[#allocation3 + $0x2d2] sm:$0xff]
  %v6485 = vld [vmem:[#allocation3 + $0x2da] sm:$0xff]
  %v6486 = vld [vmem:[#allocation3 + $0x2ea] sm:$0xff]
  %v6487 = vld [vmem:[#allocation3 + $0x2f2] sm:$0xff]
  %v6488 = vld [vmem:[#allocation3 + $0x302] sm:$0xff]
  %v6489 = vld [vmem:[#allocation3 + $0x30a] sm:$0xff]
  %v6490 = vld [vmem:[#allocation3 + $0x31a] sm:$0xff]
  %v6491 = vld [vmem:[#allocation3 + $0x322] sm:$0xff]
  %v6492 = vpack.c.bf16 %v6429, %v6428
  %v6493 = vpack.c.bf16 %v6431, %v6430
  %v6494 = vpack.c.bf16 %v6433, %v6432
  %v6495 = vpack.c.bf16 %v6435, %v6434
  %v6496 = vpack.c.bf16 %v6437, %v6436
  %v6497 = vpack.c.bf16 %v6439, %v6438
  %v6498 = vpack.c.bf16 %v6441, %v6440
  %v6499 = vpack.c.bf16 %v6443, %v6442
  %v6500 = vpack.c.bf16 %v6445, %v6444
  %v6501 = vpack.c.bf16 %v6447, %v6446
  %v6502 = vpack.c.bf16 %v6449, %v6448
  %v6503 = vpack.c.bf16 %v6451, %v6450
  %v6504 = vpack.c.bf16 %v6453, %v6452
  %v6505 = vpack.c.bf16 %v6455, %v6454
  %v6506 = vpack.c.bf16 %v6457, %v6456
  %v6507 = vpack.c.bf16 %v6459, %v6458
  %v6508 = vpack.c.bf16 %v6461, %v6460
  %v6509 = vpack.c.bf16 %v6463, %v6462
  %v6510 = vpack.c.bf16 %v6465, %v6464
  %v6511 = vpack.c.bf16 %v6467, %v6466
  %v6512 = vpack.c.bf16 %v6469, %v6468
  %v6513 = vpack.c.bf16 %v6471, %v6470
  %v6514 = vpack.c.bf16 %v6473, %v6472
  %v6515 = vpack.c.bf16 %v6475, %v6474
  %v6516 = vpack.c.bf16 %v6477, %v6476
  %v6517 = vpack.c.bf16 %v6479, %v6478
  %v6518 = vpack.c.bf16 %v6481, %v6480
  %v6519 = vpack.c.bf16 %v6483, %v6482
  %v6520 = vpack.c.bf16 %v6485, %v6484
  %v6521 = vpack.c.bf16 %v6487, %v6486
  %v6522 = vpack.c.bf16 %v6489, %v6488
  %v6523 = vpack.c.bf16 %v6491, %v6490
  %s6524 = scalar_lea.vmem %s4, 128
  %v6525 = vld [vmem:[%s6524] sm:$0xf]
  %v6526 = vld [vmem:[%s6524 + $0x4] sm:$0xf]
  %v6527 = vld [vmem:[%s6524 + $0x8] sm:$0xf]
  %v6528 = vld [vmem:[%s6524 + $0xc] sm:$0xf]
  %v6529 = vld [vmem:[%s6524 + $0x10] sm:$0xf]
  %v6530 = vld [vmem:[%s6524 + $0x14] sm:$0xf]
  %v6531 = vld [vmem:[%s6524 + $0x18] sm:$0xf]
  %v6532 = vld [vmem:[%s6524 + $0x1c] sm:$0xf]
  %v6533 = vld [vmem:[%s6524 + $0x20] sm:$0xf]
  %v6534 = vld [vmem:[%s6524 + $0x24] sm:$0xf]
  %v6535 = vld [vmem:[%s6524 + $0x28] sm:$0xf]
  %v6536 = vld [vmem:[%s6524 + $0x2c] sm:$0xf]
  %v6537 = vld [vmem:[%s6524 + $0x30] sm:$0xf]
  %v6538 = vld [vmem:[%s6524 + $0x34] sm:$0xf]
  %v6539 = vld [vmem:[%s6524 + $0x38] sm:$0xf]
  %v6540 = vld [vmem:[%s6524 + $0x3c] sm:$0xf]
  %v6557 = vunpack.c.l.b16 %v6525
  %v6558 = vunpack.c.l.b16 %v6526
  %v6559 = vunpack.c.l.b16 %v6527
  %v6560 = vunpack.c.l.b16 %v6528
  %v6561 = vunpack.c.l.b16 %v6529
  %v6562 = vunpack.c.l.b16 %v6530
  %v6563 = vunpack.c.l.b16 %v6531
  %v6564 = vunpack.c.l.b16 %v6532
  %v6565 = vunpack.c.l.b16 %v6533
  %v6566 = vunpack.c.l.b16 %v6534
  %v6567 = vunpack.c.l.b16 %v6535
  %v6568 = vunpack.c.l.b16 %v6536
  %v6569 = vunpack.c.l.b16 %v6537
  %v6570 = vunpack.c.l.b16 %v6538
  %v6571 = vunpack.c.l.b16 %v6539
  %v6572 = vunpack.c.l.b16 %v6540
  %v6573 = vpack.c.b16 %v6558, %v6557
  %v6574 = vpack.c.b16 %v6560, %v6559
  %v6575 = vpack.c.b16 %v6562, %v6561
  %v6576 = vpack.c.b16 %v6564, %v6563
  %v6577 = vpack.c.b16 %v6566, %v6565
  %v6578 = vpack.c.b16 %v6568, %v6567
  %v6579 = vpack.c.b16 %v6570, %v6569
  %v6580 = vpack.c.b16 %v6572, %v6571
  %6589 = vmatpush.bf16.msra.mxu0 %v6580
  %6590 = vmatpush.bf16.msra.mxu0 %v6579
  %6591 = vmatpush.bf16.msra.mxu0 %v6578
  %6592 = vmatpush.bf16.msra.mxu0 %v6577
  %6593 = vmatpush.bf16.msra.mxu0 %v6576
  %6594 = vmatpush.bf16.msra.mxu0 %v6575
  %6595 = vmatpush.bf16.msra.mxu0 %v6574
  %6596 = vmatpush.bf16.msra.mxu0 %v6573
  %6597 = vmatmul.bf16.gmra.mxu0 %v6492
  %v6598 = vpop.f32.mrf.mxu0
  %v6599 = vadd.f32 0.0, %v6598
  %v6600 = vpop.f32.mrf.mxu0
  %v6601 = vadd.f32 0.0, %v6600
  %6602 = vmatmul.bf16.gmra.mxu0 %v6493
  %v6603 = vpop.f32.mrf.mxu0
  %v6604 = vadd.f32 0.0, %v6603
  %v6605 = vpop.f32.mrf.mxu0
  %v6606 = vadd.f32 0.0, %v6605
  %6607 = vmatmul.bf16.gmra.mxu0 %v6494
  %v6608 = vpop.f32.mrf.mxu0
  %v6609 = vadd.f32 0.0, %v6608
  %v6610 = vpop.f32.mrf.mxu0
  %v6611 = vadd.f32 0.0, %v6610
  %6612 = vmatmul.bf16.gmra.mxu0 %v6495
  %v6613 = vpop.f32.mrf.mxu0
  %v6614 = vadd.f32 0.0, %v6613
  %v6615 = vpop.f32.mrf.mxu0
  %v6616 = vadd.f32 0.0, %v6615
  %6617 = vmatmul.bf16.gmra.mxu0 %v6496
  %v6618 = vpop.f32.mrf.mxu0
  %v6619 = vadd.f32 0.0, %v6618
  %v6620 = vpop.f32.mrf.mxu0
  %v6621 = vadd.f32 0.0, %v6620
  %6622 = vmatmul.bf16.gmra.mxu0 %v6497
  %v6623 = vpop.f32.mrf.mxu0
  %v6624 = vadd.f32 0.0, %v6623
  %v6625 = vpop.f32.mrf.mxu0
  %v6626 = vadd.f32 0.0, %v6625
  %6627 = vmatmul.bf16.gmra.mxu0 %v6498
  %v6628 = vpop.f32.mrf.mxu0
  %v6629 = vadd.f32 0.0, %v6628
  %v6630 = vpop.f32.mrf.mxu0
  %v6631 = vadd.f32 0.0, %v6630
  %6632 = vmatmul.bf16.gmra.mxu0 %v6499
  %v6633 = vpop.f32.mrf.mxu0
  %v6634 = vadd.f32 0.0, %v6633
  %v6635 = vpop.f32.mrf.mxu0
  %v6636 = vadd.f32 0.0, %v6635
  %6637 = vmatmul.bf16.gmra.mxu0 %v6500
  %v6638 = vpop.f32.mrf.mxu0
  %v6639 = vadd.f32 0.0, %v6638
  %v6640 = vpop.f32.mrf.mxu0
  %v6641 = vadd.f32 0.0, %v6640
  %6642 = vmatmul.bf16.gmra.mxu0 %v6501
  %v6643 = vpop.f32.mrf.mxu0
  %v6644 = vadd.f32 0.0, %v6643
  %v6645 = vpop.f32.mrf.mxu0
  %v6646 = vadd.f32 0.0, %v6645
  %6647 = vmatmul.bf16.gmra.mxu0 %v6502
  %v6648 = vpop.f32.mrf.mxu0
  %v6649 = vadd.f32 0.0, %v6648
  %v6650 = vpop.f32.mrf.mxu0
  %v6651 = vadd.f32 0.0, %v6650
  %6652 = vmatmul.bf16.gmra.mxu0 %v6503
  %v6653 = vpop.f32.mrf.mxu0
  %v6654 = vadd.f32 0.0, %v6653
  %v6655 = vpop.f32.mrf.mxu0
  %v6656 = vadd.f32 0.0, %v6655
  %6657 = vmatmul.bf16.gmra.mxu0 %v6504
  %v6658 = vpop.f32.mrf.mxu0
  %v6659 = vadd.f32 0.0, %v6658
  %v6660 = vpop.f32.mrf.mxu0
  %v6661 = vadd.f32 0.0, %v6660
  %6662 = vmatmul.bf16.gmra.mxu0 %v6505
  %v6663 = vpop.f32.mrf.mxu0
  %v6664 = vadd.f32 0.0, %v6663
  %v6665 = vpop.f32.mrf.mxu0
  %v6666 = vadd.f32 0.0, %v6665
  %6667 = vmatmul.bf16.gmra.mxu0 %v6506
  %v6668 = vpop.f32.mrf.mxu0
  %v6669 = vadd.f32 0.0, %v6668
  %v6670 = vpop.f32.mrf.mxu0
  %v6671 = vadd.f32 0.0, %v6670
  %6672 = vmatmul.bf16.gmra.mxu0 %v6507
  %v6673 = vpop.f32.mrf.mxu0
  %v6674 = vadd.f32 0.0, %v6673
  %v6675 = vpop.f32.mrf.mxu0
  %v6676 = vadd.f32 0.0, %v6675
  %6677 = vmatmul.bf16.gmra.mxu0 %v6508
  %v6678 = vpop.f32.mrf.mxu0
  %v6679 = vadd.f32 0.0, %v6678
  %v6680 = vpop.f32.mrf.mxu0
  %v6681 = vadd.f32 0.0, %v6680
  %6682 = vmatmul.bf16.gmra.mxu0 %v6509
  %v6683 = vpop.f32.mrf.mxu0
  %v6684 = vadd.f32 0.0, %v6683
  %v6685 = vpop.f32.mrf.mxu0
  %v6686 = vadd.f32 0.0, %v6685
  %6687 = vmatmul.bf16.gmra.mxu0 %v6510
  %v6688 = vpop.f32.mrf.mxu0
  %v6689 = vadd.f32 0.0, %v6688
  %v6690 = vpop.f32.mrf.mxu0
  %v6691 = vadd.f32 0.0, %v6690
  %6692 = vmatmul.bf16.gmra.mxu0 %v6511
  %v6693 = vpop.f32.mrf.mxu0
  %v6694 = vadd.f32 0.0, %v6693
  %v6695 = vpop.f32.mrf.mxu0
  %v6696 = vadd.f32 0.0, %v6695
  %6697 = vmatmul.bf16.gmra.mxu0 %v6512
  %v6698 = vpop.f32.mrf.mxu0
  %v6699 = vadd.f32 0.0, %v6698
  %v6700 = vpop.f32.mrf.mxu0
  %v6701 = vadd.f32 0.0, %v6700
  %6702 = vmatmul.bf16.gmra.mxu0 %v6513
  %v6703 = vpop.f32.mrf.mxu0
  %v6704 = vadd.f32 0.0, %v6703
  %v6705 = vpop.f32.mrf.mxu0
  %v6706 = vadd.f32 0.0, %v6705
  %6707 = vmatmul.bf16.gmra.mxu0 %v6514
  %v6708 = vpop.f32.mrf.mxu0
  %v6709 = vadd.f32 0.0, %v6708
  %v6710 = vpop.f32.mrf.mxu0
  %v6711 = vadd.f32 0.0, %v6710
  %6712 = vmatmul.bf16.gmra.mxu0 %v6515
  %v6713 = vpop.f32.mrf.mxu0
  %v6714 = vadd.f32 0.0, %v6713
  %v6715 = vpop.f32.mrf.mxu0
  %v6716 = vadd.f32 0.0, %v6715
  %6717 = vmatmul.bf16.gmra.mxu0 %v6516
  %v6718 = vpop.f32.mrf.mxu0
  %v6719 = vadd.f32 0.0, %v6718
  %v6720 = vpop.f32.mrf.mxu0
  %v6721 = vadd.f32 0.0, %v6720
  %6722 = vmatmul.bf16.gmra.mxu0 %v6517
  %v6723 = vpop.f32.mrf.mxu0
  %v6724 = vadd.f32 0.0, %v6723
  %v6725 = vpop.f32.mrf.mxu0
  %v6726 = vadd.f32 0.0, %v6725
  %6727 = vmatmul.bf16.gmra.mxu0 %v6518
  %v6728 = vpop.f32.mrf.mxu0
  %v6729 = vadd.f32 0.0, %v6728
  %v6730 = vpop.f32.mrf.mxu0
  %v6731 = vadd.f32 0.0, %v6730
  %6732 = vmatmul.bf16.gmra.mxu0 %v6519
  %v6733 = vpop.f32.mrf.mxu0
  %v6734 = vadd.f32 0.0, %v6733
  %v6735 = vpop.f32.mrf.mxu0
  %v6736 = vadd.f32 0.0, %v6735
  %6737 = vmatmul.bf16.gmra.mxu0 %v6520
  %v6738 = vpop.f32.mrf.mxu0
  %v6739 = vadd.f32 0.0, %v6738
  %v6740 = vpop.f32.mrf.mxu0
  %v6741 = vadd.f32 0.0, %v6740
  %6742 = vmatmul.bf16.gmra.mxu0 %v6521
  %v6743 = vpop.f32.mrf.mxu0
  %v6744 = vadd.f32 0.0, %v6743
  %v6745 = vpop.f32.mrf.mxu0
  %v6746 = vadd.f32 0.0, %v6745
  %6747 = vmatmul.bf16.gmra.mxu0 %v6522
  %v6748 = vpop.f32.mrf.mxu0
  %v6749 = vadd.f32 0.0, %v6748
  %v6750 = vpop.f32.mrf.mxu0
  %v6751 = vadd.f32 0.0, %v6750
  %6752 = vmatmul.bf16.gmra.mxu0 %v6523
  %v6753 = vpop.f32.mrf.mxu0
  %v6754 = vadd.f32 0.0, %v6753
  %v6755 = vpop.f32.mrf.mxu0
  %v6756 = vadd.f32 0.0, %v6755
  %6757 = vdwg.mxu0
  %v6758 = vld [vmem:[#allocation4] sm:$0xff]
  %v6759 = vld [vmem:[#allocation4 + $0x8] sm:$0xff]
  %v6760 = vld [vmem:[#allocation4 + $0x10] sm:$0xff]
  %v6761 = vld [vmem:[#allocation4 + $0x18] sm:$0xff]
  %v6762 = vld [vmem:[#allocation4 + $0x20] sm:$0xff]
  %v6763 = vld [vmem:[#allocation4 + $0x28] sm:$0xff]
  %v6764 = vld [vmem:[#allocation4 + $0x30] sm:$0xff]
  %v6765 = vld [vmem:[#allocation4 + $0x38] sm:$0xff]
  %v6766 = vld [vmem:[#allocation4 + $0x40] sm:$0xff]
  %v6767 = vld [vmem:[#allocation4 + $0x48] sm:$0xff]
  %v6768 = vld [vmem:[#allocation4 + $0x50] sm:$0xff]
  %v6769 = vld [vmem:[#allocation4 + $0x58] sm:$0xff]
  %v6770 = vld [vmem:[#allocation4 + $0x60] sm:$0xff]
  %v6771 = vld [vmem:[#allocation4 + $0x68] sm:$0xff]
  %v6772 = vld [vmem:[#allocation4 + $0x70] sm:$0xff]
  %v6773 = vld [vmem:[#allocation4 + $0x78] sm:$0xff]
  %v6774 = vld [vmem:[#allocation4 + $0x80] sm:$0xff]
  %v6775 = vld [vmem:[#allocation4 + $0x88] sm:$0xff]
  %v6776 = vld [vmem:[#allocation4 + $0x90] sm:$0xff]
  %v6777 = vld [vmem:[#allocation4 + $0x98] sm:$0xff]
  %v6778 = vld [vmem:[#allocation4 + $0xa0] sm:$0xff]
  %v6779 = vld [vmem:[#allocation4 + $0xa8] sm:$0xff]
  %v6780 = vld [vmem:[#allocation4 + $0xb0] sm:$0xff]
  %v6781 = vld [vmem:[#allocation4 + $0xb8] sm:$0xff]
  %v6782 = vld [vmem:[#allocation4 + $0xc0] sm:$0xff]
  %v6783 = vld [vmem:[#allocation4 + $0xc8] sm:$0xff]
  %v6784 = vld [vmem:[#allocation4 + $0xd0] sm:$0xff]
  %v6785 = vld [vmem:[#allocation4 + $0xd8] sm:$0xff]
  %v6786 = vld [vmem:[#allocation4 + $0xe0] sm:$0xff]
  %v6787 = vld [vmem:[#allocation4 + $0xe8] sm:$0xff]
  %v6788 = vld [vmem:[#allocation4 + $0xf0] sm:$0xff]
  %v6789 = vld [vmem:[#allocation4 + $0xf8] sm:$0xff]
  %v6790 = vld [vmem:[#allocation4 + $0x100] sm:$0xff]
  %v6791 = vld [vmem:[#allocation4 + $0x108] sm:$0xff]
  %v6792 = vld [vmem:[#allocation4 + $0x110] sm:$0xff]
  %v6793 = vld [vmem:[#allocation4 + $0x118] sm:$0xff]
  %v6794 = vld [vmem:[#allocation4 + $0x120] sm:$0xff]
  %v6795 = vld [vmem:[#allocation4 + $0x128] sm:$0xff]
  %v6796 = vld [vmem:[#allocation4 + $0x130] sm:$0xff]
  %v6797 = vld [vmem:[#allocation4 + $0x138] sm:$0xff]
  %v6798 = vld [vmem:[#allocation4 + $0x140] sm:$0xff]
  %v6799 = vld [vmem:[#allocation4 + $0x148] sm:$0xff]
  %v6800 = vld [vmem:[#allocation4 + $0x150] sm:$0xff]
  %v6801 = vld [vmem:[#allocation4 + $0x158] sm:$0xff]
  %v6802 = vld [vmem:[#allocation4 + $0x160] sm:$0xff]
  %v6803 = vld [vmem:[#allocation4 + $0x168] sm:$0xff]
  %v6804 = vld [vmem:[#allocation4 + $0x170] sm:$0xff]
  %v6805 = vld [vmem:[#allocation4 + $0x178] sm:$0xff]
  %v6806 = vld [vmem:[#allocation4 + $0x180] sm:$0xff]
  %v6807 = vld [vmem:[#allocation4 + $0x188] sm:$0xff]
  %v6808 = vld [vmem:[#allocation4 + $0x190] sm:$0xff]
  %v6809 = vld [vmem:[#allocation4 + $0x198] sm:$0xff]
  %v6810 = vld [vmem:[#allocation4 + $0x1a0] sm:$0xff]
  %v6811 = vld [vmem:[#allocation4 + $0x1a8] sm:$0xff]
  %v6812 = vld [vmem:[#allocation4 + $0x1b0] sm:$0xff]
  %v6813 = vld [vmem:[#allocation4 + $0x1b8] sm:$0xff]
  %v6814 = vld [vmem:[#allocation4 + $0x1c0] sm:$0xff]
  %v6815 = vld [vmem:[#allocation4 + $0x1c8] sm:$0xff]
  %v6816 = vld [vmem:[#allocation4 + $0x1d0] sm:$0xff]
  %v6817 = vld [vmem:[#allocation4 + $0x1d8] sm:$0xff]
  %v6818 = vld [vmem:[#allocation4 + $0x1e0] sm:$0xff]
  %v6819 = vld [vmem:[#allocation4 + $0x1e8] sm:$0xff]
  %v6820 = vld [vmem:[#allocation4 + $0x1f0] sm:$0xff]
  %v6821 = vld [vmem:[#allocation4 + $0x1f8] sm:$0xff]
  %v6822 = vadd.f32 %v6758, %v6599
  %v6823 = vadd.f32 %v6759, %v6601
  %v6824 = vadd.f32 %v6760, %v6604
  %v6825 = vadd.f32 %v6761, %v6606
  %v6826 = vadd.f32 %v6762, %v6609
  %v6827 = vadd.f32 %v6763, %v6611
  %v6828 = vadd.f32 %v6764, %v6614
  %v6829 = vadd.f32 %v6765, %v6616
  %v6830 = vadd.f32 %v6766, %v6619
  %v6831 = vadd.f32 %v6767, %v6621
  %v6832 = vadd.f32 %v6768, %v6624
  %v6833 = vadd.f32 %v6769, %v6626
  %v6834 = vadd.f32 %v6770, %v6629
  %v6835 = vadd.f32 %v6771, %v6631
  %v6836 = vadd.f32 %v6772, %v6634
  %v6837 = vadd.f32 %v6773, %v6636
  %v6838 = vadd.f32 %v6774, %v6639
  %v6839 = vadd.f32 %v6775, %v6641
  %v6840 = vadd.f32 %v6776, %v6644
  %v6841 = vadd.f32 %v6777, %v6646
  %v6842 = vadd.f32 %v6778, %v6649
  %v6843 = vadd.f32 %v6779, %v6651
  %v6844 = vadd.f32 %v6780, %v6654
  %v6845 = vadd.f32 %v6781, %v6656
  %v6846 = vadd.f32 %v6782, %v6659
  %v6847 = vadd.f32 %v6783, %v6661
  %v6848 = vadd.f32 %v6784, %v6664
  %v6849 = vadd.f32 %v6785, %v6666
  %v6850 = vadd.f32 %v6786, %v6669
  %v6851 = vadd.f32 %v6787, %v6671
  %v6852 = vadd.f32 %v6788, %v6674
  %v6853 = vadd.f32 %v6789, %v6676
  %v6854 = vadd.f32 %v6790, %v6679
  %v6855 = vadd.f32 %v6791, %v6681
  %v6856 = vadd.f32 %v6792, %v6684
  %v6857 = vadd.f32 %v6793, %v6686
  %v6858 = vadd.f32 %v6794, %v6689
  %v6859 = vadd.f32 %v6795, %v6691
  %v6860 = vadd.f32 %v6796, %v6694
  %v6861 = vadd.f32 %v6797, %v6696
  %v6862 = vadd.f32 %v6798, %v6699
  %v6863 = vadd.f32 %v6799, %v6701
  %v6864 = vadd.f32 %v6800, %v6704
  %v6865 = vadd.f32 %v6801, %v6706
  %v6866 = vadd.f32 %v6802, %v6709
  %v6867 = vadd.f32 %v6803, %v6711
  %v6868 = vadd.f32 %v6804, %v6714
  %v6869 = vadd.f32 %v6805, %v6716
  %v6870 = vadd.f32 %v6806, %v6719
  %v6871 = vadd.f32 %v6807, %v6721
  %v6872 = vadd.f32 %v6808, %v6724
  %v6873 = vadd.f32 %v6809, %v6726
  %v6874 = vadd.f32 %v6810, %v6729
  %v6875 = vadd.f32 %v6811, %v6731
  %v6876 = vadd.f32 %v6812, %v6734
  %v6877 = vadd.f32 %v6813, %v6736
  %v6878 = vadd.f32 %v6814, %v6739
  %v6879 = vadd.f32 %v6815, %v6741
  %v6880 = vadd.f32 %v6816, %v6744
  %v6881 = vadd.f32 %v6817, %v6746
  %v6882 = vadd.f32 %v6818, %v6749
  %v6883 = vadd.f32 %v6819, %v6751
  %v6884 = vadd.f32 %v6820, %v6754
  %v6885 = vadd.f32 %v6821, %v6756
  %6886 = vst [vmem:[#allocation4] sm:$0xff] %v6822
  %6887 = vst [vmem:[#allocation4 + $0x8] sm:$0xff] %v6823
  %6888 = vst [vmem:[#allocation4 + $0x10] sm:$0xff] %v6824
  %6889 = vst [vmem:[#allocation4 + $0x18] sm:$0xff] %v6825
  %6890 = vst [vmem:[#allocation4 + $0x20] sm:$0xff] %v6826
  %6891 = vst [vmem:[#allocation4 + $0x28] sm:$0xff] %v6827
  %6892 = vst [vmem:[#allocation4 + $0x30] sm:$0xff] %v6828
  %6893 = vst [vmem:[#allocation4 + $0x38] sm:$0xff] %v6829
  %6894 = vst [vmem:[#allocation4 + $0x40] sm:$0xff] %v6830
  %6895 = vst [vmem:[#allocation4 + $0x48] sm:$0xff] %v6831
  %6896 = vst [vmem:[#allocation4 + $0x50] sm:$0xff] %v6832
  %6897 = vst [vmem:[#allocation4 + $0x58] sm:$0xff] %v6833
  %6898 = vst [vmem:[#allocation4 + $0x60] sm:$0xff] %v6834
  %6899 = vst [vmem:[#allocation4 + $0x68] sm:$0xff] %v6835
  %6900 = vst [vmem:[#allocation4 + $0x70] sm:$0xff] %v6836
  %6901 = vst [vmem:[#allocation4 + $0x78] sm:$0xff] %v6837
  %6902 = vst [vmem:[#allocation4 + $0x80] sm:$0xff] %v6838
  %6903 = vst [vmem:[#allocation4 + $0x88] sm:$0xff] %v6839
  %6904 = vst [vmem:[#allocation4 + $0x90] sm:$0xff] %v6840
  %6905 = vst [vmem:[#allocation4 + $0x98] sm:$0xff] %v6841
  %6906 = vst [vmem:[#allocation4 + $0xa0] sm:$0xff] %v6842
  %6907 = vst [vmem:[#allocation4 + $0xa8] sm:$0xff] %v6843
  %6908 = vst [vmem:[#allocation4 + $0xb0] sm:$0xff] %v6844
  %6909 = vst [vmem:[#allocation4 + $0xb8] sm:$0xff] %v6845
  %6910 = vst [vmem:[#allocation4 + $0xc0] sm:$0xff] %v6846
  %6911 = vst [vmem:[#allocation4 + $0xc8] sm:$0xff] %v6847
  %6912 = vst [vmem:[#allocation4 + $0xd0] sm:$0xff] %v6848
  %6913 = vst [vmem:[#allocation4 + $0xd8] sm:$0xff] %v6849
  %6914 = vst [vmem:[#allocation4 + $0xe0] sm:$0xff] %v6850
  %6915 = vst [vmem:[#allocation4 + $0xe8] sm:$0xff] %v6851
  %6916 = vst [vmem:[#allocation4 + $0xf0] sm:$0xff] %v6852
  %6917 = vst [vmem:[#allocation4 + $0xf8] sm:$0xff] %v6853
  %6918 = vst [vmem:[#allocation4 + $0x100] sm:$0xff] %v6854
  %6919 = vst [vmem:[#allocation4 + $0x108] sm:$0xff] %v6855
  %6920 = vst [vmem:[#allocation4 + $0x110] sm:$0xff] %v6856
  %6921 = vst [vmem:[#allocation4 + $0x118] sm:$0xff] %v6857
  %6922 = vst [vmem:[#allocation4 + $0x120] sm:$0xff] %v6858
  %6923 = vst [vmem:[#allocation4 + $0x128] sm:$0xff] %v6859
  %6924 = vst [vmem:[#allocation4 + $0x130] sm:$0xff] %v6860
  %6925 = vst [vmem:[#allocation4 + $0x138] sm:$0xff] %v6861
  %6926 = vst [vmem:[#allocation4 + $0x140] sm:$0xff] %v6862
  %6927 = vst [vmem:[#allocation4 + $0x148] sm:$0xff] %v6863
  %6928 = vst [vmem:[#allocation4 + $0x150] sm:$0xff] %v6864
  %6929 = vst [vmem:[#allocation4 + $0x158] sm:$0xff] %v6865
  %6930 = vst [vmem:[#allocation4 + $0x160] sm:$0xff] %v6866
  %6931 = vst [vmem:[#allocation4 + $0x168] sm:$0xff] %v6867
  %6932 = vst [vmem:[#allocation4 + $0x170] sm:$0xff] %v6868
  %6933 = vst [vmem:[#allocation4 + $0x178] sm:$0xff] %v6869
  %6934 = vst [vmem:[#allocation4 + $0x180] sm:$0xff] %v6870
  %6935 = vst [vmem:[#allocation4 + $0x188] sm:$0xff] %v6871
  %6936 = vst [vmem:[#allocation4 + $0x190] sm:$0xff] %v6872
  %6937 = vst [vmem:[#allocation4 + $0x198] sm:$0xff] %v6873
  %6938 = vst [vmem:[#allocation4 + $0x1a0] sm:$0xff] %v6874
  %6939 = vst [vmem:[#allocation4 + $0x1a8] sm:$0xff] %v6875
  %6940 = vst [vmem:[#allocation4 + $0x1b0] sm:$0xff] %v6876
  %6941 = vst [vmem:[#allocation4 + $0x1b8] sm:$0xff] %v6877
  %6942 = vst [vmem:[#allocation4 + $0x1c0] sm:$0xff] %v6878
  %6943 = vst [vmem:[#allocation4 + $0x1c8] sm:$0xff] %v6879
  %6944 = vst [vmem:[#allocation4 + $0x1d0] sm:$0xff] %v6880
  %6945 = vst [vmem:[#allocation4 + $0x1d8] sm:$0xff] %v6881
  %6946 = vst [vmem:[#allocation4 + $0x1e0] sm:$0xff] %v6882
  %6947 = vst [vmem:[#allocation4 + $0x1e8] sm:$0xff] %v6883
  %6948 = vst [vmem:[#allocation4 + $0x1f0] sm:$0xff] %v6884
  %6949 = vst [vmem:[#allocation4 + $0x1f8] sm:$0xff] %v6885
  %v6950 = vld [vmem:[%s5448] sm:$0xff]
  %v6951 = vld [vmem:[%s5448 + $0x8] sm:$0xff]
  %v6952 = vld [vmem:[%s5448 + $0x18] sm:$0xff]
  %v6953 = vld [vmem:[%s5448 + $0x20] sm:$0xff]
  %v6954 = vld [vmem:[%s5448 + $0x30] sm:$0xff]
  %v6955 = vld [vmem:[%s5448 + $0x38] sm:$0xff]
  %v6956 = vld [vmem:[%s5448 + $0x48] sm:$0xff]
  %v6957 = vld [vmem:[%s5448 + $0x50] sm:$0xff]
  %v6958 = vld [vmem:[%s5448 + $0x60] sm:$0xff]
  %v6959 = vld [vmem:[%s5448 + $0x68] sm:$0xff]
  %v6960 = vld [vmem:[%s5448 + $0x78] sm:$0xff]
  %v6961 = vld [vmem:[%s5448 + $0x80] sm:$0xff]
  %v6962 = vld [vmem:[%s5448 + $0x90] sm:$0xff]
  %v6963 = vld [vmem:[%s5448 + $0x98] sm:$0xff]
  %v6964 = vld [vmem:[%s5448 + $0xa8] sm:$0xff]
  %v6965 = vld [vmem:[%s5448 + $0xb0] sm:$0xff]
  %v6966 = vld [vmem:[%s5448 + $0xc0] sm:$0xff]
  %v6967 = vld [vmem:[%s5448 + $0xc8] sm:$0xff]
  %v6968 = vld [vmem:[%s5448 + $0xd8] sm:$0xff]
  %v6969 = vld [vmem:[%s5448 + $0xe0] sm:$0xff]
  %v6970 = vld [vmem:[%s5448 + $0xf0] sm:$0xff]
  %v6971 = vld [vmem:[%s5448 + $0xf8] sm:$0xff]
  %v6972 = vld [vmem:[%s5448 + $0x108] sm:$0xff]
  %v6973 = vld [vmem:[%s5448 + $0x110] sm:$0xff]
  %v6974 = vld [vmem:[%s5448 + $0x120] sm:$0xff]
  %v6975 = vld [vmem:[%s5448 + $0x128] sm:$0xff]
  %v6976 = vld [vmem:[%s5448 + $0x138] sm:$0xff]
  %v6977 = vld [vmem:[%s5448 + $0x140] sm:$0xff]
  %v6978 = vld [vmem:[%s5448 + $0x150] sm:$0xff]
  %v6979 = vld [vmem:[%s5448 + $0x158] sm:$0xff]
  %v6980 = vld [vmem:[%s5448 + $0x168] sm:$0xff]
  %v6981 = vld [vmem:[%s5448 + $0x170] sm:$0xff]
  %v6982 = vld [vmem:[%s5448 + $0x1b0] sm:$0xff]
  %v6983 = vld [vmem:[%s5448 + $0x1b8] sm:$0xff]
  %v6984 = vld [vmem:[%s5448 + $0x1c8] sm:$0xff]
  %v6985 = vld [vmem:[%s5448 + $0x1d0] sm:$0xff]
  %v6986 = vld [vmem:[%s5448 + $0x1e0] sm:$0xff]
  %v6987 = vld [vmem:[%s5448 + $0x1e8] sm:$0xff]
  %v6988 = vld [vmem:[%s5448 + $0x1f8] sm:$0xff]
  %v6989 = vld [vmem:[%s5448 + $0x200] sm:$0xff]
  %v6990 = vld [vmem:[%s5448 + $0x210] sm:$0xff]
  %v6991 = vld [vmem:[%s5448 + $0x218] sm:$0xff]
  %v6992 = vld [vmem:[%s5448 + $0x228] sm:$0xff]
  %v6993 = vld [vmem:[%s5448 + $0x230] sm:$0xff]
  %v6994 = vld [vmem:[%s5448 + $0x240] sm:$0xff]
  %v6995 = vld [vmem:[%s5448 + $0x248] sm:$0xff]
  %v6996 = vld [vmem:[%s5448 + $0x258] sm:$0xff]
  %v6997 = vld [vmem:[%s5448 + $0x260] sm:$0xff]
  %v6998 = vld [vmem:[%s5448 + $0x270] sm:$0xff]
  %v6999 = vld [vmem:[%s5448 + $0x278] sm:$0xff]
  %v7000 = vld [vmem:[%s5448 + $0x288] sm:$0xff]
  %v7001 = vld [vmem:[%s5448 + $0x290] sm:$0xff]
  %v7002 = vld [vmem:[%s5448 + $0x2a0] sm:$0xff]
  %v7003 = vld [vmem:[%s5448 + $0x2a8] sm:$0xff]
  %v7004 = vld [vmem:[%s5448 + $0x2b8] sm:$0xff]
  %v7005 = vld [vmem:[%s5448 + $0x2c0] sm:$0xff]
  %v7006 = vld [vmem:[%s5448 + $0x2d0] sm:$0xff]
  %v7007 = vld [vmem:[%s5448 + $0x2d8] sm:$0xff]
  %v7008 = vld [vmem:[%s5448 + $0x2e8] sm:$0xff]
  %v7009 = vld [vmem:[%s5448 + $0x2f0] sm:$0xff]
  %v7010 = vld [vmem:[%s5448 + $0x300] sm:$0xff]
  %v7011 = vld [vmem:[%s5448 + $0x308] sm:$0xff]
  %v7012 = vld [vmem:[%s5448 + $0x318] sm:$0xff]
  %v7013 = vld [vmem:[%s5448 + $0x320] sm:$0xff]
  %v7014 = vpack.c.bf16 %v6951, %v6950
  %v7015 = vpack.c.bf16 %v6953, %v6952
  %v7016 = vpack.c.bf16 %v6955, %v6954
  %v7017 = vpack.c.bf16 %v6957, %v6956
  %v7018 = vpack.c.bf16 %v6959, %v6958
  %v7019 = vpack.c.bf16 %v6961, %v6960
  %v7020 = vpack.c.bf16 %v6963, %v6962
  %v7021 = vpack.c.bf16 %v6965, %v6964
  %v7022 = vpack.c.bf16 %v6967, %v6966
  %v7023 = vpack.c.bf16 %v6969, %v6968
  %v7024 = vpack.c.bf16 %v6971, %v6970
  %v7025 = vpack.c.bf16 %v6973, %v6972
  %v7026 = vpack.c.bf16 %v6975, %v6974
  %v7027 = vpack.c.bf16 %v6977, %v6976
  %v7028 = vpack.c.bf16 %v6979, %v6978
  %v7029 = vpack.c.bf16 %v6981, %v6980
  %v7030 = vpack.c.bf16 %v6983, %v6982
  %v7031 = vpack.c.bf16 %v6985, %v6984
  %v7032 = vpack.c.bf16 %v6987, %v6986
  %v7033 = vpack.c.bf16 %v6989, %v6988
  %v7034 = vpack.c.bf16 %v6991, %v6990
  %v7035 = vpack.c.bf16 %v6993, %v6992
  %v7036 = vpack.c.bf16 %v6995, %v6994
  %v7037 = vpack.c.bf16 %v6997, %v6996
  %v7038 = vpack.c.bf16 %v6999, %v6998
  %v7039 = vpack.c.bf16 %v7001, %v7000
  %v7040 = vpack.c.bf16 %v7003, %v7002
  %v7041 = vpack.c.bf16 %v7005, %v7004
  %v7042 = vpack.c.bf16 %v7007, %v7006
  %v7043 = vpack.c.bf16 %v7009, %v7008
  %v7044 = vpack.c.bf16 %v7011, %v7010
  %v7045 = vpack.c.bf16 %v7013, %v7012
  %s7046 = scalar_lea.vmem %s4, 192
  %v7047 = vld [vmem:[%s7046] sm:$0xf]
  %v7048 = vld [vmem:[%s7046 + $0x4] sm:$0xf]
  %v7049 = vld [vmem:[%s7046 + $0x8] sm:$0xf]
  %v7050 = vld [vmem:[%s7046 + $0xc] sm:$0xf]
  %v7051 = vld [vmem:[%s7046 + $0x10] sm:$0xf]
  %v7052 = vld [vmem:[%s7046 + $0x14] sm:$0xf]
  %v7053 = vld [vmem:[%s7046 + $0x18] sm:$0xf]
  %v7054 = vld [vmem:[%s7046 + $0x1c] sm:$0xf]
  %v7055 = vld [vmem:[%s7046 + $0x20] sm:$0xf]
  %v7056 = vld [vmem:[%s7046 + $0x24] sm:$0xf]
  %v7057 = vld [vmem:[%s7046 + $0x28] sm:$0xf]
  %v7058 = vld [vmem:[%s7046 + $0x2c] sm:$0xf]
  %v7059 = vld [vmem:[%s7046 + $0x30] sm:$0xf]
  %v7060 = vld [vmem:[%s7046 + $0x34] sm:$0xf]
  %v7061 = vld [vmem:[%s7046 + $0x38] sm:$0xf]
  %v7062 = vld [vmem:[%s7046 + $0x3c] sm:$0xf]
  %v7079 = vunpack.c.l.b16 %v7047
  %v7080 = vunpack.c.l.b16 %v7048
  %v7081 = vunpack.c.l.b16 %v7049
  %v7082 = vunpack.c.l.b16 %v7050
  %v7083 = vunpack.c.l.b16 %v7051
  %v7084 = vunpack.c.l.b16 %v7052
  %v7085 = vunpack.c.l.b16 %v7053
  %v7086 = vunpack.c.l.b16 %v7054
  %v7087 = vunpack.c.l.b16 %v7055
  %v7088 = vunpack.c.l.b16 %v7056
  %v7089 = vunpack.c.l.b16 %v7057
  %v7090 = vunpack.c.l.b16 %v7058
  %v7091 = vunpack.c.l.b16 %v7059
  %v7092 = vunpack.c.l.b16 %v7060
  %v7093 = vunpack.c.l.b16 %v7061
  %v7094 = vunpack.c.l.b16 %v7062
  %v7095 = vpack.c.b16 %v7080, %v7079
  %v7096 = vpack.c.b16 %v7082, %v7081
  %v7097 = vpack.c.b16 %v7084, %v7083
  %v7098 = vpack.c.b16 %v7086, %v7085
  %v7099 = vpack.c.b16 %v7088, %v7087
  %v7100 = vpack.c.b16 %v7090, %v7089
  %v7101 = vpack.c.b16 %v7092, %v7091
  %v7102 = vpack.c.b16 %v7094, %v7093
  %7111 = vmatpush.bf16.msra.mxu0 %v7102
  %7112 = vmatpush.bf16.msra.mxu0 %v7101
  %7113 = vmatpush.bf16.msra.mxu0 %v7100
  %7114 = vmatpush.bf16.msra.mxu0 %v7099
  %7115 = vmatpush.bf16.msra.mxu0 %v7098
  %7116 = vmatpush.bf16.msra.mxu0 %v7097
  %7117 = vmatpush.bf16.msra.mxu0 %v7096
  %7118 = vmatpush.bf16.msra.mxu0 %v7095
  %7119 = vmatmul.bf16.gmra.mxu0 %v7014
  %v7120 = vpop.f32.mrf.mxu0
  %v7121 = vadd.f32 0.0, %v7120
  %v7122 = vpop.f32.mrf.mxu0
  %v7123 = vadd.f32 0.0, %v7122
  %7124 = vmatmul.bf16.gmra.mxu0 %v7015
  %v7125 = vpop.f32.mrf.mxu0
  %v7126 = vadd.f32 0.0, %v7125
  %v7127 = vpop.f32.mrf.mxu0
  %v7128 = vadd.f32 0.0, %v7127
  %7129 = vmatmul.bf16.gmra.mxu0 %v7016
  %v7130 = vpop.f32.mrf.mxu0
  %v7131 = vadd.f32 0.0, %v7130
  %v7132 = vpop.f32.mrf.mxu0
  %v7133 = vadd.f32 0.0, %v7132
  %7134 = vmatmul.bf16.gmra.mxu0 %v7017
  %v7135 = vpop.f32.mrf.mxu0
  %v7136 = vadd.f32 0.0, %v7135
  %v7137 = vpop.f32.mrf.mxu0
  %v7138 = vadd.f32 0.0, %v7137
  %7139 = vmatmul.bf16.gmra.mxu0 %v7018
  %v7140 = vpop.f32.mrf.mxu0
  %v7141 = vadd.f32 0.0, %v7140
  %v7142 = vpop.f32.mrf.mxu0
  %v7143 = vadd.f32 0.0, %v7142
  %7144 = vmatmul.bf16.gmra.mxu0 %v7019
  %v7145 = vpop.f32.mrf.mxu0
  %v7146 = vadd.f32 0.0, %v7145
  %v7147 = vpop.f32.mrf.mxu0
  %v7148 = vadd.f32 0.0, %v7147
  %7149 = vmatmul.bf16.gmra.mxu0 %v7020
  %v7150 = vpop.f32.mrf.mxu0
  %v7151 = vadd.f32 0.0, %v7150
  %v7152 = vpop.f32.mrf.mxu0
  %v7153 = vadd.f32 0.0, %v7152
  %7154 = vmatmul.bf16.gmra.mxu0 %v7021
  %v7155 = vpop.f32.mrf.mxu0
  %v7156 = vadd.f32 0.0, %v7155
  %v7157 = vpop.f32.mrf.mxu0
  %v7158 = vadd.f32 0.0, %v7157
  %7159 = vmatmul.bf16.gmra.mxu0 %v7022
  %v7160 = vpop.f32.mrf.mxu0
  %v7161 = vadd.f32 0.0, %v7160
  %v7162 = vpop.f32.mrf.mxu0
  %v7163 = vadd.f32 0.0, %v7162
  %7164 = vmatmul.bf16.gmra.mxu0 %v7023
  %v7165 = vpop.f32.mrf.mxu0
  %v7166 = vadd.f32 0.0, %v7165
  %v7167 = vpop.f32.mrf.mxu0
  %v7168 = vadd.f32 0.0, %v7167
  %7169 = vmatmul.bf16.gmra.mxu0 %v7024
  %v7170 = vpop.f32.mrf.mxu0
  %v7171 = vadd.f32 0.0, %v7170
  %v7172 = vpop.f32.mrf.mxu0
  %v7173 = vadd.f32 0.0, %v7172
  %7174 = vmatmul.bf16.gmra.mxu0 %v7025
  %v7175 = vpop.f32.mrf.mxu0
  %v7176 = vadd.f32 0.0, %v7175
  %v7177 = vpop.f32.mrf.mxu0
  %v7178 = vadd.f32 0.0, %v7177
  %7179 = vmatmul.bf16.gmra.mxu0 %v7026
  %v7180 = vpop.f32.mrf.mxu0
  %v7181 = vadd.f32 0.0, %v7180
  %v7182 = vpop.f32.mrf.mxu0
  %v7183 = vadd.f32 0.0, %v7182
  %7184 = vmatmul.bf16.gmra.mxu0 %v7027
  %v7185 = vpop.f32.mrf.mxu0
  %v7186 = vadd.f32 0.0, %v7185
  %v7187 = vpop.f32.mrf.mxu0
  %v7188 = vadd.f32 0.0, %v7187
  %7189 = vmatmul.bf16.gmra.mxu0 %v7028
  %v7190 = vpop.f32.mrf.mxu0
  %v7191 = vadd.f32 0.0, %v7190
  %v7192 = vpop.f32.mrf.mxu0
  %v7193 = vadd.f32 0.0, %v7192
  %7194 = vmatmul.bf16.gmra.mxu0 %v7029
  %v7195 = vpop.f32.mrf.mxu0
  %v7196 = vadd.f32 0.0, %v7195
  %v7197 = vpop.f32.mrf.mxu0
  %v7198 = vadd.f32 0.0, %v7197
  %7199 = vmatmul.bf16.gmra.mxu0 %v7030
  %v7200 = vpop.f32.mrf.mxu0
  %v7201 = vadd.f32 0.0, %v7200
  %v7202 = vpop.f32.mrf.mxu0
  %v7203 = vadd.f32 0.0, %v7202
  %7204 = vmatmul.bf16.gmra.mxu0 %v7031
  %v7205 = vpop.f32.mrf.mxu0
  %v7206 = vadd.f32 0.0, %v7205
  %v7207 = vpop.f32.mrf.mxu0
  %v7208 = vadd.f32 0.0, %v7207
  %7209 = vmatmul.bf16.gmra.mxu0 %v7032
  %v7210 = vpop.f32.mrf.mxu0
  %v7211 = vadd.f32 0.0, %v7210
  %v7212 = vpop.f32.mrf.mxu0
  %v7213 = vadd.f32 0.0, %v7212
  %7214 = vmatmul.bf16.gmra.mxu0 %v7033
  %v7215 = vpop.f32.mrf.mxu0
  %v7216 = vadd.f32 0.0, %v7215
  %v7217 = vpop.f32.mrf.mxu0
  %v7218 = vadd.f32 0.0, %v7217
  %7219 = vmatmul.bf16.gmra.mxu0 %v7034
  %v7220 = vpop.f32.mrf.mxu0
  %v7221 = vadd.f32 0.0, %v7220
  %v7222 = vpop.f32.mrf.mxu0
  %v7223 = vadd.f32 0.0, %v7222
  %7224 = vmatmul.bf16.gmra.mxu0 %v7035
  %v7225 = vpop.f32.mrf.mxu0
  %v7226 = vadd.f32 0.0, %v7225
  %v7227 = vpop.f32.mrf.mxu0
  %v7228 = vadd.f32 0.0, %v7227
  %7229 = vmatmul.bf16.gmra.mxu0 %v7036
  %v7230 = vpop.f32.mrf.mxu0
  %v7231 = vadd.f32 0.0, %v7230
  %v7232 = vpop.f32.mrf.mxu0
  %v7233 = vadd.f32 0.0, %v7232
  %7234 = vmatmul.bf16.gmra.mxu0 %v7037
  %v7235 = vpop.f32.mrf.mxu0
  %v7236 = vadd.f32 0.0, %v7235
  %v7237 = vpop.f32.mrf.mxu0
  %v7238 = vadd.f32 0.0, %v7237
  %7239 = vmatmul.bf16.gmra.mxu0 %v7038
  %v7240 = vpop.f32.mrf.mxu0
  %v7241 = vadd.f32 0.0, %v7240
  %v7242 = vpop.f32.mrf.mxu0
  %v7243 = vadd.f32 0.0, %v7242
  %7244 = vmatmul.bf16.gmra.mxu0 %v7039
  %v7245 = vpop.f32.mrf.mxu0
  %v7246 = vadd.f32 0.0, %v7245
  %v7247 = vpop.f32.mrf.mxu0
  %v7248 = vadd.f32 0.0, %v7247
  %7249 = vmatmul.bf16.gmra.mxu0 %v7040
  %v7250 = vpop.f32.mrf.mxu0
  %v7251 = vadd.f32 0.0, %v7250
  %v7252 = vpop.f32.mrf.mxu0
  %v7253 = vadd.f32 0.0, %v7252
  %7254 = vmatmul.bf16.gmra.mxu0 %v7041
  %v7255 = vpop.f32.mrf.mxu0
  %v7256 = vadd.f32 0.0, %v7255
  %v7257 = vpop.f32.mrf.mxu0
  %v7258 = vadd.f32 0.0, %v7257
  %7259 = vmatmul.bf16.gmra.mxu0 %v7042
  %v7260 = vpop.f32.mrf.mxu0
  %v7261 = vadd.f32 0.0, %v7260
  %v7262 = vpop.f32.mrf.mxu0
  %v7263 = vadd.f32 0.0, %v7262
  %7264 = vmatmul.bf16.gmra.mxu0 %v7043
  %v7265 = vpop.f32.mrf.mxu0
  %v7266 = vadd.f32 0.0, %v7265
  %v7267 = vpop.f32.mrf.mxu0
  %v7268 = vadd.f32 0.0, %v7267
  %7269 = vmatmul.bf16.gmra.mxu0 %v7044
  %v7270 = vpop.f32.mrf.mxu0
  %v7271 = vadd.f32 0.0, %v7270
  %v7272 = vpop.f32.mrf.mxu0
  %v7273 = vadd.f32 0.0, %v7272
  %7274 = vmatmul.bf16.gmra.mxu0 %v7045
  %v7275 = vpop.f32.mrf.mxu0
  %v7276 = vadd.f32 0.0, %v7275
  %v7277 = vpop.f32.mrf.mxu0
  %v7278 = vadd.f32 0.0, %v7277
  %7279 = vdwg.mxu0
  %v7280 = vld [vmem:[#allocation4] sm:$0xff]
  %v7281 = vld [vmem:[#allocation4 + $0x8] sm:$0xff]
  %v7282 = vld [vmem:[#allocation4 + $0x10] sm:$0xff]
  %v7283 = vld [vmem:[#allocation4 + $0x18] sm:$0xff]
  %v7284 = vld [vmem:[#allocation4 + $0x20] sm:$0xff]
  %v7285 = vld [vmem:[#allocation4 + $0x28] sm:$0xff]
  %v7286 = vld [vmem:[#allocation4 + $0x30] sm:$0xff]
  %v7287 = vld [vmem:[#allocation4 + $0x38] sm:$0xff]
  %v7288 = vld [vmem:[#allocation4 + $0x40] sm:$0xff]
  %v7289 = vld [vmem:[#allocation4 + $0x48] sm:$0xff]
  %v7290 = vld [vmem:[#allocation4 + $0x50] sm:$0xff]
  %v7291 = vld [vmem:[#allocation4 + $0x58] sm:$0xff]
  %v7292 = vld [vmem:[#allocation4 + $0x60] sm:$0xff]
  %v7293 = vld [vmem:[#allocation4 + $0x68] sm:$0xff]
  %v7294 = vld [vmem:[#allocation4 + $0x70] sm:$0xff]
  %v7295 = vld [vmem:[#allocation4 + $0x78] sm:$0xff]
  %v7296 = vld [vmem:[#allocation4 + $0x80] sm:$0xff]
  %v7297 = vld [vmem:[#allocation4 + $0x88] sm:$0xff]
  %v7298 = vld [vmem:[#allocation4 + $0x90] sm:$0xff]
  %v7299 = vld [vmem:[#allocation4 + $0x98] sm:$0xff]
  %v7300 = vld [vmem:[#allocation4 + $0xa0] sm:$0xff]
  %v7301 = vld [vmem:[#allocation4 + $0xa8] sm:$0xff]
  %v7302 = vld [vmem:[#allocation4 + $0xb0] sm:$0xff]
  %v7303 = vld [vmem:[#allocation4 + $0xb8] sm:$0xff]
  %v7304 = vld [vmem:[#allocation4 + $0xc0] sm:$0xff]
  %v7305 = vld [vmem:[#allocation4 + $0xc8] sm:$0xff]
  %v7306 = vld [vmem:[#allocation4 + $0xd0] sm:$0xff]
  %v7307 = vld [vmem:[#allocation4 + $0xd8] sm:$0xff]
  %v7308 = vld [vmem:[#allocation4 + $0xe0] sm:$0xff]
  %v7309 = vld [vmem:[#allocation4 + $0xe8] sm:$0xff]
  %v7310 = vld [vmem:[#allocation4 + $0xf0] sm:$0xff]
  %v7311 = vld [vmem:[#allocation4 + $0xf8] sm:$0xff]
  %v7312 = vld [vmem:[#allocation4 + $0x100] sm:$0xff]
  %v7313 = vld [vmem:[#allocation4 + $0x108] sm:$0xff]
  %v7314 = vld [vmem:[#allocation4 + $0x110] sm:$0xff]
  %v7315 = vld [vmem:[#allocation4 + $0x118] sm:$0xff]
  %v7316 = vld [vmem:[#allocation4 + $0x120] sm:$0xff]
  %v7317 = vld [vmem:[#allocation4 + $0x128] sm:$0xff]
  %v7318 = vld [vmem:[#allocation4 + $0x130] sm:$0xff]
  %v7319 = vld [vmem:[#allocation4 + $0x138] sm:$0xff]
  %v7320 = vld [vmem:[#allocation4 + $0x140] sm:$0xff]
  %v7321 = vld [vmem:[#allocation4 + $0x148] sm:$0xff]
  %v7322 = vld [vmem:[#allocation4 + $0x150] sm:$0xff]
  %v7323 = vld [vmem:[#allocation4 + $0x158] sm:$0xff]
  %v7324 = vld [vmem:[#allocation4 + $0x160] sm:$0xff]
  %v7325 = vld [vmem:[#allocation4 + $0x168] sm:$0xff]
  %v7326 = vld [vmem:[#allocation4 + $0x170] sm:$0xff]
  %v7327 = vld [vmem:[#allocation4 + $0x178] sm:$0xff]
  %v7328 = vld [vmem:[#allocation4 + $0x180] sm:$0xff]
  %v7329 = vld [vmem:[#allocation4 + $0x188] sm:$0xff]
  %v7330 = vld [vmem:[#allocation4 + $0x190] sm:$0xff]
  %v7331 = vld [vmem:[#allocation4 + $0x198] sm:$0xff]
  %v7332 = vld [vmem:[#allocation4 + $0x1a0] sm:$0xff]
  %v7333 = vld [vmem:[#allocation4 + $0x1a8] sm:$0xff]
  %v7334 = vld [vmem:[#allocation4 + $0x1b0] sm:$0xff]
  %v7335 = vld [vmem:[#allocation4 + $0x1b8] sm:$0xff]
  %v7336 = vld [vmem:[#allocation4 + $0x1c0] sm:$0xff]
  %v7337 = vld [vmem:[#allocation4 + $0x1c8] sm:$0xff]
  %v7338 = vld [vmem:[#allocation4 + $0x1d0] sm:$0xff]
  %v7339 = vld [vmem:[#allocation4 + $0x1d8] sm:$0xff]
  %v7340 = vld [vmem:[#allocation4 + $0x1e0] sm:$0xff]
  %v7341 = vld [vmem:[#allocation4 + $0x1e8] sm:$0xff]
  %v7342 = vld [vmem:[#allocation4 + $0x1f0] sm:$0xff]
  %v7343 = vld [vmem:[#allocation4 + $0x1f8] sm:$0xff]
  %v7344 = vadd.f32 %v7280, %v7121
  %v7345 = vadd.f32 %v7281, %v7123
  %v7346 = vadd.f32 %v7282, %v7126
  %v7347 = vadd.f32 %v7283, %v7128
  %v7348 = vadd.f32 %v7284, %v7131
  %v7349 = vadd.f32 %v7285, %v7133
  %v7350 = vadd.f32 %v7286, %v7136
  %v7351 = vadd.f32 %v7287, %v7138
  %v7352 = vadd.f32 %v7288, %v7141
  %v7353 = vadd.f32 %v7289, %v7143
  %v7354 = vadd.f32 %v7290, %v7146
  %v7355 = vadd.f32 %v7291, %v7148
  %v7356 = vadd.f32 %v7292, %v7151
  %v7357 = vadd.f32 %v7293, %v7153
  %v7358 = vadd.f32 %v7294, %v7156
  %v7359 = vadd.f32 %v7295, %v7158
  %v7360 = vadd.f32 %v7296, %v7161
  %v7361 = vadd.f32 %v7297, %v7163
  %v7362 = vadd.f32 %v7298, %v7166
  %v7363 = vadd.f32 %v7299, %v7168
  %v7364 = vadd.f32 %v7300, %v7171
  %v7365 = vadd.f32 %v7301, %v7173
  %v7366 = vadd.f32 %v7302, %v7176
  %v7367 = vadd.f32 %v7303, %v7178
  %v7368 = vadd.f32 %v7304, %v7181
  %v7369 = vadd.f32 %v7305, %v7183
  %v7370 = vadd.f32 %v7306, %v7186
  %v7371 = vadd.f32 %v7307, %v7188
  %v7372 = vadd.f32 %v7308, %v7191
  %v7373 = vadd.f32 %v7309, %v7193
  %v7374 = vadd.f32 %v7310, %v7196
  %v7375 = vadd.f32 %v7311, %v7198
  %v7376 = vadd.f32 %v7312, %v7201
  %v7377 = vadd.f32 %v7313, %v7203
  %v7378 = vadd.f32 %v7314, %v7206
  %v7379 = vadd.f32 %v7315, %v7208
  %v7380 = vadd.f32 %v7316, %v7211
  %v7381 = vadd.f32 %v7317, %v7213
  %v7382 = vadd.f32 %v7318, %v7216
  %v7383 = vadd.f32 %v7319, %v7218
  %v7384 = vadd.f32 %v7320, %v7221
  %v7385 = vadd.f32 %v7321, %v7223
  %v7386 = vadd.f32 %v7322, %v7226
  %v7387 = vadd.f32 %v7323, %v7228
  %v7388 = vadd.f32 %v7324, %v7231
  %v7389 = vadd.f32 %v7325, %v7233
  %v7390 = vadd.f32 %v7326, %v7236
  %v7391 = vadd.f32 %v7327, %v7238
  %v7392 = vadd.f32 %v7328, %v7241
  %v7393 = vadd.f32 %v7329, %v7243
  %v7394 = vadd.f32 %v7330, %v7246
  %v7395 = vadd.f32 %v7331, %v7248
  %v7396 = vadd.f32 %v7332, %v7251
  %v7397 = vadd.f32 %v7333, %v7253
  %v7398 = vadd.f32 %v7334, %v7256
  %v7399 = vadd.f32 %v7335, %v7258
  %v7400 = vadd.f32 %v7336, %v7261
  %v7401 = vadd.f32 %v7337, %v7263
  %v7402 = vadd.f32 %v7338, %v7266
  %v7403 = vadd.f32 %v7339, %v7268
  %v7404 = vadd.f32 %v7340, %v7271
  %v7405 = vadd.f32 %v7341, %v7273
  %v7406 = vadd.f32 %v7342, %v7276
  %v7407 = vadd.f32 %v7343, %v7278
  %7408 = vst [vmem:[#allocation4] sm:$0xff] %v7344
  %7409 = vst [vmem:[#allocation4 + $0x8] sm:$0xff] %v7345
  %7410 = vst [vmem:[#allocation4 + $0x10] sm:$0xff] %v7346
  %7411 = vst [vmem:[#allocation4 + $0x18] sm:$0xff] %v7347
  %7412 = vst [vmem:[#allocation4 + $0x20] sm:$0xff] %v7348
  %7413 = vst [vmem:[#allocation4 + $0x28] sm:$0xff] %v7349
  %7414 = vst [vmem:[#allocation4 + $0x30] sm:$0xff] %v7350
  %7415 = vst [vmem:[#allocation4 + $0x38] sm:$0xff] %v7351
  %7416 = vst [vmem:[#allocation4 + $0x40] sm:$0xff] %v7352
  %7417 = vst [vmem:[#allocation4 + $0x48] sm:$0xff] %v7353
  %7418 = vst [vmem:[#allocation4 + $0x50] sm:$0xff] %v7354
  %7419 = vst [vmem:[#allocation4 + $0x58] sm:$0xff] %v7355
  %7420 = vst [vmem:[#allocation4 + $0x60] sm:$0xff] %v7356
  %7421 = vst [vmem:[#allocation4 + $0x68] sm:$0xff] %v7357
  %7422 = vst [vmem:[#allocation4 + $0x70] sm:$0xff] %v7358
  %7423 = vst [vmem:[#allocation4 + $0x78] sm:$0xff] %v7359
  %7424 = vst [vmem:[#allocation4 + $0x80] sm:$0xff] %v7360
  %7425 = vst [vmem:[#allocation4 + $0x88] sm:$0xff] %v7361
  %7426 = vst [vmem:[#allocation4 + $0x90] sm:$0xff] %v7362
  %7427 = vst [vmem:[#allocation4 + $0x98] sm:$0xff] %v7363
  %7428 = vst [vmem:[#allocation4 + $0xa0] sm:$0xff] %v7364
  %7429 = vst [vmem:[#allocation4 + $0xa8] sm:$0xff] %v7365
  %7430 = vst [vmem:[#allocation4 + $0xb0] sm:$0xff] %v7366
  %7431 = vst [vmem:[#allocation4 + $0xb8] sm:$0xff] %v7367
  %7432 = vst [vmem:[#allocation4 + $0xc0] sm:$0xff] %v7368
  %7433 = vst [vmem:[#allocation4 + $0xc8] sm:$0xff] %v7369
  %7434 = vst [vmem:[#allocation4 + $0xd0] sm:$0xff] %v7370
  %7435 = vst [vmem:[#allocation4 + $0xd8] sm:$0xff] %v7371
  %7436 = vst [vmem:[#allocation4 + $0xe0] sm:$0xff] %v7372
  %7437 = vst [vmem:[#allocation4 + $0xe8] sm:$0xff] %v7373
  %7438 = vst [vmem:[#allocation4 + $0xf0] sm:$0xff] %v7374
  %7439 = vst [vmem:[#allocation4 + $0xf8] sm:$0xff] %v7375
  %7440 = vst [vmem:[#allocation4 + $0x100] sm:$0xff] %v7376
  %7441 = vst [vmem:[#allocation4 + $0x108] sm:$0xff] %v7377
  %7442 = vst [vmem:[#allocation4 + $0x110] sm:$0xff] %v7378
  %7443 = vst [vmem:[#allocation4 + $0x118] sm:$0xff] %v7379
  %7444 = vst [vmem:[#allocation4 + $0x120] sm:$0xff] %v7380
  %7445 = vst [vmem:[#allocation4 + $0x128] sm:$0xff] %v7381
  %7446 = vst [vmem:[#allocation4 + $0x130] sm:$0xff] %v7382
  %7447 = vst [vmem:[#allocation4 + $0x138] sm:$0xff] %v7383
  %7448 = vst [vmem:[#allocation4 + $0x140] sm:$0xff] %v7384
  %7449 = vst [vmem:[#allocation4 + $0x148] sm:$0xff] %v7385
  %7450 = vst [vmem:[#allocation4 + $0x150] sm:$0xff] %v7386
  %7451 = vst [vmem:[#allocation4 + $0x158] sm:$0xff] %v7387
  %7452 = vst [vmem:[#allocation4 + $0x160] sm:$0xff] %v7388
  %7453 = vst [vmem:[#allocation4 + $0x168] sm:$0xff] %v7389
  %7454 = vst [vmem:[#allocation4 + $0x170] sm:$0xff] %v7390
  %7455 = vst [vmem:[#allocation4 + $0x178] sm:$0xff] %v7391
  %7456 = vst [vmem:[#allocation4 + $0x180] sm:$0xff] %v7392
  %7457 = vst [vmem:[#allocation4 + $0x188] sm:$0xff] %v7393
  %7458 = vst [vmem:[#allocation4 + $0x190] sm:$0xff] %v7394
  %7459 = vst [vmem:[#allocation4 + $0x198] sm:$0xff] %v7395
  %7460 = vst [vmem:[#allocation4 + $0x1a0] sm:$0xff] %v7396
  %7461 = vst [vmem:[#allocation4 + $0x1a8] sm:$0xff] %v7397
  %7462 = vst [vmem:[#allocation4 + $0x1b0] sm:$0xff] %v7398
  %7463 = vst [vmem:[#allocation4 + $0x1b8] sm:$0xff] %v7399
  %7464 = vst [vmem:[#allocation4 + $0x1c0] sm:$0xff] %v7400
  %7465 = vst [vmem:[#allocation4 + $0x1c8] sm:$0xff] %v7401
  %7466 = vst [vmem:[#allocation4 + $0x1d0] sm:$0xff] %v7402
  %7467 = vst [vmem:[#allocation4 + $0x1d8] sm:$0xff] %v7403
  %7468 = vst [vmem:[#allocation4 + $0x1e0] sm:$0xff] %v7404
  %7469 = vst [vmem:[#allocation4 + $0x1e8] sm:$0xff] %v7405
  %7470 = vst [vmem:[#allocation4 + $0x1f0] sm:$0xff] %v7406
  %7471 = vst [vmem:[#allocation4 + $0x1f8] sm:$0xff] %v7407
  %v7472 = vld [vmem:[%s5448 + $0x1] sm:$0xff]
  %v7473 = vld [vmem:[%s5448 + $0x9] sm:$0xff]
  %v7474 = vld [vmem:[%s5448 + $0x19] sm:$0xff]
  %v7475 = vld [vmem:[%s5448 + $0x21] sm:$0xff]
  %v7476 = vld [vmem:[%s5448 + $0x31] sm:$0xff]
  %v7477 = vld [vmem:[%s5448 + $0x39] sm:$0xff]
  %v7478 = vld [vmem:[%s5448 + $0x49] sm:$0xff]
  %v7479 = vld [vmem:[%s5448 + $0x51] sm:$0xff]
  %v7480 = vld [vmem:[%s5448 + $0x61] sm:$0xff]
  %v7481 = vld [vmem:[%s5448 + $0x69] sm:$0xff]
  %v7482 = vld [vmem:[%s5448 + $0x79] sm:$0xff]
  %v7483 = vld [vmem:[%s5448 + $0x81] sm:$0xff]
  %v7484 = vld [vmem:[%s5448 + $0x91] sm:$0xff]
  %v7485 = vld [vmem:[%s5448 + $0x99] sm:$0xff]
  %v7486 = vld [vmem:[%s5448 + $0xa9] sm:$0xff]
  %v7487 = vld [vmem:[%s5448 + $0xb1] sm:$0xff]
  %v7488 = vld [vmem:[%s5448 + $0xc1] sm:$0xff]
  %v7489 = vld [vmem:[%s5448 + $0xc9] sm:$0xff]
  %v7490 = vld [vmem:[%s5448 + $0xd9] sm:$0xff]
  %v7491 = vld [vmem:[%s5448 + $0xe1] sm:$0xff]
  %v7492 = vld [vmem:[%s5448 + $0xf1] sm:$0xff]
  %v7493 = vld [vmem:[%s5448 + $0xf9] sm:$0xff]
  %v7494 = vld [vmem:[%s5448 + $0x109] sm:$0xff]
  %v7495 = vld [vmem:[%s5448 + $0x111] sm:$0xff]
  %v7496 = vld [vmem:[%s5448 + $0x121] sm:$0xff]
  %v7497 = vld [vmem:[%s5448 + $0x129] sm:$0xff]
  %v7498 = vld [vmem:[%s5448 + $0x139] sm:$0xff]
  %v7499 = vld [vmem:[%s5448 + $0x141] sm:$0xff]
  %v7500 = vld [vmem:[%s5448 + $0x151] sm:$0xff]
  %v7501 = vld [vmem:[%s5448 + $0x159] sm:$0xff]
  %v7502 = vld [vmem:[%s5448 + $0x169] sm:$0xff]
  %v7503 = vld [vmem:[%s5448 + $0x171] sm:$0xff]
  %v7504 = vld [vmem:[%s5448 + $0x1b1] sm:$0xff]
  %v7505 = vld [vmem:[%s5448 + $0x1b9] sm:$0xff]
  %v7506 = vld [vmem:[%s5448 + $0x1c9] sm:$0xff]
  %v7507 = vld [vmem:[%s5448 + $0x1d1] sm:$0xff]
  %v7508 = vld [vmem:[%s5448 + $0x1e1] sm:$0xff]
  %v7509 = vld [vmem:[%s5448 + $0x1e9] sm:$0xff]
  %v7510 = vld [vmem:[%s5448 + $0x1f9] sm:$0xff]
  %v7511 = vld [vmem:[%s5448 + $0x201] sm:$0xff]
  %v7512 = vld [vmem:[%s5448 + $0x211] sm:$0xff]
  %v7513 = vld [vmem:[%s5448 + $0x219] sm:$0xff]
  %v7514 = vld [vmem:[%s5448 + $0x229] sm:$0xff]
  %v7515 = vld [vmem:[%s5448 + $0x231] sm:$0xff]
  %v7516 = vld [vmem:[%s5448 + $0x241] sm:$0xff]
  %v7517 = vld [vmem:[%s5448 + $0x249] sm:$0xff]
  %v7518 = vld [vmem:[%s5448 + $0x259] sm:$0xff]
  %v7519 = vld [vmem:[%s5448 + $0x261] sm:$0xff]
  %v7520 = vld [vmem:[%s5448 + $0x271] sm:$0xff]
  %v7521 = vld [vmem:[%s5448 + $0x279] sm:$0xff]
  %v7522 = vld [vmem:[%s5448 + $0x289] sm:$0xff]
  %v7523 = vld [vmem:[%s5448 + $0x291] sm:$0xff]
  %v7524 = vld [vmem:[%s5448 + $0x2a1] sm:$0xff]
  %v7525 = vld [vmem:[%s5448 + $0x2a9] sm:$0xff]
  %v7526 = vld [vmem:[%s5448 + $0x2b9] sm:$0xff]
  %v7527 = vld [vmem:[%s5448 + $0x2c1] sm:$0xff]
  %v7528 = vld [vmem:[%s5448 + $0x2d1] sm:$0xff]
  %v7529 = vld [vmem:[%s5448 + $0x2d9] sm:$0xff]
  %v7530 = vld [vmem:[%s5448 + $0x2e9] sm:$0xff]
  %v7531 = vld [vmem:[%s5448 + $0x2f1] sm:$0xff]
  %v7532 = vld [vmem:[%s5448 + $0x301] sm:$0xff]
  %v7533 = vld [vmem:[%s5448 + $0x309] sm:$0xff]
  %v7534 = vld [vmem:[%s5448 + $0x319] sm:$0xff]
  %v7535 = vld [vmem:[%s5448 + $0x321] sm:$0xff]
  %v7536 = vpack.c.bf16 %v7473, %v7472
  %v7537 = vpack.c.bf16 %v7475, %v7474
  %v7538 = vpack.c.bf16 %v7477, %v7476
  %v7539 = vpack.c.bf16 %v7479, %v7478
  %v7540 = vpack.c.bf16 %v7481, %v7480
  %v7541 = vpack.c.bf16 %v7483, %v7482
  %v7542 = vpack.c.bf16 %v7485, %v7484
  %v7543 = vpack.c.bf16 %v7487, %v7486
  %v7544 = vpack.c.bf16 %v7489, %v7488
  %v7545 = vpack.c.bf16 %v7491, %v7490
  %v7546 = vpack.c.bf16 %v7493, %v7492
  %v7547 = vpack.c.bf16 %v7495, %v7494
  %v7548 = vpack.c.bf16 %v7497, %v7496
  %v7549 = vpack.c.bf16 %v7499, %v7498
  %v7550 = vpack.c.bf16 %v7501, %v7500
  %v7551 = vpack.c.bf16 %v7503, %v7502
  %v7552 = vpack.c.bf16 %v7505, %v7504
  %v7553 = vpack.c.bf16 %v7507, %v7506
  %v7554 = vpack.c.bf16 %v7509, %v7508
  %v7555 = vpack.c.bf16 %v7511, %v7510
  %v7556 = vpack.c.bf16 %v7513, %v7512
  %v7557 = vpack.c.bf16 %v7515, %v7514
  %v7558 = vpack.c.bf16 %v7517, %v7516
  %v7559 = vpack.c.bf16 %v7519, %v7518
  %v7560 = vpack.c.bf16 %v7521, %v7520
  %v7561 = vpack.c.bf16 %v7523, %v7522
  %v7562 = vpack.c.bf16 %v7525, %v7524
  %v7563 = vpack.c.bf16 %v7527, %v7526
  %v7564 = vpack.c.bf16 %v7529, %v7528
  %v7565 = vpack.c.bf16 %v7531, %v7530
  %v7566 = vpack.c.bf16 %v7533, %v7532
  %v7567 = vpack.c.bf16 %v7535, %v7534
  %s7568 = scalar_lea.vmem %s4, 256
  %v7569 = vld [vmem:[%s7568] sm:$0xf]
  %v7570 = vld [vmem:[%s7568 + $0x4] sm:$0xf]
  %v7571 = vld [vmem:[%s7568 + $0x8] sm:$0xf]
  %v7572 = vld [vmem:[%s7568 + $0xc] sm:$0xf]
  %v7573 = vld [vmem:[%s7568 + $0x10] sm:$0xf]
  %v7574 = vld [vmem:[%s7568 + $0x14] sm:$0xf]
  %v7575 = vld [vmem:[%s7568 + $0x18] sm:$0xf]
  %v7576 = vld [vmem:[%s7568 + $0x1c] sm:$0xf]
  %v7577 = vld [vmem:[%s7568 + $0x20] sm:$0xf]
  %v7578 = vld [vmem:[%s7568 + $0x24] sm:$0xf]
  %v7579 = vld [vmem:[%s7568 + $0x28] sm:$0xf]
  %v7580 = vld [vmem:[%s7568 + $0x2c] sm:$0xf]
  %v7581 = vld [vmem:[%s7568 + $0x30] sm:$0xf]
  %v7582 = vld [vmem:[%s7568 + $0x34] sm:$0xf]
  %v7583 = vld [vmem:[%s7568 + $0x38] sm:$0xf]
  %v7584 = vld [vmem:[%s7568 + $0x3c] sm:$0xf]
  %v7601 = vunpack.c.l.b16 %v7569
  %v7602 = vunpack.c.l.b16 %v7570
  %v7603 = vunpack.c.l.b16 %v7571
  %v7604 = vunpack.c.l.b16 %v7572
  %v7605 = vunpack.c.l.b16 %v7573
  %v7606 = vunpack.c.l.b16 %v7574
  %v7607 = vunpack.c.l.b16 %v7575
  %v7608 = vunpack.c.l.b16 %v7576
  %v7609 = vunpack.c.l.b16 %v7577
  %v7610 = vunpack.c.l.b16 %v7578
  %v7611 = vunpack.c.l.b16 %v7579
  %v7612 = vunpack.c.l.b16 %v7580
  %v7613 = vunpack.c.l.b16 %v7581
  %v7614 = vunpack.c.l.b16 %v7582
  %v7615 = vunpack.c.l.b16 %v7583
  %v7616 = vunpack.c.l.b16 %v7584
  %v7617 = vpack.c.b16 %v7602, %v7601
  %v7618 = vpack.c.b16 %v7604, %v7603
  %v7619 = vpack.c.b16 %v7606, %v7605
  %v7620 = vpack.c.b16 %v7608, %v7607
  %v7621 = vpack.c.b16 %v7610, %v7609
  %v7622 = vpack.c.b16 %v7612, %v7611
  %v7623 = vpack.c.b16 %v7614, %v7613
  %v7624 = vpack.c.b16 %v7616, %v7615
  %7633 = vmatpush.bf16.msra.mxu0 %v7624
  %7634 = vmatpush.bf16.msra.mxu0 %v7623
  %7635 = vmatpush.bf16.msra.mxu0 %v7622
  %7636 = vmatpush.bf16.msra.mxu0 %v7621
  %7637 = vmatpush.bf16.msra.mxu0 %v7620
  %7638 = vmatpush.bf16.msra.mxu0 %v7619
  %7639 = vmatpush.bf16.msra.mxu0 %v7618
  %7640 = vmatpush.bf16.msra.mxu0 %v7617
  %7641 = vmatmul.bf16.gmra.mxu0 %v7536
  %v7642 = vpop.f32.mrf.mxu0
  %v7643 = vadd.f32 0.0, %v7642
  %v7644 = vpop.f32.mrf.mxu0
  %v7645 = vadd.f32 0.0, %v7644
  %7646 = vmatmul.bf16.gmra.mxu0 %v7537
  %v7647 = vpop.f32.mrf.mxu0
  %v7648 = vadd.f32 0.0, %v7647
  %v7649 = vpop.f32.mrf.mxu0
  %v7650 = vadd.f32 0.0, %v7649
  %7651 = vmatmul.bf16.gmra.mxu0 %v7538
  %v7652 = vpop.f32.mrf.mxu0
  %v7653 = vadd.f32 0.0, %v7652
  %v7654 = vpop.f32.mrf.mxu0
  %v7655 = vadd.f32 0.0, %v7654
  %7656 = vmatmul.bf16.gmra.mxu0 %v7539
  %v7657 = vpop.f32.mrf.mxu0
  %v7658 = vadd.f32 0.0, %v7657
  %v7659 = vpop.f32.mrf.mxu0
  %v7660 = vadd.f32 0.0, %v7659
  %7661 = vmatmul.bf16.gmra.mxu0 %v7540
  %v7662 = vpop.f32.mrf.mxu0
  %v7663 = vadd.f32 0.0, %v7662
  %v7664 = vpop.f32.mrf.mxu0
  %v7665 = vadd.f32 0.0, %v7664
  %7666 = vmatmul.bf16.gmra.mxu0 %v7541
  %v7667 = vpop.f32.mrf.mxu0
  %v7668 = vadd.f32 0.0, %v7667
  %v7669 = vpop.f32.mrf.mxu0
  %v7670 = vadd.f32 0.0, %v7669
  %7671 = vmatmul.bf16.gmra.mxu0 %v7542
  %v7672 = vpop.f32.mrf.mxu0
  %v7673 = vadd.f32 0.0, %v7672
  %v7674 = vpop.f32.mrf.mxu0
  %v7675 = vadd.f32 0.0, %v7674
  %7676 = vmatmul.bf16.gmra.mxu0 %v7543
  %v7677 = vpop.f32.mrf.mxu0
  %v7678 = vadd.f32 0.0, %v7677
  %v7679 = vpop.f32.mrf.mxu0
  %v7680 = vadd.f32 0.0, %v7679
  %7681 = vmatmul.bf16.gmra.mxu0 %v7544
  %v7682 = vpop.f32.mrf.mxu0
  %v7683 = vadd.f32 0.0, %v7682
  %v7684 = vpop.f32.mrf.mxu0
  %v7685 = vadd.f32 0.0, %v7684
  %7686 = vmatmul.bf16.gmra.mxu0 %v7545
  %v7687 = vpop.f32.mrf.mxu0
  %v7688 = vadd.f32 0.0, %v7687
  %v7689 = vpop.f32.mrf.mxu0
  %v7690 = vadd.f32 0.0, %v7689
  %7691 = vmatmul.bf16.gmra.mxu0 %v7546
  %v7692 = vpop.f32.mrf.mxu0
  %v7693 = vadd.f32 0.0, %v7692
  %v7694 = vpop.f32.mrf.mxu0
  %v7695 = vadd.f32 0.0, %v7694
  %7696 = vmatmul.bf16.gmra.mxu0 %v7547
  %v7697 = vpop.f32.mrf.mxu0
  %v7698 = vadd.f32 0.0, %v7697
  %v7699 = vpop.f32.mrf.mxu0
  %v7700 = vadd.f32 0.0, %v7699
  %7701 = vmatmul.bf16.gmra.mxu0 %v7548
  %v7702 = vpop.f32.mrf.mxu0
  %v7703 = vadd.f32 0.0, %v7702
  %v7704 = vpop.f32.mrf.mxu0
  %v7705 = vadd.f32 0.0, %v7704
  %7706 = vmatmul.bf16.gmra.mxu0 %v7549
  %v7707 = vpop.f32.mrf.mxu0
  %v7708 = vadd.f32 0.0, %v7707
  %v7709 = vpop.f32.mrf.mxu0
  %v7710 = vadd.f32 0.0, %v7709
  %7711 = vmatmul.bf16.gmra.mxu0 %v7550
  %v7712 = vpop.f32.mrf.mxu0
  %v7713 = vadd.f32 0.0, %v7712
  %v7714 = vpop.f32.mrf.mxu0
  %v7715 = vadd.f32 0.0, %v7714
  %7716 = vmatmul.bf16.gmra.mxu0 %v7551
  %v7717 = vpop.f32.mrf.mxu0
  %v7718 = vadd.f32 0.0, %v7717
  %v7719 = vpop.f32.mrf.mxu0
  %v7720 = vadd.f32 0.0, %v7719
  %7721 = vmatmul.bf16.gmra.mxu0 %v7552
  %v7722 = vpop.f32.mrf.mxu0
  %v7723 = vadd.f32 0.0, %v7722
  %v7724 = vpop.f32.mrf.mxu0
  %v7725 = vadd.f32 0.0, %v7724
  %7726 = vmatmul.bf16.gmra.mxu0 %v7553
  %v7727 = vpop.f32.mrf.mxu0
  %v7728 = vadd.f32 0.0, %v7727
  %v7729 = vpop.f32.mrf.mxu0
  %v7730 = vadd.f32 0.0, %v7729
  %7731 = vmatmul.bf16.gmra.mxu0 %v7554
  %v7732 = vpop.f32.mrf.mxu0
  %v7733 = vadd.f32 0.0, %v7732
  %v7734 = vpop.f32.mrf.mxu0
  %v7735 = vadd.f32 0.0, %v7734
  %7736 = vmatmul.bf16.gmra.mxu0 %v7555
  %v7737 = vpop.f32.mrf.mxu0
  %v7738 = vadd.f32 0.0, %v7737
  %v7739 = vpop.f32.mrf.mxu0
  %v7740 = vadd.f32 0.0, %v7739
  %7741 = vmatmul.bf16.gmra.mxu0 %v7556
  %v7742 = vpop.f32.mrf.mxu0
  %v7743 = vadd.f32 0.0, %v7742
  %v7744 = vpop.f32.mrf.mxu0
  %v7745 = vadd.f32 0.0, %v7744
  %7746 = vmatmul.bf16.gmra.mxu0 %v7557
  %v7747 = vpop.f32.mrf.mxu0
  %v7748 = vadd.f32 0.0, %v7747
  %v7749 = vpop.f32.mrf.mxu0
  %v7750 = vadd.f32 0.0, %v7749
  %7751 = vmatmul.bf16.gmra.mxu0 %v7558
  %v7752 = vpop.f32.mrf.mxu0
  %v7753 = vadd.f32 0.0, %v7752
  %v7754 = vpop.f32.mrf.mxu0
  %v7755 = vadd.f32 0.0, %v7754
  %7756 = vmatmul.bf16.gmra.mxu0 %v7559
  %v7757 = vpop.f32.mrf.mxu0
  %v7758 = vadd.f32 0.0, %v7757
  %v7759 = vpop.f32.mrf.mxu0
  %v7760 = vadd.f32 0.0, %v7759
  %7761 = vmatmul.bf16.gmra.mxu0 %v7560
  %v7762 = vpop.f32.mrf.mxu0
  %v7763 = vadd.f32 0.0, %v7762
  %v7764 = vpop.f32.mrf.mxu0
  %v7765 = vadd.f32 0.0, %v7764
  %7766 = vmatmul.bf16.gmra.mxu0 %v7561
  %v7767 = vpop.f32.mrf.mxu0
  %v7768 = vadd.f32 0.0, %v7767
  %v7769 = vpop.f32.mrf.mxu0
  %v7770 = vadd.f32 0.0, %v7769
  %7771 = vmatmul.bf16.gmra.mxu0 %v7562
  %v7772 = vpop.f32.mrf.mxu0
  %v7773 = vadd.f32 0.0, %v7772
  %v7774 = vpop.f32.mrf.mxu0
  %v7775 = vadd.f32 0.0, %v7774
  %7776 = vmatmul.bf16.gmra.mxu0 %v7563
  %v7777 = vpop.f32.mrf.mxu0
  %v7778 = vadd.f32 0.0, %v7777
  %v7779 = vpop.f32.mrf.mxu0
  %v7780 = vadd.f32 0.0, %v7779
  %7781 = vmatmul.bf16.gmra.mxu0 %v7564
  %v7782 = vpop.f32.mrf.mxu0
  %v7783 = vadd.f32 0.0, %v7782
  %v7784 = vpop.f32.mrf.mxu0
  %v7785 = vadd.f32 0.0, %v7784
  %7786 = vmatmul.bf16.gmra.mxu0 %v7565
  %v7787 = vpop.f32.mrf.mxu0
  %v7788 = vadd.f32 0.0, %v7787
  %v7789 = vpop.f32.mrf.mxu0
  %v7790 = vadd.f32 0.0, %v7789
  %7791 = vmatmul.bf16.gmra.mxu0 %v7566
  %v7792 = vpop.f32.mrf.mxu0
  %v7793 = vadd.f32 0.0, %v7792
  %v7794 = vpop.f32.mrf.mxu0
  %v7795 = vadd.f32 0.0, %v7794
  %7796 = vmatmul.bf16.gmra.mxu0 %v7567
  %v7797 = vpop.f32.mrf.mxu0
  %v7798 = vadd.f32 0.0, %v7797
  %v7799 = vpop.f32.mrf.mxu0
  %v7800 = vadd.f32 0.0, %v7799
  %7801 = vdwg.mxu0
  %v7802 = vld [vmem:[#allocation4] sm:$0xff]
  %v7803 = vld [vmem:[#allocation4 + $0x8] sm:$0xff]
  %v7804 = vld [vmem:[#allocation4 + $0x10] sm:$0xff]
  %v7805 = vld [vmem:[#allocation4 + $0x18] sm:$0xff]
  %v7806 = vld [vmem:[#allocation4 + $0x20] sm:$0xff]
  %v7807 = vld [vmem:[#allocation4 + $0x28] sm:$0xff]
  %v7808 = vld [vmem:[#allocation4 + $0x30] sm:$0xff]
  %v7809 = vld [vmem:[#allocation4 + $0x38] sm:$0xff]
  %v7810 = vld [vmem:[#allocation4 + $0x40] sm:$0xff]
  %v7811 = vld [vmem:[#allocation4 + $0x48] sm:$0xff]
  %v7812 = vld [vmem:[#allocation4 + $0x50] sm:$0xff]
  %v7813 = vld [vmem:[#allocation4 + $0x58] sm:$0xff]
  %v7814 = vld [vmem:[#allocation4 + $0x60] sm:$0xff]
  %v7815 = vld [vmem:[#allocation4 + $0x68] sm:$0xff]
  %v7816 = vld [vmem:[#allocation4 + $0x70] sm:$0xff]
  %v7817 = vld [vmem:[#allocation4 + $0x78] sm:$0xff]
  %v7818 = vld [vmem:[#allocation4 + $0x80] sm:$0xff]
  %v7819 = vld [vmem:[#allocation4 + $0x88] sm:$0xff]
  %v7820 = vld [vmem:[#allocation4 + $0x90] sm:$0xff]
  %v7821 = vld [vmem:[#allocation4 + $0x98] sm:$0xff]
  %v7822 = vld [vmem:[#allocation4 + $0xa0] sm:$0xff]
  %v7823 = vld [vmem:[#allocation4 + $0xa8] sm:$0xff]
  %v7824 = vld [vmem:[#allocation4 + $0xb0] sm:$0xff]
  %v7825 = vld [vmem:[#allocation4 + $0xb8] sm:$0xff]
  %v7826 = vld [vmem:[#allocation4 + $0xc0] sm:$0xff]
  %v7827 = vld [vmem:[#allocation4 + $0xc8] sm:$0xff]
  %v7828 = vld [vmem:[#allocation4 + $0xd0] sm:$0xff]
  %v7829 = vld [vmem:[#allocation4 + $0xd8] sm:$0xff]
  %v7830 = vld [vmem:[#allocation4 + $0xe0] sm:$0xff]
  %v7831 = vld [vmem:[#allocation4 + $0xe8] sm:$0xff]
  %v7832 = vld [vmem:[#allocation4 + $0xf0] sm:$0xff]
  %v7833 = vld [vmem:[#allocation4 + $0xf8] sm:$0xff]
  %v7834 = vld [vmem:[#allocation4 + $0x100] sm:$0xff]
  %v7835 = vld [vmem:[#allocation4 + $0x108] sm:$0xff]
  %v7836 = vld [vmem:[#allocation4 + $0x110] sm:$0xff]
  %v7837 = vld [vmem:[#allocation4 + $0x118] sm:$0xff]
  %v7838 = vld [vmem:[#allocation4 + $0x120] sm:$0xff]
  %v7839 = vld [vmem:[#allocation4 + $0x128] sm:$0xff]
  %v7840 = vld [vmem:[#allocation4 + $0x130] sm:$0xff]
  %v7841 = vld [vmem:[#allocation4 + $0x138] sm:$0xff]
  %v7842 = vld [vmem:[#allocation4 + $0x140] sm:$0xff]
  %v7843 = vld [vmem:[#allocation4 + $0x148] sm:$0xff]
  %v7844 = vld [vmem:[#allocation4 + $0x150] sm:$0xff]
  %v7845 = vld [vmem:[#allocation4 + $0x158] sm:$0xff]
  %v7846 = vld [vmem:[#allocation4 + $0x160] sm:$0xff]
  %v7847 = vld [vmem:[#allocation4 + $0x168] sm:$0xff]
  %v7848 = vld [vmem:[#allocation4 + $0x170] sm:$0xff]
  %v7849 = vld [vmem:[#allocation4 + $0x178] sm:$0xff]
  %v7850 = vld [vmem:[#allocation4 + $0x180] sm:$0xff]
  %v7851 = vld [vmem:[#allocation4 + $0x188] sm:$0xff]
  %v7852 = vld [vmem:[#allocation4 + $0x190] sm:$0xff]
  %v7853 = vld [vmem:[#allocation4 + $0x198] sm:$0xff]
  %v7854 = vld [vmem:[#allocation4 + $0x1a0] sm:$0xff]
  %v7855 = vld [vmem:[#allocation4 + $0x1a8] sm:$0xff]
  %v7856 = vld [vmem:[#allocation4 + $0x1b0] sm:$0xff]
  %v7857 = vld [vmem:[#allocation4 + $0x1b8] sm:$0xff]
  %v7858 = vld [vmem:[#allocation4 + $0x1c0] sm:$0xff]
  %v7859 = vld [vmem:[#allocation4 + $0x1c8] sm:$0xff]
  %v7860 = vld [vmem:[#allocation4 + $0x1d0] sm:$0xff]
  %v7861 = vld [vmem:[#allocation4 + $0x1d8] sm:$0xff]
  %v7862 = vld [vmem:[#allocation4 + $0x1e0] sm:$0xff]
  %v7863 = vld [vmem:[#allocation4 + $0x1e8] sm:$0xff]
  %v7864 = vld [vmem:[#allocation4 + $0x1f0] sm:$0xff]
  %v7865 = vld [vmem:[#allocation4 + $0x1f8] sm:$0xff]
  %v7866 = vadd.f32 %v7802, %v7643
  %v7867 = vadd.f32 %v7803, %v7645
  %v7868 = vadd.f32 %v7804, %v7648
  %v7869 = vadd.f32 %v7805, %v7650
  %v7870 = vadd.f32 %v7806, %v7653
  %v7871 = vadd.f32 %v7807, %v7655
  %v7872 = vadd.f32 %v7808, %v7658
  %v7873 = vadd.f32 %v7809, %v7660
  %v7874 = vadd.f32 %v7810, %v7663
  %v7875 = vadd.f32 %v7811, %v7665
  %v7876 = vadd.f32 %v7812, %v7668
  %v7877 = vadd.f32 %v7813, %v7670
  %v7878 = vadd.f32 %v7814, %v7673
  %v7879 = vadd.f32 %v7815, %v7675
  %v7880 = vadd.f32 %v7816, %v7678
  %v7881 = vadd.f32 %v7817, %v7680
  %v7882 = vadd.f32 %v7818, %v7683
  %v7883 = vadd.f32 %v7819, %v7685
  %v7884 = vadd.f32 %v7820, %v7688
  %v7885 = vadd.f32 %v7821, %v7690
  %v7886 = vadd.f32 %v7822, %v7693
  %v7887 = vadd.f32 %v7823, %v7695
  %v7888 = vadd.f32 %v7824, %v7698
  %v7889 = vadd.f32 %v7825, %v7700
  %v7890 = vadd.f32 %v7826, %v7703
  %v7891 = vadd.f32 %v7827, %v7705
  %v7892 = vadd.f32 %v7828, %v7708
  %v7893 = vadd.f32 %v7829, %v7710
  %v7894 = vadd.f32 %v7830, %v7713
  %v7895 = vadd.f32 %v7831, %v7715
  %v7896 = vadd.f32 %v7832, %v7718
  %v7897 = vadd.f32 %v7833, %v7720
  %v7898 = vadd.f32 %v7834, %v7723
  %v7899 = vadd.f32 %v7835, %v7725
  %v7900 = vadd.f32 %v7836, %v7728
  %v7901 = vadd.f32 %v7837, %v7730
  %v7902 = vadd.f32 %v7838, %v7733
  %v7903 = vadd.f32 %v7839, %v7735
  %v7904 = vadd.f32 %v7840, %v7738
  %v7905 = vadd.f32 %v7841, %v7740
  %v7906 = vadd.f32 %v7842, %v7743
  %v7907 = vadd.f32 %v7843, %v7745
  %v7908 = vadd.f32 %v7844, %v7748
  %v7909 = vadd.f32 %v7845, %v7750
  %v7910 = vadd.f32 %v7846, %v7753
  %v7911 = vadd.f32 %v7847, %v7755
  %v7912 = vadd.f32 %v7848, %v7758
  %v7913 = vadd.f32 %v7849, %v7760
  %v7914 = vadd.f32 %v7850, %v7763
  %v7915 = vadd.f32 %v7851, %v7765
  %v7916 = vadd.f32 %v7852, %v7768
  %v7917 = vadd.f32 %v7853, %v7770
  %v7918 = vadd.f32 %v7854, %v7773
  %v7919 = vadd.f32 %v7855, %v7775
  %v7920 = vadd.f32 %v7856, %v7778
  %v7921 = vadd.f32 %v7857, %v7780
  %v7922 = vadd.f32 %v7858, %v7783
  %v7923 = vadd.f32 %v7859, %v7785
  %v7924 = vadd.f32 %v7860, %v7788
  %v7925 = vadd.f32 %v7861, %v7790
  %v7926 = vadd.f32 %v7862, %v7793
  %v7927 = vadd.f32 %v7863, %v7795
  %v7928 = vadd.f32 %v7864, %v7798
  %v7929 = vadd.f32 %v7865, %v7800
  %7930 = vst [vmem:[#allocation4] sm:$0xff] %v7866
  %7931 = vst [vmem:[#allocation4 + $0x8] sm:$0xff] %v7867
  %7932 = vst [vmem:[#allocation4 + $0x10] sm:$0xff] %v7868
  %7933 = vst [vmem:[#allocation4 + $0x18] sm:$0xff] %v7869
  %7934 = vst [vmem:[#allocation4 + $0x20] sm:$0xff] %v7870
  %7935 = vst [vmem:[#allocation4 + $0x28] sm:$0xff] %v7871
  %7936 = vst [vmem:[#allocation4 + $0x30] sm:$0xff] %v7872
  %7937 = vst [vmem:[#allocation4 + $0x38] sm:$0xff] %v7873
  %7938 = vst [vmem:[#allocation4 + $0x40] sm:$0xff] %v7874
  %7939 = vst [vmem:[#allocation4 + $0x48] sm:$0xff] %v7875
  %7940 = vst [vmem:[#allocation4 + $0x50] sm:$0xff] %v7876
  %7941 = vst [vmem:[#allocation4 + $0x58] sm:$0xff] %v7877
  %7942 = vst [vmem:[#allocation4 + $0x60] sm:$0xff] %v7878
  %7943 = vst [vmem:[#allocation4 + $0x68] sm:$0xff] %v7879
  %7944 = vst [vmem:[#allocation4 + $0x70] sm:$0xff] %v7880
  %7945 = vst [vmem:[#allocation4 + $0x78] sm:$0xff] %v7881
  %7946 = vst [vmem:[#allocation4 + $0x80] sm:$0xff] %v7882
  %7947 = vst [vmem:[#allocation4 + $0x88] sm:$0xff] %v7883
  %7948 = vst [vmem:[#allocation4 + $0x90] sm:$0xff] %v7884
  %7949 = vst [vmem:[#allocation4 + $0x98] sm:$0xff] %v7885
  %7950 = vst [vmem:[#allocation4 + $0xa0] sm:$0xff] %v7886
  %7951 = vst [vmem:[#allocation4 + $0xa8] sm:$0xff] %v7887
  %7952 = vst [vmem:[#allocation4 + $0xb0] sm:$0xff] %v7888
  %7953 = vst [vmem:[#allocation4 + $0xb8] sm:$0xff] %v7889
  %7954 = vst [vmem:[#allocation4 + $0xc0] sm:$0xff] %v7890
  %7955 = vst [vmem:[#allocation4 + $0xc8] sm:$0xff] %v7891
  %7956 = vst [vmem:[#allocation4 + $0xd0] sm:$0xff] %v7892
  %7957 = vst [vmem:[#allocation4 + $0xd8] sm:$0xff] %v7893
  %7958 = vst [vmem:[#allocation4 + $0xe0] sm:$0xff] %v7894
  %7959 = vst [vmem:[#allocation4 + $0xe8] sm:$0xff] %v7895
  %7960 = vst [vmem:[#allocation4 + $0xf0] sm:$0xff] %v7896
  %7961 = vst [vmem:[#allocation4 + $0xf8] sm:$0xff] %v7897
  %7962 = vst [vmem:[#allocation4 + $0x100] sm:$0xff] %v7898
  %7963 = vst [vmem:[#allocation4 + $0x108] sm:$0xff] %v7899
  %7964 = vst [vmem:[#allocation4 + $0x110] sm:$0xff] %v7900
  %7965 = vst [vmem:[#allocation4 + $0x118] sm:$0xff] %v7901
  %7966 = vst [vmem:[#allocation4 + $0x120] sm:$0xff] %v7902
  %7967 = vst [vmem:[#allocation4 + $0x128] sm:$0xff] %v7903
  %7968 = vst [vmem:[#allocation4 + $0x130] sm:$0xff] %v7904
  %7969 = vst [vmem:[#allocation4 + $0x138] sm:$0xff] %v7905
  %7970 = vst [vmem:[#allocation4 + $0x140] sm:$0xff] %v7906
  %7971 = vst [vmem:[#allocation4 + $0x148] sm:$0xff] %v7907
  %7972 = vst [vmem:[#allocation4 + $0x150] sm:$0xff] %v7908
  %7973 = vst [vmem:[#allocation4 + $0x158] sm:$0xff] %v7909
  %7974 = vst [vmem:[#allocation4 + $0x160] sm:$0xff] %v7910
  %7975 = vst [vmem:[#allocation4 + $0x168] sm:$0xff] %v7911
  %7976 = vst [vmem:[#allocation4 + $0x170] sm:$0xff] %v7912
  %7977 = vst [vmem:[#allocation4 + $0x178] sm:$0xff] %v7913
  %7978 = vst [vmem:[#allocation4 + $0x180] sm:$0xff] %v7914
  %7979 = vst [vmem:[#allocation4 + $0x188] sm:$0xff] %v7915
  %7980 = vst [vmem:[#allocation4 + $0x190] sm:$0xff] %v7916
  %7981 = vst [vmem:[#allocation4 + $0x198] sm:$0xff] %v7917
  %7982 = vst [vmem:[#allocation4 + $0x1a0] sm:$0xff] %v7918
  %7983 = vst [vmem:[#allocation4 + $0x1a8] sm:$0xff] %v7919
  %7984 = vst [vmem:[#allocation4 + $0x1b0] sm:$0xff] %v7920
  %7985 = vst [vmem:[#allocation4 + $0x1b8] sm:$0xff] %v7921
  %7986 = vst [vmem:[#allocation4 + $0x1c0] sm:$0xff] %v7922
  %7987 = vst [vmem:[#allocation4 + $0x1c8] sm:$0xff] %v7923
  %7988 = vst [vmem:[#allocation4 + $0x1d0] sm:$0xff] %v7924
  %7989 = vst [vmem:[#allocation4 + $0x1d8] sm:$0xff] %v7925
  %7990 = vst [vmem:[#allocation4 + $0x1e0] sm:$0xff] %v7926
  %7991 = vst [vmem:[#allocation4 + $0x1e8] sm:$0xff] %v7927
  %7992 = vst [vmem:[#allocation4 + $0x1f0] sm:$0xff] %v7928
  %7993 = vst [vmem:[#allocation4 + $0x1f8] sm:$0xff] %v7929
  %v7994 = vld [vmem:[%s5448 + $0x2] sm:$0xff]
  %v7995 = vld [vmem:[%s5448 + $0xa] sm:$0xff]
  %v7996 = vld [vmem:[%s5448 + $0x1a] sm:$0xff]
  %v7997 = vld [vmem:[%s5448 + $0x22] sm:$0xff]
  %v7998 = vld [vmem:[%s5448 + $0x32] sm:$0xff]
  %v7999 = vld [vmem:[%s5448 + $0x3a] sm:$0xff]
  %v8000 = vld [vmem:[%s5448 + $0x4a] sm:$0xff]
  %v8001 = vld [vmem:[%s5448 + $0x52] sm:$0xff]
  %v8002 = vld [vmem:[%s5448 + $0x62] sm:$0xff]
  %v8003 = vld [vmem:[%s5448 + $0x6a] sm:$0xff]
  %v8004 = vld [vmem:[%s5448 + $0x7a] sm:$0xff]
  %v8005 = vld [vmem:[%s5448 + $0x82] sm:$0xff]
  %v8006 = vld [vmem:[%s5448 + $0x92] sm:$0xff]
  %v8007 = vld [vmem:[%s5448 + $0x9a] sm:$0xff]
  %v8008 = vld [vmem:[%s5448 + $0xaa] sm:$0xff]
  %v8009 = vld [vmem:[%s5448 + $0xb2] sm:$0xff]
  %v8010 = vld [vmem:[%s5448 + $0xc2] sm:$0xff]
  %v8011 = vld [vmem:[%s5448 + $0xca] sm:$0xff]
  %v8012 = vld [vmem:[%s5448 + $0xda] sm:$0xff]
  %v8013 = vld [vmem:[%s5448 + $0xe2] sm:$0xff]
  %v8014 = vld [vmem:[%s5448 + $0xf2] sm:$0xff]
  %v8015 = vld [vmem:[%s5448 + $0xfa] sm:$0xff]
  %v8016 = vld [vmem:[%s5448 + $0x10a] sm:$0xff]
  %v8017 = vld [vmem:[%s5448 + $0x112] sm:$0xff]
  %v8018 = vld [vmem:[%s5448 + $0x122] sm:$0xff]
  %v8019 = vld [vmem:[%s5448 + $0x12a] sm:$0xff]
  %v8020 = vld [vmem:[%s5448 + $0x13a] sm:$0xff]
  %v8021 = vld [vmem:[%s5448 + $0x142] sm:$0xff]
  %v8022 = vld [vmem:[%s5448 + $0x152] sm:$0xff]
  %v8023 = vld [vmem:[%s5448 + $0x15a] sm:$0xff]
  %v8024 = vld [vmem:[%s5448 + $0x16a] sm:$0xff]
  %v8025 = vld [vmem:[%s5448 + $0x172] sm:$0xff]
  %v8026 = vld [vmem:[%s5448 + $0x1b2] sm:$0xff]
  %v8027 = vld [vmem:[%s5448 + $0x1ba] sm:$0xff]
  %v8028 = vld [vmem:[%s5448 + $0x1ca] sm:$0xff]
  %v8029 = vld [vmem:[%s5448 + $0x1d2] sm:$0xff]
  %v8030 = vld [vmem:[%s5448 + $0x1e2] sm:$0xff]
  %v8031 = vld [vmem:[%s5448 + $0x1ea] sm:$0xff]
  %v8032 = vld [vmem:[%s5448 + $0x1fa] sm:$0xff]
  %v8033 = vld [vmem:[%s5448 + $0x202] sm:$0xff]
  %v8034 = vld [vmem:[%s5448 + $0x212] sm:$0xff]
  %v8035 = vld [vmem:[%s5448 + $0x21a] sm:$0xff]
  %v8036 = vld [vmem:[%s5448 + $0x22a] sm:$0xff]
  %v8037 = vld [vmem:[%s5448 + $0x232] sm:$0xff]
  %v8038 = vld [vmem:[%s5448 + $0x242] sm:$0xff]
  %v8039 = vld [vmem:[%s5448 + $0x24a] sm:$0xff]
  %v8040 = vld [vmem:[%s5448 + $0x25a] sm:$0xff]
  %v8041 = vld [vmem:[%s5448 + $0x262] sm:$0xff]
  %v8042 = vld [vmem:[%s5448 + $0x272] sm:$0xff]
  %v8043 = vld [vmem:[%s5448 + $0x27a] sm:$0xff]
  %v8044 = vld [vmem:[%s5448 + $0x28a] sm:$0xff]
  %v8045 = vld [vmem:[%s5448 + $0x292] sm:$0xff]
  %v8046 = vld [vmem:[%s5448 + $0x2a2] sm:$0xff]
  %v8047 = vld [vmem:[%s5448 + $0x2aa] sm:$0xff]
  %v8048 = vld [vmem:[%s5448 + $0x2ba] sm:$0xff]
  %v8049 = vld [vmem:[%s5448 + $0x2c2] sm:$0xff]
  %v8050 = vld [vmem:[%s5448 + $0x2d2] sm:$0xff]
  %v8051 = vld [vmem:[%s5448 + $0x2da] sm:$0xff]
  %v8052 = vld [vmem:[%s5448 + $0x2ea] sm:$0xff]
  %v8053 = vld [vmem:[%s5448 + $0x2f2] sm:$0xff]
  %v8054 = vld [vmem:[%s5448 + $0x302] sm:$0xff]
  %v8055 = vld [vmem:[%s5448 + $0x30a] sm:$0xff]
  %v8056 = vld [vmem:[%s5448 + $0x31a] sm:$0xff]
  %v8057 = vld [vmem:[%s5448 + $0x322] sm:$0xff]
  %v8058 = vpack.c.bf16 %v7995, %v7994
  %v8059 = vpack.c.bf16 %v7997, %v7996
  %v8060 = vpack.c.bf16 %v7999, %v7998
  %v8061 = vpack.c.bf16 %v8001, %v8000
  %v8062 = vpack.c.bf16 %v8003, %v8002
  %v8063 = vpack.c.bf16 %v8005, %v8004
  %v8064 = vpack.c.bf16 %v8007, %v8006
  %v8065 = vpack.c.bf16 %v8009, %v8008
  %v8066 = vpack.c.bf16 %v8011, %v8010
  %v8067 = vpack.c.bf16 %v8013, %v8012
  %v8068 = vpack.c.bf16 %v8015, %v8014
  %v8069 = vpack.c.bf16 %v8017, %v8016
  %v8070 = vpack.c.bf16 %v8019, %v8018
  %v8071 = vpack.c.bf16 %v8021, %v8020
  %v8072 = vpack.c.bf16 %v8023, %v8022
  %v8073 = vpack.c.bf16 %v8025, %v8024
  %v8074 = vpack.c.bf16 %v8027, %v8026
  %v8075 = vpack.c.bf16 %v8029, %v8028
  %v8076 = vpack.c.bf16 %v8031, %v8030
  %v8077 = vpack.c.bf16 %v8033, %v8032
  %v8078 = vpack.c.bf16 %v8035, %v8034
  %v8079 = vpack.c.bf16 %v8037, %v8036
  %v8080 = vpack.c.bf16 %v8039, %v8038
  %v8081 = vpack.c.bf16 %v8041, %v8040
  %v8082 = vpack.c.bf16 %v8043, %v8042
  %v8083 = vpack.c.bf16 %v8045, %v8044
  %v8084 = vpack.c.bf16 %v8047, %v8046
  %v8085 = vpack.c.bf16 %v8049, %v8048
  %v8086 = vpack.c.bf16 %v8051, %v8050
  %v8087 = vpack.c.bf16 %v8053, %v8052
  %v8088 = vpack.c.bf16 %v8055, %v8054
  %v8089 = vpack.c.bf16 %v8057, %v8056
  %s8090 = scalar_lea.vmem %s4, 320
  %v8091 = vld [vmem:[%s8090] sm:$0xf]
  %v8092 = vld [vmem:[%s8090 + $0x4] sm:$0xf]
  %v8093 = vld [vmem:[%s8090 + $0x8] sm:$0xf]
  %v8094 = vld [vmem:[%s8090 + $0xc] sm:$0xf]
  %v8095 = vld [vmem:[%s8090 + $0x10] sm:$0xf]
  %v8096 = vld [vmem:[%s8090 + $0x14] sm:$0xf]
  %v8097 = vld [vmem:[%s8090 + $0x18] sm:$0xf]
  %v8098 = vld [vmem:[%s8090 + $0x1c] sm:$0xf]
  %v8099 = vld [vmem:[%s8090 + $0x20] sm:$0xf]
  %v8100 = vld [vmem:[%s8090 + $0x24] sm:$0xf]
  %v8101 = vld [vmem:[%s8090 + $0x28] sm:$0xf]
  %v8102 = vld [vmem:[%s8090 + $0x2c] sm:$0xf]
  %v8103 = vld [vmem:[%s8090 + $0x30] sm:$0xf]
  %v8104 = vld [vmem:[%s8090 + $0x34] sm:$0xf]
  %v8105 = vld [vmem:[%s8090 + $0x38] sm:$0xf]
  %v8106 = vld [vmem:[%s8090 + $0x3c] sm:$0xf]
  %v8123 = vunpack.c.l.b16 %v8091
  %v8124 = vunpack.c.l.b16 %v8092
  %v8125 = vunpack.c.l.b16 %v8093
  %v8126 = vunpack.c.l.b16 %v8094
  %v8127 = vunpack.c.l.b16 %v8095
  %v8128 = vunpack.c.l.b16 %v8096
  %v8129 = vunpack.c.l.b16 %v8097
  %v8130 = vunpack.c.l.b16 %v8098
  %v8131 = vunpack.c.l.b16 %v8099
  %v8132 = vunpack.c.l.b16 %v8100
  %v8133 = vunpack.c.l.b16 %v8101
  %v8134 = vunpack.c.l.b16 %v8102
  %v8135 = vunpack.c.l.b16 %v8103
  %v8136 = vunpack.c.l.b16 %v8104
  %v8137 = vunpack.c.l.b16 %v8105
  %v8138 = vunpack.c.l.b16 %v8106
  %v8139 = vpack.c.b16 %v8124, %v8123
  %v8140 = vpack.c.b16 %v8126, %v8125
  %v8141 = vpack.c.b16 %v8128, %v8127
  %v8142 = vpack.c.b16 %v8130, %v8129
  %v8143 = vpack.c.b16 %v8132, %v8131
  %v8144 = vpack.c.b16 %v8134, %v8133
  %v8145 = vpack.c.b16 %v8136, %v8135
  %v8146 = vpack.c.b16 %v8138, %v8137
  %8155 = vmatpush.bf16.msra.mxu0 %v8146
  %8156 = vmatpush.bf16.msra.mxu0 %v8145
  %8157 = vmatpush.bf16.msra.mxu0 %v8144
  %8158 = vmatpush.bf16.msra.mxu0 %v8143
  %8159 = vmatpush.bf16.msra.mxu0 %v8142
  %8160 = vmatpush.bf16.msra.mxu0 %v8141
  %8161 = vmatpush.bf16.msra.mxu0 %v8140
  %8162 = vmatpush.bf16.msra.mxu0 %v8139
  %8163 = vmatmul.bf16.gmra.mxu0 %v8058
  %v8164 = vpop.f32.mrf.mxu0
  %v8165 = vadd.f32 0.0, %v8164
  %v8166 = vpop.f32.mrf.mxu0
  %v8167 = vadd.f32 0.0, %v8166
  %8168 = vmatmul.bf16.gmra.mxu0 %v8059
  %v8169 = vpop.f32.mrf.mxu0
  %v8170 = vadd.f32 0.0, %v8169
  %v8171 = vpop.f32.mrf.mxu0
  %v8172 = vadd.f32 0.0, %v8171
  %8173 = vmatmul.bf16.gmra.mxu0 %v8060
  %v8174 = vpop.f32.mrf.mxu0
  %v8175 = vadd.f32 0.0, %v8174
  %v8176 = vpop.f32.mrf.mxu0
  %v8177 = vadd.f32 0.0, %v8176
  %8178 = vmatmul.bf16.gmra.mxu0 %v8061
  %v8179 = vpop.f32.mrf.mxu0
  %v8180 = vadd.f32 0.0, %v8179
  %v8181 = vpop.f32.mrf.mxu0
  %v8182 = vadd.f32 0.0, %v8181
  %8183 = vmatmul.bf16.gmra.mxu0 %v8062
  %v8184 = vpop.f32.mrf.mxu0
  %v8185 = vadd.f32 0.0, %v8184
  %v8186 = vpop.f32.mrf.mxu0
  %v8187 = vadd.f32 0.0, %v8186
  %8188 = vmatmul.bf16.gmra.mxu0 %v8063
  %v8189 = vpop.f32.mrf.mxu0
  %v8190 = vadd.f32 0.0, %v8189
  %v8191 = vpop.f32.mrf.mxu0
  %v8192 = vadd.f32 0.0, %v8191
  %8193 = vmatmul.bf16.gmra.mxu0 %v8064
  %v8194 = vpop.f32.mrf.mxu0
  %v8195 = vadd.f32 0.0, %v8194
  %v8196 = vpop.f32.mrf.mxu0
  %v8197 = vadd.f32 0.0, %v8196
  %8198 = vmatmul.bf16.gmra.mxu0 %v8065
  %v8199 = vpop.f32.mrf.mxu0
  %v8200 = vadd.f32 0.0, %v8199
  %v8201 = vpop.f32.mrf.mxu0
  %v8202 = vadd.f32 0.0, %v8201
  %8203 = vmatmul.bf16.gmra.mxu0 %v8066
  %v8204 = vpop.f32.mrf.mxu0
  %v8205 = vadd.f32 0.0, %v8204
  %v8206 = vpop.f32.mrf.mxu0
  %v8207 = vadd.f32 0.0, %v8206
  %8208 = vmatmul.bf16.gmra.mxu0 %v8067
  %v8209 = vpop.f32.mrf.mxu0
  %v8210 = vadd.f32 0.0, %v8209
  %v8211 = vpop.f32.mrf.mxu0
  %v8212 = vadd.f32 0.0, %v8211
  %8213 = vmatmul.bf16.gmra.mxu0 %v8068
  %v8214 = vpop.f32.mrf.mxu0
  %v8215 = vadd.f32 0.0, %v8214
  %v8216 = vpop.f32.mrf.mxu0
  %v8217 = vadd.f32 0.0, %v8216
  %8218 = vmatmul.bf16.gmra.mxu0 %v8069
  %v8219 = vpop.f32.mrf.mxu0
  %v8220 = vadd.f32 0.0, %v8219
  %v8221 = vpop.f32.mrf.mxu0
  %v8222 = vadd.f32 0.0, %v8221
  %8223 = vmatmul.bf16.gmra.mxu0 %v8070
  %v8224 = vpop.f32.mrf.mxu0
  %v8225 = vadd.f32 0.0, %v8224
  %v8226 = vpop.f32.mrf.mxu0
  %v8227 = vadd.f32 0.0, %v8226
  %8228 = vmatmul.bf16.gmra.mxu0 %v8071
  %v8229 = vpop.f32.mrf.mxu0
  %v8230 = vadd.f32 0.0, %v8229
  %v8231 = vpop.f32.mrf.mxu0
  %v8232 = vadd.f32 0.0, %v8231
  %8233 = vmatmul.bf16.gmra.mxu0 %v8072
  %v8234 = vpop.f32.mrf.mxu0
  %v8235 = vadd.f32 0.0, %v8234
  %v8236 = vpop.f32.mrf.mxu0
  %v8237 = vadd.f32 0.0, %v8236
  %8238 = vmatmul.bf16.gmra.mxu0 %v8073
  %v8239 = vpop.f32.mrf.mxu0
  %v8240 = vadd.f32 0.0, %v8239
  %v8241 = vpop.f32.mrf.mxu0
  %v8242 = vadd.f32 0.0, %v8241
  %8243 = vmatmul.bf16.gmra.mxu0 %v8074
  %v8244 = vpop.f32.mrf.mxu0
  %v8245 = vadd.f32 0.0, %v8244
  %v8246 = vpop.f32.mrf.mxu0
  %v8247 = vadd.f32 0.0, %v8246
  %8248 = vmatmul.bf16.gmra.mxu0 %v8075
  %v8249 = vpop.f32.mrf.mxu0
  %v8250 = vadd.f32 0.0, %v8249
  %v8251 = vpop.f32.mrf.mxu0
  %v8252 = vadd.f32 0.0, %v8251
  %8253 = vmatmul.bf16.gmra.mxu0 %v8076
  %v8254 = vpop.f32.mrf.mxu0
  %v8255 = vadd.f32 0.0, %v8254
  %v8256 = vpop.f32.mrf.mxu0
  %v8257 = vadd.f32 0.0, %v8256
  %8258 = vmatmul.bf16.gmra.mxu0 %v8077
  %v8259 = vpop.f32.mrf.mxu0
  %v8260 = vadd.f32 0.0, %v8259
  %v8261 = vpop.f32.mrf.mxu0
  %v8262 = vadd.f32 0.0, %v8261
  %8263 = vmatmul.bf16.gmra.mxu0 %v8078
  %v8264 = vpop.f32.mrf.mxu0
  %v8265 = vadd.f32 0.0, %v8264
  %v8266 = vpop.f32.mrf.mxu0
  %v8267 = vadd.f32 0.0, %v8266
  %8268 = vmatmul.bf16.gmra.mxu0 %v8079
  %v8269 = vpop.f32.mrf.mxu0
  %v8270 = vadd.f32 0.0, %v8269
  %v8271 = vpop.f32.mrf.mxu0
  %v8272 = vadd.f32 0.0, %v8271
  %8273 = vmatmul.bf16.gmra.mxu0 %v8080
  %v8274 = vpop.f32.mrf.mxu0
  %v8275 = vadd.f32 0.0, %v8274
  %v8276 = vpop.f32.mrf.mxu0
  %v8277 = vadd.f32 0.0, %v8276
  %8278 = vmatmul.bf16.gmra.mxu0 %v8081
  %v8279 = vpop.f32.mrf.mxu0
  %v8280 = vadd.f32 0.0, %v8279
  %v8281 = vpop.f32.mrf.mxu0
  %v8282 = vadd.f32 0.0, %v8281
  %8283 = vmatmul.bf16.gmra.mxu0 %v8082
  %v8284 = vpop.f32.mrf.mxu0
  %v8285 = vadd.f32 0.0, %v8284
  %v8286 = vpop.f32.mrf.mxu0
  %v8287 = vadd.f32 0.0, %v8286
  %8288 = vmatmul.bf16.gmra.mxu0 %v8083
  %v8289 = vpop.f32.mrf.mxu0
  %v8290 = vadd.f32 0.0, %v8289
  %v8291 = vpop.f32.mrf.mxu0
  %v8292 = vadd.f32 0.0, %v8291
  %8293 = vmatmul.bf16.gmra.mxu0 %v8084
  %v8294 = vpop.f32.mrf.mxu0
  %v8295 = vadd.f32 0.0, %v8294
  %v8296 = vpop.f32.mrf.mxu0
  %v8297 = vadd.f32 0.0, %v8296
  %8298 = vmatmul.bf16.gmra.mxu0 %v8085
  %v8299 = vpop.f32.mrf.mxu0
  %v8300 = vadd.f32 0.0, %v8299
  %v8301 = vpop.f32.mrf.mxu0
  %v8302 = vadd.f32 0.0, %v8301
  %8303 = vmatmul.bf16.gmra.mxu0 %v8086
  %v8304 = vpop.f32.mrf.mxu0
  %v8305 = vadd.f32 0.0, %v8304
  %v8306 = vpop.f32.mrf.mxu0
  %v8307 = vadd.f32 0.0, %v8306
  %8308 = vmatmul.bf16.gmra.mxu0 %v8087
  %v8309 = vpop.f32.mrf.mxu0
  %v8310 = vadd.f32 0.0, %v8309
  %v8311 = vpop.f32.mrf.mxu0
  %v8312 = vadd.f32 0.0, %v8311
  %8313 = vmatmul.bf16.gmra.mxu0 %v8088
  %v8314 = vpop.f32.mrf.mxu0
  %v8315 = vadd.f32 0.0, %v8314
  %v8316 = vpop.f32.mrf.mxu0
  %v8317 = vadd.f32 0.0, %v8316
  %8318 = vmatmul.bf16.gmra.mxu0 %v8089
  %v8319 = vpop.f32.mrf.mxu0
  %v8320 = vadd.f32 0.0, %v8319
  %v8321 = vpop.f32.mrf.mxu0
  %v8322 = vadd.f32 0.0, %v8321
  %8323 = vdwg.mxu0
  %v8324 = vld [vmem:[#allocation4] sm:$0xff]
  %v8325 = vld [vmem:[#allocation4 + $0x8] sm:$0xff]
  %v8326 = vld [vmem:[#allocation4 + $0x10] sm:$0xff]
  %v8327 = vld [vmem:[#allocation4 + $0x18] sm:$0xff]
  %v8328 = vld [vmem:[#allocation4 + $0x20] sm:$0xff]
  %v8329 = vld [vmem:[#allocation4 + $0x28] sm:$0xff]
  %v8330 = vld [vmem:[#allocation4 + $0x30] sm:$0xff]
  %v8331 = vld [vmem:[#allocation4 + $0x38] sm:$0xff]
  %v8332 = vld [vmem:[#allocation4 + $0x40] sm:$0xff]
  %v8333 = vld [vmem:[#allocation4 + $0x48] sm:$0xff]
  %v8334 = vld [vmem:[#allocation4 + $0x50] sm:$0xff]
  %v8335 = vld [vmem:[#allocation4 + $0x58] sm:$0xff]
  %v8336 = vld [vmem:[#allocation4 + $0x60] sm:$0xff]
  %v8337 = vld [vmem:[#allocation4 + $0x68] sm:$0xff]
  %v8338 = vld [vmem:[#allocation4 + $0x70] sm:$0xff]
  %v8339 = vld [vmem:[#allocation4 + $0x78] sm:$0xff]
  %v8340 = vld [vmem:[#allocation4 + $0x80] sm:$0xff]
  %v8341 = vld [vmem:[#allocation4 + $0x88] sm:$0xff]
  %v8342 = vld [vmem:[#allocation4 + $0x90] sm:$0xff]
  %v8343 = vld [vmem:[#allocation4 + $0x98] sm:$0xff]
  %v8344 = vld [vmem:[#allocation4 + $0xa0] sm:$0xff]
  %v8345 = vld [vmem:[#allocation4 + $0xa8] sm:$0xff]
  %v8346 = vld [vmem:[#allocation4 + $0xb0] sm:$0xff]
  %v8347 = vld [vmem:[#allocation4 + $0xb8] sm:$0xff]
  %v8348 = vld [vmem:[#allocation4 + $0xc0] sm:$0xff]
  %v8349 = vld [vmem:[#allocation4 + $0xc8] sm:$0xff]
  %v8350 = vld [vmem:[#allocation4 + $0xd0] sm:$0xff]
  %v8351 = vld [vmem:[#allocation4 + $0xd8] sm:$0xff]
  %v8352 = vld [vmem:[#allocation4 + $0xe0] sm:$0xff]
  %v8353 = vld [vmem:[#allocation4 + $0xe8] sm:$0xff]
  %v8354 = vld [vmem:[#allocation4 + $0xf0] sm:$0xff]
  %v8355 = vld [vmem:[#allocation4 + $0xf8] sm:$0xff]
  %v8356 = vld [vmem:[#allocation4 + $0x100] sm:$0xff]
  %v8357 = vld [vmem:[#allocation4 + $0x108] sm:$0xff]
  %v8358 = vld [vmem:[#allocation4 + $0x110] sm:$0xff]
  %v8359 = vld [vmem:[#allocation4 + $0x118] sm:$0xff]
  %v8360 = vld [vmem:[#allocation4 + $0x120] sm:$0xff]
  %v8361 = vld [vmem:[#allocation4 + $0x128] sm:$0xff]
  %v8362 = vld [vmem:[#allocation4 + $0x130] sm:$0xff]
  %v8363 = vld [vmem:[#allocation4 + $0x138] sm:$0xff]
  %v8364 = vld [vmem:[#allocation4 + $0x140] sm:$0xff]
  %v8365 = vld [vmem:[#allocation4 + $0x148] sm:$0xff]
  %v8366 = vld [vmem:[#allocation4 + $0x150] sm:$0xff]
  %v8367 = vld [vmem:[#allocation4 + $0x158] sm:$0xff]
  %v8368 = vld [vmem:[#allocation4 + $0x160] sm:$0xff]
  %v8369 = vld [vmem:[#allocation4 + $0x168] sm:$0xff]
  %v8370 = vld [vmem:[#allocation4 + $0x170] sm:$0xff]
  %v8371 = vld [vmem:[#allocation4 + $0x178] sm:$0xff]
  %v8372 = vld [vmem:[#allocation4 + $0x180] sm:$0xff]
  %v8373 = vld [vmem:[#allocation4 + $0x188] sm:$0xff]
  %v8374 = vld [vmem:[#allocation4 + $0x190] sm:$0xff]
  %v8375 = vld [vmem:[#allocation4 + $0x198] sm:$0xff]
  %v8376 = vld [vmem:[#allocation4 + $0x1a0] sm:$0xff]
  %v8377 = vld [vmem:[#allocation4 + $0x1a8] sm:$0xff]
  %v8378 = vld [vmem:[#allocation4 + $0x1b0] sm:$0xff]
  %v8379 = vld [vmem:[#allocation4 + $0x1b8] sm:$0xff]
  %v8380 = vld [vmem:[#allocation4 + $0x1c0] sm:$0xff]
  %v8381 = vld [vmem:[#allocation4 + $0x1c8] sm:$0xff]
  %v8382 = vld [vmem:[#allocation4 + $0x1d0] sm:$0xff]
  %v8383 = vld [vmem:[#allocation4 + $0x1d8] sm:$0xff]
  %v8384 = vld [vmem:[#allocation4 + $0x1e0] sm:$0xff]
  %v8385 = vld [vmem:[#allocation4 + $0x1e8] sm:$0xff]
  %v8386 = vld [vmem:[#allocation4 + $0x1f0] sm:$0xff]
  %v8387 = vld [vmem:[#allocation4 + $0x1f8] sm:$0xff]
  %v8388 = vadd.f32 %v8324, %v8165
  %v8389 = vadd.f32 %v8325, %v8167
  %v8390 = vadd.f32 %v8326, %v8170
  %v8391 = vadd.f32 %v8327, %v8172
  %v8392 = vadd.f32 %v8328, %v8175
  %v8393 = vadd.f32 %v8329, %v8177
  %v8394 = vadd.f32 %v8330, %v8180
  %v8395 = vadd.f32 %v8331, %v8182
  %v8396 = vadd.f32 %v8332, %v8185
  %v8397 = vadd.f32 %v8333, %v8187
  %v8398 = vadd.f32 %v8334, %v8190
  %v8399 = vadd.f32 %v8335, %v8192
  %v8400 = vadd.f32 %v8336, %v8195
  %v8401 = vadd.f32 %v8337, %v8197
  %v8402 = vadd.f32 %v8338, %v8200
  %v8403 = vadd.f32 %v8339, %v8202
  %v8404 = vadd.f32 %v8340, %v8205
  %v8405 = vadd.f32 %v8341, %v8207
  %v8406 = vadd.f32 %v8342, %v8210
  %v8407 = vadd.f32 %v8343, %v8212
  %v8408 = vadd.f32 %v8344, %v8215
  %v8409 = vadd.f32 %v8345, %v8217
  %v8410 = vadd.f32 %v8346, %v8220
  %v8411 = vadd.f32 %v8347, %v8222
  %v8412 = vadd.f32 %v8348, %v8225
  %v8413 = vadd.f32 %v8349, %v8227
  %v8414 = vadd.f32 %v8350, %v8230
  %v8415 = vadd.f32 %v8351, %v8232
  %v8416 = vadd.f32 %v8352, %v8235
  %v8417 = vadd.f32 %v8353, %v8237
  %v8418 = vadd.f32 %v8354, %v8240
  %v8419 = vadd.f32 %v8355, %v8242
  %v8420 = vadd.f32 %v8356, %v8245
  %v8421 = vadd.f32 %v8357, %v8247
  %v8422 = vadd.f32 %v8358, %v8250
  %v8423 = vadd.f32 %v8359, %v8252
  %v8424 = vadd.f32 %v8360, %v8255
  %v8425 = vadd.f32 %v8361, %v8257
  %v8426 = vadd.f32 %v8362, %v8260
  %v8427 = vadd.f32 %v8363, %v8262
  %v8428 = vadd.f32 %v8364, %v8265
  %v8429 = vadd.f32 %v8365, %v8267
  %v8430 = vadd.f32 %v8366, %v8270
  %v8431 = vadd.f32 %v8367, %v8272
  %v8432 = vadd.f32 %v8368, %v8275
  %v8433 = vadd.f32 %v8369, %v8277
  %v8434 = vadd.f32 %v8370, %v8280
  %v8435 = vadd.f32 %v8371, %v8282
  %v8436 = vadd.f32 %v8372, %v8285
  %v8437 = vadd.f32 %v8373, %v8287
  %v8438 = vadd.f32 %v8374, %v8290
  %v8439 = vadd.f32 %v8375, %v8292
  %v8440 = vadd.f32 %v8376, %v8295
  %v8441 = vadd.f32 %v8377, %v8297
  %v8442 = vadd.f32 %v8378, %v8300
  %v8443 = vadd.f32 %v8379, %v8302
  %v8444 = vadd.f32 %v8380, %v8305
  %v8445 = vadd.f32 %v8381, %v8307
  %v8446 = vadd.f32 %v8382, %v8310
  %v8447 = vadd.f32 %v8383, %v8312
  %v8448 = vadd.f32 %v8384, %v8315
  %v8449 = vadd.f32 %v8385, %v8317
  %v8450 = vadd.f32 %v8386, %v8320
  %v8451 = vadd.f32 %v8387, %v8322
  %8452 = vst [vmem:[#allocation4] sm:$0xff] %v8388
  %8453 = vst [vmem:[#allocation4 + $0x8] sm:$0xff] %v8389
  %8454 = vst [vmem:[#allocation4 + $0x10] sm:$0xff] %v8390
  %8455 = vst [vmem:[#allocation4 + $0x18] sm:$0xff] %v8391
  %8456 = vst [vmem:[#allocation4 + $0x20] sm:$0xff] %v8392
  %8457 = vst [vmem:[#allocation4 + $0x28] sm:$0xff] %v8393
  %8458 = vst [vmem:[#allocation4 + $0x30] sm:$0xff] %v8394
  %8459 = vst [vmem:[#allocation4 + $0x38] sm:$0xff] %v8395
  %8460 = vst [vmem:[#allocation4 + $0x40] sm:$0xff] %v8396
  %8461 = vst [vmem:[#allocation4 + $0x48] sm:$0xff] %v8397
  %8462 = vst [vmem:[#allocation4 + $0x50] sm:$0xff] %v8398
  %8463 = vst [vmem:[#allocation4 + $0x58] sm:$0xff] %v8399
  %8464 = vst [vmem:[#allocation4 + $0x60] sm:$0xff] %v8400
  %8465 = vst [vmem:[#allocation4 + $0x68] sm:$0xff] %v8401
  %8466 = vst [vmem:[#allocation4 + $0x70] sm:$0xff] %v8402
  %8467 = vst [vmem:[#allocation4 + $0x78] sm:$0xff] %v8403
  %8468 = vst [vmem:[#allocation4 + $0x80] sm:$0xff] %v8404
  %8469 = vst [vmem:[#allocation4 + $0x88] sm:$0xff] %v8405
  %8470 = vst [vmem:[#allocation4 + $0x90] sm:$0xff] %v8406
  %8471 = vst [vmem:[#allocation4 + $0x98] sm:$0xff] %v8407
  %8472 = vst [vmem:[#allocation4 + $0xa0] sm:$0xff] %v8408
  %8473 = vst [vmem:[#allocation4 + $0xa8] sm:$0xff] %v8409
  %8474 = vst [vmem:[#allocation4 + $0xb0] sm:$0xff] %v8410
  %8475 = vst [vmem:[#allocation4 + $0xb8] sm:$0xff] %v8411
  %8476 = vst [vmem:[#allocation4 + $0xc0] sm:$0xff] %v8412
  %8477 = vst [vmem:[#allocation4 + $0xc8] sm:$0xff] %v8413
  %8478 = vst [vmem:[#allocation4 + $0xd0] sm:$0xff] %v8414
  %8479 = vst [vmem:[#allocation4 + $0xd8] sm:$0xff] %v8415
  %8480 = vst [vmem:[#allocation4 + $0xe0] sm:$0xff] %v8416
  %8481 = vst [vmem:[#allocation4 + $0xe8] sm:$0xff] %v8417
  %8482 = vst [vmem:[#allocation4 + $0xf0] sm:$0xff] %v8418
  %8483 = vst [vmem:[#allocation4 + $0xf8] sm:$0xff] %v8419
  %8484 = vst [vmem:[#allocation4 + $0x100] sm:$0xff] %v8420
  %8485 = vst [vmem:[#allocation4 + $0x108] sm:$0xff] %v8421
  %8486 = vst [vmem:[#allocation4 + $0x110] sm:$0xff] %v8422
  %8487 = vst [vmem:[#allocation4 + $0x118] sm:$0xff] %v8423
  %8488 = vst [vmem:[#allocation4 + $0x120] sm:$0xff] %v8424
  %8489 = vst [vmem:[#allocation4 + $0x128] sm:$0xff] %v8425
  %8490 = vst [vmem:[#allocation4 + $0x130] sm:$0xff] %v8426
  %8491 = vst [vmem:[#allocation4 + $0x138] sm:$0xff] %v8427
  %8492 = vst [vmem:[#allocation4 + $0x140] sm:$0xff] %v8428
  %8493 = vst [vmem:[#allocation4 + $0x148] sm:$0xff] %v8429
  %8494 = vst [vmem:[#allocation4 + $0x150] sm:$0xff] %v8430
  %8495 = vst [vmem:[#allocation4 + $0x158] sm:$0xff] %v8431
  %8496 = vst [vmem:[#allocation4 + $0x160] sm:$0xff] %v8432
  %8497 = vst [vmem:[#allocation4 + $0x168] sm:$0xff] %v8433
  %8498 = vst [vmem:[#allocation4 + $0x170] sm:$0xff] %v8434
  %8499 = vst [vmem:[#allocation4 + $0x178] sm:$0xff] %v8435
  %8500 = vst [vmem:[#allocation4 + $0x180] sm:$0xff] %v8436
  %8501 = vst [vmem:[#allocation4 + $0x188] sm:$0xff] %v8437
  %8502 = vst [vmem:[#allocation4 + $0x190] sm:$0xff] %v8438
  %8503 = vst [vmem:[#allocation4 + $0x198] sm:$0xff] %v8439
  %8504 = vst [vmem:[#allocation4 + $0x1a0] sm:$0xff] %v8440
  %8505 = vst [vmem:[#allocation4 + $0x1a8] sm:$0xff] %v8441
  %8506 = vst [vmem:[#allocation4 + $0x1b0] sm:$0xff] %v8442
  %8507 = vst [vmem:[#allocation4 + $0x1b8] sm:$0xff] %v8443
  %8508 = vst [vmem:[#allocation4 + $0x1c0] sm:$0xff] %v8444
  %8509 = vst [vmem:[#allocation4 + $0x1c8] sm:$0xff] %v8445
  %8510 = vst [vmem:[#allocation4 + $0x1d0] sm:$0xff] %v8446
  %8511 = vst [vmem:[#allocation4 + $0x1d8] sm:$0xff] %v8447
  %8512 = vst [vmem:[#allocation4 + $0x1e0] sm:$0xff] %v8448
  %8513 = vst [vmem:[#allocation4 + $0x1e8] sm:$0xff] %v8449
  %8514 = vst [vmem:[#allocation4 + $0x1f0] sm:$0xff] %v8450
  %8515 = vst [vmem:[#allocation4 + $0x1f8] sm:$0xff] %v8451
  %s8516 = scalar_lea.vmem [#allocation3], 48
  %v8517 = vld [vmem:[%s8516] sm:$0xff]
  %v8518 = vld [vmem:[%s8516 + $0x8] sm:$0xff]
  %v8519 = vld [vmem:[%s8516 + $0x18] sm:$0xff]
  %v8520 = vld [vmem:[%s8516 + $0x20] sm:$0xff]
  %v8521 = vld [vmem:[%s8516 + $0x30] sm:$0xff]
  %v8522 = vld [vmem:[%s8516 + $0x38] sm:$0xff]
  %v8523 = vld [vmem:[%s8516 + $0x48] sm:$0xff]
  %v8524 = vld [vmem:[%s8516 + $0x50] sm:$0xff]
  %v8525 = vld [vmem:[%s8516 + $0x60] sm:$0xff]
  %v8526 = vld [vmem:[%s8516 + $0x68] sm:$0xff]
  %v8527 = vld [vmem:[%s8516 + $0x78] sm:$0xff]
  %v8528 = vld [vmem:[%s8516 + $0x80] sm:$0xff]
  %v8529 = vld [vmem:[%s8516 + $0x90] sm:$0xff]
  %v8530 = vld [vmem:[%s8516 + $0x98] sm:$0xff]
  %v8531 = vld [vmem:[%s8516 + $0xa8] sm:$0xff]
  %v8532 = vld [vmem:[%s8516 + $0xb0] sm:$0xff]
  %v8533 = vld [vmem:[%s8516 + $0xc0] sm:$0xff]
  %v8534 = vld [vmem:[%s8516 + $0xc8] sm:$0xff]
  %v8535 = vld [vmem:[%s8516 + $0xd8] sm:$0xff]
  %v8536 = vld [vmem:[%s8516 + $0xe0] sm:$0xff]
  %v8537 = vld [vmem:[%s8516 + $0xf0] sm:$0xff]
  %v8538 = vld [vmem:[%s8516 + $0xf8] sm:$0xff]
  %v8539 = vld [vmem:[%s8516 + $0x108] sm:$0xff]
  %v8540 = vld [vmem:[%s8516 + $0x110] sm:$0xff]
  %v8541 = vld [vmem:[%s8516 + $0x120] sm:$0xff]
  %v8542 = vld [vmem:[%s8516 + $0x128] sm:$0xff]
  %v8543 = vld [vmem:[%s8516 + $0x138] sm:$0xff]
  %v8544 = vld [vmem:[%s8516 + $0x140] sm:$0xff]
  %v8545 = vld [vmem:[%s8516 + $0x150] sm:$0xff]
  %v8546 = vld [vmem:[%s8516 + $0x158] sm:$0xff]
  %v8547 = vld [vmem:[%s8516 + $0x168] sm:$0xff]
  %v8548 = vld [vmem:[%s8516 + $0x170] sm:$0xff]
  %v8549 = vld [vmem:[%s8516 + $0x1b0] sm:$0xff]
  %v8550 = vld [vmem:[%s8516 + $0x1b8] sm:$0xff]
  %v8551 = vld [vmem:[%s8516 + $0x1c8] sm:$0xff]
  %v8552 = vld [vmem:[%s8516 + $0x1d0] sm:$0xff]
  %v8553 = vld [vmem:[%s8516 + $0x1e0] sm:$0xff]
  %v8554 = vld [vmem:[%s8516 + $0x1e8] sm:$0xff]
  %v8555 = vld [vmem:[%s8516 + $0x1f8] sm:$0xff]
  %v8556 = vld [vmem:[%s8516 + $0x200] sm:$0xff]
  %v8557 = vld [vmem:[%s8516 + $0x210] sm:$0xff]
  %v8558 = vld [vmem:[%s8516 + $0x218] sm:$0xff]
  %v8559 = vld [vmem:[%s8516 + $0x228] sm:$0xff]
  %v8560 = vld [vmem:[%s8516 + $0x230] sm:$0xff]
  %v8561 = vld [vmem:[%s8516 + $0x240] sm:$0xff]
  %v8562 = vld [vmem:[%s8516 + $0x248] sm:$0xff]
  %v8563 = vld [vmem:[%s8516 + $0x258] sm:$0xff]
  %v8564 = vld [vmem:[%s8516 + $0x260] sm:$0xff]
  %v8565 = vld [vmem:[%s8516 + $0x270] sm:$0xff]
  %v8566 = vld [vmem:[%s8516 + $0x278] sm:$0xff]
  %v8567 = vld [vmem:[%s8516 + $0x288] sm:$0xff]
  %v8568 = vld [vmem:[%s8516 + $0x290] sm:$0xff]
  %v8569 = vld [vmem:[%s8516 + $0x2a0] sm:$0xff]
  %v8570 = vld [vmem:[%s8516 + $0x2a8] sm:$0xff]
  %v8571 = vld [vmem:[%s8516 + $0x2b8] sm:$0xff]
  %v8572 = vld [vmem:[%s8516 + $0x2c0] sm:$0xff]
  %v8573 = vld [vmem:[%s8516 + $0x2d0] sm:$0xff]
  %v8574 = vld [vmem:[%s8516 + $0x2d8] sm:$0xff]
  %v8575 = vld [vmem:[%s8516 + $0x2e8] sm:$0xff]
  %v8576 = vld [vmem:[%s8516 + $0x2f0] sm:$0xff]
  %v8577 = vld [vmem:[%s8516 + $0x300] sm:$0xff]
  %v8578 = vld [vmem:[%s8516 + $0x308] sm:$0xff]
  %v8579 = vld [vmem:[%s8516 + $0x318] sm:$0xff]
  %v8580 = vld [vmem:[%s8516 + $0x320] sm:$0xff]
  %v8581 = vpack.c.bf16 %v8518, %v8517
  %v8582 = vpack.c.bf16 %v8520, %v8519
  %v8583 = vpack.c.bf16 %v8522, %v8521
  %v8584 = vpack.c.bf16 %v8524, %v8523
  %v8585 = vpack.c.bf16 %v8526, %v8525
  %v8586 = vpack.c.bf16 %v8528, %v8527
  %v8587 = vpack.c.bf16 %v8530, %v8529
  %v8588 = vpack.c.bf16 %v8532, %v8531
  %v8589 = vpack.c.bf16 %v8534, %v8533
  %v8590 = vpack.c.bf16 %v8536, %v8535
  %v8591 = vpack.c.bf16 %v8538, %v8537
  %v8592 = vpack.c.bf16 %v8540, %v8539
  %v8593 = vpack.c.bf16 %v8542, %v8541
  %v8594 = vpack.c.bf16 %v8544, %v8543
  %v8595 = vpack.c.bf16 %v8546, %v8545
  %v8596 = vpack.c.bf16 %v8548, %v8547
  %v8597 = vpack.c.bf16 %v8550, %v8549
  %v8598 = vpack.c.bf16 %v8552, %v8551
  %v8599 = vpack.c.bf16 %v8554, %v8553
  %v8600 = vpack.c.bf16 %v8556, %v8555
  %v8601 = vpack.c.bf16 %v8558, %v8557
  %v8602 = vpack.c.bf16 %v8560, %v8559
  %v8603 = vpack.c.bf16 %v8562, %v8561
  %v8604 = vpack.c.bf16 %v8564, %v8563
  %v8605 = vpack.c.bf16 %v8566, %v8565
  %v8606 = vpack.c.bf16 %v8568, %v8567
  %v8607 = vpack.c.bf16 %v8570, %v8569
  %v8608 = vpack.c.bf16 %v8572, %v8571
  %v8609 = vpack.c.bf16 %v8574, %v8573
  %v8610 = vpack.c.bf16 %v8576, %v8575
  %v8611 = vpack.c.bf16 %v8578, %v8577
  %v8612 = vpack.c.bf16 %v8580, %v8579
  %s8613 = scalar_lea.vmem %s4, 384
  %v8614 = vld [vmem:[%s8613] sm:$0xf]
  %v8615 = vld [vmem:[%s8613 + $0x4] sm:$0xf]
  %v8616 = vld [vmem:[%s8613 + $0x8] sm:$0xf]
  %v8617 = vld [vmem:[%s8613 + $0xc] sm:$0xf]
  %v8618 = vld [vmem:[%s8613 + $0x10] sm:$0xf]
  %v8619 = vld [vmem:[%s8613 + $0x14] sm:$0xf]
  %v8620 = vld [vmem:[%s8613 + $0x18] sm:$0xf]
  %v8621 = vld [vmem:[%s8613 + $0x1c] sm:$0xf]
  %v8622 = vld [vmem:[%s8613 + $0x20] sm:$0xf]
  %v8623 = vld [vmem:[%s8613 + $0x24] sm:$0xf]
  %v8624 = vld [vmem:[%s8613 + $0x28] sm:$0xf]
  %v8625 = vld [vmem:[%s8613 + $0x2c] sm:$0xf]
  %v8626 = vld [vmem:[%s8613 + $0x30] sm:$0xf]
  %v8627 = vld [vmem:[%s8613 + $0x34] sm:$0xf]
  %v8628 = vld [vmem:[%s8613 + $0x38] sm:$0xf]
  %v8629 = vld [vmem:[%s8613 + $0x3c] sm:$0xf]
  %v8646 = vunpack.c.l.b16 %v8614
  %v8647 = vunpack.c.l.b16 %v8615
  %v8648 = vunpack.c.l.b16 %v8616
  %v8649 = vunpack.c.l.b16 %v8617
  %v8650 = vunpack.c.l.b16 %v8618
  %v8651 = vunpack.c.l.b16 %v8619
  %v8652 = vunpack.c.l.b16 %v8620
  %v8653 = vunpack.c.l.b16 %v8621
  %v8654 = vunpack.c.l.b16 %v8622
  %v8655 = vunpack.c.l.b16 %v8623
  %v8656 = vunpack.c.l.b16 %v8624
  %v8657 = vunpack.c.l.b16 %v8625
  %v8658 = vunpack.c.l.b16 %v8626
  %v8659 = vunpack.c.l.b16 %v8627
  %v8660 = vunpack.c.l.b16 %v8628
  %v8661 = vunpack.c.l.b16 %v8629
  %v8662 = vpack.c.b16 %v8647, %v8646
  %v8663 = vpack.c.b16 %v8649, %v8648
  %v8664 = vpack.c.b16 %v8651, %v8650
  %v8665 = vpack.c.b16 %v8653, %v8652
  %v8666 = vpack.c.b16 %v8655, %v8654
  %v8667 = vpack.c.b16 %v8657, %v8656
  %v8668 = vpack.c.b16 %v8659, %v8658
  %v8669 = vpack.c.b16 %v8661, %v8660
  %8678 = vmatpush.bf16.msra.mxu0 %v8669
  %8679 = vmatpush.bf16.msra.mxu0 %v8668
  %8680 = vmatpush.bf16.msra.mxu0 %v8667
  %8681 = vmatpush.bf16.msra.mxu0 %v8666
  %8682 = vmatpush.bf16.msra.mxu0 %v8665
  %8683 = vmatpush.bf16.msra.mxu0 %v8664
  %8684 = vmatpush.bf16.msra.mxu0 %v8663
  %8685 = vmatpush.bf16.msra.mxu0 %v8662
  %8686 = vmatmul.bf16.gmra.mxu0 %v8581
  %v8687 = vpop.f32.mrf.mxu0
  %v8688 = vadd.f32 0.0, %v8687
  %v8689 = vpop.f32.mrf.mxu0
  %v8690 = vadd.f32 0.0, %v8689
  %8691 = vmatmul.bf16.gmra.mxu0 %v8582
  %v8692 = vpop.f32.mrf.mxu0
  %v8693 = vadd.f32 0.0, %v8692
  %v8694 = vpop.f32.mrf.mxu0
  %v8695 = vadd.f32 0.0, %v8694
  %8696 = vmatmul.bf16.gmra.mxu0 %v8583
  %v8697 = vpop.f32.mrf.mxu0
  %v8698 = vadd.f32 0.0, %v8697
  %v8699 = vpop.f32.mrf.mxu0
  %v8700 = vadd.f32 0.0, %v8699
  %8701 = vmatmul.bf16.gmra.mxu0 %v8584
  %v8702 = vpop.f32.mrf.mxu0
  %v8703 = vadd.f32 0.0, %v8702
  %v8704 = vpop.f32.mrf.mxu0
  %v8705 = vadd.f32 0.0, %v8704
  %8706 = vmatmul.bf16.gmra.mxu0 %v8585
  %v8707 = vpop.f32.mrf.mxu0
  %v8708 = vadd.f32 0.0, %v8707
  %v8709 = vpop.f32.mrf.mxu0
  %v8710 = vadd.f32 0.0, %v8709
  %8711 = vmatmul.bf16.gmra.mxu0 %v8586
  %v8712 = vpop.f32.mrf.mxu0
  %v8713 = vadd.f32 0.0, %v8712
  %v8714 = vpop.f32.mrf.mxu0
  %v8715 = vadd.f32 0.0, %v8714
  %8716 = vmatmul.bf16.gmra.mxu0 %v8587
  %v8717 = vpop.f32.mrf.mxu0
  %v8718 = vadd.f32 0.0, %v8717
  %v8719 = vpop.f32.mrf.mxu0
  %v8720 = vadd.f32 0.0, %v8719
  %8721 = vmatmul.bf16.gmra.mxu0 %v8588
  %v8722 = vpop.f32.mrf.mxu0
  %v8723 = vadd.f32 0.0, %v8722
  %v8724 = vpop.f32.mrf.mxu0
  %v8725 = vadd.f32 0.0, %v8724
  %8726 = vmatmul.bf16.gmra.mxu0 %v8589
  %v8727 = vpop.f32.mrf.mxu0
  %v8728 = vadd.f32 0.0, %v8727
  %v8729 = vpop.f32.mrf.mxu0
  %v8730 = vadd.f32 0.0, %v8729
  %8731 = vmatmul.bf16.gmra.mxu0 %v8590
  %v8732 = vpop.f32.mrf.mxu0
  %v8733 = vadd.f32 0.0, %v8732
  %v8734 = vpop.f32.mrf.mxu0
  %v8735 = vadd.f32 0.0, %v8734
  %8736 = vmatmul.bf16.gmra.mxu0 %v8591
  %v8737 = vpop.f32.mrf.mxu0
  %v8738 = vadd.f32 0.0, %v8737
  %v8739 = vpop.f32.mrf.mxu0
  %v8740 = vadd.f32 0.0, %v8739
  %8741 = vmatmul.bf16.gmra.mxu0 %v8592
  %v8742 = vpop.f32.mrf.mxu0
  %v8743 = vadd.f32 0.0, %v8742
  %v8744 = vpop.f32.mrf.mxu0
  %v8745 = vadd.f32 0.0, %v8744
  %8746 = vmatmul.bf16.gmra.mxu0 %v8593
  %v8747 = vpop.f32.mrf.mxu0
  %v8748 = vadd.f32 0.0, %v8747
  %v8749 = vpop.f32.mrf.mxu0
  %v8750 = vadd.f32 0.0, %v8749
  %8751 = vmatmul.bf16.gmra.mxu0 %v8594
  %v8752 = vpop.f32.mrf.mxu0
  %v8753 = vadd.f32 0.0, %v8752
  %v8754 = vpop.f32.mrf.mxu0
  %v8755 = vadd.f32 0.0, %v8754
  %8756 = vmatmul.bf16.gmra.mxu0 %v8595
  %v8757 = vpop.f32.mrf.mxu0
  %v8758 = vadd.f32 0.0, %v8757
  %v8759 = vpop.f32.mrf.mxu0
  %v8760 = vadd.f32 0.0, %v8759
  %8761 = vmatmul.bf16.gmra.mxu0 %v8596
  %v8762 = vpop.f32.mrf.mxu0
  %v8763 = vadd.f32 0.0, %v8762
  %v8764 = vpop.f32.mrf.mxu0
  %v8765 = vadd.f32 0.0, %v8764
  %8766 = vmatmul.bf16.gmra.mxu0 %v8597
  %v8767 = vpop.f32.mrf.mxu0
  %v8768 = vadd.f32 0.0, %v8767
  %v8769 = vpop.f32.mrf.mxu0
  %v8770 = vadd.f32 0.0, %v8769
  %8771 = vmatmul.bf16.gmra.mxu0 %v8598
  %v8772 = vpop.f32.mrf.mxu0
  %v8773 = vadd.f32 0.0, %v8772
  %v8774 = vpop.f32.mrf.mxu0
  %v8775 = vadd.f32 0.0, %v8774
  %8776 = vmatmul.bf16.gmra.mxu0 %v8599
  %v8777 = vpop.f32.mrf.mxu0
  %v8778 = vadd.f32 0.0, %v8777
  %v8779 = vpop.f32.mrf.mxu0
  %v8780 = vadd.f32 0.0, %v8779
  %8781 = vmatmul.bf16.gmra.mxu0 %v8600
  %v8782 = vpop.f32.mrf.mxu0
  %v8783 = vadd.f32 0.0, %v8782
  %v8784 = vpop.f32.mrf.mxu0
  %v8785 = vadd.f32 0.0, %v8784
  %8786 = vmatmul.bf16.gmra.mxu0 %v8601
  %v8787 = vpop.f32.mrf.mxu0
  %v8788 = vadd.f32 0.0, %v8787
  %v8789 = vpop.f32.mrf.mxu0
  %v8790 = vadd.f32 0.0, %v8789
  %8791 = vmatmul.bf16.gmra.mxu0 %v8602
  %v8792 = vpop.f32.mrf.mxu0
  %v8793 = vadd.f32 0.0, %v8792
  %v8794 = vpop.f32.mrf.mxu0
  %v8795 = vadd.f32 0.0, %v8794
  %8796 = vmatmul.bf16.gmra.mxu0 %v8603
  %v8797 = vpop.f32.mrf.mxu0
  %v8798 = vadd.f32 0.0, %v8797
  %v8799 = vpop.f32.mrf.mxu0
  %v8800 = vadd.f32 0.0, %v8799
  %8801 = vmatmul.bf16.gmra.mxu0 %v8604
  %v8802 = vpop.f32.mrf.mxu0
  %v8803 = vadd.f32 0.0, %v8802
  %v8804 = vpop.f32.mrf.mxu0
  %v8805 = vadd.f32 0.0, %v8804
  %8806 = vmatmul.bf16.gmra.mxu0 %v8605
  %v8807 = vpop.f32.mrf.mxu0
  %v8808 = vadd.f32 0.0, %v8807
  %v8809 = vpop.f32.mrf.mxu0
  %v8810 = vadd.f32 0.0, %v8809
  %8811 = vmatmul.bf16.gmra.mxu0 %v8606
  %v8812 = vpop.f32.mrf.mxu0
  %v8813 = vadd.f32 0.0, %v8812
  %v8814 = vpop.f32.mrf.mxu0
  %v8815 = vadd.f32 0.0, %v8814
  %8816 = vmatmul.bf16.gmra.mxu0 %v8607
  %v8817 = vpop.f32.mrf.mxu0
  %v8818 = vadd.f32 0.0, %v8817
  %v8819 = vpop.f32.mrf.mxu0
  %v8820 = vadd.f32 0.0, %v8819
  %8821 = vmatmul.bf16.gmra.mxu0 %v8608
  %v8822 = vpop.f32.mrf.mxu0
  %v8823 = vadd.f32 0.0, %v8822
  %v8824 = vpop.f32.mrf.mxu0
  %v8825 = vadd.f32 0.0, %v8824
  %8826 = vmatmul.bf16.gmra.mxu0 %v8609
  %v8827 = vpop.f32.mrf.mxu0
  %v8828 = vadd.f32 0.0, %v8827
  %v8829 = vpop.f32.mrf.mxu0
  %v8830 = vadd.f32 0.0, %v8829
  %8831 = vmatmul.bf16.gmra.mxu0 %v8610
  %v8832 = vpop.f32.mrf.mxu0
  %v8833 = vadd.f32 0.0, %v8832
  %v8834 = vpop.f32.mrf.mxu0
  %v8835 = vadd.f32 0.0, %v8834
  %8836 = vmatmul.bf16.gmra.mxu0 %v8611
  %v8837 = vpop.f32.mrf.mxu0
  %v8838 = vadd.f32 0.0, %v8837
  %v8839 = vpop.f32.mrf.mxu0
  %v8840 = vadd.f32 0.0, %v8839
  %8841 = vmatmul.bf16.gmra.mxu0 %v8612
  %v8842 = vpop.f32.mrf.mxu0
  %v8843 = vadd.f32 0.0, %v8842
  %v8844 = vpop.f32.mrf.mxu0
  %v8845 = vadd.f32 0.0, %v8844
  %8846 = vdwg.mxu0
  %v8847 = vld [vmem:[#allocation4] sm:$0xff]
  %v8848 = vld [vmem:[#allocation4 + $0x8] sm:$0xff]
  %v8849 = vld [vmem:[#allocation4 + $0x10] sm:$0xff]
  %v8850 = vld [vmem:[#allocation4 + $0x18] sm:$0xff]
  %v8851 = vld [vmem:[#allocation4 + $0x20] sm:$0xff]
  %v8852 = vld [vmem:[#allocation4 + $0x28] sm:$0xff]
  %v8853 = vld [vmem:[#allocation4 + $0x30] sm:$0xff]
  %v8854 = vld [vmem:[#allocation4 + $0x38] sm:$0xff]
  %v8855 = vld [vmem:[#allocation4 + $0x40] sm:$0xff]
  %v8856 = vld [vmem:[#allocation4 + $0x48] sm:$0xff]
  %v8857 = vld [vmem:[#allocation4 + $0x50] sm:$0xff]
  %v8858 = vld [vmem:[#allocation4 + $0x58] sm:$0xff]
  %v8859 = vld [vmem:[#allocation4 + $0x60] sm:$0xff]
  %v8860 = vld [vmem:[#allocation4 + $0x68] sm:$0xff]
  %v8861 = vld [vmem:[#allocation4 + $0x70] sm:$0xff]
  %v8862 = vld [vmem:[#allocation4 + $0x78] sm:$0xff]
  %v8863 = vld [vmem:[#allocation4 + $0x80] sm:$0xff]
  %v8864 = vld [vmem:[#allocation4 + $0x88] sm:$0xff]
  %v8865 = vld [vmem:[#allocation4 + $0x90] sm:$0xff]
  %v8866 = vld [vmem:[#allocation4 + $0x98] sm:$0xff]
  %v8867 = vld [vmem:[#allocation4 + $0xa0] sm:$0xff]
  %v8868 = vld [vmem:[#allocation4 + $0xa8] sm:$0xff]
  %v8869 = vld [vmem:[#allocation4 + $0xb0] sm:$0xff]
  %v8870 = vld [vmem:[#allocation4 + $0xb8] sm:$0xff]
  %v8871 = vld [vmem:[#allocation4 + $0xc0] sm:$0xff]
  %v8872 = vld [vmem:[#allocation4 + $0xc8] sm:$0xff]
  %v8873 = vld [vmem:[#allocation4 + $0xd0] sm:$0xff]
  %v8874 = vld [vmem:[#allocation4 + $0xd8] sm:$0xff]
  %v8875 = vld [vmem:[#allocation4 + $0xe0] sm:$0xff]
  %v8876 = vld [vmem:[#allocation4 + $0xe8] sm:$0xff]
  %v8877 = vld [vmem:[#allocation4 + $0xf0] sm:$0xff]
  %v8878 = vld [vmem:[#allocation4 + $0xf8] sm:$0xff]
  %v8879 = vld [vmem:[#allocation4 + $0x100] sm:$0xff]
  %v8880 = vld [vmem:[#allocation4 + $0x108] sm:$0xff]
  %v8881 = vld [vmem:[#allocation4 + $0x110] sm:$0xff]
  %v8882 = vld [vmem:[#allocation4 + $0x118] sm:$0xff]
  %v8883 = vld [vmem:[#allocation4 + $0x120] sm:$0xff]
  %v8884 = vld [vmem:[#allocation4 + $0x128] sm:$0xff]
  %v8885 = vld [vmem:[#allocation4 + $0x130] sm:$0xff]
  %v8886 = vld [vmem:[#allocation4 + $0x138] sm:$0xff]
  %v8887 = vld [vmem:[#allocation4 + $0x140] sm:$0xff]
  %v8888 = vld [vmem:[#allocation4 + $0x148] sm:$0xff]
  %v8889 = vld [vmem:[#allocation4 + $0x150] sm:$0xff]
  %v8890 = vld [vmem:[#allocation4 + $0x158] sm:$0xff]
  %v8891 = vld [vmem:[#allocation4 + $0x160] sm:$0xff]
  %v8892 = vld [vmem:[#allocation4 + $0x168] sm:$0xff]
  %v8893 = vld [vmem:[#allocation4 + $0x170] sm:$0xff]
  %v8894 = vld [vmem:[#allocation4 + $0x178] sm:$0xff]
  %v8895 = vld [vmem:[#allocation4 + $0x180] sm:$0xff]
  %v8896 = vld [vmem:[#allocation4 + $0x188] sm:$0xff]
  %v8897 = vld [vmem:[#allocation4 + $0x190] sm:$0xff]
  %v8898 = vld [vmem:[#allocation4 + $0x198] sm:$0xff]
  %v8899 = vld [vmem:[#allocation4 + $0x1a0] sm:$0xff]
  %v8900 = vld [vmem:[#allocation4 + $0x1a8] sm:$0xff]
  %v8901 = vld [vmem:[#allocation4 + $0x1b0] sm:$0xff]
  %v8902 = vld [vmem:[#allocation4 + $0x1b8] sm:$0xff]
  %v8903 = vld [vmem:[#allocation4 + $0x1c0] sm:$0xff]
  %v8904 = vld [vmem:[#allocation4 + $0x1c8] sm:$0xff]
  %v8905 = vld [vmem:[#allocation4 + $0x1d0] sm:$0xff]
  %v8906 = vld [vmem:[#allocation4 + $0x1d8] sm:$0xff]
  %v8907 = vld [vmem:[#allocation4 + $0x1e0] sm:$0xff]
  %v8908 = vld [vmem:[#allocation4 + $0x1e8] sm:$0xff]
  %v8909 = vld [vmem:[#allocation4 + $0x1f0] sm:$0xff]
  %v8910 = vld [vmem:[#allocation4 + $0x1f8] sm:$0xff]
  %v8911 = vadd.f32 %v8847, %v8688
  %v8912 = vadd.f32 %v8848, %v8690
  %v8913 = vadd.f32 %v8849, %v8693
  %v8914 = vadd.f32 %v8850, %v8695
  %v8915 = vadd.f32 %v8851, %v8698
  %v8916 = vadd.f32 %v8852, %v8700
  %v8917 = vadd.f32 %v8853, %v8703
  %v8918 = vadd.f32 %v8854, %v8705
  %v8919 = vadd.f32 %v8855, %v8708
  %v8920 = vadd.f32 %v8856, %v8710
  %v8921 = vadd.f32 %v8857, %v8713
  %v8922 = vadd.f32 %v8858, %v8715
  %v8923 = vadd.f32 %v8859, %v8718
  %v8924 = vadd.f32 %v8860, %v8720
  %v8925 = vadd.f32 %v8861, %v8723
  %v8926 = vadd.f32 %v8862, %v8725
  %v8927 = vadd.f32 %v8863, %v8728
  %v8928 = vadd.f32 %v8864, %v8730
  %v8929 = vadd.f32 %v8865, %v8733
  %v8930 = vadd.f32 %v8866, %v8735
  %v8931 = vadd.f32 %v8867, %v8738
  %v8932 = vadd.f32 %v8868, %v8740
  %v8933 = vadd.f32 %v8869, %v8743
  %v8934 = vadd.f32 %v8870, %v8745
  %v8935 = vadd.f32 %v8871, %v8748
  %v8936 = vadd.f32 %v8872, %v8750
  %v8937 = vadd.f32 %v8873, %v8753
  %v8938 = vadd.f32 %v8874, %v8755
  %v8939 = vadd.f32 %v8875, %v8758
  %v8940 = vadd.f32 %v8876, %v8760
  %v8941 = vadd.f32 %v8877, %v8763
  %v8942 = vadd.f32 %v8878, %v8765
  %v8943 = vadd.f32 %v8879, %v8768
  %v8944 = vadd.f32 %v8880, %v8770
  %v8945 = vadd.f32 %v8881, %v8773
  %v8946 = vadd.f32 %v8882, %v8775
  %v8947 = vadd.f32 %v8883, %v8778
  %v8948 = vadd.f32 %v8884, %v8780
  %v8949 = vadd.f32 %v8885, %v8783
  %v8950 = vadd.f32 %v8886, %v8785
  %v8951 = vadd.f32 %v8887, %v8788
  %v8952 = vadd.f32 %v8888, %v8790
  %v8953 = vadd.f32 %v8889, %v8793
  %v8954 = vadd.f32 %v8890, %v8795
  %v8955 = vadd.f32 %v8891, %v8798
  %v8956 = vadd.f32 %v8892, %v8800
  %v8957 = vadd.f32 %v8893, %v8803
  %v8958 = vadd.f32 %v8894, %v8805
  %v8959 = vadd.f32 %v8895, %v8808
  %v8960 = vadd.f32 %v8896, %v8810
  %v8961 = vadd.f32 %v8897, %v8813
  %v8962 = vadd.f32 %v8898, %v8815
  %v8963 = vadd.f32 %v8899, %v8818
  %v8964 = vadd.f32 %v8900, %v8820
  %v8965 = vadd.f32 %v8901, %v8823
  %v8966 = vadd.f32 %v8902, %v8825
  %v8967 = vadd.f32 %v8903, %v8828
  %v8968 = vadd.f32 %v8904, %v8830
  %v8969 = vadd.f32 %v8905, %v8833
  %v8970 = vadd.f32 %v8906, %v8835
  %v8971 = vadd.f32 %v8907, %v8838
  %v8972 = vadd.f32 %v8908, %v8840
  %v8973 = vadd.f32 %v8909, %v8843
  %v8974 = vadd.f32 %v8910, %v8845
  %8975 = vst [vmem:[#allocation4] sm:$0xff] %v8911
  %8976 = vst [vmem:[#allocation4 + $0x8] sm:$0xff] %v8912
  %8977 = vst [vmem:[#allocation4 + $0x10] sm:$0xff] %v8913
  %8978 = vst [vmem:[#allocation4 + $0x18] sm:$0xff] %v8914
  %8979 = vst [vmem:[#allocation4 + $0x20] sm:$0xff] %v8915
  %8980 = vst [vmem:[#allocation4 + $0x28] sm:$0xff] %v8916
  %8981 = vst [vmem:[#allocation4 + $0x30] sm:$0xff] %v8917
  %8982 = vst [vmem:[#allocation4 + $0x38] sm:$0xff] %v8918
  %8983 = vst [vmem:[#allocation4 + $0x40] sm:$0xff] %v8919
  %8984 = vst [vmem:[#allocation4 + $0x48] sm:$0xff] %v8920
  %8985 = vst [vmem:[#allocation4 + $0x50] sm:$0xff] %v8921
  %8986 = vst [vmem:[#allocation4 + $0x58] sm:$0xff] %v8922
  %8987 = vst [vmem:[#allocation4 + $0x60] sm:$0xff] %v8923
  %8988 = vst [vmem:[#allocation4 + $0x68] sm:$0xff] %v8924
  %8989 = vst [vmem:[#allocation4 + $0x70] sm:$0xff] %v8925
  %8990 = vst [vmem:[#allocation4 + $0x78] sm:$0xff] %v8926
  %8991 = vst [vmem:[#allocation4 + $0x80] sm:$0xff] %v8927
  %8992 = vst [vmem:[#allocation4 + $0x88] sm:$0xff] %v8928
  %8993 = vst [vmem:[#allocation4 + $0x90] sm:$0xff] %v8929
  %8994 = vst [vmem:[#allocation4 + $0x98] sm:$0xff] %v8930
  %8995 = vst [vmem:[#allocation4 + $0xa0] sm:$0xff] %v8931
  %8996 = vst [vmem:[#allocation4 + $0xa8] sm:$0xff] %v8932
  %8997 = vst [vmem:[#allocation4 + $0xb0] sm:$0xff] %v8933
  %8998 = vst [vmem:[#allocation4 + $0xb8] sm:$0xff] %v8934
  %8999 = vst [vmem:[#allocation4 + $0xc0] sm:$0xff] %v8935
  %9000 = vst [vmem:[#allocation4 + $0xc8] sm:$0xff] %v8936
  %9001 = vst [vmem:[#allocation4 + $0xd0] sm:$0xff] %v8937
  %9002 = vst [vmem:[#allocation4 + $0xd8] sm:$0xff] %v8938
  %9003 = vst [vmem:[#allocation4 + $0xe0] sm:$0xff] %v8939
  %9004 = vst [vmem:[#allocation4 + $0xe8] sm:$0xff] %v8940
  %9005 = vst [vmem:[#allocation4 + $0xf0] sm:$0xff] %v8941
  %9006 = vst [vmem:[#allocation4 + $0xf8] sm:$0xff] %v8942
  %9007 = vst [vmem:[#allocation4 + $0x100] sm:$0xff] %v8943
  %9008 = vst [vmem:[#allocation4 + $0x108] sm:$0xff] %v8944
  %9009 = vst [vmem:[#allocation4 + $0x110] sm:$0xff] %v8945
  %9010 = vst [vmem:[#allocation4 + $0x118] sm:$0xff] %v8946
  %9011 = vst [vmem:[#allocation4 + $0x120] sm:$0xff] %v8947
  %9012 = vst [vmem:[#allocation4 + $0x128] sm:$0xff] %v8948
  %9013 = vst [vmem:[#allocation4 + $0x130] sm:$0xff] %v8949
  %9014 = vst [vmem:[#allocation4 + $0x138] sm:$0xff] %v8950
  %9015 = vst [vmem:[#allocation4 + $0x140] sm:$0xff] %v8951
  %9016 = vst [vmem:[#allocation4 + $0x148] sm:$0xff] %v8952
  %9017 = vst [vmem:[#allocation4 + $0x150] sm:$0xff] %v8953
  %9018 = vst [vmem:[#allocation4 + $0x158] sm:$0xff] %v8954
  %9019 = vst [vmem:[#allocation4 + $0x160] sm:$0xff] %v8955
  %9020 = vst [vmem:[#allocation4 + $0x168] sm:$0xff] %v8956
  %9021 = vst [vmem:[#allocation4 + $0x170] sm:$0xff] %v8957
  %9022 = vst [vmem:[#allocation4 + $0x178] sm:$0xff] %v8958
  %9023 = vst [vmem:[#allocation4 + $0x180] sm:$0xff] %v8959
  %9024 = vst [vmem:[#allocation4 + $0x188] sm:$0xff] %v8960
  %9025 = vst [vmem:[#allocation4 + $0x190] sm:$0xff] %v8961
  %9026 = vst [vmem:[#allocation4 + $0x198] sm:$0xff] %v8962
  %9027 = vst [vmem:[#allocation4 + $0x1a0] sm:$0xff] %v8963
  %9028 = vst [vmem:[#allocation4 + $0x1a8] sm:$0xff] %v8964
  %9029 = vst [vmem:[#allocation4 + $0x1b0] sm:$0xff] %v8965
  %9030 = vst [vmem:[#allocation4 + $0x1b8] sm:$0xff] %v8966
  %9031 = vst [vmem:[#allocation4 + $0x1c0] sm:$0xff] %v8967
  %9032 = vst [vmem:[#allocation4 + $0x1c8] sm:$0xff] %v8968
  %9033 = vst [vmem:[#allocation4 + $0x1d0] sm:$0xff] %v8969
  %9034 = vst [vmem:[#allocation4 + $0x1d8] sm:$0xff] %v8970
  %9035 = vst [vmem:[#allocation4 + $0x1e0] sm:$0xff] %v8971
  %9036 = vst [vmem:[#allocation4 + $0x1e8] sm:$0xff] %v8972
  %9037 = vst [vmem:[#allocation4 + $0x1f0] sm:$0xff] %v8973
  %9038 = vst [vmem:[#allocation4 + $0x1f8] sm:$0xff] %v8974
  %v9039 = vld [vmem:[%s8516 + $0x1] sm:$0xff]
  %v9040 = vld [vmem:[%s8516 + $0x9] sm:$0xff]
  %v9041 = vld [vmem:[%s8516 + $0x19] sm:$0xff]
  %v9042 = vld [vmem:[%s8516 + $0x21] sm:$0xff]
  %v9043 = vld [vmem:[%s8516 + $0x31] sm:$0xff]
  %v9044 = vld [vmem:[%s8516 + $0x39] sm:$0xff]
  %v9045 = vld [vmem:[%s8516 + $0x49] sm:$0xff]
  %v9046 = vld [vmem:[%s8516 + $0x51] sm:$0xff]
  %v9047 = vld [vmem:[%s8516 + $0x61] sm:$0xff]
  %v9048 = vld [vmem:[%s8516 + $0x69] sm:$0xff]
  %v9049 = vld [vmem:[%s8516 + $0x79] sm:$0xff]
  %v9050 = vld [vmem:[%s8516 + $0x81] sm:$0xff]
  %v9051 = vld [vmem:[%s8516 + $0x91] sm:$0xff]
  %v9052 = vld [vmem:[%s8516 + $0x99] sm:$0xff]
  %v9053 = vld [vmem:[%s8516 + $0xa9] sm:$0xff]
  %v9054 = vld [vmem:[%s8516 + $0xb1] sm:$0xff]
  %v9055 = vld [vmem:[%s8516 + $0xc1] sm:$0xff]
  %v9056 = vld [vmem:[%s8516 + $0xc9] sm:$0xff]
  %v9057 = vld [vmem:[%s8516 + $0xd9] sm:$0xff]
  %v9058 = vld [vmem:[%s8516 + $0xe1] sm:$0xff]
  %v9059 = vld [vmem:[%s8516 + $0xf1] sm:$0xff]
  %v9060 = vld [vmem:[%s8516 + $0xf9] sm:$0xff]
  %v9061 = vld [vmem:[%s8516 + $0x109] sm:$0xff]
  %v9062 = vld [vmem:[%s8516 + $0x111] sm:$0xff]
  %v9063 = vld [vmem:[%s8516 + $0x121] sm:$0xff]
  %v9064 = vld [vmem:[%s8516 + $0x129] sm:$0xff]
  %v9065 = vld [vmem:[%s8516 + $0x139] sm:$0xff]
  %v9066 = vld [vmem:[%s8516 + $0x141] sm:$0xff]
  %v9067 = vld [vmem:[%s8516 + $0x151] sm:$0xff]
  %v9068 = vld [vmem:[%s8516 + $0x159] sm:$0xff]
  %v9069 = vld [vmem:[%s8516 + $0x169] sm:$0xff]
  %v9070 = vld [vmem:[%s8516 + $0x171] sm:$0xff]
  %v9071 = vld [vmem:[%s8516 + $0x1b1] sm:$0xff]
  %v9072 = vld [vmem:[%s8516 + $0x1b9] sm:$0xff]
  %v9073 = vld [vmem:[%s8516 + $0x1c9] sm:$0xff]
  %v9074 = vld [vmem:[%s8516 + $0x1d1] sm:$0xff]
  %v9075 = vld [vmem:[%s8516 + $0x1e1] sm:$0xff]
  %v9076 = vld [vmem:[%s8516 + $0x1e9] sm:$0xff]
  %v9077 = vld [vmem:[%s8516 + $0x1f9] sm:$0xff]
  %v9078 = vld [vmem:[%s8516 + $0x201] sm:$0xff]
  %v9079 = vld [vmem:[%s8516 + $0x211] sm:$0xff]
  %v9080 = vld [vmem:[%s8516 + $0x219] sm:$0xff]
  %v9081 = vld [vmem:[%s8516 + $0x229] sm:$0xff]
  %v9082 = vld [vmem:[%s8516 + $0x231] sm:$0xff]
  %v9083 = vld [vmem:[%s8516 + $0x241] sm:$0xff]
  %v9084 = vld [vmem:[%s8516 + $0x249] sm:$0xff]
  %v9085 = vld [vmem:[%s8516 + $0x259] sm:$0xff]
  %v9086 = vld [vmem:[%s8516 + $0x261] sm:$0xff]
  %v9087 = vld [vmem:[%s8516 + $0x271] sm:$0xff]
  %v9088 = vld [vmem:[%s8516 + $0x279] sm:$0xff]
  %v9089 = vld [vmem:[%s8516 + $0x289] sm:$0xff]
  %v9090 = vld [vmem:[%s8516 + $0x291] sm:$0xff]
  %v9091 = vld [vmem:[%s8516 + $0x2a1] sm:$0xff]
  %v9092 = vld [vmem:[%s8516 + $0x2a9] sm:$0xff]
  %v9093 = vld [vmem:[%s8516 + $0x2b9] sm:$0xff]
  %v9094 = vld [vmem:[%s8516 + $0x2c1] sm:$0xff]
  %v9095 = vld [vmem:[%s8516 + $0x2d1] sm:$0xff]
  %v9096 = vld [vmem:[%s8516 + $0x2d9] sm:$0xff]
  %v9097 = vld [vmem:[%s8516 + $0x2e9] sm:$0xff]
  %v9098 = vld [vmem:[%s8516 + $0x2f1] sm:$0xff]
  %v9099 = vld [vmem:[%s8516 + $0x301] sm:$0xff]
  %v9100 = vld [vmem:[%s8516 + $0x309] sm:$0xff]
  %v9101 = vld [vmem:[%s8516 + $0x319] sm:$0xff]
  %v9102 = vld [vmem:[%s8516 + $0x321] sm:$0xff]
  %v9103 = vpack.c.bf16 %v9040, %v9039
  %v9104 = vpack.c.bf16 %v9042, %v9041
  %v9105 = vpack.c.bf16 %v9044, %v9043
  %v9106 = vpack.c.bf16 %v9046, %v9045
  %v9107 = vpack.c.bf16 %v9048, %v9047
  %v9108 = vpack.c.bf16 %v9050, %v9049
  %v9109 = vpack.c.bf16 %v9052, %v9051
  %v9110 = vpack.c.bf16 %v9054, %v9053
  %v9111 = vpack.c.bf16 %v9056, %v9055
  %v9112 = vpack.c.bf16 %v9058, %v9057
  %v9113 = vpack.c.bf16 %v9060, %v9059
  %v9114 = vpack.c.bf16 %v9062, %v9061
  %v9115 = vpack.c.bf16 %v9064, %v9063
  %v9116 = vpack.c.bf16 %v9066, %v9065
  %v9117 = vpack.c.bf16 %v9068, %v9067
  %v9118 = vpack.c.bf16 %v9070, %v9069
  %v9119 = vpack.c.bf16 %v9072, %v9071
  %v9120 = vpack.c.bf16 %v9074, %v9073
  %v9121 = vpack.c.bf16 %v9076, %v9075
  %v9122 = vpack.c.bf16 %v9078, %v9077
  %v9123 = vpack.c.bf16 %v9080, %v9079
  %v9124 = vpack.c.bf16 %v9082, %v9081
  %v9125 = vpack.c.bf16 %v9084, %v9083
  %v9126 = vpack.c.bf16 %v9086, %v9085
  %v9127 = vpack.c.bf16 %v9088, %v9087
  %v9128 = vpack.c.bf16 %v9090, %v9089
  %v9129 = vpack.c.bf16 %v9092, %v9091
  %v9130 = vpack.c.bf16 %v9094, %v9093
  %v9131 = vpack.c.bf16 %v9096, %v9095
  %v9132 = vpack.c.bf16 %v9098, %v9097
  %v9133 = vpack.c.bf16 %v9100, %v9099
  %v9134 = vpack.c.bf16 %v9102, %v9101
  %s9135 = scalar_lea.vmem %s4, 448
  %v9136 = vld [vmem:[%s9135] sm:$0xf]
  %v9137 = vld [vmem:[%s9135 + $0x4] sm:$0xf]
  %v9138 = vld [vmem:[%s9135 + $0x8] sm:$0xf]
  %v9139 = vld [vmem:[%s9135 + $0xc] sm:$0xf]
  %v9140 = vld [vmem:[%s9135 + $0x10] sm:$0xf]
  %v9141 = vld [vmem:[%s9135 + $0x14] sm:$0xf]
  %v9142 = vld [vmem:[%s9135 + $0x18] sm:$0xf]
  %v9143 = vld [vmem:[%s9135 + $0x1c] sm:$0xf]
  %v9144 = vld [vmem:[%s9135 + $0x20] sm:$0xf]
  %v9145 = vld [vmem:[%s9135 + $0x24] sm:$0xf]
  %v9146 = vld [vmem:[%s9135 + $0x28] sm:$0xf]
  %v9147 = vld [vmem:[%s9135 + $0x2c] sm:$0xf]
  %v9148 = vld [vmem:[%s9135 + $0x30] sm:$0xf]
  %v9149 = vld [vmem:[%s9135 + $0x34] sm:$0xf]
  %v9150 = vld [vmem:[%s9135 + $0x38] sm:$0xf]
  %v9151 = vld [vmem:[%s9135 + $0x3c] sm:$0xf]
  %v9168 = vunpack.c.l.b16 %v9136
  %v9169 = vunpack.c.l.b16 %v9137
  %v9170 = vunpack.c.l.b16 %v9138
  %v9171 = vunpack.c.l.b16 %v9139
  %v9172 = vunpack.c.l.b16 %v9140
  %v9173 = vunpack.c.l.b16 %v9141
  %v9174 = vunpack.c.l.b16 %v9142
  %v9175 = vunpack.c.l.b16 %v9143
  %v9176 = vunpack.c.l.b16 %v9144
  %v9177 = vunpack.c.l.b16 %v9145
  %v9178 = vunpack.c.l.b16 %v9146
  %v9179 = vunpack.c.l.b16 %v9147
  %v9180 = vunpack.c.l.b16 %v9148
  %v9181 = vunpack.c.l.b16 %v9149
  %v9182 = vunpack.c.l.b16 %v9150
  %v9183 = vunpack.c.l.b16 %v9151
  %v9184 = vpack.c.b16 %v9169, %v9168
  %v9185 = vpack.c.b16 %v9171, %v9170
  %v9186 = vpack.c.b16 %v9173, %v9172
  %v9187 = vpack.c.b16 %v9175, %v9174
  %v9188 = vpack.c.b16 %v9177, %v9176
  %v9189 = vpack.c.b16 %v9179, %v9178
  %v9190 = vpack.c.b16 %v9181, %v9180
  %v9191 = vpack.c.b16 %v9183, %v9182
  %9200 = vmatpush.bf16.msra.mxu0 %v9191
  %9201 = vmatpush.bf16.msra.mxu0 %v9190
  %9202 = vmatpush.bf16.msra.mxu0 %v9189
  %9203 = vmatpush.bf16.msra.mxu0 %v9188
  %9204 = vmatpush.bf16.msra.mxu0 %v9187
  %9205 = vmatpush.bf16.msra.mxu0 %v9186
  %9206 = vmatpush.bf16.msra.mxu0 %v9185
  %9207 = vmatpush.bf16.msra.mxu0 %v9184
  %9208 = vmatmul.bf16.gmra.mxu0 %v9103
  %v9209 = vpop.f32.mrf.mxu0
  %v9210 = vadd.f32 0.0, %v9209
  %v9211 = vpop.f32.mrf.mxu0
  %v9212 = vadd.f32 0.0, %v9211
  %9213 = vmatmul.bf16.gmra.mxu0 %v9104
  %v9214 = vpop.f32.mrf.mxu0
  %v9215 = vadd.f32 0.0, %v9214
  %v9216 = vpop.f32.mrf.mxu0
  %v9217 = vadd.f32 0.0, %v9216
  %9218 = vmatmul.bf16.gmra.mxu0 %v9105
  %v9219 = vpop.f32.mrf.mxu0
  %v9220 = vadd.f32 0.0, %v9219
  %v9221 = vpop.f32.mrf.mxu0
  %v9222 = vadd.f32 0.0, %v9221
  %9223 = vmatmul.bf16.gmra.mxu0 %v9106
  %v9224 = vpop.f32.mrf.mxu0
  %v9225 = vadd.f32 0.0, %v9224
  %v9226 = vpop.f32.mrf.mxu0
  %v9227 = vadd.f32 0.0, %v9226
  %9228 = vmatmul.bf16.gmra.mxu0 %v9107
  %v9229 = vpop.f32.mrf.mxu0
  %v9230 = vadd.f32 0.0, %v9229
  %v9231 = vpop.f32.mrf.mxu0
  %v9232 = vadd.f32 0.0, %v9231
  %9233 = vmatmul.bf16.gmra.mxu0 %v9108
  %v9234 = vpop.f32.mrf.mxu0
  %v9235 = vadd.f32 0.0, %v9234
  %v9236 = vpop.f32.mrf.mxu0
  %v9237 = vadd.f32 0.0, %v9236
  %9238 = vmatmul.bf16.gmra.mxu0 %v9109
  %v9239 = vpop.f32.mrf.mxu0
  %v9240 = vadd.f32 0.0, %v9239
  %v9241 = vpop.f32.mrf.mxu0
  %v9242 = vadd.f32 0.0, %v9241
  %9243 = vmatmul.bf16.gmra.mxu0 %v9110
  %v9244 = vpop.f32.mrf.mxu0
  %v9245 = vadd.f32 0.0, %v9244
  %v9246 = vpop.f32.mrf.mxu0
  %v9247 = vadd.f32 0.0, %v9246
  %9248 = vmatmul.bf16.gmra.mxu0 %v9111
  %v9249 = vpop.f32.mrf.mxu0
  %v9250 = vadd.f32 0.0, %v9249
  %v9251 = vpop.f32.mrf.mxu0
  %v9252 = vadd.f32 0.0, %v9251
  %9253 = vmatmul.bf16.gmra.mxu0 %v9112
  %v9254 = vpop.f32.mrf.mxu0
  %v9255 = vadd.f32 0.0, %v9254
  %v9256 = vpop.f32.mrf.mxu0
  %v9257 = vadd.f32 0.0, %v9256
  %9258 = vmatmul.bf16.gmra.mxu0 %v9113
  %v9259 = vpop.f32.mrf.mxu0
  %v9260 = vadd.f32 0.0, %v9259
  %v9261 = vpop.f32.mrf.mxu0
  %v9262 = vadd.f32 0.0, %v9261
  %9263 = vmatmul.bf16.gmra.mxu0 %v9114
  %v9264 = vpop.f32.mrf.mxu0
  %v9265 = vadd.f32 0.0, %v9264
  %v9266 = vpop.f32.mrf.mxu0
  %v9267 = vadd.f32 0.0, %v9266
  %9268 = vmatmul.bf16.gmra.mxu0 %v9115
  %v9269 = vpop.f32.mrf.mxu0
  %v9270 = vadd.f32 0.0, %v9269
  %v9271 = vpop.f32.mrf.mxu0
  %v9272 = vadd.f32 0.0, %v9271
  %9273 = vmatmul.bf16.gmra.mxu0 %v9116
  %v9274 = vpop.f32.mrf.mxu0
  %v9275 = vadd.f32 0.0, %v9274
  %v9276 = vpop.f32.mrf.mxu0
  %v9277 = vadd.f32 0.0, %v9276
  %9278 = vmatmul.bf16.gmra.mxu0 %v9117
  %v9279 = vpop.f32.mrf.mxu0
  %v9280 = vadd.f32 0.0, %v9279
  %v9281 = vpop.f32.mrf.mxu0
  %v9282 = vadd.f32 0.0, %v9281
  %9283 = vmatmul.bf16.gmra.mxu0 %v9118
  %v9284 = vpop.f32.mrf.mxu0
  %v9285 = vadd.f32 0.0, %v9284
  %v9286 = vpop.f32.mrf.mxu0
  %v9287 = vadd.f32 0.0, %v9286
  %9288 = vmatmul.bf16.gmra.mxu0 %v9119
  %v9289 = vpop.f32.mrf.mxu0
  %v9290 = vadd.f32 0.0, %v9289
  %v9291 = vpop.f32.mrf.mxu0
  %v9292 = vadd.f32 0.0, %v9291
  %9293 = vmatmul.bf16.gmra.mxu0 %v9120
  %v9294 = vpop.f32.mrf.mxu0
  %v9295 = vadd.f32 0.0, %v9294
  %v9296 = vpop.f32.mrf.mxu0
  %v9297 = vadd.f32 0.0, %v9296
  %9298 = vmatmul.bf16.gmra.mxu0 %v9121
  %v9299 = vpop.f32.mrf.mxu0
  %v9300 = vadd.f32 0.0, %v9299
  %v9301 = vpop.f32.mrf.mxu0
  %v9302 = vadd.f32 0.0, %v9301
  %9303 = vmatmul.bf16.gmra.mxu0 %v9122
  %v9304 = vpop.f32.mrf.mxu0
  %v9305 = vadd.f32 0.0, %v9304
  %v9306 = vpop.f32.mrf.mxu0
  %v9307 = vadd.f32 0.0, %v9306
  %9308 = vmatmul.bf16.gmra.mxu0 %v9123
  %v9309 = vpop.f32.mrf.mxu0
  %v9310 = vadd.f32 0.0, %v9309
  %v9311 = vpop.f32.mrf.mxu0
  %v9312 = vadd.f32 0.0, %v9311
  %9313 = vmatmul.bf16.gmra.mxu0 %v9124
  %v9314 = vpop.f32.mrf.mxu0
  %v9315 = vadd.f32 0.0, %v9314
  %v9316 = vpop.f32.mrf.mxu0
  %v9317 = vadd.f32 0.0, %v9316
  %9318 = vmatmul.bf16.gmra.mxu0 %v9125
  %v9319 = vpop.f32.mrf.mxu0
  %v9320 = vadd.f32 0.0, %v9319
  %v9321 = vpop.f32.mrf.mxu0
  %v9322 = vadd.f32 0.0, %v9321
  %9323 = vmatmul.bf16.gmra.mxu0 %v9126
  %v9324 = vpop.f32.mrf.mxu0
  %v9325 = vadd.f32 0.0, %v9324
  %v9326 = vpop.f32.mrf.mxu0
  %v9327 = vadd.f32 0.0, %v9326
  %9328 = vmatmul.bf16.gmra.mxu0 %v9127
  %v9329 = vpop.f32.mrf.mxu0
  %v9330 = vadd.f32 0.0, %v9329
  %v9331 = vpop.f32.mrf.mxu0
  %v9332 = vadd.f32 0.0, %v9331
  %9333 = vmatmul.bf16.gmra.mxu0 %v9128
  %v9334 = vpop.f32.mrf.mxu0
  %v9335 = vadd.f32 0.0, %v9334
  %v9336 = vpop.f32.mrf.mxu0
  %v9337 = vadd.f32 0.0, %v9336
  %9338 = vmatmul.bf16.gmra.mxu0 %v9129
  %v9339 = vpop.f32.mrf.mxu0
  %v9340 = vadd.f32 0.0, %v9339
  %v9341 = vpop.f32.mrf.mxu0
  %v9342 = vadd.f32 0.0, %v9341
  %9343 = vmatmul.bf16.gmra.mxu0 %v9130
  %v9344 = vpop.f32.mrf.mxu0
  %v9345 = vadd.f32 0.0, %v9344
  %v9346 = vpop.f32.mrf.mxu0
  %v9347 = vadd.f32 0.0, %v9346
  %9348 = vmatmul.bf16.gmra.mxu0 %v9131
  %v9349 = vpop.f32.mrf.mxu0
  %v9350 = vadd.f32 0.0, %v9349
  %v9351 = vpop.f32.mrf.mxu0
  %v9352 = vadd.f32 0.0, %v9351
  %9353 = vmatmul.bf16.gmra.mxu0 %v9132
  %v9354 = vpop.f32.mrf.mxu0
  %v9355 = vadd.f32 0.0, %v9354
  %v9356 = vpop.f32.mrf.mxu0
  %v9357 = vadd.f32 0.0, %v9356
  %9358 = vmatmul.bf16.gmra.mxu0 %v9133
  %v9359 = vpop.f32.mrf.mxu0
  %v9360 = vadd.f32 0.0, %v9359
  %v9361 = vpop.f32.mrf.mxu0
  %v9362 = vadd.f32 0.0, %v9361
  %9363 = vmatmul.bf16.gmra.mxu0 %v9134
  %v9364 = vpop.f32.mrf.mxu0
  %v9365 = vadd.f32 0.0, %v9364
  %v9366 = vpop.f32.mrf.mxu0
  %v9367 = vadd.f32 0.0, %v9366
  %9368 = vdwg.mxu0
  %v9369 = vld [vmem:[#allocation4] sm:$0xff]
  %v9370 = vld [vmem:[#allocation4 + $0x8] sm:$0xff]
  %v9371 = vld [vmem:[#allocation4 + $0x10] sm:$0xff]
  %v9372 = vld [vmem:[#allocation4 + $0x18] sm:$0xff]
  %v9373 = vld [vmem:[#allocation4 + $0x20] sm:$0xff]
  %v9374 = vld [vmem:[#allocation4 + $0x28] sm:$0xff]
  %v9375 = vld [vmem:[#allocation4 + $0x30] sm:$0xff]
  %v9376 = vld [vmem:[#allocation4 + $0x38] sm:$0xff]
  %v9377 = vld [vmem:[#allocation4 + $0x40] sm:$0xff]
  %v9378 = vld [vmem:[#allocation4 + $0x48] sm:$0xff]
  %v9379 = vld [vmem:[#allocation4 + $0x50] sm:$0xff]
  %v9380 = vld [vmem:[#allocation4 + $0x58] sm:$0xff]
  %v9381 = vld [vmem:[#allocation4 + $0x60] sm:$0xff]
  %v9382 = vld [vmem:[#allocation4 + $0x68] sm:$0xff]
  %v9383 = vld [vmem:[#allocation4 + $0x70] sm:$0xff]
  %v9384 = vld [vmem:[#allocation4 + $0x78] sm:$0xff]
  %v9385 = vld [vmem:[#allocation4 + $0x80] sm:$0xff]
  %v9386 = vld [vmem:[#allocation4 + $0x88] sm:$0xff]
  %v9387 = vld [vmem:[#allocation4 + $0x90] sm:$0xff]
  %v9388 = vld [vmem:[#allocation4 + $0x98] sm:$0xff]
  %v9389 = vld [vmem:[#allocation4 + $0xa0] sm:$0xff]
  %v9390 = vld [vmem:[#allocation4 + $0xa8] sm:$0xff]
  %v9391 = vld [vmem:[#allocation4 + $0xb0] sm:$0xff]
  %v9392 = vld [vmem:[#allocation4 + $0xb8] sm:$0xff]
  %v9393 = vld [vmem:[#allocation4 + $0xc0] sm:$0xff]
  %v9394 = vld [vmem:[#allocation4 + $0xc8] sm:$0xff]
  %v9395 = vld [vmem:[#allocation4 + $0xd0] sm:$0xff]
  %v9396 = vld [vmem:[#allocation4 + $0xd8] sm:$0xff]
  %v9397 = vld [vmem:[#allocation4 + $0xe0] sm:$0xff]
  %v9398 = vld [vmem:[#allocation4 + $0xe8] sm:$0xff]
  %v9399 = vld [vmem:[#allocation4 + $0xf0] sm:$0xff]
  %v9400 = vld [vmem:[#allocation4 + $0xf8] sm:$0xff]
  %v9401 = vld [vmem:[#allocation4 + $0x100] sm:$0xff]
  %v9402 = vld [vmem:[#allocation4 + $0x108] sm:$0xff]
  %v9403 = vld [vmem:[#allocation4 + $0x110] sm:$0xff]
  %v9404 = vld [vmem:[#allocation4 + $0x118] sm:$0xff]
  %v9405 = vld [vmem:[#allocation4 + $0x120] sm:$0xff]
  %v9406 = vld [vmem:[#allocation4 + $0x128] sm:$0xff]
  %v9407 = vld [vmem:[#allocation4 + $0x130] sm:$0xff]
  %v9408 = vld [vmem:[#allocation4 + $0x138] sm:$0xff]
  %v9409 = vld [vmem:[#allocation4 + $0x140] sm:$0xff]
  %v9410 = vld [vmem:[#allocation4 + $0x148] sm:$0xff]
  %v9411 = vld [vmem:[#allocation4 + $0x150] sm:$0xff]
  %v9412 = vld [vmem:[#allocation4 + $0x158] sm:$0xff]
  %v9413 = vld [vmem:[#allocation4 + $0x160] sm:$0xff]
  %v9414 = vld [vmem:[#allocation4 + $0x168] sm:$0xff]
  %v9415 = vld [vmem:[#allocation4 + $0x170] sm:$0xff]
  %v9416 = vld [vmem:[#allocation4 + $0x178] sm:$0xff]
  %v9417 = vld [vmem:[#allocation4 + $0x180] sm:$0xff]
  %v9418 = vld [vmem:[#allocation4 + $0x188] sm:$0xff]
  %v9419 = vld [vmem:[#allocation4 + $0x190] sm:$0xff]
  %v9420 = vld [vmem:[#allocation4 + $0x198] sm:$0xff]
  %v9421 = vld [vmem:[#allocation4 + $0x1a0] sm:$0xff]
  %v9422 = vld [vmem:[#allocation4 + $0x1a8] sm:$0xff]
  %v9423 = vld [vmem:[#allocation4 + $0x1b0] sm:$0xff]
  %v9424 = vld [vmem:[#allocation4 + $0x1b8] sm:$0xff]
  %v9425 = vld [vmem:[#allocation4 + $0x1c0] sm:$0xff]
  %v9426 = vld [vmem:[#allocation4 + $0x1c8] sm:$0xff]
  %v9427 = vld [vmem:[#allocation4 + $0x1d0] sm:$0xff]
  %v9428 = vld [vmem:[#allocation4 + $0x1d8] sm:$0xff]
  %v9429 = vld [vmem:[#allocation4 + $0x1e0] sm:$0xff]
  %v9430 = vld [vmem:[#allocation4 + $0x1e8] sm:$0xff]
  %v9431 = vld [vmem:[#allocation4 + $0x1f0] sm:$0xff]
  %v9432 = vld [vmem:[#allocation4 + $0x1f8] sm:$0xff]
  %v9433 = vadd.f32 %v9369, %v9210
  %v9434 = vadd.f32 %v9370, %v9212
  %v9435 = vadd.f32 %v9371, %v9215
  %v9436 = vadd.f32 %v9372, %v9217
  %v9437 = vadd.f32 %v9373, %v9220
  %v9438 = vadd.f32 %v9374, %v9222
  %v9439 = vadd.f32 %v9375, %v9225
  %v9440 = vadd.f32 %v9376, %v9227
  %v9441 = vadd.f32 %v9377, %v9230
  %v9442 = vadd.f32 %v9378, %v9232
  %v9443 = vadd.f32 %v9379, %v9235
  %v9444 = vadd.f32 %v9380, %v9237
  %v9445 = vadd.f32 %v9381, %v9240
  %v9446 = vadd.f32 %v9382, %v9242
  %v9447 = vadd.f32 %v9383, %v9245
  %v9448 = vadd.f32 %v9384, %v9247
  %v9449 = vadd.f32 %v9385, %v9250
  %v9450 = vadd.f32 %v9386, %v9252
  %v9451 = vadd.f32 %v9387, %v9255
  %v9452 = vadd.f32 %v9388, %v9257
  %v9453 = vadd.f32 %v9389, %v9260
  %v9454 = vadd.f32 %v9390, %v9262
  %v9455 = vadd.f32 %v9391, %v9265
  %v9456 = vadd.f32 %v9392, %v9267
  %v9457 = vadd.f32 %v9393, %v9270
  %v9458 = vadd.f32 %v9394, %v9272
  %v9459 = vadd.f32 %v9395, %v9275
  %v9460 = vadd.f32 %v9396, %v9277
  %v9461 = vadd.f32 %v9397, %v9280
  %v9462 = vadd.f32 %v9398, %v9282
  %v9463 = vadd.f32 %v9399, %v9285
  %v9464 = vadd.f32 %v9400, %v9287
  %v9465 = vadd.f32 %v9401, %v9290
  %v9466 = vadd.f32 %v9402, %v9292
  %v9467 = vadd.f32 %v9403, %v9295
  %v9468 = vadd.f32 %v9404, %v9297
  %v9469 = vadd.f32 %v9405, %v9300
  %v9470 = vadd.f32 %v9406, %v9302
  %v9471 = vadd.f32 %v9407, %v9305
  %v9472 = vadd.f32 %v9408, %v9307
  %v9473 = vadd.f32 %v9409, %v9310
  %v9474 = vadd.f32 %v9410, %v9312
  %v9475 = vadd.f32 %v9411, %v9315
  %v9476 = vadd.f32 %v9412, %v9317
  %v9477 = vadd.f32 %v9413, %v9320
  %v9478 = vadd.f32 %v9414, %v9322
  %v9479 = vadd.f32 %v9415, %v9325
  %v9480 = vadd.f32 %v9416, %v9327
  %v9481 = vadd.f32 %v9417, %v9330
  %v9482 = vadd.f32 %v9418, %v9332
  %v9483 = vadd.f32 %v9419, %v9335
  %v9484 = vadd.f32 %v9420, %v9337
  %v9485 = vadd.f32 %v9421, %v9340
  %v9486 = vadd.f32 %v9422, %v9342
  %v9487 = vadd.f32 %v9423, %v9345
  %v9488 = vadd.f32 %v9424, %v9347
  %v9489 = vadd.f32 %v9425, %v9350
  %v9490 = vadd.f32 %v9426, %v9352
  %v9491 = vadd.f32 %v9427, %v9355
  %v9492 = vadd.f32 %v9428, %v9357
  %v9493 = vadd.f32 %v9429, %v9360
  %v9494 = vadd.f32 %v9430, %v9362
  %v9495 = vadd.f32 %v9431, %v9365
  %v9496 = vadd.f32 %v9432, %v9367
  %9497 = vst [vmem:[#allocation4] sm:$0xff] %v9433
  %9498 = vst [vmem:[#allocation4 + $0x8] sm:$0xff] %v9434
  %9499 = vst [vmem:[#allocation4 + $0x10] sm:$0xff] %v9435
  %9500 = vst [vmem:[#allocation4 + $0x18] sm:$0xff] %v9436
  %9501 = vst [vmem:[#allocation4 + $0x20] sm:$0xff] %v9437
  %9502 = vst [vmem:[#allocation4 + $0x28] sm:$0xff] %v9438
  %9503 = vst [vmem:[#allocation4 + $0x30] sm:$0xff] %v9439
  %9504 = vst [vmem:[#allocation4 + $0x38] sm:$0xff] %v9440
  %9505 = vst [vmem:[#allocation4 + $0x40] sm:$0xff] %v9441
  %9506 = vst [vmem:[#allocation4 + $0x48] sm:$0xff] %v9442
  %9507 = vst [vmem:[#allocation4 + $0x50] sm:$0xff] %v9443
  %9508 = vst [vmem:[#allocation4 + $0x58] sm:$0xff] %v9444
  %9509 = vst [vmem:[#allocation4 + $0x60] sm:$0xff] %v9445
  %9510 = vst [vmem:[#allocation4 + $0x68] sm:$0xff] %v9446
  %9511 = vst [vmem:[#allocation4 + $0x70] sm:$0xff] %v9447
  %9512 = vst [vmem:[#allocation4 + $0x78] sm:$0xff] %v9448
  %9513 = vst [vmem:[#allocation4 + $0x80] sm:$0xff] %v9449
  %9514 = vst [vmem:[#allocation4 + $0x88] sm:$0xff] %v9450
  %9515 = vst [vmem:[#allocation4 + $0x90] sm:$0xff] %v9451
  %9516 = vst [vmem:[#allocation4 + $0x98] sm:$0xff] %v9452
  %9517 = vst [vmem:[#allocation4 + $0xa0] sm:$0xff] %v9453
  %9518 = vst [vmem:[#allocation4 + $0xa8] sm:$0xff] %v9454
  %9519 = vst [vmem:[#allocation4 + $0xb0] sm:$0xff] %v9455
  %9520 = vst [vmem:[#allocation4 + $0xb8] sm:$0xff] %v9456
  %9521 = vst [vmem:[#allocation4 + $0xc0] sm:$0xff] %v9457
  %9522 = vst [vmem:[#allocation4 + $0xc8] sm:$0xff] %v9458
  %9523 = vst [vmem:[#allocation4 + $0xd0] sm:$0xff] %v9459
  %9524 = vst [vmem:[#allocation4 + $0xd8] sm:$0xff] %v9460
  %9525 = vst [vmem:[#allocation4 + $0xe0] sm:$0xff] %v9461
  %9526 = vst [vmem:[#allocation4 + $0xe8] sm:$0xff] %v9462
  %9527 = vst [vmem:[#allocation4 + $0xf0] sm:$0xff] %v9463
  %9528 = vst [vmem:[#allocation4 + $0xf8] sm:$0xff] %v9464
  %9529 = vst [vmem:[#allocation4 + $0x100] sm:$0xff] %v9465
  %9530 = vst [vmem:[#allocation4 + $0x108] sm:$0xff] %v9466
  %9531 = vst [vmem:[#allocation4 + $0x110] sm:$0xff] %v9467
  %9532 = vst [vmem:[#allocation4 + $0x118] sm:$0xff] %v9468
  %9533 = vst [vmem:[#allocation4 + $0x120] sm:$0xff] %v9469
  %9534 = vst [vmem:[#allocation4 + $0x128] sm:$0xff] %v9470
  %9535 = vst [vmem:[#allocation4 + $0x130] sm:$0xff] %v9471
  %9536 = vst [vmem:[#allocation4 + $0x138] sm:$0xff] %v9472
  %9537 = vst [vmem:[#allocation4 + $0x140] sm:$0xff] %v9473
  %9538 = vst [vmem:[#allocation4 + $0x148] sm:$0xff] %v9474
  %9539 = vst [vmem:[#allocation4 + $0x150] sm:$0xff] %v9475
  %9540 = vst [vmem:[#allocation4 + $0x158] sm:$0xff] %v9476
  %9541 = vst [vmem:[#allocation4 + $0x160] sm:$0xff] %v9477
  %9542 = vst [vmem:[#allocation4 + $0x168] sm:$0xff] %v9478
  %9543 = vst [vmem:[#allocation4 + $0x170] sm:$0xff] %v9479
  %9544 = vst [vmem:[#allocation4 + $0x178] sm:$0xff] %v9480
  %9545 = vst [vmem:[#allocation4 + $0x180] sm:$0xff] %v9481
  %9546 = vst [vmem:[#allocation4 + $0x188] sm:$0xff] %v9482
  %9547 = vst [vmem:[#allocation4 + $0x190] sm:$0xff] %v9483
  %9548 = vst [vmem:[#allocation4 + $0x198] sm:$0xff] %v9484
  %9549 = vst [vmem:[#allocation4 + $0x1a0] sm:$0xff] %v9485
  %9550 = vst [vmem:[#allocation4 + $0x1a8] sm:$0xff] %v9486
  %9551 = vst [vmem:[#allocation4 + $0x1b0] sm:$0xff] %v9487
  %9552 = vst [vmem:[#allocation4 + $0x1b8] sm:$0xff] %v9488
  %9553 = vst [vmem:[#allocation4 + $0x1c0] sm:$0xff] %v9489
  %9554 = vst [vmem:[#allocation4 + $0x1c8] sm:$0xff] %v9490
  %9555 = vst [vmem:[#allocation4 + $0x1d0] sm:$0xff] %v9491
  %9556 = vst [vmem:[#allocation4 + $0x1d8] sm:$0xff] %v9492
  %9557 = vst [vmem:[#allocation4 + $0x1e0] sm:$0xff] %v9493
  %9558 = vst [vmem:[#allocation4 + $0x1e8] sm:$0xff] %v9494
  %9559 = vst [vmem:[#allocation4 + $0x1f0] sm:$0xff] %v9495
  %9560 = vst [vmem:[#allocation4 + $0x1f8] sm:$0xff] %v9496
  %v9561 = vld [vmem:[%s8516 + $0x2] sm:$0xff]
  %v9562 = vld [vmem:[%s8516 + $0xa] sm:$0xff]
  %v9563 = vld [vmem:[%s8516 + $0x1a] sm:$0xff]
  %v9564 = vld [vmem:[%s8516 + $0x22] sm:$0xff]
  %v9565 = vld [vmem:[%s8516 + $0x32] sm:$0xff]
  %v9566 = vld [vmem:[%s8516 + $0x3a] sm:$0xff]
  %v9567 = vld [vmem:[%s8516 + $0x4a] sm:$0xff]
  %v9568 = vld [vmem:[%s8516 + $0x52] sm:$0xff]
  %v9569 = vld [vmem:[%s8516 + $0x62] sm:$0xff]
  %v9570 = vld [vmem:[%s8516 + $0x6a] sm:$0xff]
  %v9571 = vld [vmem:[%s8516 + $0x7a] sm:$0xff]
  %v9572 = vld [vmem:[%s8516 + $0x82] sm:$0xff]
  %v9573 = vld [vmem:[%s8516 + $0x92] sm:$0xff]
  %v9574 = vld [vmem:[%s8516 + $0x9a] sm:$0xff]
  %v9575 = vld [vmem:[%s8516 + $0xaa] sm:$0xff]
  %v9576 = vld [vmem:[%s8516 + $0xb2] sm:$0xff]
  %v9577 = vld [vmem:[%s8516 + $0xc2] sm:$0xff]
  %v9578 = vld [vmem:[%s8516 + $0xca] sm:$0xff]
  %v9579 = vld [vmem:[%s8516 + $0xda] sm:$0xff]
  %v9580 = vld [vmem:[%s8516 + $0xe2] sm:$0xff]
  %v9581 = vld [vmem:[%s8516 + $0xf2] sm:$0xff]
  %v9582 = vld [vmem:[%s8516 + $0xfa] sm:$0xff]
  %v9583 = vld [vmem:[%s8516 + $0x10a] sm:$0xff]
  %v9584 = vld [vmem:[%s8516 + $0x112] sm:$0xff]
  %v9585 = vld [vmem:[%s8516 + $0x122] sm:$0xff]
  %v9586 = vld [vmem:[%s8516 + $0x12a] sm:$0xff]
  %v9587 = vld [vmem:[%s8516 + $0x13a] sm:$0xff]
  %v9588 = vld [vmem:[%s8516 + $0x142] sm:$0xff]
  %v9589 = vld [vmem:[%s8516 + $0x152] sm:$0xff]
  %v9590 = vld [vmem:[%s8516 + $0x15a] sm:$0xff]
  %v9591 = vld [vmem:[%s8516 + $0x16a] sm:$0xff]
  %v9592 = vld [vmem:[%s8516 + $0x172] sm:$0xff]
  %v9593 = vld [vmem:[%s8516 + $0x1b2] sm:$0xff]
  %v9594 = vld [vmem:[%s8516 + $0x1ba] sm:$0xff]
  %v9595 = vld [vmem:[%s8516 + $0x1ca] sm:$0xff]
  %v9596 = vld [vmem:[%s8516 + $0x1d2] sm:$0xff]
  %v9597 = vld [vmem:[%s8516 + $0x1e2] sm:$0xff]
  %v9598 = vld [vmem:[%s8516 + $0x1ea] sm:$0xff]
  %v9599 = vld [vmem:[%s8516 + $0x1fa] sm:$0xff]
  %v9600 = vld [vmem:[%s8516 + $0x202] sm:$0xff]
  %v9601 = vld [vmem:[%s8516 + $0x212] sm:$0xff]
  %v9602 = vld [vmem:[%s8516 + $0x21a] sm:$0xff]
  %v9603 = vld [vmem:[%s8516 + $0x22a] sm:$0xff]
  %v9604 = vld [vmem:[%s8516 + $0x232] sm:$0xff]
  %v9605 = vld [vmem:[%s8516 + $0x242] sm:$0xff]
  %v9606 = vld [vmem:[%s8516 + $0x24a] sm:$0xff]
  %v9607 = vld [vmem:[%s8516 + $0x25a] sm:$0xff]
  %v9608 = vld [vmem:[%s8516 + $0x262] sm:$0xff]
  %v9609 = vld [vmem:[%s8516 + $0x272] sm:$0xff]
  %v9610 = vld [vmem:[%s8516 + $0x27a] sm:$0xff]
  %v9611 = vld [vmem:[%s8516 + $0x28a] sm:$0xff]
  %v9612 = vld [vmem:[%s8516 + $0x292] sm:$0xff]
  %v9613 = vld [vmem:[%s8516 + $0x2a2] sm:$0xff]
  %v9614 = vld [vmem:[%s8516 + $0x2aa] sm:$0xff]
  %v9615 = vld [vmem:[%s8516 + $0x2ba] sm:$0xff]
  %v9616 = vld [vmem:[%s8516 + $0x2c2] sm:$0xff]
  %v9617 = vld [vmem:[%s8516 + $0x2d2] sm:$0xff]
  %v9618 = vld [vmem:[%s8516 + $0x2da] sm:$0xff]
  %v9619 = vld [vmem:[%s8516 + $0x2ea] sm:$0xff]
  %v9620 = vld [vmem:[%s8516 + $0x2f2] sm:$0xff]
  %v9621 = vld [vmem:[%s8516 + $0x302] sm:$0xff]
  %v9622 = vld [vmem:[%s8516 + $0x30a] sm:$0xff]
  %v9623 = vld [vmem:[%s8516 + $0x31a] sm:$0xff]
  %v9624 = vld [vmem:[%s8516 + $0x322] sm:$0xff]
  %v9625 = vpack.c.bf16 %v9562, %v9561
  %v9626 = vpack.c.bf16 %v9564, %v9563
  %v9627 = vpack.c.bf16 %v9566, %v9565
  %v9628 = vpack.c.bf16 %v9568, %v9567
  %v9629 = vpack.c.bf16 %v9570, %v9569
  %v9630 = vpack.c.bf16 %v9572, %v9571
  %v9631 = vpack.c.bf16 %v9574, %v9573
  %v9632 = vpack.c.bf16 %v9576, %v9575
  %v9633 = vpack.c.bf16 %v9578, %v9577
  %v9634 = vpack.c.bf16 %v9580, %v9579
  %v9635 = vpack.c.bf16 %v9582, %v9581
  %v9636 = vpack.c.bf16 %v9584, %v9583
  %v9637 = vpack.c.bf16 %v9586, %v9585
  %v9638 = vpack.c.bf16 %v9588, %v9587
  %v9639 = vpack.c.bf16 %v9590, %v9589
  %v9640 = vpack.c.bf16 %v9592, %v9591
  %v9641 = vpack.c.bf16 %v9594, %v9593
  %v9642 = vpack.c.bf16 %v9596, %v9595
  %v9643 = vpack.c.bf16 %v9598, %v9597
  %v9644 = vpack.c.bf16 %v9600, %v9599
  %v9645 = vpack.c.bf16 %v9602, %v9601
  %v9646 = vpack.c.bf16 %v9604, %v9603
  %v9647 = vpack.c.bf16 %v9606, %v9605
  %v9648 = vpack.c.bf16 %v9608, %v9607
  %v9649 = vpack.c.bf16 %v9610, %v9609
  %v9650 = vpack.c.bf16 %v9612, %v9611
  %v9651 = vpack.c.bf16 %v9614, %v9613
  %v9652 = vpack.c.bf16 %v9616, %v9615
  %v9653 = vpack.c.bf16 %v9618, %v9617
  %v9654 = vpack.c.bf16 %v9620, %v9619
  %v9655 = vpack.c.bf16 %v9622, %v9621
  %v9656 = vpack.c.bf16 %v9624, %v9623
  %s9657 = scalar_lea.vmem %s4, 512
  %v9658 = vld [vmem:[%s9657] sm:$0xf]
  %v9659 = vld [vmem:[%s9657 + $0x4] sm:$0xf]
  %v9660 = vld [vmem:[%s9657 + $0x8] sm:$0xf]
  %v9661 = vld [vmem:[%s9657 + $0xc] sm:$0xf]
  %v9662 = vld [vmem:[%s9657 + $0x10] sm:$0xf]
  %v9663 = vld [vmem:[%s9657 + $0x14] sm:$0xf]
  %v9664 = vld [vmem:[%s9657 + $0x18] sm:$0xf]
  %v9665 = vld [vmem:[%s9657 + $0x1c] sm:$0xf]
  %v9666 = vld [vmem:[%s9657 + $0x20] sm:$0xf]
  %v9667 = vld [vmem:[%s9657 + $0x24] sm:$0xf]
  %v9668 = vld [vmem:[%s9657 + $0x28] sm:$0xf]
  %v9669 = vld [vmem:[%s9657 + $0x2c] sm:$0xf]
  %v9670 = vld [vmem:[%s9657 + $0x30] sm:$0xf]
  %v9671 = vld [vmem:[%s9657 + $0x34] sm:$0xf]
  %v9672 = vld [vmem:[%s9657 + $0x38] sm:$0xf]
  %v9673 = vld [vmem:[%s9657 + $0x3c] sm:$0xf]
  %v9690 = vunpack.c.l.b16 %v9658
  %v9691 = vunpack.c.l.b16 %v9659
  %v9692 = vunpack.c.l.b16 %v9660
  %v9693 = vunpack.c.l.b16 %v9661
  %v9694 = vunpack.c.l.b16 %v9662
  %v9695 = vunpack.c.l.b16 %v9663
  %v9696 = vunpack.c.l.b16 %v9664
  %v9697 = vunpack.c.l.b16 %v9665
  %v9698 = vunpack.c.l.b16 %v9666
  %v9699 = vunpack.c.l.b16 %v9667
  %v9700 = vunpack.c.l.b16 %v9668
  %v9701 = vunpack.c.l.b16 %v9669
  %v9702 = vunpack.c.l.b16 %v9670
  %v9703 = vunpack.c.l.b16 %v9671
  %v9704 = vunpack.c.l.b16 %v9672
  %v9705 = vunpack.c.l.b16 %v9673
  %v9706 = vpack.c.b16 %v9691, %v9690
  %v9707 = vpack.c.b16 %v9693, %v9692
  %v9708 = vpack.c.b16 %v9695, %v9694
  %v9709 = vpack.c.b16 %v9697, %v9696
  %v9710 = vpack.c.b16 %v9699, %v9698
  %v9711 = vpack.c.b16 %v9701, %v9700
  %v9712 = vpack.c.b16 %v9703, %v9702
  %v9713 = vpack.c.b16 %v9705, %v9704
  %9722 = vmatpush.bf16.msra.mxu0 %v9713
  %9723 = vmatpush.bf16.msra.mxu0 %v9712
  %9724 = vmatpush.bf16.msra.mxu0 %v9711
  %9725 = vmatpush.bf16.msra.mxu0 %v9710
  %9726 = vmatpush.bf16.msra.mxu0 %v9709
  %9727 = vmatpush.bf16.msra.mxu0 %v9708
  %9728 = vmatpush.bf16.msra.mxu0 %v9707
  %9729 = vmatpush.bf16.msra.mxu0 %v9706
  %9730 = vmatmul.bf16.gmra.mxu0 %v9625
  %v9731 = vpop.f32.mrf.mxu0
  %v9732 = vadd.f32 0.0, %v9731
  %v9733 = vpop.f32.mrf.mxu0
  %v9734 = vadd.f32 0.0, %v9733
  %9735 = vmatmul.bf16.gmra.mxu0 %v9626
  %v9736 = vpop.f32.mrf.mxu0
  %v9737 = vadd.f32 0.0, %v9736
  %v9738 = vpop.f32.mrf.mxu0
  %v9739 = vadd.f32 0.0, %v9738
  %9740 = vmatmul.bf16.gmra.mxu0 %v9627
  %v9741 = vpop.f32.mrf.mxu0
  %v9742 = vadd.f32 0.0, %v9741
  %v9743 = vpop.f32.mrf.mxu0
  %v9744 = vadd.f32 0.0, %v9743
  %9745 = vmatmul.bf16.gmra.mxu0 %v9628
  %v9746 = vpop.f32.mrf.mxu0
  %v9747 = vadd.f32 0.0, %v9746
  %v9748 = vpop.f32.mrf.mxu0
  %v9749 = vadd.f32 0.0, %v9748
  %9750 = vmatmul.bf16.gmra.mxu0 %v9629
  %v9751 = vpop.f32.mrf.mxu0
  %v9752 = vadd.f32 0.0, %v9751
  %v9753 = vpop.f32.mrf.mxu0
  %v9754 = vadd.f32 0.0, %v9753
  %9755 = vmatmul.bf16.gmra.mxu0 %v9630
  %v9756 = vpop.f32.mrf.mxu0
  %v9757 = vadd.f32 0.0, %v9756
  %v9758 = vpop.f32.mrf.mxu0
  %v9759 = vadd.f32 0.0, %v9758
  %9760 = vmatmul.bf16.gmra.mxu0 %v9631
  %v9761 = vpop.f32.mrf.mxu0
  %v9762 = vadd.f32 0.0, %v9761
  %v9763 = vpop.f32.mrf.mxu0
  %v9764 = vadd.f32 0.0, %v9763
  %9765 = vmatmul.bf16.gmra.mxu0 %v9632
  %v9766 = vpop.f32.mrf.mxu0
  %v9767 = vadd.f32 0.0, %v9766
  %v9768 = vpop.f32.mrf.mxu0
  %v9769 = vadd.f32 0.0, %v9768
  %9770 = vmatmul.bf16.gmra.mxu0 %v9633
  %v9771 = vpop.f32.mrf.mxu0
  %v9772 = vadd.f32 0.0, %v9771
  %v9773 = vpop.f32.mrf.mxu0
  %v9774 = vadd.f32 0.0, %v9773
  %9775 = vmatmul.bf16.gmra.mxu0 %v9634
  %v9776 = vpop.f32.mrf.mxu0
  %v9777 = vadd.f32 0.0, %v9776
  %v9778 = vpop.f32.mrf.mxu0
  %v9779 = vadd.f32 0.0, %v9778
  %9780 = vmatmul.bf16.gmra.mxu0 %v9635
  %v9781 = vpop.f32.mrf.mxu0
  %v9782 = vadd.f32 0.0, %v9781
  %v9783 = vpop.f32.mrf.mxu0
  %v9784 = vadd.f32 0.0, %v9783
  %9785 = vmatmul.bf16.gmra.mxu0 %v9636
  %v9786 = vpop.f32.mrf.mxu0
  %v9787 = vadd.f32 0.0, %v9786
  %v9788 = vpop.f32.mrf.mxu0
  %v9789 = vadd.f32 0.0, %v9788
  %9790 = vmatmul.bf16.gmra.mxu0 %v9637
  %v9791 = vpop.f32.mrf.mxu0
  %v9792 = vadd.f32 0.0, %v9791
  %v9793 = vpop.f32.mrf.mxu0
  %v9794 = vadd.f32 0.0, %v9793
  %9795 = vmatmul.bf16.gmra.mxu0 %v9638
  %v9796 = vpop.f32.mrf.mxu0
  %v9797 = vadd.f32 0.0, %v9796
  %v9798 = vpop.f32.mrf.mxu0
  %v9799 = vadd.f32 0.0, %v9798
  %9800 = vmatmul.bf16.gmra.mxu0 %v9639
  %v9801 = vpop.f32.mrf.mxu0
  %v9802 = vadd.f32 0.0, %v9801
  %v9803 = vpop.f32.mrf.mxu0
  %v9804 = vadd.f32 0.0, %v9803
  %9805 = vmatmul.bf16.gmra.mxu0 %v9640
  %v9806 = vpop.f32.mrf.mxu0
  %v9807 = vadd.f32 0.0, %v9806
  %v9808 = vpop.f32.mrf.mxu0
  %v9809 = vadd.f32 0.0, %v9808
  %9810 = vmatmul.bf16.gmra.mxu0 %v9641
  %v9811 = vpop.f32.mrf.mxu0
  %v9812 = vadd.f32 0.0, %v9811
  %v9813 = vpop.f32.mrf.mxu0
  %v9814 = vadd.f32 0.0, %v9813
  %9815 = vmatmul.bf16.gmra.mxu0 %v9642
  %v9816 = vpop.f32.mrf.mxu0
  %v9817 = vadd.f32 0.0, %v9816
  %v9818 = vpop.f32.mrf.mxu0
  %v9819 = vadd.f32 0.0, %v9818
  %9820 = vmatmul.bf16.gmra.mxu0 %v9643
  %v9821 = vpop.f32.mrf.mxu0
  %v9822 = vadd.f32 0.0, %v9821
  %v9823 = vpop.f32.mrf.mxu0
  %v9824 = vadd.f32 0.0, %v9823
  %9825 = vmatmul.bf16.gmra.mxu0 %v9644
  %v9826 = vpop.f32.mrf.mxu0
  %v9827 = vadd.f32 0.0, %v9826
  %v9828 = vpop.f32.mrf.mxu0
  %v9829 = vadd.f32 0.0, %v9828
  %9830 = vmatmul.bf16.gmra.mxu0 %v9645
  %v9831 = vpop.f32.mrf.mxu0
  %v9832 = vadd.f32 0.0, %v9831
  %v9833 = vpop.f32.mrf.mxu0
  %v9834 = vadd.f32 0.0, %v9833
  %9835 = vmatmul.bf16.gmra.mxu0 %v9646
  %v9836 = vpop.f32.mrf.mxu0
  %v9837 = vadd.f32 0.0, %v9836
  %v9838 = vpop.f32.mrf.mxu0
  %v9839 = vadd.f32 0.0, %v9838
  %9840 = vmatmul.bf16.gmra.mxu0 %v9647
  %v9841 = vpop.f32.mrf.mxu0
  %v9842 = vadd.f32 0.0, %v9841
  %v9843 = vpop.f32.mrf.mxu0
  %v9844 = vadd.f32 0.0, %v9843
  %9845 = vmatmul.bf16.gmra.mxu0 %v9648
  %v9846 = vpop.f32.mrf.mxu0
  %v9847 = vadd.f32 0.0, %v9846
  %v9848 = vpop.f32.mrf.mxu0
  %v9849 = vadd.f32 0.0, %v9848
  %9850 = vmatmul.bf16.gmra.mxu0 %v9649
  %v9851 = vpop.f32.mrf.mxu0
  %v9852 = vadd.f32 0.0, %v9851
  %v9853 = vpop.f32.mrf.mxu0
  %v9854 = vadd.f32 0.0, %v9853
  %9855 = vmatmul.bf16.gmra.mxu0 %v9650
  %v9856 = vpop.f32.mrf.mxu0
  %v9857 = vadd.f32 0.0, %v9856
  %v9858 = vpop.f32.mrf.mxu0
  %v9859 = vadd.f32 0.0, %v9858
  %9860 = vmatmul.bf16.gmra.mxu0 %v9651
  %v9861 = vpop.f32.mrf.mxu0
  %v9862 = vadd.f32 0.0, %v9861
  %v9863 = vpop.f32.mrf.mxu0
  %v9864 = vadd.f32 0.0, %v9863
  %9865 = vmatmul.bf16.gmra.mxu0 %v9652
  %v9866 = vpop.f32.mrf.mxu0
  %v9867 = vadd.f32 0.0, %v9866
  %v9868 = vpop.f32.mrf.mxu0
  %v9869 = vadd.f32 0.0, %v9868
  %9870 = vmatmul.bf16.gmra.mxu0 %v9653
  %v9871 = vpop.f32.mrf.mxu0
  %v9872 = vadd.f32 0.0, %v9871
  %v9873 = vpop.f32.mrf.mxu0
  %v9874 = vadd.f32 0.0, %v9873
  %9875 = vmatmul.bf16.gmra.mxu0 %v9654
  %v9876 = vpop.f32.mrf.mxu0
  %v9877 = vadd.f32 0.0, %v9876
  %v9878 = vpop.f32.mrf.mxu0
  %v9879 = vadd.f32 0.0, %v9878
  %9880 = vmatmul.bf16.gmra.mxu0 %v9655
  %v9881 = vpop.f32.mrf.mxu0
  %v9882 = vadd.f32 0.0, %v9881
  %v9883 = vpop.f32.mrf.mxu0
  %v9884 = vadd.f32 0.0, %v9883
  %9885 = vmatmul.bf16.gmra.mxu0 %v9656
  %v9886 = vpop.f32.mrf.mxu0
  %v9887 = vadd.f32 0.0, %v9886
  %v9888 = vpop.f32.mrf.mxu0
  %v9889 = vadd.f32 0.0, %v9888
  %9890 = vdwg.mxu0
  %v9891 = vld [vmem:[#allocation4] sm:$0xff]
  %v9892 = vld [vmem:[#allocation4 + $0x8] sm:$0xff]
  %v9893 = vld [vmem:[#allocation4 + $0x10] sm:$0xff]
  %v9894 = vld [vmem:[#allocation4 + $0x18] sm:$0xff]
  %v9895 = vld [vmem:[#allocation4 + $0x20] sm:$0xff]
  %v9896 = vld [vmem:[#allocation4 + $0x28] sm:$0xff]
  %v9897 = vld [vmem:[#allocation4 + $0x30] sm:$0xff]
  %v9898 = vld [vmem:[#allocation4 + $0x38] sm:$0xff]
  %v9899 = vld [vmem:[#allocation4 + $0x40] sm:$0xff]
  %v9900 = vld [vmem:[#allocation4 + $0x48] sm:$0xff]
  %v9901 = vld [vmem:[#allocation4 + $0x50] sm:$0xff]
  %v9902 = vld [vmem:[#allocation4 + $0x58] sm:$0xff]
  %v9903 = vld [vmem:[#allocation4 + $0x60] sm:$0xff]
  %v9904 = vld [vmem:[#allocation4 + $0x68] sm:$0xff]
  %v9905 = vld [vmem:[#allocation4 + $0x70] sm:$0xff]
  %v9906 = vld [vmem:[#allocation4 + $0x78] sm:$0xff]
  %v9907 = vld [vmem:[#allocation4 + $0x80] sm:$0xff]
  %v9908 = vld [vmem:[#allocation4 + $0x88] sm:$0xff]
  %v9909 = vld [vmem:[#allocation4 + $0x90] sm:$0xff]
  %v9910 = vld [vmem:[#allocation4 + $0x98] sm:$0xff]
  %v9911 = vld [vmem:[#allocation4 + $0xa0] sm:$0xff]
  %v9912 = vld [vmem:[#allocation4 + $0xa8] sm:$0xff]
  %v9913 = vld [vmem:[#allocation4 + $0xb0] sm:$0xff]
  %v9914 = vld [vmem:[#allocation4 + $0xb8] sm:$0xff]
  %v9915 = vld [vmem:[#allocation4 + $0xc0] sm:$0xff]
  %v9916 = vld [vmem:[#allocation4 + $0xc8] sm:$0xff]
  %v9917 = vld [vmem:[#allocation4 + $0xd0] sm:$0xff]
  %v9918 = vld [vmem:[#allocation4 + $0xd8] sm:$0xff]
  %v9919 = vld [vmem:[#allocation4 + $0xe0] sm:$0xff]
  %v9920 = vld [vmem:[#allocation4 + $0xe8] sm:$0xff]
  %v9921 = vld [vmem:[#allocation4 + $0xf0] sm:$0xff]
  %v9922 = vld [vmem:[#allocation4 + $0xf8] sm:$0xff]
  %v9923 = vld [vmem:[#allocation4 + $0x100] sm:$0xff]
  %v9924 = vld [vmem:[#allocation4 + $0x108] sm:$0xff]
  %v9925 = vld [vmem:[#allocation4 + $0x110] sm:$0xff]
  %v9926 = vld [vmem:[#allocation4 + $0x118] sm:$0xff]
  %v9927 = vld [vmem:[#allocation4 + $0x120] sm:$0xff]
  %v9928 = vld [vmem:[#allocation4 + $0x128] sm:$0xff]
  %v9929 = vld [vmem:[#allocation4 + $0x130] sm:$0xff]
  %v9930 = vld [vmem:[#allocation4 + $0x138] sm:$0xff]
  %v9931 = vld [vmem:[#allocation4 + $0x140] sm:$0xff]
  %v9932 = vld [vmem:[#allocation4 + $0x148] sm:$0xff]
  %v9933 = vld [vmem:[#allocation4 + $0x150] sm:$0xff]
  %v9934 = vld [vmem:[#allocation4 + $0x158] sm:$0xff]
  %v9935 = vld [vmem:[#allocation4 + $0x160] sm:$0xff]
  %v9936 = vld [vmem:[#allocation4 + $0x168] sm:$0xff]
  %v9937 = vld [vmem:[#allocation4 + $0x170] sm:$0xff]
  %v9938 = vld [vmem:[#allocation4 + $0x178] sm:$0xff]
  %v9939 = vld [vmem:[#allocation4 + $0x180] sm:$0xff]
  %v9940 = vld [vmem:[#allocation4 + $0x188] sm:$0xff]
  %v9941 = vld [vmem:[#allocation4 + $0x190] sm:$0xff]
  %v9942 = vld [vmem:[#allocation4 + $0x198] sm:$0xff]
  %v9943 = vld [vmem:[#allocation4 + $0x1a0] sm:$0xff]
  %v9944 = vld [vmem:[#allocation4 + $0x1a8] sm:$0xff]
  %v9945 = vld [vmem:[#allocation4 + $0x1b0] sm:$0xff]
  %v9946 = vld [vmem:[#allocation4 + $0x1b8] sm:$0xff]
  %v9947 = vld [vmem:[#allocation4 + $0x1c0] sm:$0xff]
  %v9948 = vld [vmem:[#allocation4 + $0x1c8] sm:$0xff]
  %v9949 = vld [vmem:[#allocation4 + $0x1d0] sm:$0xff]
  %v9950 = vld [vmem:[#allocation4 + $0x1d8] sm:$0xff]
  %v9951 = vld [vmem:[#allocation4 + $0x1e0] sm:$0xff]
  %v9952 = vld [vmem:[#allocation4 + $0x1e8] sm:$0xff]
  %v9953 = vld [vmem:[#allocation4 + $0x1f0] sm:$0xff]
  %v9954 = vld [vmem:[#allocation4 + $0x1f8] sm:$0xff]
  %v9955 = vadd.f32 %v9891, %v9732
  %v9956 = vadd.f32 %v9892, %v9734
  %v9957 = vadd.f32 %v9893, %v9737
  %v9958 = vadd.f32 %v9894, %v9739
  %v9959 = vadd.f32 %v9895, %v9742
  %v9960 = vadd.f32 %v9896, %v9744
  %v9961 = vadd.f32 %v9897, %v9747
  %v9962 = vadd.f32 %v9898, %v9749
  %v9963 = vadd.f32 %v9899, %v9752
  %v9964 = vadd.f32 %v9900, %v9754
  %v9965 = vadd.f32 %v9901, %v9757
  %v9966 = vadd.f32 %v9902, %v9759
  %v9967 = vadd.f32 %v9903, %v9762
  %v9968 = vadd.f32 %v9904, %v9764
  %v9969 = vadd.f32 %v9905, %v9767
  %v9970 = vadd.f32 %v9906, %v9769
  %v9971 = vadd.f32 %v9907, %v9772
  %v9972 = vadd.f32 %v9908, %v9774
  %v9973 = vadd.f32 %v9909, %v9777
  %v9974 = vadd.f32 %v9910, %v9779
  %v9975 = vadd.f32 %v9911, %v9782
  %v9976 = vadd.f32 %v9912, %v9784
  %v9977 = vadd.f32 %v9913, %v9787
  %v9978 = vadd.f32 %v9914, %v9789
  %v9979 = vadd.f32 %v9915, %v9792
  %v9980 = vadd.f32 %v9916, %v9794
  %v9981 = vadd.f32 %v9917, %v9797
  %v9982 = vadd.f32 %v9918, %v9799
  %v9983 = vadd.f32 %v9919, %v9802
  %v9984 = vadd.f32 %v9920, %v9804
  %v9985 = vadd.f32 %v9921, %v9807
  %v9986 = vadd.f32 %v9922, %v9809
  %v9987 = vadd.f32 %v9923, %v9812
  %v9988 = vadd.f32 %v9924, %v9814
  %v9989 = vadd.f32 %v9925, %v9817
  %v9990 = vadd.f32 %v9926, %v9819
  %v9991 = vadd.f32 %v9927, %v9822
  %v9992 = vadd.f32 %v9928, %v9824
  %v9993 = vadd.f32 %v9929, %v9827
  %v9994 = vadd.f32 %v9930, %v9829
  %v9995 = vadd.f32 %v9931, %v9832
  %v9996 = vadd.f32 %v9932, %v9834
  %v9997 = vadd.f32 %v9933, %v9837
  %v9998 = vadd.f32 %v9934, %v9839
  %v9999 = vadd.f32 %v9935, %v9842
  %v10000 = vadd.f32 %v9936, %v9844
  %v10001 = vadd.f32 %v9937, %v9847
  %v10002 = vadd.f32 %v9938, %v9849
  %v10003 = vadd.f32 %v9939, %v9852
  %v10004 = vadd.f32 %v9940, %v9854
  %v10005 = vadd.f32 %v9941, %v9857
  %v10006 = vadd.f32 %v9942, %v9859
  %v10007 = vadd.f32 %v9943, %v9862
  %v10008 = vadd.f32 %v9944, %v9864
  %v10009 = vadd.f32 %v9945, %v9867
  %v10010 = vadd.f32 %v9946, %v9869
  %v10011 = vadd.f32 %v9947, %v9872
  %v10012 = vadd.f32 %v9948, %v9874
  %v10013 = vadd.f32 %v9949, %v9877
  %v10014 = vadd.f32 %v9950, %v9879
  %v10015 = vadd.f32 %v9951, %v9882
  %v10016 = vadd.f32 %v9952, %v9884
  %v10017 = vadd.f32 %v9953, %v9887
  %v10018 = vadd.f32 %v9954, %v9889
  %10019 = vst [vmem:[#allocation4] sm:$0xff] %v9955
  %10020 = vst [vmem:[#allocation4 + $0x8] sm:$0xff] %v9956
  %10021 = vst [vmem:[#allocation4 + $0x10] sm:$0xff] %v9957
  %10022 = vst [vmem:[#allocation4 + $0x18] sm:$0xff] %v9958
  %10023 = vst [vmem:[#allocation4 + $0x20] sm:$0xff] %v9959
  %10024 = vst [vmem:[#allocation4 + $0x28] sm:$0xff] %v9960
  %10025 = vst [vmem:[#allocation4 + $0x30] sm:$0xff] %v9961
  %10026 = vst [vmem:[#allocation4 + $0x38] sm:$0xff] %v9962
  %10027 = vst [vmem:[#allocation4 + $0x40] sm:$0xff] %v9963
  %10028 = vst [vmem:[#allocation4 + $0x48] sm:$0xff] %v9964
  %10029 = vst [vmem:[#allocation4 + $0x50] sm:$0xff] %v9965
  %10030 = vst [vmem:[#allocation4 + $0x58] sm:$0xff] %v9966
  %10031 = vst [vmem:[#allocation4 + $0x60] sm:$0xff] %v9967
  %10032 = vst [vmem:[#allocation4 + $0x68] sm:$0xff] %v9968
  %10033 = vst [vmem:[#allocation4 + $0x70] sm:$0xff] %v9969
  %10034 = vst [vmem:[#allocation4 + $0x78] sm:$0xff] %v9970
  %10035 = vst [vmem:[#allocation4 + $0x80] sm:$0xff] %v9971
  %10036 = vst [vmem:[#allocation4 + $0x88] sm:$0xff] %v9972
  %10037 = vst [vmem:[#allocation4 + $0x90] sm:$0xff] %v9973
  %10038 = vst [vmem:[#allocation4 + $0x98] sm:$0xff] %v9974
  %10039 = vst [vmem:[#allocation4 + $0xa0] sm:$0xff] %v9975
  %10040 = vst [vmem:[#allocation4 + $0xa8] sm:$0xff] %v9976
  %10041 = vst [vmem:[#allocation4 + $0xb0] sm:$0xff] %v9977
  %10042 = vst [vmem:[#allocation4 + $0xb8] sm:$0xff] %v9978
  %10043 = vst [vmem:[#allocation4 + $0xc0] sm:$0xff] %v9979
  %10044 = vst [vmem:[#allocation4 + $0xc8] sm:$0xff] %v9980
  %10045 = vst [vmem:[#allocation4 + $0xd0] sm:$0xff] %v9981
  %10046 = vst [vmem:[#allocation4 + $0xd8] sm:$0xff] %v9982
  %10047 = vst [vmem:[#allocation4 + $0xe0] sm:$0xff] %v9983
  %10048 = vst [vmem:[#allocation4 + $0xe8] sm:$0xff] %v9984
  %10049 = vst [vmem:[#allocation4 + $0xf0] sm:$0xff] %v9985
  %10050 = vst [vmem:[#allocation4 + $0xf8] sm:$0xff] %v9986
  %10051 = vst [vmem:[#allocation4 + $0x100] sm:$0xff] %v9987
  %10052 = vst [vmem:[#allocation4 + $0x108] sm:$0xff] %v9988
  %10053 = vst [vmem:[#allocation4 + $0x110] sm:$0xff] %v9989
  %10054 = vst [vmem:[#allocation4 + $0x118] sm:$0xff] %v9990
  %10055 = vst [vmem:[#allocation4 + $0x120] sm:$0xff] %v9991
  %10056 = vst [vmem:[#allocation4 + $0x128] sm:$0xff] %v9992
  %10057 = vst [vmem:[#allocation4 + $0x130] sm:$0xff] %v9993
  %10058 = vst [vmem:[#allocation4 + $0x138] sm:$0xff] %v9994
  %10059 = vst [vmem:[#allocation4 + $0x140] sm:$0xff] %v9995
  %10060 = vst [vmem:[#allocation4 + $0x148] sm:$0xff] %v9996
  %10061 = vst [vmem:[#allocation4 + $0x150] sm:$0xff] %v9997
  %10062 = vst [vmem:[#allocation4 + $0x158] sm:$0xff] %v9998
  %10063 = vst [vmem:[#allocation4 + $0x160] sm:$0xff] %v9999
  %10064 = vst [vmem:[#allocation4 + $0x168] sm:$0xff] %v10000
  %10065 = vst [vmem:[#allocation4 + $0x170] sm:$0xff] %v10001
  %10066 = vst [vmem:[#allocation4 + $0x178] sm:$0xff] %v10002
  %10067 = vst [vmem:[#allocation4 + $0x180] sm:$0xff] %v10003
  %10068 = vst [vmem:[#allocation4 + $0x188] sm:$0xff] %v10004
  %10069 = vst [vmem:[#allocation4 + $0x190] sm:$0xff] %v10005
  %10070 = vst [vmem:[#allocation4 + $0x198] sm:$0xff] %v10006
  %10071 = vst [vmem:[#allocation4 + $0x1a0] sm:$0xff] %v10007
  %10072 = vst [vmem:[#allocation4 + $0x1a8] sm:$0xff] %v10008
  %10073 = vst [vmem:[#allocation4 + $0x1b0] sm:$0xff] %v10009
  %10074 = vst [vmem:[#allocation4 + $0x1b8] sm:$0xff] %v10010
  %10075 = vst [vmem:[#allocation4 + $0x1c0] sm:$0xff] %v10011
  %10076 = vst [vmem:[#allocation4 + $0x1c8] sm:$0xff] %v10012
  %10077 = vst [vmem:[#allocation4 + $0x1d0] sm:$0xff] %v10013
  %10078 = vst [vmem:[#allocation4 + $0x1d8] sm:$0xff] %v10014
  %10079 = vst [vmem:[#allocation4 + $0x1e0] sm:$0xff] %v10015
  %10080 = vst [vmem:[#allocation4 + $0x1e8] sm:$0xff] %v10016
  %10081 = vst [vmem:[#allocation4 + $0x1f0] sm:$0xff] %v10017
  %10082 = vst [vmem:[#allocation4 + $0x1f8] sm:$0xff] %v10018
  %v10083 = vld [vmem:[#allocation4] sm:$0xff]
  %v10084 = vld [vmem:[#allocation4 + $0x8] sm:$0xff]
  %v10085 = vld [vmem:[#allocation4 + $0x10] sm:$0xff]
  %v10086 = vld [vmem:[#allocation4 + $0x18] sm:$0xff]
  %v10087 = vld [vmem:[#allocation4 + $0x20] sm:$0xff]
  %v10088 = vld [vmem:[#allocation4 + $0x28] sm:$0xff]
  %v10089 = vld [vmem:[#allocation4 + $0x30] sm:$0xff]
  %v10090 = vld [vmem:[#allocation4 + $0x38] sm:$0xff]
  %v10091 = vld [vmem:[#allocation4 + $0x40] sm:$0xff]
  %v10092 = vld [vmem:[#allocation4 + $0x48] sm:$0xff]
  %v10093 = vld [vmem:[#allocation4 + $0x50] sm:$0xff]
  %v10094 = vld [vmem:[#allocation4 + $0x58] sm:$0xff]
  %v10095 = vld [vmem:[#allocation4 + $0x60] sm:$0xff]
  %v10096 = vld [vmem:[#allocation4 + $0x68] sm:$0xff]
  %v10097 = vld [vmem:[#allocation4 + $0x70] sm:$0xff]
  %v10098 = vld [vmem:[#allocation4 + $0x78] sm:$0xff]
  %v10099 = vld [vmem:[#allocation4 + $0x80] sm:$0xff]
  %v10100 = vld [vmem:[#allocation4 + $0x88] sm:$0xff]
  %v10101 = vld [vmem:[#allocation4 + $0x90] sm:$0xff]
  %v10102 = vld [vmem:[#allocation4 + $0x98] sm:$0xff]
  %v10103 = vld [vmem:[#allocation4 + $0xa0] sm:$0xff]
  %v10104 = vld [vmem:[#allocation4 + $0xa8] sm:$0xff]
  %v10105 = vld [vmem:[#allocation4 + $0xb0] sm:$0xff]
  %v10106 = vld [vmem:[#allocation4 + $0xb8] sm:$0xff]
  %v10107 = vld [vmem:[#allocation4 + $0xc0] sm:$0xff]
  %v10108 = vld [vmem:[#allocation4 + $0xc8] sm:$0xff]
  %v10109 = vld [vmem:[#allocation4 + $0xd0] sm:$0xff]
  %v10110 = vld [vmem:[#allocation4 + $0xd8] sm:$0xff]
  %v10111 = vld [vmem:[#allocation4 + $0xe0] sm:$0xff]
  %v10112 = vld [vmem:[#allocation4 + $0xe8] sm:$0xff]
  %v10113 = vld [vmem:[#allocation4 + $0xf0] sm:$0xff]
  %v10114 = vld [vmem:[#allocation4 + $0xf8] sm:$0xff]
  %v10115 = vld [vmem:[#allocation4 + $0x100] sm:$0xff]
  %v10116 = vld [vmem:[#allocation4 + $0x108] sm:$0xff]
  %v10117 = vld [vmem:[#allocation4 + $0x110] sm:$0xff]
  %v10118 = vld [vmem:[#allocation4 + $0x118] sm:$0xff]
  %v10119 = vld [vmem:[#allocation4 + $0x120] sm:$0xff]
  %v10120 = vld [vmem:[#allocation4 + $0x128] sm:$0xff]
  %v10121 = vld [vmem:[#allocation4 + $0x130] sm:$0xff]
  %v10122 = vld [vmem:[#allocation4 + $0x138] sm:$0xff]
  %v10123 = vld [vmem:[#allocation4 + $0x140] sm:$0xff]
  %v10124 = vld [vmem:[#allocation4 + $0x148] sm:$0xff]
  %v10125 = vld [vmem:[#allocation4 + $0x150] sm:$0xff]
  %v10126 = vld [vmem:[#allocation4 + $0x158] sm:$0xff]
  %v10127 = vld [vmem:[#allocation4 + $0x160] sm:$0xff]
  %v10128 = vld [vmem:[#allocation4 + $0x168] sm:$0xff]
  %v10129 = vld [vmem:[#allocation4 + $0x170] sm:$0xff]
  %v10130 = vld [vmem:[#allocation4 + $0x178] sm:$0xff]
  %v10131 = vld [vmem:[#allocation4 + $0x180] sm:$0xff]
  %v10132 = vld [vmem:[#allocation4 + $0x188] sm:$0xff]
  %v10133 = vld [vmem:[#allocation4 + $0x190] sm:$0xff]
  %v10134 = vld [vmem:[#allocation4 + $0x198] sm:$0xff]
  %v10135 = vld [vmem:[#allocation4 + $0x1a0] sm:$0xff]
  %v10136 = vld [vmem:[#allocation4 + $0x1a8] sm:$0xff]
  %v10137 = vld [vmem:[#allocation4 + $0x1b0] sm:$0xff]
  %v10138 = vld [vmem:[#allocation4 + $0x1b8] sm:$0xff]
  %v10139 = vld [vmem:[#allocation4 + $0x1c0] sm:$0xff]
  %v10140 = vld [vmem:[#allocation4 + $0x1c8] sm:$0xff]
  %v10141 = vld [vmem:[#allocation4 + $0x1d0] sm:$0xff]
  %v10142 = vld [vmem:[#allocation4 + $0x1d8] sm:$0xff]
  %v10143 = vld [vmem:[#allocation4 + $0x1e0] sm:$0xff]
  %v10144 = vld [vmem:[#allocation4 + $0x1e8] sm:$0xff]
  %v10145 = vld [vmem:[#allocation4 + $0x1f0] sm:$0xff]
  %v10146 = vld [vmem:[#allocation4 + $0x1f8] sm:$0xff]
  %v10147 = vadd.f32 %v10083, %v10084
  %v10148 = vadd.f32 %v10147, %v10085
  %v10149 = vadd.f32 %v10148, %v10086
  %v10150 = vadd.f32 %v10149, %v10087
  %v10151 = vadd.f32 %v10150, %v10088
  %v10152 = vadd.f32 %v10151, %v10089
  %v10153 = vadd.f32 %v10152, %v10090
  %v10154 = vadd.f32 %v10153, %v10091
  %v10155 = vadd.f32 %v10154, %v10092
  %v10156 = vadd.f32 %v10155, %v10093
  %v10157 = vadd.f32 %v10156, %v10094
  %v10158 = vadd.f32 %v10157, %v10095
  %v10159 = vadd.f32 %v10158, %v10096
  %v10160 = vadd.f32 %v10159, %v10097
  %v10161 = vadd.f32 %v10160, %v10098
  %v10162 = vadd.f32 %v10161, %v10099
  %v10163 = vadd.f32 %v10162, %v10100
  %v10164 = vadd.f32 %v10163, %v10101
  %v10165 = vadd.f32 %v10164, %v10102
  %v10166 = vadd.f32 %v10165, %v10103
  %v10167 = vadd.f32 %v10166, %v10104
  %v10168 = vadd.f32 %v10167, %v10105
  %v10169 = vadd.f32 %v10168, %v10106
  %v10170 = vadd.f32 %v10169, %v10107
  %v10171 = vadd.f32 %v10170, %v10108
  %v10172 = vadd.f32 %v10171, %v10109
  %v10173 = vadd.f32 %v10172, %v10110
  %v10174 = vadd.f32 %v10173, %v10111
  %v10175 = vadd.f32 %v10174, %v10112
  %v10176 = vadd.f32 %v10175, %v10113
  %v10177 = vadd.f32 %v10176, %v10114
  %v10178 = vadd.f32 %v10177, %v10115
  %v10179 = vadd.f32 %v10178, %v10116
  %v10180 = vadd.f32 %v10179, %v10117
  %v10181 = vadd.f32 %v10180, %v10118
  %v10182 = vadd.f32 %v10181, %v10119
  %v10183 = vadd.f32 %v10182, %v10120
  %v10184 = vadd.f32 %v10183, %v10121
  %v10185 = vadd.f32 %v10184, %v10122
  %v10186 = vadd.f32 %v10185, %v10123
  %v10187 = vadd.f32 %v10186, %v10124
  %v10188 = vadd.f32 %v10187, %v10125
  %v10189 = vadd.f32 %v10188, %v10126
  %v10190 = vadd.f32 %v10189, %v10127
  %v10191 = vadd.f32 %v10190, %v10128
  %v10192 = vadd.f32 %v10191, %v10129
  %v10193 = vadd.f32 %v10192, %v10130
  %v10194 = vadd.f32 %v10193, %v10131
  %v10195 = vadd.f32 %v10194, %v10132
  %v10196 = vadd.f32 %v10195, %v10133
  %v10197 = vadd.f32 %v10196, %v10134
  %v10198 = vadd.f32 %v10197, %v10135
  %v10199 = vadd.f32 %v10198, %v10136
  %v10200 = vadd.f32 %v10199, %v10137
  %v10201 = vadd.f32 %v10200, %v10138
  %v10202 = vadd.f32 %v10201, %v10139
  %v10203 = vadd.f32 %v10202, %v10140
  %v10204 = vadd.f32 %v10203, %v10141
  %v10205 = vadd.f32 %v10204, %v10142
  %v10206 = vadd.f32 %v10205, %v10143
  %v10207 = vadd.f32 %v10206, %v10144
  %v10208 = vadd.f32 %v10207, %v10145
  %v10209 = vadd.f32 %v10208, %v10146
  %v10210 = vrot.slane %v10209, 4
  %v10211 = vadd.f32 %v10209, %v10210
  %v10212 = vrot.slane %v10211, 2
  %v10213 = vadd.f32 %v10211, %v10212
  %v10214 = vrot.slane %v10213, 1
  %v10215 = vadd.f32 %v10213, %v10214
  %v10216 = vmul.f32 %v10215, %v5034
  %v10217 = vsub.f32 %v10083, %v10216
  %v10218 = vsub.f32 %v10084, %v10216
  %v10219 = vsub.f32 %v10085, %v10216
  %v10220 = vsub.f32 %v10086, %v10216
  %v10221 = vsub.f32 %v10087, %v10216
  %v10222 = vsub.f32 %v10088, %v10216
  %v10223 = vsub.f32 %v10089, %v10216
  %v10224 = vsub.f32 %v10090, %v10216
  %v10225 = vsub.f32 %v10091, %v10216
  %v10226 = vsub.f32 %v10092, %v10216
  %v10227 = vsub.f32 %v10093, %v10216
  %v10228 = vsub.f32 %v10094, %v10216
  %v10229 = vsub.f32 %v10095, %v10216
  %v10230 = vsub.f32 %v10096, %v10216
  %v10231 = vsub.f32 %v10097, %v10216
  %v10232 = vsub.f32 %v10098, %v10216
  %v10233 = vsub.f32 %v10099, %v10216
  %v10234 = vsub.f32 %v10100, %v10216
  %v10235 = vsub.f32 %v10101, %v10216
  %v10236 = vsub.f32 %v10102, %v10216
  %v10237 = vsub.f32 %v10103, %v10216
  %v10238 = vsub.f32 %v10104, %v10216
  %v10239 = vsub.f32 %v10105, %v10216
  %v10240 = vsub.f32 %v10106, %v10216
  %v10241 = vsub.f32 %v10107, %v10216
  %v10242 = vsub.f32 %v10108, %v10216
  %v10243 = vsub.f32 %v10109, %v10216
  %v10244 = vsub.f32 %v10110, %v10216
  %v10245 = vsub.f32 %v10111, %v10216
  %v10246 = vsub.f32 %v10112, %v10216
  %v10247 = vsub.f32 %v10113, %v10216
  %v10248 = vsub.f32 %v10114, %v10216
  %v10249 = vsub.f32 %v10115, %v10216
  %v10250 = vsub.f32 %v10116, %v10216
  %v10251 = vsub.f32 %v10117, %v10216
  %v10252 = vsub.f32 %v10118, %v10216
  %v10253 = vsub.f32 %v10119, %v10216
  %v10254 = vsub.f32 %v10120, %v10216
  %v10255 = vsub.f32 %v10121, %v10216
  %v10256 = vsub.f32 %v10122, %v10216
  %v10257 = vsub.f32 %v10123, %v10216
  %v10258 = vsub.f32 %v10124, %v10216
  %v10259 = vsub.f32 %v10125, %v10216
  %v10260 = vsub.f32 %v10126, %v10216
  %v10261 = vsub.f32 %v10127, %v10216
  %v10262 = vsub.f32 %v10128, %v10216
  %v10263 = vsub.f32 %v10129, %v10216
  %v10264 = vsub.f32 %v10130, %v10216
  %v10265 = vsub.f32 %v10131, %v10216
  %v10266 = vsub.f32 %v10132, %v10216
  %v10267 = vsub.f32 %v10133, %v10216
  %v10268 = vsub.f32 %v10134, %v10216
  %v10269 = vsub.f32 %v10135, %v10216
  %v10270 = vsub.f32 %v10136, %v10216
  %v10271 = vsub.f32 %v10137, %v10216
  %v10272 = vsub.f32 %v10138, %v10216
  %v10273 = vsub.f32 %v10139, %v10216
  %v10274 = vsub.f32 %v10140, %v10216
  %v10275 = vsub.f32 %v10141, %v10216
  %v10276 = vsub.f32 %v10142, %v10216
  %v10277 = vsub.f32 %v10143, %v10216
  %v10278 = vsub.f32 %v10144, %v10216
  %v10279 = vsub.f32 %v10145, %v10216
  %v10280 = vsub.f32 %v10146, %v10216
  %v10281 = vmul.f32 %v10217, %v10217
  %v10282 = vmul.f32 %v10218, %v10218
  %v10283 = vmul.f32 %v10219, %v10219
  %v10284 = vmul.f32 %v10220, %v10220
  %v10285 = vmul.f32 %v10221, %v10221
  %v10286 = vmul.f32 %v10222, %v10222
  %v10287 = vmul.f32 %v10223, %v10223
  %v10288 = vmul.f32 %v10224, %v10224
  %v10289 = vmul.f32 %v10225, %v10225
  %v10290 = vmul.f32 %v10226, %v10226
  %v10291 = vmul.f32 %v10227, %v10227
  %v10292 = vmul.f32 %v10228, %v10228
  %v10293 = vmul.f32 %v10229, %v10229
  %v10294 = vmul.f32 %v10230, %v10230
  %v10295 = vmul.f32 %v10231, %v10231
  %v10296 = vmul.f32 %v10232, %v10232
  %v10297 = vmul.f32 %v10233, %v10233
  %v10298 = vmul.f32 %v10234, %v10234
  %v10299 = vmul.f32 %v10235, %v10235
  %v10300 = vmul.f32 %v10236, %v10236
  %v10301 = vmul.f32 %v10237, %v10237
  %v10302 = vmul.f32 %v10238, %v10238
  %v10303 = vmul.f32 %v10239, %v10239
  %v10304 = vmul.f32 %v10240, %v10240
  %v10305 = vmul.f32 %v10241, %v10241
  %v10306 = vmul.f32 %v10242, %v10242
  %v10307 = vmul.f32 %v10243, %v10243
  %v10308 = vmul.f32 %v10244, %v10244
  %v10309 = vmul.f32 %v10245, %v10245
  %v10310 = vmul.f32 %v10246, %v10246
  %v10311 = vmul.f32 %v10247, %v10247
  %v10312 = vmul.f32 %v10248, %v10248
  %v10313 = vmul.f32 %v10249, %v10249
  %v10314 = vmul.f32 %v10250, %v10250
  %v10315 = vmul.f32 %v10251, %v10251
  %v10316 = vmul.f32 %v10252, %v10252
  %v10317 = vmul.f32 %v10253, %v10253
  %v10318 = vmul.f32 %v10254, %v10254
  %v10319 = vmul.f32 %v10255, %v10255
  %v10320 = vmul.f32 %v10256, %v10256
  %v10321 = vmul.f32 %v10257, %v10257
  %v10322 = vmul.f32 %v10258, %v10258
  %v10323 = vmul.f32 %v10259, %v10259
  %v10324 = vmul.f32 %v10260, %v10260
  %v10325 = vmul.f32 %v10261, %v10261
  %v10326 = vmul.f32 %v10262, %v10262
  %v10327 = vmul.f32 %v10263, %v10263
  %v10328 = vmul.f32 %v10264, %v10264
  %v10329 = vmul.f32 %v10265, %v10265
  %v10330 = vmul.f32 %v10266, %v10266
  %v10331 = vmul.f32 %v10267, %v10267
  %v10332 = vmul.f32 %v10268, %v10268
  %v10333 = vmul.f32 %v10269, %v10269
  %v10334 = vmul.f32 %v10270, %v10270
  %v10335 = vmul.f32 %v10271, %v10271
  %v10336 = vmul.f32 %v10272, %v10272
  %v10337 = vmul.f32 %v10273, %v10273
  %v10338 = vmul.f32 %v10274, %v10274
  %v10339 = vmul.f32 %v10275, %v10275
  %v10340 = vmul.f32 %v10276, %v10276
  %v10341 = vmul.f32 %v10277, %v10277
  %v10342 = vmul.f32 %v10278, %v10278
  %v10343 = vmul.f32 %v10279, %v10279
  %v10344 = vmul.f32 %v10280, %v10280
  %v10345 = vadd.f32 %v10281, %v10282
  %v10346 = vadd.f32 %v10345, %v10283
  %v10347 = vadd.f32 %v10346, %v10284
  %v10348 = vadd.f32 %v10347, %v10285
  %v10349 = vadd.f32 %v10348, %v10286
  %v10350 = vadd.f32 %v10349, %v10287
  %v10351 = vadd.f32 %v10350, %v10288
  %v10352 = vadd.f32 %v10351, %v10289
  %v10353 = vadd.f32 %v10352, %v10290
  %v10354 = vadd.f32 %v10353, %v10291
  %v10355 = vadd.f32 %v10354, %v10292
  %v10356 = vadd.f32 %v10355, %v10293
  %v10357 = vadd.f32 %v10356, %v10294
  %v10358 = vadd.f32 %v10357, %v10295
  %v10359 = vadd.f32 %v10358, %v10296
  %v10360 = vadd.f32 %v10359, %v10297
  %v10361 = vadd.f32 %v10360, %v10298
  %v10362 = vadd.f32 %v10361, %v10299
  %v10363 = vadd.f32 %v10362, %v10300
  %v10364 = vadd.f32 %v10363, %v10301
  %v10365 = vadd.f32 %v10364, %v10302
  %v10366 = vadd.f32 %v10365, %v10303
  %v10367 = vadd.f32 %v10366, %v10304
  %v10368 = vadd.f32 %v10367, %v10305
  %v10369 = vadd.f32 %v10368, %v10306
  %v10370 = vadd.f32 %v10369, %v10307
  %v10371 = vadd.f32 %v10370, %v10308
  %v10372 = vadd.f32 %v10371, %v10309
  %v10373 = vadd.f32 %v10372, %v10310
  %v10374 = vadd.f32 %v10373, %v10311
  %v10375 = vadd.f32 %v10374, %v10312
  %v10376 = vadd.f32 %v10375, %v10313
  %v10377 = vadd.f32 %v10376, %v10314
  %v10378 = vadd.f32 %v10377, %v10315
  %v10379 = vadd.f32 %v10378, %v10316
  %v10380 = vadd.f32 %v10379, %v10317
  %v10381 = vadd.f32 %v10380, %v10318
  %v10382 = vadd.f32 %v10381, %v10319
  %v10383 = vadd.f32 %v10382, %v10320
  %v10384 = vadd.f32 %v10383, %v10321
  %v10385 = vadd.f32 %v10384, %v10322
  %v10386 = vadd.f32 %v10385, %v10323
  %v10387 = vadd.f32 %v10386, %v10324
  %v10388 = vadd.f32 %v10387, %v10325
  %v10389 = vadd.f32 %v10388, %v10326
  %v10390 = vadd.f32 %v10389, %v10327
  %v10391 = vadd.f32 %v10390, %v10328
  %v10392 = vadd.f32 %v10391, %v10329
  %v10393 = vadd.f32 %v10392, %v10330
  %v10394 = vadd.f32 %v10393, %v10331
  %v10395 = vadd.f32 %v10394, %v10332
  %v10396 = vadd.f32 %v10395, %v10333
  %v10397 = vadd.f32 %v10396, %v10334
  %v10398 = vadd.f32 %v10397, %v10335
  %v10399 = vadd.f32 %v10398, %v10336
  %v10400 = vadd.f32 %v10399, %v10337
  %v10401 = vadd.f32 %v10400, %v10338
  %v10402 = vadd.f32 %v10401, %v10339
  %v10403 = vadd.f32 %v10402, %v10340
  %v10404 = vadd.f32 %v10403, %v10341
  %v10405 = vadd.f32 %v10404, %v10342
  %v10406 = vadd.f32 %v10405, %v10343
  %v10407 = vadd.f32 %v10406, %v10344
  %v10408 = vrot.slane %v10407, 4
  %v10409 = vadd.f32 %v10407, %v10408
  %v10410 = vrot.slane %v10409, 2
  %v10411 = vadd.f32 %v10409, %v10410
  %v10412 = vrot.slane %v10411, 1
  %v10413 = vadd.f32 %v10411, %v10412
  %v10414 = vmul.f32 %v10413, %v5034
  %v10415 = vld [vmem:[%s5] sm:$0x1]
  %v10416 = vadd.f32 %v10414, 1e-05
  %v10417 = vrsqrt.pop %v10416
  %v10418 = vmul.f32 %v10417, %v10416
  %v10419 = vmul.f32 %v10418, %v10417
  %v10420 = vmul.f32 0.5, %v10419
  %v10421 = vsub.f32 1.5, %v10420
  %v10422 = vmul.f32 %v10417, %v10421
  %vm10423 = vweird.f32 %v10416
  %vm10424 = vweird.f32 %v10417
  %vm10425 = vmor %vm10423, %vm10424
  %v10426 = vsel %vm10425, %v10417, %v10422
  %v10427 = vmul.f32 %v10415, %v10426
  %v10428 = vld [vmem:[%s6] sm:$0x1]
  %v10429 = vmul.f32 %v10216, %v10427
  %v10430 = vsub.f32 %v10428, %v10429
  %v10432 = vperm.slane %v10427, 0
  %v10434 = vmul.f32 %v10083, %v10432
  %v10435 = vmul.f32 %v10084, %v10432
  %v10436 = vmul.f32 %v10085, %v10432
  %v10437 = vmul.f32 %v10086, %v10432
  %v10438 = vmul.f32 %v10087, %v10432
  %v10439 = vmul.f32 %v10088, %v10432
  %v10440 = vmul.f32 %v10089, %v10432
  %v10441 = vmul.f32 %v10090, %v10432
  %v10442 = vmul.f32 %v10091, %v10432
  %v10443 = vmul.f32 %v10092, %v10432
  %v10444 = vmul.f32 %v10093, %v10432
  %v10445 = vmul.f32 %v10094, %v10432
  %v10446 = vmul.f32 %v10095, %v10432
  %v10447 = vmul.f32 %v10096, %v10432
  %v10448 = vmul.f32 %v10097, %v10432
  %v10449 = vmul.f32 %v10098, %v10432
  %v10450 = vmul.f32 %v10099, %v10432
  %v10451 = vmul.f32 %v10100, %v10432
  %v10452 = vmul.f32 %v10101, %v10432
  %v10453 = vmul.f32 %v10102, %v10432
  %v10454 = vmul.f32 %v10103, %v10432
  %v10455 = vmul.f32 %v10104, %v10432
  %v10456 = vmul.f32 %v10105, %v10432
  %v10457 = vmul.f32 %v10106, %v10432
  %v10458 = vmul.f32 %v10107, %v10432
  %v10459 = vmul.f32 %v10108, %v10432
  %v10460 = vmul.f32 %v10109, %v10432
  %v10461 = vmul.f32 %v10110, %v10432
  %v10462 = vmul.f32 %v10111, %v10432
  %v10463 = vmul.f32 %v10112, %v10432
  %v10464 = vmul.f32 %v10113, %v10432
  %v10465 = vmul.f32 %v10114, %v10432
  %v10466 = vmul.f32 %v10115, %v10432
  %v10467 = vmul.f32 %v10116, %v10432
  %v10468 = vmul.f32 %v10117, %v10432
  %v10469 = vmul.f32 %v10118, %v10432
  %v10470 = vmul.f32 %v10119, %v10432
  %v10471 = vmul.f32 %v10120, %v10432
  %v10472 = vmul.f32 %v10121, %v10432
  %v10473 = vmul.f32 %v10122, %v10432
  %v10474 = vmul.f32 %v10123, %v10432
  %v10475 = vmul.f32 %v10124, %v10432
  %v10476 = vmul.f32 %v10125, %v10432
  %v10477 = vmul.f32 %v10126, %v10432
  %v10478 = vmul.f32 %v10127, %v10432
  %v10479 = vmul.f32 %v10128, %v10432
  %v10480 = vmul.f32 %v10129, %v10432
  %v10481 = vmul.f32 %v10130, %v10432
  %v10482 = vmul.f32 %v10131, %v10432
  %v10483 = vmul.f32 %v10132, %v10432
  %v10484 = vmul.f32 %v10133, %v10432
  %v10485 = vmul.f32 %v10134, %v10432
  %v10486 = vmul.f32 %v10135, %v10432
  %v10487 = vmul.f32 %v10136, %v10432
  %v10488 = vmul.f32 %v10137, %v10432
  %v10489 = vmul.f32 %v10138, %v10432
  %v10490 = vmul.f32 %v10139, %v10432
  %v10491 = vmul.f32 %v10140, %v10432
  %v10492 = vmul.f32 %v10141, %v10432
  %v10493 = vmul.f32 %v10142, %v10432
  %v10494 = vmul.f32 %v10143, %v10432
  %v10495 = vmul.f32 %v10144, %v10432
  %v10496 = vmul.f32 %v10145, %v10432
  %v10497 = vmul.f32 %v10146, %v10432
  %v10499 = vperm.slane %v10430, 0
  %v10501 = vadd.f32 %v10434, %v10499
  %v10502 = vadd.f32 %v10435, %v10499
  %v10503 = vadd.f32 %v10436, %v10499
  %v10504 = vadd.f32 %v10437, %v10499
  %v10505 = vadd.f32 %v10438, %v10499
  %v10506 = vadd.f32 %v10439, %v10499
  %v10507 = vadd.f32 %v10440, %v10499
  %v10508 = vadd.f32 %v10441, %v10499
  %v10509 = vadd.f32 %v10442, %v10499
  %v10510 = vadd.f32 %v10443, %v10499
  %v10511 = vadd.f32 %v10444, %v10499
  %v10512 = vadd.f32 %v10445, %v10499
  %v10513 = vadd.f32 %v10446, %v10499
  %v10514 = vadd.f32 %v10447, %v10499
  %v10515 = vadd.f32 %v10448, %v10499
  %v10516 = vadd.f32 %v10449, %v10499
  %v10517 = vadd.f32 %v10450, %v10499
  %v10518 = vadd.f32 %v10451, %v10499
  %v10519 = vadd.f32 %v10452, %v10499
  %v10520 = vadd.f32 %v10453, %v10499
  %v10521 = vadd.f32 %v10454, %v10499
  %v10522 = vadd.f32 %v10455, %v10499
  %v10523 = vadd.f32 %v10456, %v10499
  %v10524 = vadd.f32 %v10457, %v10499
  %v10525 = vadd.f32 %v10458, %v10499
  %v10526 = vadd.f32 %v10459, %v10499
  %v10527 = vadd.f32 %v10460, %v10499
  %v10528 = vadd.f32 %v10461, %v10499
  %v10529 = vadd.f32 %v10462, %v10499
  %v10530 = vadd.f32 %v10463, %v10499
  %v10531 = vadd.f32 %v10464, %v10499
  %v10532 = vadd.f32 %v10465, %v10499
  %v10533 = vadd.f32 %v10466, %v10499
  %v10534 = vadd.f32 %v10467, %v10499
  %v10535 = vadd.f32 %v10468, %v10499
  %v10536 = vadd.f32 %v10469, %v10499
  %v10537 = vadd.f32 %v10470, %v10499
  %v10538 = vadd.f32 %v10471, %v10499
  %v10539 = vadd.f32 %v10472, %v10499
  %v10540 = vadd.f32 %v10473, %v10499
  %v10541 = vadd.f32 %v10474, %v10499
  %v10542 = vadd.f32 %v10475, %v10499
  %v10543 = vadd.f32 %v10476, %v10499
  %v10544 = vadd.f32 %v10477, %v10499
  %v10545 = vadd.f32 %v10478, %v10499
  %v10546 = vadd.f32 %v10479, %v10499
  %v10547 = vadd.f32 %v10480, %v10499
  %v10548 = vadd.f32 %v10481, %v10499
  %v10549 = vadd.f32 %v10482, %v10499
  %v10550 = vadd.f32 %v10483, %v10499
  %v10551 = vadd.f32 %v10484, %v10499
  %v10552 = vadd.f32 %v10485, %v10499
  %v10553 = vadd.f32 %v10486, %v10499
  %v10554 = vadd.f32 %v10487, %v10499
  %v10555 = vadd.f32 %v10488, %v10499
  %v10556 = vadd.f32 %v10489, %v10499
  %v10557 = vadd.f32 %v10490, %v10499
  %v10558 = vadd.f32 %v10491, %v10499
  %v10559 = vadd.f32 %v10492, %v10499
  %v10560 = vadd.f32 %v10493, %v10499
  %v10561 = vadd.f32 %v10494, %v10499
  %v10562 = vadd.f32 %v10495, %v10499
  %v10563 = vadd.f32 %v10496, %v10499
  %v10564 = vadd.f32 %v10497, %v10499
  %v10565 = vld [vmem:[%s0] sm:$0xff]
  %v10566 = vld [vmem:[%s0 + $0x8] sm:$0xff]
  %v10567 = vld [vmem:[%s0 + $0x10] sm:$0xff]
  %v10568 = vld [vmem:[%s0 + $0x18] sm:$0xff]
  %v10569 = vld [vmem:[%s0 + $0x20] sm:$0xff]
  %v10570 = vld [vmem:[%s0 + $0x28] sm:$0xff]
  %v10571 = vld [vmem:[%s0 + $0x30] sm:$0xff]
  %v10572 = vld [vmem:[%s0 + $0x38] sm:$0xff]
  %v10573 = vld [vmem:[%s0 + $0x40] sm:$0xff]
  %v10574 = vld [vmem:[%s0 + $0x48] sm:$0xff]
  %v10575 = vld [vmem:[%s0 + $0x50] sm:$0xff]
  %v10576 = vld [vmem:[%s0 + $0x58] sm:$0xff]
  %v10577 = vld [vmem:[%s0 + $0x60] sm:$0xff]
  %v10578 = vld [vmem:[%s0 + $0x68] sm:$0xff]
  %v10579 = vld [vmem:[%s0 + $0x70] sm:$0xff]
  %v10580 = vld [vmem:[%s0 + $0x78] sm:$0xff]
  %v10581 = vld [vmem:[%s0 + $0x80] sm:$0xff]
  %v10582 = vld [vmem:[%s0 + $0x88] sm:$0xff]
  %v10583 = vld [vmem:[%s0 + $0x90] sm:$0xff]
  %v10584 = vld [vmem:[%s0 + $0x98] sm:$0xff]
  %v10585 = vld [vmem:[%s0 + $0xa0] sm:$0xff]
  %v10586 = vld [vmem:[%s0 + $0xa8] sm:$0xff]
  %v10587 = vld [vmem:[%s0 + $0xb0] sm:$0xff]
  %v10588 = vld [vmem:[%s0 + $0xb8] sm:$0xff]
  %v10589 = vld [vmem:[%s0 + $0xc0] sm:$0xff]
  %v10590 = vld [vmem:[%s0 + $0xc8] sm:$0xff]
  %v10591 = vld [vmem:[%s0 + $0xd0] sm:$0xff]
  %v10592 = vld [vmem:[%s0 + $0xd8] sm:$0xff]
  %v10593 = vld [vmem:[%s0 + $0xe0] sm:$0xff]
  %v10594 = vld [vmem:[%s0 + $0xe8] sm:$0xff]
  %v10595 = vld [vmem:[%s0 + $0xf0] sm:$0xff]
  %v10596 = vld [vmem:[%s0 + $0xf8] sm:$0xff]
  %v10597 = vld [vmem:[%s0 + $0x100] sm:$0xff]
  %v10598 = vld [vmem:[%s0 + $0x108] sm:$0xff]
  %v10599 = vld [vmem:[%s0 + $0x110] sm:$0xff]
  %v10600 = vld [vmem:[%s0 + $0x118] sm:$0xff]
  %v10601 = vld [vmem:[%s0 + $0x120] sm:$0xff]
  %v10602 = vld [vmem:[%s0 + $0x128] sm:$0xff]
  %v10603 = vld [vmem:[%s0 + $0x130] sm:$0xff]
  %v10604 = vld [vmem:[%s0 + $0x138] sm:$0xff]
  %v10605 = vld [vmem:[%s0 + $0x140] sm:$0xff]
  %v10606 = vld [vmem:[%s0 + $0x148] sm:$0xff]
  %v10607 = vld [vmem:[%s0 + $0x150] sm:$0xff]
  %v10608 = vld [vmem:[%s0 + $0x158] sm:$0xff]
  %v10609 = vld [vmem:[%s0 + $0x160] sm:$0xff]
  %v10610 = vld [vmem:[%s0 + $0x168] sm:$0xff]
  %v10611 = vld [vmem:[%s0 + $0x170] sm:$0xff]
  %v10612 = vld [vmem:[%s0 + $0x178] sm:$0xff]
  %v10613 = vld [vmem:[%s0 + $0x180] sm:$0xff]
  %v10614 = vld [vmem:[%s0 + $0x188] sm:$0xff]
  %v10615 = vld [vmem:[%s0 + $0x190] sm:$0xff]
  %v10616 = vld [vmem:[%s0 + $0x198] sm:$0xff]
  %v10617 = vld [vmem:[%s0 + $0x1a0] sm:$0xff]
  %v10618 = vld [vmem:[%s0 + $0x1a8] sm:$0xff]
  %v10619 = vld [vmem:[%s0 + $0x1b0] sm:$0xff]
  %v10620 = vld [vmem:[%s0 + $0x1b8] sm:$0xff]
  %v10621 = vld [vmem:[%s0 + $0x1c0] sm:$0xff]
  %v10622 = vld [vmem:[%s0 + $0x1c8] sm:$0xff]
  %v10623 = vld [vmem:[%s0 + $0x1d0] sm:$0xff]
  %v10624 = vld [vmem:[%s0 + $0x1d8] sm:$0xff]
  %v10625 = vld [vmem:[%s0 + $0x1e0] sm:$0xff]
  %v10626 = vld [vmem:[%s0 + $0x1e8] sm:$0xff]
  %v10627 = vld [vmem:[%s0 + $0x1f0] sm:$0xff]
  %v10628 = vld [vmem:[%s0 + $0x1f8] sm:$0xff]
  %v10629 = vadd.f32 %v10501, %v10565
  %v10630 = vadd.f32 %v10502, %v10566
  %v10631 = vadd.f32 %v10503, %v10567
  %v10632 = vadd.f32 %v10504, %v10568
  %v10633 = vadd.f32 %v10505, %v10569
  %v10634 = vadd.f32 %v10506, %v10570
  %v10635 = vadd.f32 %v10507, %v10571
  %v10636 = vadd.f32 %v10508, %v10572
  %v10637 = vadd.f32 %v10509, %v10573
  %v10638 = vadd.f32 %v10510, %v10574
  %v10639 = vadd.f32 %v10511, %v10575
  %v10640 = vadd.f32 %v10512, %v10576
  %v10641 = vadd.f32 %v10513, %v10577
  %v10642 = vadd.f32 %v10514, %v10578
  %v10643 = vadd.f32 %v10515, %v10579
  %v10644 = vadd.f32 %v10516, %v10580
  %v10645 = vadd.f32 %v10517, %v10581
  %v10646 = vadd.f32 %v10518, %v10582
  %v10647 = vadd.f32 %v10519, %v10583
  %v10648 = vadd.f32 %v10520, %v10584
  %v10649 = vadd.f32 %v10521, %v10585
  %v10650 = vadd.f32 %v10522, %v10586
  %v10651 = vadd.f32 %v10523, %v10587
  %v10652 = vadd.f32 %v10524, %v10588
  %v10653 = vadd.f32 %v10525, %v10589
  %v10654 = vadd.f32 %v10526, %v10590
  %v10655 = vadd.f32 %v10527, %v10591
  %v10656 = vadd.f32 %v10528, %v10592
  %v10657 = vadd.f32 %v10529, %v10593
  %v10658 = vadd.f32 %v10530, %v10594
  %v10659 = vadd.f32 %v10531, %v10595
  %v10660 = vadd.f32 %v10532, %v10596
  %v10661 = vadd.f32 %v10533, %v10597
  %v10662 = vadd.f32 %v10534, %v10598
  %v10663 = vadd.f32 %v10535, %v10599
  %v10664 = vadd.f32 %v10536, %v10600
  %v10665 = vadd.f32 %v10537, %v10601
  %v10666 = vadd.f32 %v10538, %v10602
  %v10667 = vadd.f32 %v10539, %v10603
  %v10668 = vadd.f32 %v10540, %v10604
  %v10669 = vadd.f32 %v10541, %v10605
  %v10670 = vadd.f32 %v10542, %v10606
  %v10671 = vadd.f32 %v10543, %v10607
  %v10672 = vadd.f32 %v10544, %v10608
  %v10673 = vadd.f32 %v10545, %v10609
  %v10674 = vadd.f32 %v10546, %v10610
  %v10675 = vadd.f32 %v10547, %v10611
  %v10676 = vadd.f32 %v10548, %v10612
  %v10677 = vadd.f32 %v10549, %v10613
  %v10678 = vadd.f32 %v10550, %v10614
  %v10679 = vadd.f32 %v10551, %v10615
  %v10680 = vadd.f32 %v10552, %v10616
  %v10681 = vadd.f32 %v10553, %v10617
  %v10682 = vadd.f32 %v10554, %v10618
  %v10683 = vadd.f32 %v10555, %v10619
  %v10684 = vadd.f32 %v10556, %v10620
  %v10685 = vadd.f32 %v10557, %v10621
  %v10686 = vadd.f32 %v10558, %v10622
  %v10687 = vadd.f32 %v10559, %v10623
  %v10688 = vadd.f32 %v10560, %v10624
  %v10689 = vadd.f32 %v10561, %v10625
  %v10690 = vadd.f32 %v10562, %v10626
  %v10691 = vadd.f32 %v10563, %v10627
  %v10692 = vadd.f32 %v10564, %v10628
  %v10693 = vmax.f32 %v10629, 0.0
  %v10694 = vmax.f32 %v10630, 0.0
  %v10695 = vmax.f32 %v10631, 0.0
  %v10696 = vmax.f32 %v10632, 0.0
  %v10697 = vmax.f32 %v10633, 0.0
  %v10698 = vmax.f32 %v10634, 0.0
  %v10699 = vmax.f32 %v10635, 0.0
  %v10700 = vmax.f32 %v10636, 0.0
  %v10701 = vmax.f32 %v10637, 0.0
  %v10702 = vmax.f32 %v10638, 0.0
  %v10703 = vmax.f32 %v10639, 0.0
  %v10704 = vmax.f32 %v10640, 0.0
  %v10705 = vmax.f32 %v10641, 0.0
  %v10706 = vmax.f32 %v10642, 0.0
  %v10707 = vmax.f32 %v10643, 0.0
  %v10708 = vmax.f32 %v10644, 0.0
  %v10709 = vmax.f32 %v10645, 0.0
  %v10710 = vmax.f32 %v10646, 0.0
  %v10711 = vmax.f32 %v10647, 0.0
  %v10712 = vmax.f32 %v10648, 0.0
  %v10713 = vmax.f32 %v10649, 0.0
  %v10714 = vmax.f32 %v10650, 0.0
  %v10715 = vmax.f32 %v10651, 0.0
  %v10716 = vmax.f32 %v10652, 0.0
  %v10717 = vmax.f32 %v10653, 0.0
  %v10718 = vmax.f32 %v10654, 0.0
  %v10719 = vmax.f32 %v10655, 0.0
  %v10720 = vmax.f32 %v10656, 0.0
  %v10721 = vmax.f32 %v10657, 0.0
  %v10722 = vmax.f32 %v10658, 0.0
  %v10723 = vmax.f32 %v10659, 0.0
  %v10724 = vmax.f32 %v10660, 0.0
  %v10725 = vmax.f32 %v10661, 0.0
  %v10726 = vmax.f32 %v10662, 0.0
  %v10727 = vmax.f32 %v10663, 0.0
  %v10728 = vmax.f32 %v10664, 0.0
  %v10729 = vmax.f32 %v10665, 0.0
  %v10730 = vmax.f32 %v10666, 0.0
  %v10731 = vmax.f32 %v10667, 0.0
  %v10732 = vmax.f32 %v10668, 0.0
  %v10733 = vmax.f32 %v10669, 0.0
  %v10734 = vmax.f32 %v10670, 0.0
  %v10735 = vmax.f32 %v10671, 0.0
  %v10736 = vmax.f32 %v10672, 0.0
  %v10737 = vmax.f32 %v10673, 0.0
  %v10738 = vmax.f32 %v10674, 0.0
  %v10739 = vmax.f32 %v10675, 0.0
  %v10740 = vmax.f32 %v10676, 0.0
  %v10741 = vmax.f32 %v10677, 0.0
  %v10742 = vmax.f32 %v10678, 0.0
  %v10743 = vmax.f32 %v10679, 0.0
  %v10744 = vmax.f32 %v10680, 0.0
  %v10745 = vmax.f32 %v10681, 0.0
  %v10746 = vmax.f32 %v10682, 0.0
  %v10747 = vmax.f32 %v10683, 0.0
  %v10748 = vmax.f32 %v10684, 0.0
  %v10749 = vmax.f32 %v10685, 0.0
  %v10750 = vmax.f32 %v10686, 0.0
  %v10751 = vmax.f32 %v10687, 0.0
  %v10752 = vmax.f32 %v10688, 0.0
  %v10753 = vmax.f32 %v10689, 0.0
  %v10754 = vmax.f32 %v10690, 0.0
  %v10755 = vmax.f32 %v10691, 0.0
  %v10756 = vmax.f32 %v10692, 0.0
  %10757 = vst [vmem:[%s7] sm:$0xff] %v10693
  %10758 = vst [vmem:[%s7 + $0x8] sm:$0xff] %v10694
  %10759 = vst [vmem:[%s7 + $0x10] sm:$0xff] %v10695
  %10760 = vst [vmem:[%s7 + $0x18] sm:$0xff] %v10696
  %10761 = vst [vmem:[%s7 + $0x20] sm:$0xff] %v10697
  %10762 = vst [vmem:[%s7 + $0x28] sm:$0xff] %v10698
  %10763 = vst [vmem:[%s7 + $0x30] sm:$0xff] %v10699
  %10764 = vst [vmem:[%s7 + $0x38] sm:$0xff] %v10700
  %10765 = vst [vmem:[%s7 + $0x40] sm:$0xff] %v10701
  %10766 = vst [vmem:[%s7 + $0x48] sm:$0xff] %v10702
  %10767 = vst [vmem:[%s7 + $0x50] sm:$0xff] %v10703
  %10768 = vst [vmem:[%s7 + $0x58] sm:$0xff] %v10704
  %10769 = vst [vmem:[%s7 + $0x60] sm:$0xff] %v10705
  %10770 = vst [vmem:[%s7 + $0x68] sm:$0xff] %v10706
  %10771 = vst [vmem:[%s7 + $0x70] sm:$0xff] %v10707
  %10772 = vst [vmem:[%s7 + $0x78] sm:$0xff] %v10708
  %10773 = vst [vmem:[%s7 + $0x80] sm:$0xff] %v10709
  %10774 = vst [vmem:[%s7 + $0x88] sm:$0xff] %v10710
  %10775 = vst [vmem:[%s7 + $0x90] sm:$0xff] %v10711
  %10776 = vst [vmem:[%s7 + $0x98] sm:$0xff] %v10712
  %10777 = vst [vmem:[%s7 + $0xa0] sm:$0xff] %v10713
  %10778 = vst [vmem:[%s7 + $0xa8] sm:$0xff] %v10714
  %10779 = vst [vmem:[%s7 + $0xb0] sm:$0xff] %v10715
  %10780 = vst [vmem:[%s7 + $0xb8] sm:$0xff] %v10716
  %10781 = vst [vmem:[%s7 + $0xc0] sm:$0xff] %v10717
  %10782 = vst [vmem:[%s7 + $0xc8] sm:$0xff] %v10718
  %10783 = vst [vmem:[%s7 + $0xd0] sm:$0xff] %v10719
  %10784 = vst [vmem:[%s7 + $0xd8] sm:$0xff] %v10720
  %10785 = vst [vmem:[%s7 + $0xe0] sm:$0xff] %v10721
  %10786 = vst [vmem:[%s7 + $0xe8] sm:$0xff] %v10722
  %10787 = vst [vmem:[%s7 + $0xf0] sm:$0xff] %v10723
  %10788 = vst [vmem:[%s7 + $0xf8] sm:$0xff] %v10724
  %10789 = vst [vmem:[%s7 + $0x100] sm:$0xff] %v10725
  %10790 = vst [vmem:[%s7 + $0x108] sm:$0xff] %v10726
  %10791 = vst [vmem:[%s7 + $0x110] sm:$0xff] %v10727
  %10792 = vst [vmem:[%s7 + $0x118] sm:$0xff] %v10728
  %10793 = vst [vmem:[%s7 + $0x120] sm:$0xff] %v10729
  %10794 = vst [vmem:[%s7 + $0x128] sm:$0xff] %v10730
  %10795 = vst [vmem:[%s7 + $0x130] sm:$0xff] %v10731
  %10796 = vst [vmem:[%s7 + $0x138] sm:$0xff] %v10732
  %10797 = vst [vmem:[%s7 + $0x140] sm:$0xff] %v10733
  %10798 = vst [vmem:[%s7 + $0x148] sm:$0xff] %v10734
  %10799 = vst [vmem:[%s7 + $0x150] sm:$0xff] %v10735
  %10800 = vst [vmem:[%s7 + $0x158] sm:$0xff] %v10736
  %10801 = vst [vmem:[%s7 + $0x160] sm:$0xff] %v10737
  %10802 = vst [vmem:[%s7 + $0x168] sm:$0xff] %v10738
  %10803 = vst [vmem:[%s7 + $0x170] sm:$0xff] %v10739
  %10804 = vst [vmem:[%s7 + $0x178] sm:$0xff] %v10740
  %10805 = vst [vmem:[%s7 + $0x180] sm:$0xff] %v10741
  %10806 = vst [vmem:[%s7 + $0x188] sm:$0xff] %v10742
  %10807 = vst [vmem:[%s7 + $0x190] sm:$0xff] %v10743
  %10808 = vst [vmem:[%s7 + $0x198] sm:$0xff] %v10744
  %10809 = vst [vmem:[%s7 + $0x1a0] sm:$0xff] %v10745
  %10810 = vst [vmem:[%s7 + $0x1a8] sm:$0xff] %v10746
  %10811 = vst [vmem:[%s7 + $0x1b0] sm:$0xff] %v10747
  %10812 = vst [vmem:[%s7 + $0x1b8] sm:$0xff] %v10748
  %10813 = vst [vmem:[%s7 + $0x1c0] sm:$0xff] %v10749
  %10814 = vst [vmem:[%s7 + $0x1c8] sm:$0xff] %v10750
  %10815 = vst [vmem:[%s7 + $0x1d0] sm:$0xff] %v10751
  %10816 = vst [vmem:[%s7 + $0x1d8] sm:$0xff] %v10752
  %10817 = vst [vmem:[%s7 + $0x1e0] sm:$0xff] %v10753
  %10818 = vst [vmem:[%s7 + $0x1e8] sm:$0xff] %v10754
  %10819 = vst [vmem:[%s7 + $0x1f0] sm:$0xff] %v10755
  %10820 = vst [vmem:[%s7 + $0x1f8] sm:$0xff] %v10756
  // Predicated region
  $region30: #{basic_block_forward.1} parent=0 // pred_check
    _
  $region31: #{basic_block_forward.1} parent=0 // pred_check_branch
    %10822 = sbr.rel (0) target = $region33
  $region32: #{basic_block_forward.1} parent=0 // pred_region
    _
  $region33: #{basic_block_forward.1} parent=0 // pred_fallthru
    _
  // Predicated region
  $region34: #{basic_block_forward.1} parent=0 // pred_check
    _
  $region35: #{basic_block_forward.1} parent=0 // pred_check_branch
    %10824 = sbr.rel (0) target = $region37
  $region36: #{basic_block_forward.1} parent=0 // pred_region
    _
  $region37: #{basic_block_forward.1} parent=0 // pred_fallthru
    _

</llo_original>
